<compile_context>
chip_gen: v5e
topology: v5e:2x2
jax: 0.10.0
libtpu: 0.0.40
codegen_flags: <defaults>
</compile_context>

<pallas_src>
import jax
import jax.numpy as jnp
from jax import lax
from jax.experimental import pallas as pl
from jax.experimental.pallas import tpu as pltpu

RELU_ALPHA = 0.2
MAP_SIZE = 6
MAP_LEN = MAP_SIZE * MAP_SIZE


def _leaky(x):
    # max(x, a*x) == LeakyReLU for a < 1: lowers to vmul+vmax (no cmp/select).
    return jnp.maximum(x, RELU_ALPHA * x)


def _bf16(x):
    return x.astype(jnp.bfloat16)


# ----------------------------------------------------------------------------
# Pallas kernel: one grid step = (batch b, npoint tile pi).  Points are on the
# lane axis for every tensor the kernel creates.
# ----------------------------------------------------------------------------
def fgconv_kernel(gxyz_ref, gfeat_ref,
                  w_pn1_ref, w_pn2_ref, w_pn3_ref, w_wt1_ref, w_wt2_ref,
                  bias_ref, c1_ref, c2_ref, c3_ref,
                  out_ref):
    # gxyz_ref : (1, 1, 3, S*TP)  bf16   lanes = (s, p), s-major
    # gfeat_ref: (1, S, C, TP)    bf16   lanes = p
    # out_ref  : (1, C_out, TP)   f32/bf16, lane-dense along points
    _, S, C, TP = gfeat_ref.shape
    x = gxyz_ref[0, 0]                      # (3, S*TP) bf16

    # --- ProjWeightModule point-wise MLP, transposed: (Cout,Cin)@(Cin,S*TP) --
    def mm(w_ref, a):
        return jnp.dot(w_ref[...], _bf16(a), preferred_element_type=jnp.float32)

    h = _leaky(mm(w_pn1_ref, x))            # (8,  S*TP) f32
    h = _leaky(mm(w_pn2_ref, h))            # (16, S*TP)
    h = _leaky(mm(w_pn3_ref, h))            # (16, S*TP)
    h = _leaky(mm(w_wt1_ref, h))            # (32, S*TP)
    w = mm(w_wt2_ref, h)                    # (36, S*TP) f32

    # --- Dual normalization (f32; rsqrt on EUP, no divides) ------------------
    # torch: w / sqrt(max(sum_map w^2, 1e-8)),
    #        then / max(sqrt(max(sum_s w^2, 1e-8)), 1.0)  (squares of ORIGINAL)
    w2 = w * w
    inv1 = lax.rsqrt(jnp.maximum(jnp.sum(w2, axis=0, keepdims=True), 1e-8))
    wn = w * inv1                                          # (36, S*TP)
    ssum = w2[:, 0:TP]
    for s in range(1, S):                                  # static S, cheap adds
        ssum = ssum + w2[:, s * TP:(s + 1) * TP]
    inv2 = jnp.minimum(lax.rsqrt(jnp.maximum(ssum, 1e-8)), 1.0)   # (36, TP)

    # --- Projection: proj[m, c, p] = sum_s wn[m,s,p] * gfeat[c,s,p] ----------
    # Done as S broadcast-FMAs on the VPU so points stay on lanes (no relayout,
    # no per-point batched 36xSxC MXU einsum).  For very large C a p-batched
    # MXU matmul followed by a transpose may be preferable.
    gf = gfeat_ref[0]                                      # (S, C, TP) bf16
    acc = None
    for s in range(S):
        wn_s = wn[:, s * TP:(s + 1) * TP] * inv2           # (36, TP) f32
        term = wn_s[:, None, :] * gf[s][None].astype(jnp.float32)  # (36, C, TP)
        acc = term if acc is None else acc + term
    proj = _leaky(acc + bias_ref[...][None, :, :])         # (36, C, TP) f32
    xmap = _bf16(proj)                                     # single bf16 cast

    # --- proj_conv: valid 3x3 -> 3x3 -> 2x2 on the 6x6 map -------------------
    # Per-tap accumulation; every matmul is (Cout, Cin) @ (Cin, TP) with the
    # point axis lane-dense (TP >= 128 at realistic sizes fills the MXU N dim).
    xt0 = [[xmap[MAP_SIZE * i + j] for j in range(MAP_SIZE)]
           for i in range(MAP_SIZE)]

    def conv_block(tiles, w_ref, kh, kw):
        # tiles: list [i][j] -> (Cin, TP) bf16 ; w_ref: (kh*kw, Cout, Cin) bf16
        oh = len(tiles) - kh + 1
        ow = len(tiles[0]) - kw + 1
        acc_g = [[None for _ in range(ow)] for _ in range(oh)]
        for ki in range(kh):
            for kj in range(kw):
                wt = w_ref[ki * kw + kj]                   # (Cout, Cin) bf16
                for oi in range(oh):
                    for oj in range(ow):
                        d = jnp.dot(wt, tiles[oi + ki][oj + kj],
                                    preferred_element_type=jnp.float32)
                        acc_g[oi][oj] = d if acc_g[oi][oj] is None \
                            else acc_g[oi][oj] + d
        return acc_g                                       # f32 (pre-activation)

    y1 = conv_block(xt0, c1_ref, 3, 3)                     # 4x4 of (mid, TP)
    xt1 = [[_bf16(_leaky(t)) for t in row] for row in y1]
    y2 = conv_block(xt1, c2_ref, 3, 3)                     # 2x2 of (mid, TP)
    xt2 = [[_bf16(_leaky(t)) for t in row] for row in y2]
    y3 = conv_block(xt2, c3_ref, 2, 2)                     # 1x1 of (c_out, TP)
    out_ref[0] = _leaky(y3[0][0]).astype(out_ref.dtype)


# ----------------------------------------------------------------------------
# Pallas wrapper
# ----------------------------------------------------------------------------
def _tpu_vmem_capacity_bytes():
    try:
        return int(pltpu.get_tpu_info().vmem_capacity_bytes)
    except Exception:
        return 64 * 1024 * 1024      # conservative fallback (v7x-like)


def _choose_point_tile(p, target, batch):
    """Largest legal npoint tile <= target that divides P, keeps the output
    lane dim legal (TP == P or TP % 128 == 0) and leaves >= 2 grid steps."""
    cands = [p] + [t for t in range(128, p, 128) if p % t == 0]
    legal = sorted([t for t in cands if t <= target], reverse=True) or [min(cands)]
    for t in legal:
        if batch * (p // t) >= 2:
            return t
    return legal[-1]


def fgconv_pallas(gxyz, gfeat, params, c_out, *,
                  out_dtype=jnp.float32, tp_target=None, vmem_limit_bytes=None):
    # gxyz:  (B, P, S, 3) f32   grouped, center-relative coords
    # gfeat: (B, P, S, C) f32   grouped features
    B, P, S, C = gfeat.shape

    # Generation-aware tiling / VMEM limit (64 MiB-class parts get TP<=128).
    vmem_cap = _tpu_vmem_capacity_bytes()
    if tp_target is None:
        tp_target = 128 if vmem_cap <= 80 * 1024 * 1024 else 256
    if vmem_limit_bytes is None:
        vmem_limit_bytes = max(32 * 1024 * 1024,
                               min(vmem_cap * 3 // 4, 100 * 1024 * 1024))
    TP = _choose_point_tile(P, tp_target, B)
    ntiles = P // TP
    mid = params['c1'].shape[-1]

    # ---- wrapper-side layout plumbing (free-ish XLA ops on HBM) -------------
    # gxyz -> (B, ntiles, 3, S*TP) bf16, lanes = (s, p_local) s-major.
    gx = jnp.transpose(gxyz.astype(jnp.bfloat16), (0, 3, 2, 1))   # (B,3,S,P)
    gx = gx.reshape(B, 3, S, ntiles, TP)
    gxyz_r = jnp.transpose(gx, (0, 3, 1, 2, 4)).reshape(B, ntiles, 3, S * TP)
    # gfeat -> (B, S, C, P) bf16, points on the last (lane) axis.
    gfeat_r = jnp.transpose(gfeat.astype(jnp.bfloat16), (0, 2, 3, 1))

    # MLP weights transposed for (Cout,Cin)@(Cin,N) matmuls.
    def wT(a):
        return jnp.asarray(a, jnp.float32).T.astype(jnp.bfloat16)

    w_pn1 = wT(params['w_pn1'])            # (8, 3)
    w_pn2 = wT(params['w_pn2'])            # (16, 8)
    w_pn3 = wT(params['w_pn3'])            # (16, 16)
    w_wt1 = wT(params['w_wt1'])            # (32, 16)
    w_wt2 = wT(params['w_wt2'])            # (36, 32)
    bias = params['bias'].reshape(C, 1).astype(jnp.float32)

    # Conv weights pre-split per tap: (kh, kw, cin, cout) -> (kh*kw, cout, cin)
    def conv_taps(wc, kh, kw):
        cin, cout = wc.shape[2], wc.shape[3]
        return jnp.transpose(wc, (0, 1, 3, 2)).reshape(kh * kw, cout, cin) \
                  .astype(jnp.bfloat16)

    c1 = conv_taps(params['c1'], 3, 3)     # (9, mid, C)
    c2 = conv_taps(params['c2'], 3, 3)     # (9, mid, mid)
    c3 = conv_taps(params['c3'], 2, 2)     # (4, c_out, mid)

    weights = [w_pn1, w_pn2, w_pn3, w_wt1, w_wt2, bias, c1, c2, c3]

    in_specs = [
        pl.BlockSpec((1, 1, 3, S * TP), lambda b, p: (b, p, 0, 0)),
        pl.BlockSpec((1, S, C, TP), lambda b, p: (b, 0, 0, p)),
    ]
    for wgt in weights:   # constant index_map -> weights stay VMEM-resident
        nd = wgt.ndim
        in_specs.append(pl.BlockSpec(wgt.shape, lambda b, p, _n=nd: (0,) * _n))

    return pl.pallas_call(
        fgconv_kernel,
        out_shape=jax.ShapeDtypeStruct((B, c_out, P), out_dtype),
        grid_spec=pltpu.PrefetchScalarGridSpec(
            num_scalar_prefetch=0,
            grid=(B, ntiles),
            in_specs=in_specs,
            out_specs=pl.BlockSpec((1, c_out, TP), lambda b, p: (b, 0, p)),
        ),
        compiler_params=pltpu.CompilerParams(
            dimension_semantics=("parallel", "parallel"),
            vmem_limit_bytes=int(vmem_limit_bytes)),
    )(gxyz_r, gfeat_r, *weights)


# ----------------------------------------------------------------------------
# Plain-JAX glue: FPS, ball-query grouping (pointnet2 CUDA ops in PyTorch)
# ----------------------------------------------------------------------------
def furthest_point_sample(xyz, npoint):
    B, N, _ = xyz.shape

    def body(i, state):
        idx, dists, farthest = state
        idx = idx.at[:, i].set(farthest)
        centroid = jnp.take_along_axis(xyz, farthest[:, None, None], axis=1)
        d = jnp.sum((xyz - centroid) ** 2, axis=-1)
        dists = jnp.minimum(dists, d)
        farthest = jnp.argmax(dists, axis=-1).astype(jnp.int32)
        return idx, dists, farthest

    state = (jnp.zeros((B, npoint), jnp.int32),
             jnp.full((B, N), 1e10, jnp.float32),
             jnp.zeros((B,), jnp.int32))
    idx, _, _ = lax.fori_loop(0, npoint, body, state)
    return idx


def ball_query(radius, nsample, xyz, new_xyz):
    d2 = jnp.sum((new_xyz[:, :, None, :] - xyz[:, None, :, :]) ** 2, axis=-1)
    mask = d2 < radius ** 2
    csum = jnp.cumsum(mask.astype(jnp.int32), axis=-1)
    first_idx = jnp.argmax(mask, axis=-1)
    cols = []
    for k in range(nsample):
        sel = mask & (csum == (k + 1))
        has = jnp.any(sel, axis=-1)
        idx_k = jnp.argmax(sel, axis=-1)
        cols.append(jnp.where(has, idx_k, first_idx))
    return jnp.stack(cols, axis=-1).astype(jnp.int32)  # (B, P, S)


def query_and_group_local(radius, nsample, xyz, new_xyz, features):
    # TODO(synk): exact QueryAndGroupLocal internals unknown; using ball-query
    # grouping with center-relative (local) coordinates.
    idx = ball_query(radius, nsample, xyz, new_xyz)         # (B, P, S)
    B = xyz.shape[0]
    bidx = jnp.arange(B)[:, None, None]
    grouped_xyz = xyz[bidx, idx] - new_xyz[:, :, None, :]   # (B, P, S, 3)
    feats_t = jnp.transpose(features, (0, 2, 1))            # (B, N, C)
    grouped_feats = feats_t[bidx, idx]                      # (B, P, S, C)
    return grouped_xyz, grouped_feats


# ----------------------------------------------------------------------------
# Full module forward (use_xyz=False, bn folded to identity)
# ----------------------------------------------------------------------------
def fgconv6x6_forward(xyz, features, params, npoint, nsample, radius, c_out,
                      out_dtype=jnp.float32):
    B = xyz.shape[0]
    fps_idx = furthest_point_sample(xyz, npoint)
    new_xyz = xyz[jnp.arange(B)[:, None], fps_idx]          # (B, npoint, 3)
    gxyz, gfeat = query_and_group_local(radius, nsample, xyz, new_xyz, features)
    new_feats = fgconv_pallas(gxyz, gfeat, params, c_out, out_dtype=out_dtype)
    return new_xyz, new_feats                               # (B,np,3), (B,C,np)


# ----------------------------------------------------------------------------
# Deterministic parameter init (shapes from __init__; bias = -0.05)
# ----------------------------------------------------------------------------
def init_params(key, c_in, c_out):
    # TODO(synk): weights are random-init; loading trained PyTorch Conv3d
    # weights needs a (cout,cin,kD,kH,kW) -> (kH,kW,cin,cout) permute and BN
    # folding (BN here is identity: fresh eval-mode stats).
    mid = c_in
    ks = jax.random.split(key, 8)

    def nrm(k, shape, scale):
        return (scale * jax.random.normal(k, shape)).astype(jnp.float32)

    return dict(
        w_pn1=nrm(ks[0], (3, 8), 0.5),
        w_pn2=nrm(ks[1], (8, 16), 0.3),
        w_pn3=nrm(ks[2], (16, 16), 0.25),
        w_wt1=nrm(ks[3], (16, 32), 0.25),
        w_wt2=nrm(ks[4], (32, MAP_LEN), 0.2),
        bias=jnp.full((1, c_in), -0.05, jnp.float32),        # nn.init.constant_(-0.05)
        c1=nrm(ks[5], (3, 3, c_in, mid), 0.2),               # Conv3d (3,3,1)
        c2=nrm(ks[6], (3, 3, mid, mid), 0.2),                # Conv3d (3,3,1)
        c3=nrm(ks[7], (2, 2, mid, c_out), 0.3),              # Conv3d (2,2,1)
    )


if __name__ == "__main__":
    key = jax.random.PRNGKey(0)
    B, N, C_IN = 2, 64, 4
    NPOINT, NSAMPLE, RADIUS = 16, 8, 0.4
    C_OUT = 8

    k1, k2, k3 = jax.random.split(key, 3)
    xyz = jax.random.uniform(k1, (B, N, 3), jnp.float32)
    features = jax.random.normal(k2, (B, C_IN, N), jnp.float32)
    params = init_params(k3, C_IN, C_OUT)

    new_xyz, new_feats = fgconv6x6_forward(
        xyz, features, params, NPOINT, NSAMPLE, RADIUS, C_OUT)
    jax.block_until_ready((new_xyz, new_feats))

    assert new_xyz.shape == (B, NPOINT, 3)
    assert new_feats.shape == (B, C_OUT, NPOINT)
    assert jnp.all(jnp.isfinite(new_feats))
    print("KERNEL_OK")
</pallas_src>

<mosaic_0001>
module attributes {stable_mosaic.version = 11 : i64} {
  func.func @fgconv_kernel(%arg0: i32, %arg1: i32, %arg2: memref<1x1x3x128xbf16, #tpu.memory_space<vmem>>, %arg3: memref<1x8x4x16xbf16, #tpu.memory_space<vmem>>, %arg4: memref<8x3xbf16, #tpu.memory_space<vmem>>, %arg5: memref<16x8xbf16, #tpu.memory_space<vmem>>, %arg6: memref<16x16xbf16, #tpu.memory_space<vmem>>, %arg7: memref<32x16xbf16, #tpu.memory_space<vmem>>, %arg8: memref<36x32xbf16, #tpu.memory_space<vmem>>, %arg9: memref<4x1xf32, #tpu.memory_space<vmem>>, %arg10: memref<9x4x4xbf16, #tpu.memory_space<vmem>>, %arg11: memref<9x4x4xbf16, #tpu.memory_space<vmem>>, %arg12: memref<4x8x4xbf16, #tpu.memory_space<vmem>>, %arg13: memref<1x8x16xf32, #tpu.memory_space<vmem>>) attributes {dimension_semantics = [#tpu.dimension_semantics<parallel>, #tpu.dimension_semantics<parallel>], iteration_bounds = array<i64: 2, 1>, scalar_prefetch = 0 : i64, scratch_operands = 0 : i64, tpu.core_type = #tpu.core_type<tc>, window_params = [{transform_indices = @transform_0, window_bounds = array<i64: 1, 1, 3, 128>}, {transform_indices = @transform_1, window_bounds = array<i64: 1, 8, 4, 16>}, {pipeline_mode = #tpu.pipeline_mode<synchronous>, transform_indices = @transform_2, window_bounds = array<i64: 8, 3>}, {pipeline_mode = #tpu.pipeline_mode<synchronous>, transform_indices = @transform_3, window_bounds = array<i64: 16, 8>}, {pipeline_mode = #tpu.pipeline_mode<synchronous>, transform_indices = @transform_4, window_bounds = array<i64: 16, 16>}, {pipeline_mode = #tpu.pipeline_mode<synchronous>, transform_indices = @transform_5, window_bounds = array<i64: 32, 16>}, {pipeline_mode = #tpu.pipeline_mode<synchronous>, transform_indices = @transform_6, window_bounds = array<i64: 36, 32>}, {pipeline_mode = #tpu.pipeline_mode<synchronous>, transform_indices = @transform_7, window_bounds = array<i64: 4, 1>}, {pipeline_mode = #tpu.pipeline_mode<synchronous>, transform_indices = @transform_8, window_bounds = array<i64: 9, 4, 4>}, {pipeline_mode = #tpu.pipeline_mode<synchronous>, transform_indices = @transform_9, window_bounds = array<i64: 9, 4, 4>}, {pipeline_mode = #tpu.pipeline_mode<synchronous>, transform_indices = @transform_10, window_bounds = array<i64: 4, 8, 4>}, {transform_indices = @transform_11, window_bounds = array<i64: 1, 8, 16>}]} {
    %c0 = arith.constant 0 : index
    %c0_0 = arith.constant 0 : index
    %c0_1 = arith.constant 0 : index
    %c0_2 = arith.constant 0 : index
    %0 = vector.load %arg2[%c0, %c0_0, %c0_1, %c0_2] : memref<1x1x3x128xbf16, #tpu.memory_space<vmem>>, vector<1x1x3x128xbf16>
    %1 = vector.shape_cast %0 : vector<1x1x3x128xbf16> to vector<3x128xbf16>
    %c0_3 = arith.constant 0 : index
    %c0_4 = arith.constant 0 : index
    %2 = vector.load %arg4[%c0_3, %c0_4] : memref<8x3xbf16, #tpu.memory_space<vmem>>, vector<8x3xbf16>
    %cst = arith.constant dense<0.000000e+00> : vector<8x128xf32>
    %3 = tpu.matmul %2, %1, %cst {dimension_numbers = #tpu.dot_dimension_numbers<[1], [0], [0], [1], [0, 0, 1, 1], [], []>} : vector<8x3xbf16>, vector<3x128xbf16>, vector<8x128xf32> -> vector<8x128xf32>
    %cst_5 = arith.constant 2.000000e-01 : f32
    %4 = vector.broadcast %cst_5 : f32 to vector<8x128xf32>
    %5 = arith.mulf %4, %3 : vector<8x128xf32>
    %6 = arith.maximumf %3, %5 : vector<8x128xf32>
    %c0_6 = arith.constant 0 : index
    %c0_7 = arith.constant 0 : index
    %7 = vector.load %arg5[%c0_6, %c0_7] : memref<16x8xbf16, #tpu.memory_space<vmem>>, vector<16x8xbf16>
    %8 = arith.truncf %6 : vector<8x128xf32> to vector<8x128xbf16>
    %cst_8 = arith.constant dense<0.000000e+00> : vector<16x128xf32>
    %9 = tpu.matmul %7, %8, %cst_8 {dimension_numbers = #tpu.dot_dimension_numbers<[1], [0], [0], [1], [0, 0, 1, 1], [], []>} : vector<16x8xbf16>, vector<8x128xbf16>, vector<16x128xf32> -> vector<16x128xf32>
    %cst_9 = arith.constant 2.000000e-01 : f32
    %10 = vector.broadcast %cst_9 : f32 to vector<16x128xf32>
    %11 = arith.mulf %10, %9 : vector<16x128xf32>
    %12 = arith.maximumf %9, %11 : vector<16x128xf32>
    %c0_10 = arith.constant 0 : index
    %c0_11 = arith.constant 0 : index
    %13 = vector.load %arg6[%c0_10, %c0_11] : memref<16x16xbf16, #tpu.memory_space<vmem>>, vector<16x16xbf16>
    %14 = arith.truncf %12 : vector<16x128xf32> to vector<16x128xbf16>
    %cst_12 = arith.constant dense<0.000000e+00> : vector<16x128xf32>
    %15 = tpu.matmul %13, %14, %cst_12 {dimension_numbers = #tpu.dot_dimension_numbers<[1], [0], [0], [1], [0, 0, 1, 1], [], []>} : vector<16x16xbf16>, vector<16x128xbf16>, vector<16x128xf32> -> vector<16x128xf32>
    %cst_13 = arith.constant 2.000000e-01 : f32
    %16 = vector.broadcast %cst_13 : f32 to vector<16x128xf32>
    %17 = arith.mulf %16, %15 : vector<16x128xf32>
    %18 = arith.maximumf %15, %17 : vector<16x128xf32>
    %c0_14 = arith.constant 0 : index
    %c0_15 = arith.constant 0 : index
    %19 = vector.load %arg7[%c0_14, %c0_15] : memref<32x16xbf16, #tpu.memory_space<vmem>>, vector<32x16xbf16>
    %20 = arith.truncf %18 : vector<16x128xf32> to vector<16x128xbf16>
    %cst_16 = arith.constant dense<0.000000e+00> : vector<32x128xf32>
    %21 = tpu.matmul %19, %20, %cst_16 {dimension_numbers = #tpu.dot_dimension_numbers<[1], [0], [0], [1], [0, 0, 1, 1], [], []>} : vector<32x16xbf16>, vector<16x128xbf16>, vector<32x128xf32> -> vector<32x128xf32>
    %cst_17 = arith.constant 2.000000e-01 : f32
    %22 = vector.broadcast %cst_17 : f32 to vector<32x128xf32>
    %23 = arith.mulf %22, %21 : vector<32x128xf32>
    %24 = arith.maximumf %21, %23 : vector<32x128xf32>
    %c0_18 = arith.constant 0 : index
    %c0_19 = arith.constant 0 : index
    %25 = vector.load %arg8[%c0_18, %c0_19] : memref<36x32xbf16, #tpu.memory_space<vmem>>, vector<36x32xbf16>
    %26 = arith.truncf %24 : vector<32x128xf32> to vector<32x128xbf16>
    %cst_20 = arith.constant dense<0.000000e+00> : vector<36x128xf32>
    %27 = tpu.matmul %25, %26, %cst_20 {dimension_numbers = #tpu.dot_dimension_numbers<[1], [0], [0], [1], [0, 0, 1, 1], [], []>} : vector<36x32xbf16>, vector<32x128xbf16>, vector<36x128xf32> -> vector<36x128xf32>
    %28 = arith.mulf %27, %27 : vector<36x128xf32>
    %cst_21 = arith.constant dense<0.000000e+00> : vector<128xf32>
    %29 = vector.multi_reduction <add>, %28, %cst_21 [0] : vector<36x128xf32> to vector<128xf32>
    %30 = vector.shape_cast %29 : vector<128xf32> to vector<1x128xf32>
    %cst_22 = arith.constant 9.99999993E-9 : f32
    %31 = vector.broadcast %cst_22 : f32 to vector<1x128xf32>
    %32 = arith.maximumf %30, %31 : vector<1x128xf32>
    %33 = math.rsqrt %32 : vector<1x128xf32>
    %34 = vector.broadcast %33 : vector<1x128xf32> to vector<36x128xf32>
    %35 = arith.mulf %27, %34 : vector<36x128xf32>
    %36 = vector.extract_strided_slice %28 {offsets = [0, 0], sizes = [36, 16], strides = [1, 1]} : vector<36x128xf32> to vector<36x16xf32>
    %37 = vector.extract_strided_slice %28 {offsets = [0, 16], sizes = [36, 16], strides = [1, 1]} : vector<36x128xf32> to vector<36x16xf32>
    %38 = arith.addf %36, %37 : vector<36x16xf32>
    %39 = vector.extract_strided_slice %28 {offsets = [0, 32], sizes = [36, 16], strides = [1, 1]} : vector<36x128xf32> to vector<36x16xf32>
    %40 = arith.addf %38, %39 : vector<36x16xf32>
    %41 = vector.extract_strided_slice %28 {offsets = [0, 48], sizes = [36, 16], strides = [1, 1]} : vector<36x128xf32> to vector<36x16xf32>
    %42 = arith.addf %40, %41 : vector<36x16xf32>
    %43 = vector.extract_strided_slice %28 {offsets = [0, 64], sizes = [36, 16], strides = [1, 1]} : vector<36x128xf32> to vector<36x16xf32>
    %44 = arith.addf %42, %43 : vector<36x16xf32>
    %45 = vector.extract_strided_slice %28 {offsets = [0, 80], sizes = [36, 16], strides = [1, 1]} : vector<36x128xf32> to vector<36x16xf32>
    %46 = arith.addf %44, %45 : vector<36x16xf32>
    %47 = vector.extract_strided_slice %28 {offsets = [0, 96], sizes = [36, 16], strides = [1, 1]} : vector<36x128xf32> to vector<36x16xf32>
    %48 = arith.addf %46, %47 : vector<36x16xf32>
    %49 = vector.extract_strided_slice %28 {offsets = [0, 112], sizes = [36, 16], strides = [1, 1]} : vector<36x128xf32> to vector<36x16xf32>
    %50 = arith.addf %48, %49 : vector<36x16xf32>
    %cst_23 = arith.constant 9.99999993E-9 : f32
    %51 = vector.broadcast %cst_23 : f32 to vector<36x16xf32>
    %52 = arith.maximumf %50, %51 : vector<36x16xf32>
    %53 = math.rsqrt %52 : vector<36x16xf32>
    %cst_24 = arith.constant 1.000000e+00 : f32
    %54 = vector.broadcast %cst_24 : f32 to vector<36x16xf32>
    %55 = arith.minimumf %53, %54 : vector<36x16xf32>
    %c0_25 = arith.constant 0 : index
    %c0_26 = arith.constant 0 : index
    %c0_27 = arith.constant 0 : index
    %c0_28 = arith.constant 0 : index
    %56 = vector.load %arg3[%c0_25, %c0_26, %c0_27, %c0_28] : memref<1x8x4x16xbf16, #tpu.memory_space<vmem>>, vector<1x8x4x16xbf16>
    %57 = vector.shape_cast %56 : vector<1x8x4x16xbf16> to vector<8x4x16xbf16>
    %58 = vector.extract_strided_slice %35 {offsets = [0, 0], sizes = [36, 16], strides = [1, 1]} : vector<36x128xf32> to vector<36x16xf32>
    %59 = arith.mulf %58, %55 : vector<36x16xf32>
    %60 = vector.shape_cast %59 : vector<36x16xf32> to vector<36x1x16xf32>
    %61 = vector.extract_strided_slice %57 {offsets = [0, 0, 0], sizes = [1, 4, 16], strides = [1, 1, 1]} : vector<8x4x16xbf16> to vector<1x4x16xbf16>
    %62 = vector.shape_cast %61 : vector<1x4x16xbf16> to vector<4x16xbf16>
    %63 = vector.shape_cast %62 : vector<4x16xbf16> to vector<1x4x16xbf16>
    %64 = arith.extf %63 : vector<1x4x16xbf16> to vector<1x4x16xf32>
    %65 = vector.broadcast %60 : vector<36x1x16xf32> to vector<36x4x16xf32>
    %66 = vector.broadcast %64 : vector<1x4x16xf32> to vector<36x4x16xf32>
    %67 = arith.mulf %65, %66 : vector<36x4x16xf32>
    %68 = vector.extract_strided_slice %35 {offsets = [0, 16], sizes = [36, 16], strides = [1, 1]} : vector<36x128xf32> to vector<36x16xf32>
    %69 = arith.mulf %68, %55 : vector<36x16xf32>
    %70 = vector.shape_cast %69 : vector<36x16xf32> to vector<36x1x16xf32>
    %71 = vector.extract_strided_slice %57 {offsets = [1, 0, 0], sizes = [1, 4, 16], strides = [1, 1, 1]} : vector<8x4x16xbf16> to vector<1x4x16xbf16>
    %72 = vector.shape_cast %71 : vector<1x4x16xbf16> to vector<4x16xbf16>
    %73 = vector.shape_cast %72 : vector<4x16xbf16> to vector<1x4x16xbf16>
    %74 = arith.extf %73 : vector<1x4x16xbf16> to vector<1x4x16xf32>
    %75 = vector.broadcast %70 : vector<36x1x16xf32> to vector<36x4x16xf32>
    %76 = vector.broadcast %74 : vector<1x4x16xf32> to vector<36x4x16xf32>
    %77 = arith.mulf %75, %76 : vector<36x4x16xf32>
    %78 = arith.addf %67, %77 : vector<36x4x16xf32>
    %79 = vector.extract_strided_slice %35 {offsets = [0, 32], sizes = [36, 16], strides = [1, 1]} : vector<36x128xf32> to vector<36x16xf32>
    %80 = arith.mulf %79, %55 : vector<36x16xf32>
    %81 = vector.shape_cast %80 : vector<36x16xf32> to vector<36x1x16xf32>
    %82 = vector.extract_strided_slice %57 {offsets = [2, 0, 0], sizes = [1, 4, 16], strides = [1, 1, 1]} : vector<8x4x16xbf16> to vector<1x4x16xbf16>
    %83 = vector.shape_cast %82 : vector<1x4x16xbf16> to vector<4x16xbf16>
    %84 = vector.shape_cast %83 : vector<4x16xbf16> to vector<1x4x16xbf16>
    %85 = arith.extf %84 : vector<1x4x16xbf16> to vector<1x4x16xf32>
    %86 = vector.broadcast %81 : vector<36x1x16xf32> to vector<36x4x16xf32>
    %87 = vector.broadcast %85 : vector<1x4x16xf32> to vector<36x4x16xf32>
    %88 = arith.mulf %86, %87 : vector<36x4x16xf32>
    %89 = arith.addf %78, %88 : vector<36x4x16xf32>
    %90 = vector.extract_strided_slice %35 {offsets = [0, 48], sizes = [36, 16], strides = [1, 1]} : vector<36x128xf32> to vector<36x16xf32>
    %91 = arith.mulf %90, %55 : vector<36x16xf32>
    %92 = vector.shape_cast %91 : vector<36x16xf32> to vector<36x1x16xf32>
    %93 = vector.extract_strided_slice %57 {offsets = [3, 0, 0], sizes = [1, 4, 16], strides = [1, 1, 1]} : vector<8x4x16xbf16> to vector<1x4x16xbf16>
    %94 = vector.shape_cast %93 : vector<1x4x16xbf16> to vector<4x16xbf16>
    %95 = vector.shape_cast %94 : vector<4x16xbf16> to vector<1x4x16xbf16>
    %96 = arith.extf %95 : vector<1x4x16xbf16> to vector<1x4x16xf32>
    %97 = vector.broadcast %92 : vector<36x1x16xf32> to vector<36x4x16xf32>
    %98 = vector.broadcast %96 : vector<1x4x16xf32> to vector<36x4x16xf32>
    %99 = arith.mulf %97, %98 : vector<36x4x16xf32>
    %100 = arith.addf %89, %99 : vector<36x4x16xf32>
    %101 = vector.extract_strided_slice %35 {offsets = [0, 64], sizes = [36, 16], strides = [1, 1]} : vector<36x128xf32> to vector<36x16xf32>
    %102 = arith.mulf %101, %55 : vector<36x16xf32>
    %103 = vector.shape_cast %102 : vector<36x16xf32> to vector<36x1x16xf32>
    %104 = vector.extract_strided_slice %57 {offsets = [4, 0, 0], sizes = [1, 4, 16], strides = [1, 1, 1]} : vector<8x4x16xbf16> to vector<1x4x16xbf16>
    %105 = vector.shape_cast %104 : vector<1x4x16xbf16> to vector<4x16xbf16>
    %106 = vector.shape_cast %105 : vector<4x16xbf16> to vector<1x4x16xbf16>
    %107 = arith.extf %106 : vector<1x4x16xbf16> to vector<1x4x16xf32>
    %108 = vector.broadcast %103 : vector<36x1x16xf32> to vector<36x4x16xf32>
    %109 = vector.broadcast %107 : vector<1x4x16xf32> to vector<36x4x16xf32>
    %110 = arith.mulf %108, %109 : vector<36x4x16xf32>
    %111 = arith.addf %100, %110 : vector<36x4x16xf32>
    %112 = vector.extract_strided_slice %35 {offsets = [0, 80], sizes = [36, 16], strides = [1, 1]} : vector<36x128xf32> to vector<36x16xf32>
    %113 = arith.mulf %112, %55 : vector<36x16xf32>
    %114 = vector.shape_cast %113 : vector<36x16xf32> to vector<36x1x16xf32>
    %115 = vector.extract_strided_slice %57 {offsets = [5, 0, 0], sizes = [1, 4, 16], strides = [1, 1, 1]} : vector<8x4x16xbf16> to vector<1x4x16xbf16>
    %116 = vector.shape_cast %115 : vector<1x4x16xbf16> to vector<4x16xbf16>
    %117 = vector.shape_cast %116 : vector<4x16xbf16> to vector<1x4x16xbf16>
    %118 = arith.extf %117 : vector<1x4x16xbf16> to vector<1x4x16xf32>
    %119 = vector.broadcast %114 : vector<36x1x16xf32> to vector<36x4x16xf32>
    %120 = vector.broadcast %118 : vector<1x4x16xf32> to vector<36x4x16xf32>
    %121 = arith.mulf %119, %120 : vector<36x4x16xf32>
    %122 = arith.addf %111, %121 : vector<36x4x16xf32>
    %123 = vector.extract_strided_slice %35 {offsets = [0, 96], sizes = [36, 16], strides = [1, 1]} : vector<36x128xf32> to vector<36x16xf32>
    %124 = arith.mulf %123, %55 : vector<36x16xf32>
    %125 = vector.shape_cast %124 : vector<36x16xf32> to vector<36x1x16xf32>
    %126 = vector.extract_strided_slice %57 {offsets = [6, 0, 0], sizes = [1, 4, 16], strides = [1, 1, 1]} : vector<8x4x16xbf16> to vector<1x4x16xbf16>
    %127 = vector.shape_cast %126 : vector<1x4x16xbf16> to vector<4x16xbf16>
    %128 = vector.shape_cast %127 : vector<4x16xbf16> to vector<1x4x16xbf16>
    %129 = arith.extf %128 : vector<1x4x16xbf16> to vector<1x4x16xf32>
    %130 = vector.broadcast %125 : vector<36x1x16xf32> to vector<36x4x16xf32>
    %131 = vector.broadcast %129 : vector<1x4x16xf32> to vector<36x4x16xf32>
    %132 = arith.mulf %130, %131 : vector<36x4x16xf32>
    %133 = arith.addf %122, %132 : vector<36x4x16xf32>
    %134 = vector.extract_strided_slice %35 {offsets = [0, 112], sizes = [36, 16], strides = [1, 1]} : vector<36x128xf32> to vector<36x16xf32>
    %135 = arith.mulf %134, %55 : vector<36x16xf32>
    %136 = vector.shape_cast %135 : vector<36x16xf32> to vector<36x1x16xf32>
    %137 = vector.extract_strided_slice %57 {offsets = [7, 0, 0], sizes = [1, 4, 16], strides = [1, 1, 1]} : vector<8x4x16xbf16> to vector<1x4x16xbf16>
    %138 = vector.shape_cast %137 : vector<1x4x16xbf16> to vector<4x16xbf16>
    %139 = vector.shape_cast %138 : vector<4x16xbf16> to vector<1x4x16xbf16>
    %140 = arith.extf %139 : vector<1x4x16xbf16> to vector<1x4x16xf32>
    %141 = vector.broadcast %136 : vector<36x1x16xf32> to vector<36x4x16xf32>
    %142 = vector.broadcast %140 : vector<1x4x16xf32> to vector<36x4x16xf32>
    %143 = arith.mulf %141, %142 : vector<36x4x16xf32>
    %144 = arith.addf %133, %143 : vector<36x4x16xf32>
    %c0_29 = arith.constant 0 : index
    %c0_30 = arith.constant 0 : index
    %145 = vector.load %arg9[%c0_29, %c0_30] : memref<4x1xf32, #tpu.memory_space<vmem>>, vector<4x1xf32>
    %146 = vector.shape_cast %145 : vector<4x1xf32> to vector<1x4x1xf32>
    %147 = vector.broadcast %146 : vector<1x4x1xf32> to vector<36x4x16xf32>
    %148 = arith.addf %144, %147 : vector<36x4x16xf32>
    %cst_31 = arith.constant 2.000000e-01 : f32
    %149 = vector.broadcast %cst_31 : f32 to vector<36x4x16xf32>
    %150 = arith.mulf %149, %148 : vector<36x4x16xf32>
    %151 = arith.maximumf %148, %150 : vector<36x4x16xf32>
    %152 = arith.truncf %151 : vector<36x4x16xf32> to vector<36x4x16xbf16>
    %153 = vector.extract_strided_slice %152 {offsets = [0, 0, 0], sizes = [1, 4, 16], strides = [1, 1, 1]} : vector<36x4x16xbf16> to vector<1x4x16xbf16>
    %154 = vector.shape_cast %153 : vector<1x4x16xbf16> to vector<4x16xbf16>
    %155 = vector.extract_strided_slice %152 {offsets = [1, 0, 0], sizes = [1, 4, 16], strides = [1, 1, 1]} : vector<36x4x16xbf16> to vector<1x4x16xbf16>
    %156 = vector.shape_cast %155 : vector<1x4x16xbf16> to vector<4x16xbf16>
    %157 = vector.extract_strided_slice %152 {offsets = [2, 0, 0], sizes = [1, 4, 16], strides = [1, 1, 1]} : vector<36x4x16xbf16> to vector<1x4x16xbf16>
    %158 = vector.shape_cast %157 : vector<1x4x16xbf16> to vector<4x16xbf16>
    %159 = vector.extract_strided_slice %152 {offsets = [3, 0, 0], sizes = [1, 4, 16], strides = [1, 1, 1]} : vector<36x4x16xbf16> to vector<1x4x16xbf16>
    %160 = vector.shape_cast %159 : vector<1x4x16xbf16> to vector<4x16xbf16>
    %161 = vector.extract_strided_slice %152 {offsets = [4, 0, 0], sizes = [1, 4, 16], strides = [1, 1, 1]} : vector<36x4x16xbf16> to vector<1x4x16xbf16>
    %162 = vector.shape_cast %161 : vector<1x4x16xbf16> to vector<4x16xbf16>
    %163 = vector.extract_strided_slice %152 {offsets = [5, 0, 0], sizes = [1, 4, 16], strides = [1, 1, 1]} : vector<36x4x16xbf16> to vector<1x4x16xbf16>
    %164 = vector.shape_cast %163 : vector<1x4x16xbf16> to vector<4x16xbf16>
    %165 = vector.extract_strided_slice %152 {offsets = [6, 0, 0], sizes = [1, 4, 16], strides = [1, 1, 1]} : vector<36x4x16xbf16> to vector<1x4x16xbf16>
    %166 = vector.shape_cast %165 : vector<1x4x16xbf16> to vector<4x16xbf16>
    %167 = vector.extract_strided_slice %152 {offsets = [7, 0, 0], sizes = [1, 4, 16], strides = [1, 1, 1]} : vector<36x4x16xbf16> to vector<1x4x16xbf16>
    %168 = vector.shape_cast %167 : vector<1x4x16xbf16> to vector<4x16xbf16>
    %169 = vector.extract_strided_slice %152 {offsets = [8, 0, 0], sizes = [1, 4, 16], strides = [1, 1, 1]} : vector<36x4x16xbf16> to vector<1x4x16xbf16>
    %170 = vector.shape_cast %169 : vector<1x4x16xbf16> to vector<4x16xbf16>
    %171 = vector.extract_strided_slice %152 {offsets = [9, 0, 0], sizes = [1, 4, 16], strides = [1, 1, 1]} : vector<36x4x16xbf16> to vector<1x4x16xbf16>
    %172 = vector.shape_cast %171 : vector<1x4x16xbf16> to vector<4x16xbf16>
    %173 = vector.extract_strided_slice %152 {offsets = [10, 0, 0], sizes = [1, 4, 16], strides = [1, 1, 1]} : vector<36x4x16xbf16> to vector<1x4x16xbf16>
    %174 = vector.shape_cast %173 : vector<1x4x16xbf16> to vector<4x16xbf16>
    %175 = vector.extract_strided_slice %152 {offsets = [11, 0, 0], sizes = [1, 4, 16], strides = [1, 1, 1]} : vector<36x4x16xbf16> to vector<1x4x16xbf16>
    %176 = vector.shape_cast %175 : vector<1x4x16xbf16> to vector<4x16xbf16>
    %177 = vector.extract_strided_slice %152 {offsets = [12, 0, 0], sizes = [1, 4, 16], strides = [1, 1, 1]} : vector<36x4x16xbf16> to vector<1x4x16xbf16>
    %178 = vector.shape_cast %177 : vector<1x4x16xbf16> to vector<4x16xbf16>
    %179 = vector.extract_strided_slice %152 {offsets = [13, 0, 0], sizes = [1, 4, 16], strides = [1, 1, 1]} : vector<36x4x16xbf16> to vector<1x4x16xbf16>
    %180 = vector.shape_cast %179 : vector<1x4x16xbf16> to vector<4x16xbf16>
    %181 = vector.extract_strided_slice %152 {offsets = [14, 0, 0], sizes = [1, 4, 16], strides = [1, 1, 1]} : vector<36x4x16xbf16> to vector<1x4x16xbf16>
    %182 = vector.shape_cast %181 : vector<1x4x16xbf16> to vector<4x16xbf16>
    %183 = vector.extract_strided_slice %152 {offsets = [15, 0, 0], sizes = [1, 4, 16], strides = [1, 1, 1]} : vector<36x4x16xbf16> to vector<1x4x16xbf16>
    %184 = vector.shape_cast %183 : vector<1x4x16xbf16> to vector<4x16xbf16>
    %185 = vector.extract_strided_slice %152 {offsets = [16, 0, 0], sizes = [1, 4, 16], strides = [1, 1, 1]} : vector<36x4x16xbf16> to vector<1x4x16xbf16>
    %186 = vector.shape_cast %185 : vector<1x4x16xbf16> to vector<4x16xbf16>
    %187 = vector.extract_strided_slice %152 {offsets = [17, 0, 0], sizes = [1, 4, 16], strides = [1, 1, 1]} : vector<36x4x16xbf16> to vector<1x4x16xbf16>
    %188 = vector.shape_cast %187 : vector<1x4x16xbf16> to vector<4x16xbf16>
    %189 = vector.extract_strided_slice %152 {offsets = [18, 0, 0], sizes = [1, 4, 16], strides = [1, 1, 1]} : vector<36x4x16xbf16> to vector<1x4x16xbf16>
    %190 = vector.shape_cast %189 : vector<1x4x16xbf16> to vector<4x16xbf16>
    %191 = vector.extract_strided_slice %152 {offsets = [19, 0, 0], sizes = [1, 4, 16], strides = [1, 1, 1]} : vector<36x4x16xbf16> to vector<1x4x16xbf16>
    %192 = vector.shape_cast %191 : vector<1x4x16xbf16> to vector<4x16xbf16>
    %193 = vector.extract_strided_slice %152 {offsets = [20, 0, 0], sizes = [1, 4, 16], strides = [1, 1, 1]} : vector<36x4x16xbf16> to vector<1x4x16xbf16>
    %194 = vector.shape_cast %193 : vector<1x4x16xbf16> to vector<4x16xbf16>
    %195 = vector.extract_strided_slice %152 {offsets = [21, 0, 0], sizes = [1, 4, 16], strides = [1, 1, 1]} : vector<36x4x16xbf16> to vector<1x4x16xbf16>
    %196 = vector.shape_cast %195 : vector<1x4x16xbf16> to vector<4x16xbf16>
    %197 = vector.extract_strided_slice %152 {offsets = [22, 0, 0], sizes = [1, 4, 16], strides = [1, 1, 1]} : vector<36x4x16xbf16> to vector<1x4x16xbf16>
    %198 = vector.shape_cast %197 : vector<1x4x16xbf16> to vector<4x16xbf16>
    %199 = vector.extract_strided_slice %152 {offsets = [23, 0, 0], sizes = [1, 4, 16], strides = [1, 1, 1]} : vector<36x4x16xbf16> to vector<1x4x16xbf16>
    %200 = vector.shape_cast %199 : vector<1x4x16xbf16> to vector<4x16xbf16>
    %201 = vector.extract_strided_slice %152 {offsets = [24, 0, 0], sizes = [1, 4, 16], strides = [1, 1, 1]} : vector<36x4x16xbf16> to vector<1x4x16xbf16>
    %202 = vector.shape_cast %201 : vector<1x4x16xbf16> to vector<4x16xbf16>
    %203 = vector.extract_strided_slice %152 {offsets = [25, 0, 0], sizes = [1, 4, 16], strides = [1, 1, 1]} : vector<36x4x16xbf16> to vector<1x4x16xbf16>
    %204 = vector.shape_cast %203 : vector<1x4x16xbf16> to vector<4x16xbf16>
    %205 = vector.extract_strided_slice %152 {offsets = [26, 0, 0], sizes = [1, 4, 16], strides = [1, 1, 1]} : vector<36x4x16xbf16> to vector<1x4x16xbf16>
    %206 = vector.shape_cast %205 : vector<1x4x16xbf16> to vector<4x16xbf16>
    %207 = vector.extract_strided_slice %152 {offsets = [27, 0, 0], sizes = [1, 4, 16], strides = [1, 1, 1]} : vector<36x4x16xbf16> to vector<1x4x16xbf16>
    %208 = vector.shape_cast %207 : vector<1x4x16xbf16> to vector<4x16xbf16>
    %209 = vector.extract_strided_slice %152 {offsets = [28, 0, 0], sizes = [1, 4, 16], strides = [1, 1, 1]} : vector<36x4x16xbf16> to vector<1x4x16xbf16>
    %210 = vector.shape_cast %209 : vector<1x4x16xbf16> to vector<4x16xbf16>
    %211 = vector.extract_strided_slice %152 {offsets = [29, 0, 0], sizes = [1, 4, 16], strides = [1, 1, 1]} : vector<36x4x16xbf16> to vector<1x4x16xbf16>
    %212 = vector.shape_cast %211 : vector<1x4x16xbf16> to vector<4x16xbf16>
    %213 = vector.extract_strided_slice %152 {offsets = [30, 0, 0], sizes = [1, 4, 16], strides = [1, 1, 1]} : vector<36x4x16xbf16> to vector<1x4x16xbf16>
    %214 = vector.shape_cast %213 : vector<1x4x16xbf16> to vector<4x16xbf16>
    %215 = vector.extract_strided_slice %152 {offsets = [31, 0, 0], sizes = [1, 4, 16], strides = [1, 1, 1]} : vector<36x4x16xbf16> to vector<1x4x16xbf16>
    %216 = vector.shape_cast %215 : vector<1x4x16xbf16> to vector<4x16xbf16>
    %217 = vector.extract_strided_slice %152 {offsets = [32, 0, 0], sizes = [1, 4, 16], strides = [1, 1, 1]} : vector<36x4x16xbf16> to vector<1x4x16xbf16>
    %218 = vector.shape_cast %217 : vector<1x4x16xbf16> to vector<4x16xbf16>
    %219 = vector.extract_strided_slice %152 {offsets = [33, 0, 0], sizes = [1, 4, 16], strides = [1, 1, 1]} : vector<36x4x16xbf16> to vector<1x4x16xbf16>
    %220 = vector.shape_cast %219 : vector<1x4x16xbf16> to vector<4x16xbf16>
    %221 = vector.extract_strided_slice %152 {offsets = [34, 0, 0], sizes = [1, 4, 16], strides = [1, 1, 1]} : vector<36x4x16xbf16> to vector<1x4x16xbf16>
    %222 = vector.shape_cast %221 : vector<1x4x16xbf16> to vector<4x16xbf16>
    %223 = vector.extract_strided_slice %152 {offsets = [35, 0, 0], sizes = [1, 4, 16], strides = [1, 1, 1]} : vector<36x4x16xbf16> to vector<1x4x16xbf16>
    %224 = vector.shape_cast %223 : vector<1x4x16xbf16> to vector<4x16xbf16>
    %c0_32 = arith.constant 0 : index
    %c0_33 = arith.constant 0 : index
    %c0_34 = arith.constant 0 : index
    %225 = vector.load %arg10[%c0_32, %c0_33, %c0_34] : memref<9x4x4xbf16, #tpu.memory_space<vmem>>, vector<1x4x4xbf16>
    %226 = vector.shape_cast %225 : vector<1x4x4xbf16> to vector<4x4xbf16>
    %cst_35 = arith.constant dense<0.000000e+00> : vector<4x16xf32>
    %227 = tpu.matmul %226, %154, %cst_35 {dimension_numbers = #tpu.dot_dimension_numbers<[1], [0], [0], [1], [0, 0, 1, 1], [], []>} : vector<4x4xbf16>, vector<4x16xbf16>, vector<4x16xf32> -> vector<4x16xf32>
    %cst_36 = arith.constant dense<0.000000e+00> : vector<4x16xf32>
    %228 = tpu.matmul %226, %156, %cst_36 {dimension_numbers = #tpu.dot_dimension_numbers<[1], [0], [0], [1], [0, 0, 1, 1], [], []>} : vector<4x4xbf16>, vector<4x16xbf16>, vector<4x16xf32> -> vector<4x16xf32>
    %cst_37 = arith.constant dense<0.000000e+00> : vector<4x16xf32>
    %229 = tpu.matmul %226, %158, %cst_37 {dimension_numbers = #tpu.dot_dimension_numbers<[1], [0], [0], [1], [0, 0, 1, 1], [], []>} : vector<4x4xbf16>, vector<4x16xbf16>, vector<4x16xf32> -> vector<4x16xf32>
    %cst_38 = arith.constant dense<0.000000e+00> : vector<4x16xf32>
    %230 = tpu.matmul %226, %160, %cst_38 {dimension_numbers = #tpu.dot_dimension_numbers<[1], [0], [0], [1], [0, 0, 1, 1], [], []>} : vector<4x4xbf16>, vector<4x16xbf16>, vector<4x16xf32> -> vector<4x16xf32>
    %cst_39 = arith.constant dense<0.000000e+00> : vector<4x16xf32>
    %231 = tpu.matmul %226, %166, %cst_39 {dimension_numbers = #tpu.dot_dimension_numbers<[1], [0], [0], [1], [0, 0, 1, 1], [], []>} : vector<4x4xbf16>, vector<4x16xbf16>, vector<4x16xf32> -> vector<4x16xf32>
    %cst_40 = arith.constant dense<0.000000e+00> : vector<4x16xf32>
    %232 = tpu.matmul %226, %168, %cst_40 {dimension_numbers = #tpu.dot_dimension_numbers<[1], [0], [0], [1], [0, 0, 1, 1], [], []>} : vector<4x4xbf16>, vector<4x16xbf16>, vector<4x16xf32> -> vector<4x16xf32>
    %cst_41 = arith.constant dense<0.000000e+00> : vector<4x16xf32>
    %233 = tpu.matmul %226, %170, %cst_41 {dimension_numbers = #tpu.dot_dimension_numbers<[1], [0], [0], [1], [0, 0, 1, 1], [], []>} : vector<4x4xbf16>, vector<4x16xbf16>, vector<4x16xf32> -> vector<4x16xf32>
    %cst_42 = arith.constant dense<0.000000e+00> : vector<4x16xf32>
    %234 = tpu.matmul %226, %172, %cst_42 {dimension_numbers = #tpu.dot_dimension_numbers<[1], [0], [0], [1], [0, 0, 1, 1], [], []>} : vector<4x4xbf16>, vector<4x16xbf16>, vector<4x16xf32> -> vector<4x16xf32>
    %cst_43 = arith.constant dense<0.000000e+00> : vector<4x16xf32>
    %235 = tpu.matmul %226, %178, %cst_43 {dimension_numbers = #tpu.dot_dimension_numbers<[1], [0], [0], [1], [0, 0, 1, 1], [], []>} : vector<4x4xbf16>, vector<4x16xbf16>, vector<4x16xf32> -> vector<4x16xf32>
    %cst_44 = arith.constant dense<0.000000e+00> : vector<4x16xf32>
    %236 = tpu.matmul %226, %180, %cst_44 {dimension_numbers = #tpu.dot_dimension_numbers<[1], [0], [0], [1], [0, 0, 1, 1], [], []>} : vector<4x4xbf16>, vector<4x16xbf16>, vector<4x16xf32> -> vector<4x16xf32>
    %cst_45 = arith.constant dense<0.000000e+00> : vector<4x16xf32>
    %237 = tpu.matmul %226, %182, %cst_45 {dimension_numbers = #tpu.dot_dimension_numbers<[1], [0], [0], [1], [0, 0, 1, 1], [], []>} : vector<4x4xbf16>, vector<4x16xbf16>, vector<4x16xf32> -> vector<4x16xf32>
    %cst_46 = arith.constant dense<0.000000e+00> : vector<4x16xf32>
    %238 = tpu.matmul %226, %184, %cst_46 {dimension_numbers = #tpu.dot_dimension_numbers<[1], [0], [0], [1], [0, 0, 1, 1], [], []>} : vector<4x4xbf16>, vector<4x16xbf16>, vector<4x16xf32> -> vector<4x16xf32>
    %cst_47 = arith.constant dense<0.000000e+00> : vector<4x16xf32>
    %239 = tpu.matmul %226, %190, %cst_47 {dimension_numbers = #tpu.dot_dimension_numbers<[1], [0], [0], [1], [0, 0, 1, 1], [], []>} : vector<4x4xbf16>, vector<4x16xbf16>, vector<4x16xf32> -> vector<4x16xf32>
    %cst_48 = arith.constant dense<0.000000e+00> : vector<4x16xf32>
    %240 = tpu.matmul %226, %192, %cst_48 {dimension_numbers = #tpu.dot_dimension_numbers<[1], [0], [0], [1], [0, 0, 1, 1], [], []>} : vector<4x4xbf16>, vector<4x16xbf16>, vector<4x16xf32> -> vector<4x16xf32>
    %cst_49 = arith.constant dense<0.000000e+00> : vector<4x16xf32>
    %241 = tpu.matmul %226, %194, %cst_49 {dimension_numbers = #tpu.dot_dimension_numbers<[1], [0], [0], [1], [0, 0, 1, 1], [], []>} : vector<4x4xbf16>, vector<4x16xbf16>, vector<4x16xf32> -> vector<4x16xf32>
    %cst_50 = arith.constant dense<0.000000e+00> : vector<4x16xf32>
    %242 = tpu.matmul %226, %196, %cst_50 {dimension_numbers = #tpu.dot_dimension_numbers<[1], [0], [0], [1], [0, 0, 1, 1], [], []>} : vector<4x4xbf16>, vector<4x16xbf16>, vector<4x16xf32> -> vector<4x16xf32>
    %c1 = arith.constant 1 : index
    %c0_51 = arith.constant 0 : index
    %c0_52 = arith.constant 0 : index
    %243 = vector.load %arg10[%c1, %c0_51, %c0_52] : memref<9x4x4xbf16, #tpu.memory_space<vmem>>, vector<1x4x4xbf16>
    %244 = vector.shape_cast %243 : vector<1x4x4xbf16> to vector<4x4xbf16>
    %cst_53 = arith.constant dense<0.000000e+00> : vector<4x16xf32>
    %245 = tpu.matmul %244, %156, %cst_53 {dimension_numbers = #tpu.dot_dimension_numbers<[1], [0], [0], [1], [0, 0, 1, 1], [], []>} : vector<4x4xbf16>, vector<4x16xbf16>, vector<4x16xf32> -> vector<4x16xf32>
    %246 = arith.addf %227, %245 : vector<4x16xf32>
    %cst_54 = arith.constant dense<0.000000e+00> : vector<4x16xf32>
    %247 = tpu.matmul %244, %158, %cst_54 {dimension_numbers = #tpu.dot_dimension_numbers<[1], [0], [0], [1], [0, 0, 1, 1], [], []>} : vector<4x4xbf16>, vector<4x16xbf16>, vector<4x16xf32> -> vector<4x16xf32>
    %248 = arith.addf %228, %247 : vector<4x16xf32>
    %cst_55 = arith.constant dense<0.000000e+00> : vector<4x16xf32>
    %249 = tpu.matmul %244, %160, %cst_55 {dimension_numbers = #tpu.dot_dimension_numbers<[1], [0], [0], [1], [0, 0, 1, 1], [], []>} : vector<4x4xbf16>, vector<4x16xbf16>, vector<4x16xf32> -> vector<4x16xf32>
    %250 = arith.addf %229, %249 : vector<4x16xf32>
    %cst_56 = arith.constant dense<0.000000e+00> : vector<4x16xf32>
    %251 = tpu.matmul %244, %162, %cst_56 {dimension_numbers = #tpu.dot_dimension_numbers<[1], [0], [0], [1], [0, 0, 1, 1], [], []>} : vector<4x4xbf16>, vector<4x16xbf16>, vector<4x16xf32> -> vector<4x16xf32>
    %252 = arith.addf %230, %251 : vector<4x16xf32>
    %cst_57 = arith.constant dense<0.000000e+00> : vector<4x16xf32>
    %253 = tpu.matmul %244, %168, %cst_57 {dimension_numbers = #tpu.dot_dimension_numbers<[1], [0], [0], [1], [0, 0, 1, 1], [], []>} : vector<4x4xbf16>, vector<4x16xbf16>, vector<4x16xf32> -> vector<4x16xf32>
    %254 = arith.addf %231, %253 : vector<4x16xf32>
    %cst_58 = arith.constant dense<0.000000e+00> : vector<4x16xf32>
    %255 = tpu.matmul %244, %170, %cst_58 {dimension_numbers = #tpu.dot_dimension_numbers<[1], [0], [0], [1], [0, 0, 1, 1], [], []>} : vector<4x4xbf16>, vector<4x16xbf16>, vector<4x16xf32> -> vector<4x16xf32>
    %256 = arith.addf %232, %255 : vector<4x16xf32>
    %cst_59 = arith.constant dense<0.000000e+00> : vector<4x16xf32>
    %257 = tpu.matmul %244, %172, %cst_59 {dimension_numbers = #tpu.dot_dimension_numbers<[1], [0], [0], [1], [0, 0, 1, 1], [], []>} : vector<4x4xbf16>, vector<4x16xbf16>, vector<4x16xf32> -> vector<4x16xf32>
    %258 = arith.addf %233, %257 : vector<4x16xf32>
    %cst_60 = arith.constant dense<0.000000e+00> : vector<4x16xf32>
    %259 = tpu.matmul %244, %174, %cst_60 {dimension_numbers = #tpu.dot_dimension_numbers<[1], [0], [0], [1], [0, 0, 1, 1], [], []>} : vector<4x4xbf16>, vector<4x16xbf16>, vector<4x16xf32> -> vector<4x16xf32>
    %260 = arith.addf %234, %259 : vector<4x16xf32>
    %cst_61 = arith.constant dense<0.000000e+00> : vector<4x16xf32>
    %261 = tpu.matmul %244, %180, %cst_61 {dimension_numbers = #tpu.dot_dimension_numbers<[1], [0], [0], [1], [0, 0, 1, 1], [], []>} : vector<4x4xbf16>, vector<4x16xbf16>, vector<4x16xf32> -> vector<4x16xf32>
    %262 = arith.addf %235, %261 : vector<4x16xf32>
    %cst_62 = arith.constant dense<0.000000e+00> : vector<4x16xf32>
    %263 = tpu.matmul %244, %182, %cst_62 {dimension_numbers = #tpu.dot_dimension_numbers<[1], [0], [0], [1], [0, 0, 1, 1], [], []>} : vector<4x4xbf16>, vector<4x16xbf16>, vector<4x16xf32> -> vector<4x16xf32>
    %264 = arith.addf %236, %263 : vector<4x16xf32>
    %cst_63 = arith.constant dense<0.000000e+00> : vector<4x16xf32>
    %265 = tpu.matmul %244, %184, %cst_63 {dimension_numbers = #tpu.dot_dimension_numbers<[1], [0], [0], [1], [0, 0, 1, 1], [], []>} : vector<4x4xbf16>, vector<4x16xbf16>, vector<4x16xf32> -> vector<4x16xf32>
    %266 = arith.addf %237, %265 : vector<4x16xf32>
    %cst_64 = arith.constant dense<0.000000e+00> : vector<4x16xf32>
    %267 = tpu.matmul %244, %186, %cst_64 {dimension_numbers = #tpu.dot_dimension_numbers<[1], [0], [0], [1], [0, 0, 1, 1], [], []>} : vector<4x4xbf16>, vector<4x16xbf16>, vector<4x16xf32> -> vector<4x16xf32>
    %268 = arith.addf %238, %267 : vector<4x16xf32>
    %cst_65 = arith.constant dense<0.000000e+00> : vector<4x16xf32>
    %269 = tpu.matmul %244, %192, %cst_65 {dimension_numbers = #tpu.dot_dimension_numbers<[1], [0], [0], [1], [0, 0, 1, 1], [], []>} : vector<4x4xbf16>, vector<4x16xbf16>, vector<4x16xf32> -> vector<4x16xf32>
    %270 = arith.addf %239, %269 : vector<4x16xf32>
    %cst_66 = arith.constant dense<0.000000e+00> : vector<4x16xf32>
    %271 = tpu.matmul %244, %194, %cst_66 {dimension_numbers = #tpu.dot_dimension_numbers<[1], [0], [0], [1], [0, 0, 1, 1], [], []>} : vector<4x4xbf16>, vector<4x16xbf16>, vector<4x16xf32> -> vector<4x16xf32>
    %272 = arith.addf %240, %271 : vector<4x16xf32>
    %cst_67 = arith.constant dense<0.000000e+00> : vector<4x16xf32>
    %273 = tpu.matmul %244, %196, %cst_67 {dimension_numbers = #tpu.dot_dimension_numbers<[1], [0], [0], [1], [0, 0, 1, 1], [], []>} : vector<4x4xbf16>, vector<4x16xbf16>, vector<4x16xf32> -> vector<4x16xf32>
    %274 = arith.addf %241, %273 : vector<4x16xf32>
    %cst_68 = arith.constant dense<0.000000e+00> : vector<4x16xf32>
    %275 = tpu.matmul %244, %198, %cst_68 {dimension_numbers = #tpu.dot_dimension_numbers<[1], [0], [0], [1], [0, 0, 1, 1], [], []>} : vector<4x4xbf16>, vector<4x16xbf16>, vector<4x16xf32> -> vector<4x16xf32>
    %276 = arith.addf %242, %275 : vector<4x16xf32>
    %c2 = arith.constant 2 : index
    %c0_69 = arith.constant 0 : index
    %c0_70 = arith.constant 0 : index
    %277 = vector.load %arg10[%c2, %c0_69, %c0_70] : memref<9x4x4xbf16, #tpu.memory_space<vmem>>, vector<1x4x4xbf16>
    %278 = vector.shape_cast %277 : vector<1x4x4xbf16> to vector<4x4xbf16>
    %cst_71 = arith.constant dense<0.000000e+00> : vector<4x16xf32>
    %279 = tpu.matmul %278, %158, %cst_71 {dimension_numbers = #tpu.dot_dimension_numbers<[1], [0], [0], [1], [0, 0, 1, 1], [], []>} : vector<4x4xbf16>, vector<4x16xbf16>, vector<4x16xf32> -> vector<4x16xf32>
    %280 = arith.addf %246, %279 : vector<4x16xf32>
    %cst_72 = arith.constant dense<0.000000e+00> : vector<4x16xf32>
    %281 = tpu.matmul %278, %160, %cst_72 {dimension_numbers = #tpu.dot_dimension_numbers<[1], [0], [0], [1], [0, 0, 1, 1], [], []>} : vector<4x4xbf16>, vector<4x16xbf16>, vector<4x16xf32> -> vector<4x16xf32>
    %282 = arith.addf %248, %281 : vector<4x16xf32>
    %cst_73 = arith.constant dense<0.000000e+00> : vector<4x16xf32>
    %283 = tpu.matmul %278, %162, %cst_73 {dimension_numbers = #tpu.dot_dimension_numbers<[1], [0], [0], [1], [0, 0, 1, 1], [], []>} : vector<4x4xbf16>, vector<4x16xbf16>, vector<4x16xf32> -> vector<4x16xf32>
    %284 = arith.addf %250, %283 : vector<4x16xf32>
    %cst_74 = arith.constant dense<0.000000e+00> : vector<4x16xf32>
    %285 = tpu.matmul %278, %164, %cst_74 {dimension_numbers = #tpu.dot_dimension_numbers<[1], [0], [0], [1], [0, 0, 1, 1], [], []>} : vector<4x4xbf16>, vector<4x16xbf16>, vector<4x16xf32> -> vector<4x16xf32>
    %286 = arith.addf %252, %285 : vector<4x16xf32>
    %cst_75 = arith.constant dense<0.000000e+00> : vector<4x16xf32>
    %287 = tpu.matmul %278, %170, %cst_75 {dimension_numbers = #tpu.dot_dimension_numbers<[1], [0], [0], [1], [0, 0, 1, 1], [], []>} : vector<4x4xbf16>, vector<4x16xbf16>, vector<4x16xf32> -> vector<4x16xf32>
    %288 = arith.addf %254, %287 : vector<4x16xf32>
    %cst_76 = arith.constant dense<0.000000e+00> : vector<4x16xf32>
    %289 = tpu.matmul %278, %172, %cst_76 {dimension_numbers = #tpu.dot_dimension_numbers<[1], [0], [0], [1], [0, 0, 1, 1], [], []>} : vector<4x4xbf16>, vector<4x16xbf16>, vector<4x16xf32> -> vector<4x16xf32>
    %290 = arith.addf %256, %289 : vector<4x16xf32>
    %cst_77 = arith.constant dense<0.000000e+00> : vector<4x16xf32>
    %291 = tpu.matmul %278, %174, %cst_77 {dimension_numbers = #tpu.dot_dimension_numbers<[1], [0], [0], [1], [0, 0, 1, 1], [], []>} : vector<4x4xbf16>, vector<4x16xbf16>, vector<4x16xf32> -> vector<4x16xf32>
    %292 = arith.addf %258, %291 : vector<4x16xf32>
    %cst_78 = arith.constant dense<0.000000e+00> : vector<4x16xf32>
    %293 = tpu.matmul %278, %176, %cst_78 {dimension_numbers = #tpu.dot_dimension_numbers<[1], [0], [0], [1], [0, 0, 1, 1], [], []>} : vector<4x4xbf16>, vector<4x16xbf16>, vector<4x16xf32> -> vector<4x16xf32>
    %294 = arith.addf %260, %293 : vector<4x16xf32>
    %cst_79 = arith.constant dense<0.000000e+00> : vector<4x16xf32>
    %295 = tpu.matmul %278, %182, %cst_79 {dimension_numbers = #tpu.dot_dimension_numbers<[1], [0], [0], [1], [0, 0, 1, 1], [], []>} : vector<4x4xbf16>, vector<4x16xbf16>, vector<4x16xf32> -> vector<4x16xf32>
    %296 = arith.addf %262, %295 : vector<4x16xf32>
    %cst_80 = arith.constant dense<0.000000e+00> : vector<4x16xf32>
    %297 = tpu.matmul %278, %184, %cst_80 {dimension_numbers = #tpu.dot_dimension_numbers<[1], [0], [0], [1], [0, 0, 1, 1], [], []>} : vector<4x4xbf16>, vector<4x16xbf16>, vector<4x16xf32> -> vector<4x16xf32>
    %298 = arith.addf %264, %297 : vector<4x16xf32>
    %cst_81 = arith.constant dense<0.000000e+00> : vector<4x16xf32>
    %299 = tpu.matmul %278, %186, %cst_81 {dimension_numbers = #tpu.dot_dimension_numbers<[1], [0], [0], [1], [0, 0, 1, 1], [], []>} : vector<4x4xbf16>, vector<4x16xbf16>, vector<4x16xf32> -> vector<4x16xf32>
    %300 = arith.addf %266, %299 : vector<4x16xf32>
    %cst_82 = arith.constant dense<0.000000e+00> : vector<4x16xf32>
    %301 = tpu.matmul %278, %188, %cst_82 {dimension_numbers = #tpu.dot_dimension_numbers<[1], [0], [0], [1], [0, 0, 1, 1], [], []>} : vector<4x4xbf16>, vector<4x16xbf16>, vector<4x16xf32> -> vector<4x16xf32>
    %302 = arith.addf %268, %301 : vector<4x16xf32>
    %cst_83 = arith.constant dense<0.000000e+00> : vector<4x16xf32>
    %303 = tpu.matmul %278, %194, %cst_83 {dimension_numbers = #tpu.dot_dimension_numbers<[1], [0], [0], [1], [0, 0, 1, 1], [], []>} : vector<4x4xbf16>, vector<4x16xbf16>, vector<4x16xf32> -> vector<4x16xf32>
    %304 = arith.addf %270, %303 : vector<4x16xf32>
    %cst_84 = arith.constant dense<0.000000e+00> : vector<4x16xf32>
    %305 = tpu.matmul %278, %196, %cst_84 {dimension_numbers = #tpu.dot_dimension_numbers<[1], [0], [0], [1], [0, 0, 1, 1], [], []>} : vector<4x4xbf16>, vector<4x16xbf16>, vector<4x16xf32> -> vector<4x16xf32>
    %306 = arith.addf %272, %305 : vector<4x16xf32>
    %cst_85 = arith.constant dense<0.000000e+00> : vector<4x16xf32>
    %307 = tpu.matmul %278, %198, %cst_85 {dimension_numbers = #tpu.dot_dimension_numbers<[1], [0], [0], [1], [0, 0, 1, 1], [], []>} : vector<4x4xbf16>, vector<4x16xbf16>, vector<4x16xf32> -> vector<4x16xf32>
    %308 = arith.addf %274, %307 : vector<4x16xf32>
    %cst_86 = arith.constant dense<0.000000e+00> : vector<4x16xf32>
    %309 = tpu.matmul %278, %200, %cst_86 {dimension_numbers = #tpu.dot_dimension_numbers<[1], [0], [0], [1], [0, 0, 1, 1], [], []>} : vector<4x4xbf16>, vector<4x16xbf16>, vector<4x16xf32> -> vector<4x16xf32>
    %310 = arith.addf %276, %309 : vector<4x16xf32>
    %c3 = arith.constant 3 : index
    %c0_87 = arith.constant 0 : index
    %c0_88 = arith.constant 0 : index
    %311 = vector.load %arg10[%c3, %c0_87, %c0_88] : memref<9x4x4xbf16, #tpu.memory_space<vmem>>, vector<1x4x4xbf16>
    %312 = vector.shape_cast %311 : vector<1x4x4xbf16> to vector<4x4xbf16>
    %cst_89 = arith.constant dense<0.000000e+00> : vector<4x16xf32>
    %313 = tpu.matmul %312, %166, %cst_89 {dimension_numbers = #tpu.dot_dimension_numbers<[1], [0], [0], [1], [0, 0, 1, 1], [], []>} : vector<4x4xbf16>, vector<4x16xbf16>, vector<4x16xf32> -> vector<4x16xf32>
    %314 = arith.addf %280, %313 : vector<4x16xf32>
    %cst_90 = arith.constant dense<0.000000e+00> : vector<4x16xf32>
    %315 = tpu.matmul %312, %168, %cst_90 {dimension_numbers = #tpu.dot_dimension_numbers<[1], [0], [0], [1], [0, 0, 1, 1], [], []>} : vector<4x4xbf16>, vector<4x16xbf16>, vector<4x16xf32> -> vector<4x16xf32>
    %316 = arith.addf %282, %315 : vector<4x16xf32>
    %cst_91 = arith.constant dense<0.000000e+00> : vector<4x16xf32>
    %317 = tpu.matmul %312, %170, %cst_91 {dimension_numbers = #tpu.dot_dimension_numbers<[1], [0], [0], [1], [0, 0, 1, 1], [], []>} : vector<4x4xbf16>, vector<4x16xbf16>, vector<4x16xf32> -> vector<4x16xf32>
    %318 = arith.addf %284, %317 : vector<4x16xf32>
    %cst_92 = arith.constant dense<0.000000e+00> : vector<4x16xf32>
    %319 = tpu.matmul %312, %172, %cst_92 {dimension_numbers = #tpu.dot_dimension_numbers<[1], [0], [0], [1], [0, 0, 1, 1], [], []>} : vector<4x4xbf16>, vector<4x16xbf16>, vector<4x16xf32> -> vector<4x16xf32>
    %320 = arith.addf %286, %319 : vector<4x16xf32>
    %cst_93 = arith.constant dense<0.000000e+00> : vector<4x16xf32>
    %321 = tpu.matmul %312, %178, %cst_93 {dimension_numbers = #tpu.dot_dimension_numbers<[1], [0], [0], [1], [0, 0, 1, 1], [], []>} : vector<4x4xbf16>, vector<4x16xbf16>, vector<4x16xf32> -> vector<4x16xf32>
    %322 = arith.addf %288, %321 : vector<4x16xf32>
    %cst_94 = arith.constant dense<0.000000e+00> : vector<4x16xf32>
    %323 = tpu.matmul %312, %180, %cst_94 {dimension_numbers = #tpu.dot_dimension_numbers<[1], [0], [0], [1], [0, 0, 1, 1], [], []>} : vector<4x4xbf16>, vector<4x16xbf16>, vector<4x16xf32> -> vector<4x16xf32>
    %324 = arith.addf %290, %323 : vector<4x16xf32>
    %cst_95 = arith.constant dense<0.000000e+00> : vector<4x16xf32>
    %325 = tpu.matmul %312, %182, %cst_95 {dimension_numbers = #tpu.dot_dimension_numbers<[1], [0], [0], [1], [0, 0, 1, 1], [], []>} : vector<4x4xbf16>, vector<4x16xbf16>, vector<4x16xf32> -> vector<4x16xf32>
    %326 = arith.addf %292, %325 : vector<4x16xf32>
    %cst_96 = arith.constant dense<0.000000e+00> : vector<4x16xf32>
    %327 = tpu.matmul %312, %184, %cst_96 {dimension_numbers = #tpu.dot_dimension_numbers<[1], [0], [0], [1], [0, 0, 1, 1], [], []>} : vector<4x4xbf16>, vector<4x16xbf16>, vector<4x16xf32> -> vector<4x16xf32>
    %328 = arith.addf %294, %327 : vector<4x16xf32>
    %cst_97 = arith.constant dense<0.000000e+00> : vector<4x16xf32>
    %329 = tpu.matmul %312, %190, %cst_97 {dimension_numbers = #tpu.dot_dimension_numbers<[1], [0], [0], [1], [0, 0, 1, 1], [], []>} : vector<4x4xbf16>, vector<4x16xbf16>, vector<4x16xf32> -> vector<4x16xf32>
    %330 = arith.addf %296, %329 : vector<4x16xf32>
    %cst_98 = arith.constant dense<0.000000e+00> : vector<4x16xf32>
    %331 = tpu.matmul %312, %192, %cst_98 {dimension_numbers = #tpu.dot_dimension_numbers<[1], [0], [0], [1], [0, 0, 1, 1], [], []>} : vector<4x4xbf16>, vector<4x16xbf16>, vector<4x16xf32> -> vector<4x16xf32>
    %332 = arith.addf %298, %331 : vector<4x16xf32>
    %cst_99 = arith.constant dense<0.000000e+00> : vector<4x16xf32>
    %333 = tpu.matmul %312, %194, %cst_99 {dimension_numbers = #tpu.dot_dimension_numbers<[1], [0], [0], [1], [0, 0, 1, 1], [], []>} : vector<4x4xbf16>, vector<4x16xbf16>, vector<4x16xf32> -> vector<4x16xf32>
    %334 = arith.addf %300, %333 : vector<4x16xf32>
    %cst_100 = arith.constant dense<0.000000e+00> : vector<4x16xf32>
    %335 = tpu.matmul %312, %196, %cst_100 {dimension_numbers = #tpu.dot_dimension_numbers<[1], [0], [0], [1], [0, 0, 1, 1], [], []>} : vector<4x4xbf16>, vector<4x16xbf16>, vector<4x16xf32> -> vector<4x16xf32>
    %336 = arith.addf %302, %335 : vector<4x16xf32>
    %cst_101 = arith.constant dense<0.000000e+00> : vector<4x16xf32>
    %337 = tpu.matmul %312, %202, %cst_101 {dimension_numbers = #tpu.dot_dimension_numbers<[1], [0], [0], [1], [0, 0, 1, 1], [], []>} : vector<4x4xbf16>, vector<4x16xbf16>, vector<4x16xf32> -> vector<4x16xf32>
    %338 = arith.addf %304, %337 : vector<4x16xf32>
    %cst_102 = arith.constant dense<0.000000e+00> : vector<4x16xf32>
    %339 = tpu.matmul %312, %204, %cst_102 {dimension_numbers = #tpu.dot_dimension_numbers<[1], [0], [0], [1], [0, 0, 1, 1], [], []>} : vector<4x4xbf16>, vector<4x16xbf16>, vector<4x16xf32> -> vector<4x16xf32>
    %340 = arith.addf %306, %339 : vector<4x16xf32>
    %cst_103 = arith.constant dense<0.000000e+00> : vector<4x16xf32>
    %341 = tpu.matmul %312, %206, %cst_103 {dimension_numbers = #tpu.dot_dimension_numbers<[1], [0], [0], [1], [0, 0, 1, 1], [], []>} : vector<4x4xbf16>, vector<4x16xbf16>, vector<4x16xf32> -> vector<4x16xf32>
    %342 = arith.addf %308, %341 : vector<4x16xf32>
    %cst_104 = arith.constant dense<0.000000e+00> : vector<4x16xf32>
    %343 = tpu.matmul %312, %208, %cst_104 {dimension_numbers = #tpu.dot_dimension_numbers<[1], [0], [0], [1], [0, 0, 1, 1], [], []>} : vector<4x4xbf16>, vector<4x16xbf16>, vector<4x16xf32> -> vector<4x16xf32>
    %344 = arith.addf %310, %343 : vector<4x16xf32>
    %c4 = arith.constant 4 : index
    %c0_105 = arith.constant 0 : index
    %c0_106 = arith.constant 0 : index
    %345 = vector.load %arg10[%c4, %c0_105, %c0_106] : memref<9x4x4xbf16, #tpu.memory_space<vmem>>, vector<1x4x4xbf16>
    %346 = vector.shape_cast %345 : vector<1x4x4xbf16> to vector<4x4xbf16>
    %cst_107 = arith.constant dense<0.000000e+00> : vector<4x16xf32>
    %347 = tpu.matmul %346, %168, %cst_107 {dimension_numbers = #tpu.dot_dimension_numbers<[1], [0], [0], [1], [0, 0, 1, 1], [], []>} : vector<4x4xbf16>, vector<4x16xbf16>, vector<4x16xf32> -> vector<4x16xf32>
    %348 = arith.addf %314, %347 : vector<4x16xf32>
    %cst_108 = arith.constant dense<0.000000e+00> : vector<4x16xf32>
    %349 = tpu.matmul %346, %170, %cst_108 {dimension_numbers = #tpu.dot_dimension_numbers<[1], [0], [0], [1], [0, 0, 1, 1], [], []>} : vector<4x4xbf16>, vector<4x16xbf16>, vector<4x16xf32> -> vector<4x16xf32>
    %350 = arith.addf %316, %349 : vector<4x16xf32>
    %cst_109 = arith.constant dense<0.000000e+00> : vector<4x16xf32>
    %351 = tpu.matmul %346, %172, %cst_109 {dimension_numbers = #tpu.dot_dimension_numbers<[1], [0], [0], [1], [0, 0, 1, 1], [], []>} : vector<4x4xbf16>, vector<4x16xbf16>, vector<4x16xf32> -> vector<4x16xf32>
    %352 = arith.addf %318, %351 : vector<4x16xf32>
    %cst_110 = arith.constant dense<0.000000e+00> : vector<4x16xf32>
    %353 = tpu.matmul %346, %174, %cst_110 {dimension_numbers = #tpu.dot_dimension_numbers<[1], [0], [0], [1], [0, 0, 1, 1], [], []>} : vector<4x4xbf16>, vector<4x16xbf16>, vector<4x16xf32> -> vector<4x16xf32>
    %354 = arith.addf %320, %353 : vector<4x16xf32>
    %cst_111 = arith.constant dense<0.000000e+00> : vector<4x16xf32>
    %355 = tpu.matmul %346, %180, %cst_111 {dimension_numbers = #tpu.dot_dimension_numbers<[1], [0], [0], [1], [0, 0, 1, 1], [], []>} : vector<4x4xbf16>, vector<4x16xbf16>, vector<4x16xf32> -> vector<4x16xf32>
    %356 = arith.addf %322, %355 : vector<4x16xf32>
    %cst_112 = arith.constant dense<0.000000e+00> : vector<4x16xf32>
    %357 = tpu.matmul %346, %182, %cst_112 {dimension_numbers = #tpu.dot_dimension_numbers<[1], [0], [0], [1], [0, 0, 1, 1], [], []>} : vector<4x4xbf16>, vector<4x16xbf16>, vector<4x16xf32> -> vector<4x16xf32>
    %358 = arith.addf %324, %357 : vector<4x16xf32>
    %cst_113 = arith.constant dense<0.000000e+00> : vector<4x16xf32>
    %359 = tpu.matmul %346, %184, %cst_113 {dimension_numbers = #tpu.dot_dimension_numbers<[1], [0], [0], [1], [0, 0, 1, 1], [], []>} : vector<4x4xbf16>, vector<4x16xbf16>, vector<4x16xf32> -> vector<4x16xf32>
    %360 = arith.addf %326, %359 : vector<4x16xf32>
    %cst_114 = arith.constant dense<0.000000e+00> : vector<4x16xf32>
    %361 = tpu.matmul %346, %186, %cst_114 {dimension_numbers = #tpu.dot_dimension_numbers<[1], [0], [0], [1], [0, 0, 1, 1], [], []>} : vector<4x4xbf16>, vector<4x16xbf16>, vector<4x16xf32> -> vector<4x16xf32>
    %362 = arith.addf %328, %361 : vector<4x16xf32>
    %cst_115 = arith.constant dense<0.000000e+00> : vector<4x16xf32>
    %363 = tpu.matmul %346, %192, %cst_115 {dimension_numbers = #tpu.dot_dimension_numbers<[1], [0], [0], [1], [0, 0, 1, 1], [], []>} : vector<4x4xbf16>, vector<4x16xbf16>, vector<4x16xf32> -> vector<4x16xf32>
    %364 = arith.addf %330, %363 : vector<4x16xf32>
    %cst_116 = arith.constant dense<0.000000e+00> : vector<4x16xf32>
    %365 = tpu.matmul %346, %194, %cst_116 {dimension_numbers = #tpu.dot_dimension_numbers<[1], [0], [0], [1], [0, 0, 1, 1], [], []>} : vector<4x4xbf16>, vector<4x16xbf16>, vector<4x16xf32> -> vector<4x16xf32>
    %366 = arith.addf %332, %365 : vector<4x16xf32>
    %cst_117 = arith.constant dense<0.000000e+00> : vector<4x16xf32>
    %367 = tpu.matmul %346, %196, %cst_117 {dimension_numbers = #tpu.dot_dimension_numbers<[1], [0], [0], [1], [0, 0, 1, 1], [], []>} : vector<4x4xbf16>, vector<4x16xbf16>, vector<4x16xf32> -> vector<4x16xf32>
    %368 = arith.addf %334, %367 : vector<4x16xf32>
    %cst_118 = arith.constant dense<0.000000e+00> : vector<4x16xf32>
    %369 = tpu.matmul %346, %198, %cst_118 {dimension_numbers = #tpu.dot_dimension_numbers<[1], [0], [0], [1], [0, 0, 1, 1], [], []>} : vector<4x4xbf16>, vector<4x16xbf16>, vector<4x16xf32> -> vector<4x16xf32>
    %370 = arith.addf %336, %369 : vector<4x16xf32>
    %cst_119 = arith.constant dense<0.000000e+00> : vector<4x16xf32>
    %371 = tpu.matmul %346, %204, %cst_119 {dimension_numbers = #tpu.dot_dimension_numbers<[1], [0], [0], [1], [0, 0, 1, 1], [], []>} : vector<4x4xbf16>, vector<4x16xbf16>, vector<4x16xf32> -> vector<4x16xf32>
    %372 = arith.addf %338, %371 : vector<4x16xf32>
    %cst_120 = arith.constant dense<0.000000e+00> : vector<4x16xf32>
    %373 = tpu.matmul %346, %206, %cst_120 {dimension_numbers = #tpu.dot_dimension_numbers<[1], [0], [0], [1], [0, 0, 1, 1], [], []>} : vector<4x4xbf16>, vector<4x16xbf16>, vector<4x16xf32> -> vector<4x16xf32>
    %374 = arith.addf %340, %373 : vector<4x16xf32>
    %cst_121 = arith.constant dense<0.000000e+00> : vector<4x16xf32>
    %375 = tpu.matmul %346, %208, %cst_121 {dimension_numbers = #tpu.dot_dimension_numbers<[1], [0], [0], [1], [0, 0, 1, 1], [], []>} : vector<4x4xbf16>, vector<4x16xbf16>, vector<4x16xf32> -> vector<4x16xf32>
    %376 = arith.addf %342, %375 : vector<4x16xf32>
    %cst_122 = arith.constant dense<0.000000e+00> : vector<4x16xf32>
    %377 = tpu.matmul %346, %210, %cst_122 {dimension_numbers = #tpu.dot_dimension_numbers<[1], [0], [0], [1], [0, 0, 1, 1], [], []>} : vector<4x4xbf16>, vector<4x16xbf16>, vector<4x16xf32> -> vector<4x16xf32>
    %378 = arith.addf %344, %377 : vector<4x16xf32>
    %c5 = arith.constant 5 : index
    %c0_123 = arith.constant 0 : index
    %c0_124 = arith.constant 0 : index
    %379 = vector.load %arg10[%c5, %c0_123, %c0_124] : memref<9x4x4xbf16, #tpu.memory_space<vmem>>, vector<1x4x4xbf16>
    %380 = vector.shape_cast %379 : vector<1x4x4xbf16> to vector<4x4xbf16>
    %cst_125 = arith.constant dense<0.000000e+00> : vector<4x16xf32>
    %381 = tpu.matmul %380, %170, %cst_125 {dimension_numbers = #tpu.dot_dimension_numbers<[1], [0], [0], [1], [0, 0, 1, 1], [], []>} : vector<4x4xbf16>, vector<4x16xbf16>, vector<4x16xf32> -> vector<4x16xf32>
    %382 = arith.addf %348, %381 : vector<4x16xf32>
    %cst_126 = arith.constant dense<0.000000e+00> : vector<4x16xf32>
    %383 = tpu.matmul %380, %172, %cst_126 {dimension_numbers = #tpu.dot_dimension_numbers<[1], [0], [0], [1], [0, 0, 1, 1], [], []>} : vector<4x4xbf16>, vector<4x16xbf16>, vector<4x16xf32> -> vector<4x16xf32>
    %384 = arith.addf %350, %383 : vector<4x16xf32>
    %cst_127 = arith.constant dense<0.000000e+00> : vector<4x16xf32>
    %385 = tpu.matmul %380, %174, %cst_127 {dimension_numbers = #tpu.dot_dimension_numbers<[1], [0], [0], [1], [0, 0, 1, 1], [], []>} : vector<4x4xbf16>, vector<4x16xbf16>, vector<4x16xf32> -> vector<4x16xf32>
    %386 = arith.addf %352, %385 : vector<4x16xf32>
    %cst_128 = arith.constant dense<0.000000e+00> : vector<4x16xf32>
    %387 = tpu.matmul %380, %176, %cst_128 {dimension_numbers = #tpu.dot_dimension_numbers<[1], [0], [0], [1], [0, 0, 1, 1], [], []>} : vector<4x4xbf16>, vector<4x16xbf16>, vector<4x16xf32> -> vector<4x16xf32>
    %388 = arith.addf %354, %387 : vector<4x16xf32>
    %cst_129 = arith.constant dense<0.000000e+00> : vector<4x16xf32>
    %389 = tpu.matmul %380, %182, %cst_129 {dimension_numbers = #tpu.dot_dimension_numbers<[1], [0], [0], [1], [0, 0, 1, 1], [], []>} : vector<4x4xbf16>, vector<4x16xbf16>, vector<4x16xf32> -> vector<4x16xf32>
    %390 = arith.addf %356, %389 : vector<4x16xf32>
    %cst_130 = arith.constant dense<0.000000e+00> : vector<4x16xf32>
    %391 = tpu.matmul %380, %184, %cst_130 {dimension_numbers = #tpu.dot_dimension_numbers<[1], [0], [0], [1], [0, 0, 1, 1], [], []>} : vector<4x4xbf16>, vector<4x16xbf16>, vector<4x16xf32> -> vector<4x16xf32>
    %392 = arith.addf %358, %391 : vector<4x16xf32>
    %cst_131 = arith.constant dense<0.000000e+00> : vector<4x16xf32>
    %393 = tpu.matmul %380, %186, %cst_131 {dimension_numbers = #tpu.dot_dimension_numbers<[1], [0], [0], [1], [0, 0, 1, 1], [], []>} : vector<4x4xbf16>, vector<4x16xbf16>, vector<4x16xf32> -> vector<4x16xf32>
    %394 = arith.addf %360, %393 : vector<4x16xf32>
    %cst_132 = arith.constant dense<0.000000e+00> : vector<4x16xf32>
    %395 = tpu.matmul %380, %188, %cst_132 {dimension_numbers = #tpu.dot_dimension_numbers<[1], [0], [0], [1], [0, 0, 1, 1], [], []>} : vector<4x4xbf16>, vector<4x16xbf16>, vector<4x16xf32> -> vector<4x16xf32>
    %396 = arith.addf %362, %395 : vector<4x16xf32>
    %cst_133 = arith.constant dense<0.000000e+00> : vector<4x16xf32>
    %397 = tpu.matmul %380, %194, %cst_133 {dimension_numbers = #tpu.dot_dimension_numbers<[1], [0], [0], [1], [0, 0, 1, 1], [], []>} : vector<4x4xbf16>, vector<4x16xbf16>, vector<4x16xf32> -> vector<4x16xf32>
    %398 = arith.addf %364, %397 : vector<4x16xf32>
    %cst_134 = arith.constant dense<0.000000e+00> : vector<4x16xf32>
    %399 = tpu.matmul %380, %196, %cst_134 {dimension_numbers = #tpu.dot_dimension_numbers<[1], [0], [0], [1], [0, 0, 1, 1], [], []>} : vector<4x4xbf16>, vector<4x16xbf16>, vector<4x16xf32> -> vector<4x16xf32>
    %400 = arith.addf %366, %399 : vector<4x16xf32>
    %cst_135 = arith.constant dense<0.000000e+00> : vector<4x16xf32>
    %401 = tpu.matmul %380, %198, %cst_135 {dimension_numbers = #tpu.dot_dimension_numbers<[1], [0], [0], [1], [0, 0, 1, 1], [], []>} : vector<4x4xbf16>, vector<4x16xbf16>, vector<4x16xf32> -> vector<4x16xf32>
    %402 = arith.addf %368, %401 : vector<4x16xf32>
    %cst_136 = arith.constant dense<0.000000e+00> : vector<4x16xf32>
    %403 = tpu.matmul %380, %200, %cst_136 {dimension_numbers = #tpu.dot_dimension_numbers<[1], [0], [0], [1], [0, 0, 1, 1], [], []>} : vector<4x4xbf16>, vector<4x16xbf16>, vector<4x16xf32> -> vector<4x16xf32>
    %404 = arith.addf %370, %403 : vector<4x16xf32>
    %cst_137 = arith.constant dense<0.000000e+00> : vector<4x16xf32>
    %405 = tpu.matmul %380, %206, %cst_137 {dimension_numbers = #tpu.dot_dimension_numbers<[1], [0], [0], [1], [0, 0, 1, 1], [], []>} : vector<4x4xbf16>, vector<4x16xbf16>, vector<4x16xf32> -> vector<4x16xf32>
    %406 = arith.addf %372, %405 : vector<4x16xf32>
    %cst_138 = arith.constant dense<0.000000e+00> : vector<4x16xf32>
    %407 = tpu.matmul %380, %208, %cst_138 {dimension_numbers = #tpu.dot_dimension_numbers<[1], [0], [0], [1], [0, 0, 1, 1], [], []>} : vector<4x4xbf16>, vector<4x16xbf16>, vector<4x16xf32> -> vector<4x16xf32>
    %408 = arith.addf %374, %407 : vector<4x16xf32>
    %cst_139 = arith.constant dense<0.000000e+00> : vector<4x16xf32>
    %409 = tpu.matmul %380, %210, %cst_139 {dimension_numbers = #tpu.dot_dimension_numbers<[1], [0], [0], [1], [0, 0, 1, 1], [], []>} : vector<4x4xbf16>, vector<4x16xbf16>, vector<4x16xf32> -> vector<4x16xf32>
    %410 = arith.addf %376, %409 : vector<4x16xf32>
    %cst_140 = arith.constant dense<0.000000e+00> : vector<4x16xf32>
    %411 = tpu.matmul %380, %212, %cst_140 {dimension_numbers = #tpu.dot_dimension_numbers<[1], [0], [0], [1], [0, 0, 1, 1], [], []>} : vector<4x4xbf16>, vector<4x16xbf16>, vector<4x16xf32> -> vector<4x16xf32>
    %412 = arith.addf %378, %411 : vector<4x16xf32>
    %c6 = arith.constant 6 : index
    %c0_141 = arith.constant 0 : index
    %c0_142 = arith.constant 0 : index
    %413 = vector.load %arg10[%c6, %c0_141, %c0_142] : memref<9x4x4xbf16, #tpu.memory_space<vmem>>, vector<1x4x4xbf16>
    %414 = vector.shape_cast %413 : vector<1x4x4xbf16> to vector<4x4xbf16>
    %cst_143 = arith.constant dense<0.000000e+00> : vector<4x16xf32>
    %415 = tpu.matmul %414, %178, %cst_143 {dimension_numbers = #tpu.dot_dimension_numbers<[1], [0], [0], [1], [0, 0, 1, 1], [], []>} : vector<4x4xbf16>, vector<4x16xbf16>, vector<4x16xf32> -> vector<4x16xf32>
    %416 = arith.addf %382, %415 : vector<4x16xf32>
    %cst_144 = arith.constant dense<0.000000e+00> : vector<4x16xf32>
    %417 = tpu.matmul %414, %180, %cst_144 {dimension_numbers = #tpu.dot_dimension_numbers<[1], [0], [0], [1], [0, 0, 1, 1], [], []>} : vector<4x4xbf16>, vector<4x16xbf16>, vector<4x16xf32> -> vector<4x16xf32>
    %418 = arith.addf %384, %417 : vector<4x16xf32>
    %cst_145 = arith.constant dense<0.000000e+00> : vector<4x16xf32>
    %419 = tpu.matmul %414, %182, %cst_145 {dimension_numbers = #tpu.dot_dimension_numbers<[1], [0], [0], [1], [0, 0, 1, 1], [], []>} : vector<4x4xbf16>, vector<4x16xbf16>, vector<4x16xf32> -> vector<4x16xf32>
    %420 = arith.addf %386, %419 : vector<4x16xf32>
    %cst_146 = arith.constant dense<0.000000e+00> : vector<4x16xf32>
    %421 = tpu.matmul %414, %184, %cst_146 {dimension_numbers = #tpu.dot_dimension_numbers<[1], [0], [0], [1], [0, 0, 1, 1], [], []>} : vector<4x4xbf16>, vector<4x16xbf16>, vector<4x16xf32> -> vector<4x16xf32>
    %422 = arith.addf %388, %421 : vector<4x16xf32>
    %cst_147 = arith.constant dense<0.000000e+00> : vector<4x16xf32>
    %423 = tpu.matmul %414, %190, %cst_147 {dimension_numbers = #tpu.dot_dimension_numbers<[1], [0], [0], [1], [0, 0, 1, 1], [], []>} : vector<4x4xbf16>, vector<4x16xbf16>, vector<4x16xf32> -> vector<4x16xf32>
    %424 = arith.addf %390, %423 : vector<4x16xf32>
    %cst_148 = arith.constant dense<0.000000e+00> : vector<4x16xf32>
    %425 = tpu.matmul %414, %192, %cst_148 {dimension_numbers = #tpu.dot_dimension_numbers<[1], [0], [0], [1], [0, 0, 1, 1], [], []>} : vector<4x4xbf16>, vector<4x16xbf16>, vector<4x16xf32> -> vector<4x16xf32>
    %426 = arith.addf %392, %425 : vector<4x16xf32>
    %cst_149 = arith.constant dense<0.000000e+00> : vector<4x16xf32>
    %427 = tpu.matmul %414, %194, %cst_149 {dimension_numbers = #tpu.dot_dimension_numbers<[1], [0], [0], [1], [0, 0, 1, 1], [], []>} : vector<4x4xbf16>, vector<4x16xbf16>, vector<4x16xf32> -> vector<4x16xf32>
    %428 = arith.addf %394, %427 : vector<4x16xf32>
    %cst_150 = arith.constant dense<0.000000e+00> : vector<4x16xf32>
    %429 = tpu.matmul %414, %196, %cst_150 {dimension_numbers = #tpu.dot_dimension_numbers<[1], [0], [0], [1], [0, 0, 1, 1], [], []>} : vector<4x4xbf16>, vector<4x16xbf16>, vector<4x16xf32> -> vector<4x16xf32>
    %430 = arith.addf %396, %429 : vector<4x16xf32>
    %cst_151 = arith.constant dense<0.000000e+00> : vector<4x16xf32>
    %431 = tpu.matmul %414, %202, %cst_151 {dimension_numbers = #tpu.dot_dimension_numbers<[1], [0], [0], [1], [0, 0, 1, 1], [], []>} : vector<4x4xbf16>, vector<4x16xbf16>, vector<4x16xf32> -> vector<4x16xf32>
    %432 = arith.addf %398, %431 : vector<4x16xf32>
    %cst_152 = arith.constant dense<0.000000e+00> : vector<4x16xf32>
    %433 = tpu.matmul %414, %204, %cst_152 {dimension_numbers = #tpu.dot_dimension_numbers<[1], [0], [0], [1], [0, 0, 1, 1], [], []>} : vector<4x4xbf16>, vector<4x16xbf16>, vector<4x16xf32> -> vector<4x16xf32>
    %434 = arith.addf %400, %433 : vector<4x16xf32>
    %cst_153 = arith.constant dense<0.000000e+00> : vector<4x16xf32>
    %435 = tpu.matmul %414, %206, %cst_153 {dimension_numbers = #tpu.dot_dimension_numbers<[1], [0], [0], [1], [0, 0, 1, 1], [], []>} : vector<4x4xbf16>, vector<4x16xbf16>, vector<4x16xf32> -> vector<4x16xf32>
    %436 = arith.addf %402, %435 : vector<4x16xf32>
    %cst_154 = arith.constant dense<0.000000e+00> : vector<4x16xf32>
    %437 = tpu.matmul %414, %208, %cst_154 {dimension_numbers = #tpu.dot_dimension_numbers<[1], [0], [0], [1], [0, 0, 1, 1], [], []>} : vector<4x4xbf16>, vector<4x16xbf16>, vector<4x16xf32> -> vector<4x16xf32>
    %438 = arith.addf %404, %437 : vector<4x16xf32>
    %cst_155 = arith.constant dense<0.000000e+00> : vector<4x16xf32>
    %439 = tpu.matmul %414, %214, %cst_155 {dimension_numbers = #tpu.dot_dimension_numbers<[1], [0], [0], [1], [0, 0, 1, 1], [], []>} : vector<4x4xbf16>, vector<4x16xbf16>, vector<4x16xf32> -> vector<4x16xf32>
    %440 = arith.addf %406, %439 : vector<4x16xf32>
    %cst_156 = arith.constant dense<0.000000e+00> : vector<4x16xf32>
    %441 = tpu.matmul %414, %216, %cst_156 {dimension_numbers = #tpu.dot_dimension_numbers<[1], [0], [0], [1], [0, 0, 1, 1], [], []>} : vector<4x4xbf16>, vector<4x16xbf16>, vector<4x16xf32> -> vector<4x16xf32>
    %442 = arith.addf %408, %441 : vector<4x16xf32>
    %cst_157 = arith.constant dense<0.000000e+00> : vector<4x16xf32>
    %443 = tpu.matmul %414, %218, %cst_157 {dimension_numbers = #tpu.dot_dimension_numbers<[1], [0], [0], [1], [0, 0, 1, 1], [], []>} : vector<4x4xbf16>, vector<4x16xbf16>, vector<4x16xf32> -> vector<4x16xf32>
    %444 = arith.addf %410, %443 : vector<4x16xf32>
    %cst_158 = arith.constant dense<0.000000e+00> : vector<4x16xf32>
    %445 = tpu.matmul %414, %220, %cst_158 {dimension_numbers = #tpu.dot_dimension_numbers<[1], [0], [0], [1], [0, 0, 1, 1], [], []>} : vector<4x4xbf16>, vector<4x16xbf16>, vector<4x16xf32> -> vector<4x16xf32>
    %446 = arith.addf %412, %445 : vector<4x16xf32>
    %c7 = arith.constant 7 : index
    %c0_159 = arith.constant 0 : index
    %c0_160 = arith.constant 0 : index
    %447 = vector.load %arg10[%c7, %c0_159, %c0_160] : memref<9x4x4xbf16, #tpu.memory_space<vmem>>, vector<1x4x4xbf16>
    %448 = vector.shape_cast %447 : vector<1x4x4xbf16> to vector<4x4xbf16>
    %cst_161 = arith.constant dense<0.000000e+00> : vector<4x16xf32>
    %449 = tpu.matmul %448, %180, %cst_161 {dimension_numbers = #tpu.dot_dimension_numbers<[1], [0], [0], [1], [0, 0, 1, 1], [], []>} : vector<4x4xbf16>, vector<4x16xbf16>, vector<4x16xf32> -> vector<4x16xf32>
    %450 = arith.addf %416, %449 : vector<4x16xf32>
    %cst_162 = arith.constant dense<0.000000e+00> : vector<4x16xf32>
    %451 = tpu.matmul %448, %182, %cst_162 {dimension_numbers = #tpu.dot_dimension_numbers<[1], [0], [0], [1], [0, 0, 1, 1], [], []>} : vector<4x4xbf16>, vector<4x16xbf16>, vector<4x16xf32> -> vector<4x16xf32>
    %452 = arith.addf %418, %451 : vector<4x16xf32>
    %cst_163 = arith.constant dense<0.000000e+00> : vector<4x16xf32>
    %453 = tpu.matmul %448, %184, %cst_163 {dimension_numbers = #tpu.dot_dimension_numbers<[1], [0], [0], [1], [0, 0, 1, 1], [], []>} : vector<4x4xbf16>, vector<4x16xbf16>, vector<4x16xf32> -> vector<4x16xf32>
    %454 = arith.addf %420, %453 : vector<4x16xf32>
    %cst_164 = arith.constant dense<0.000000e+00> : vector<4x16xf32>
    %455 = tpu.matmul %448, %186, %cst_164 {dimension_numbers = #tpu.dot_dimension_numbers<[1], [0], [0], [1], [0, 0, 1, 1], [], []>} : vector<4x4xbf16>, vector<4x16xbf16>, vector<4x16xf32> -> vector<4x16xf32>
    %456 = arith.addf %422, %455 : vector<4x16xf32>
    %cst_165 = arith.constant dense<0.000000e+00> : vector<4x16xf32>
    %457 = tpu.matmul %448, %192, %cst_165 {dimension_numbers = #tpu.dot_dimension_numbers<[1], [0], [0], [1], [0, 0, 1, 1], [], []>} : vector<4x4xbf16>, vector<4x16xbf16>, vector<4x16xf32> -> vector<4x16xf32>
    %458 = arith.addf %424, %457 : vector<4x16xf32>
    %cst_166 = arith.constant dense<0.000000e+00> : vector<4x16xf32>
    %459 = tpu.matmul %448, %194, %cst_166 {dimension_numbers = #tpu.dot_dimension_numbers<[1], [0], [0], [1], [0, 0, 1, 1], [], []>} : vector<4x4xbf16>, vector<4x16xbf16>, vector<4x16xf32> -> vector<4x16xf32>
    %460 = arith.addf %426, %459 : vector<4x16xf32>
    %cst_167 = arith.constant dense<0.000000e+00> : vector<4x16xf32>
    %461 = tpu.matmul %448, %196, %cst_167 {dimension_numbers = #tpu.dot_dimension_numbers<[1], [0], [0], [1], [0, 0, 1, 1], [], []>} : vector<4x4xbf16>, vector<4x16xbf16>, vector<4x16xf32> -> vector<4x16xf32>
    %462 = arith.addf %428, %461 : vector<4x16xf32>
    %cst_168 = arith.constant dense<0.000000e+00> : vector<4x16xf32>
    %463 = tpu.matmul %448, %198, %cst_168 {dimension_numbers = #tpu.dot_dimension_numbers<[1], [0], [0], [1], [0, 0, 1, 1], [], []>} : vector<4x4xbf16>, vector<4x16xbf16>, vector<4x16xf32> -> vector<4x16xf32>
    %464 = arith.addf %430, %463 : vector<4x16xf32>
    %cst_169 = arith.constant dense<0.000000e+00> : vector<4x16xf32>
    %465 = tpu.matmul %448, %204, %cst_169 {dimension_numbers = #tpu.dot_dimension_numbers<[1], [0], [0], [1], [0, 0, 1, 1], [], []>} : vector<4x4xbf16>, vector<4x16xbf16>, vector<4x16xf32> -> vector<4x16xf32>
    %466 = arith.addf %432, %465 : vector<4x16xf32>
    %cst_170 = arith.constant dense<0.000000e+00> : vector<4x16xf32>
    %467 = tpu.matmul %448, %206, %cst_170 {dimension_numbers = #tpu.dot_dimension_numbers<[1], [0], [0], [1], [0, 0, 1, 1], [], []>} : vector<4x4xbf16>, vector<4x16xbf16>, vector<4x16xf32> -> vector<4x16xf32>
    %468 = arith.addf %434, %467 : vector<4x16xf32>
    %cst_171 = arith.constant dense<0.000000e+00> : vector<4x16xf32>
    %469 = tpu.matmul %448, %208, %cst_171 {dimension_numbers = #tpu.dot_dimension_numbers<[1], [0], [0], [1], [0, 0, 1, 1], [], []>} : vector<4x4xbf16>, vector<4x16xbf16>, vector<4x16xf32> -> vector<4x16xf32>
    %470 = arith.addf %436, %469 : vector<4x16xf32>
    %cst_172 = arith.constant dense<0.000000e+00> : vector<4x16xf32>
    %471 = tpu.matmul %448, %210, %cst_172 {dimension_numbers = #tpu.dot_dimension_numbers<[1], [0], [0], [1], [0, 0, 1, 1], [], []>} : vector<4x4xbf16>, vector<4x16xbf16>, vector<4x16xf32> -> vector<4x16xf32>
    %472 = arith.addf %438, %471 : vector<4x16xf32>
    %cst_173 = arith.constant dense<0.000000e+00> : vector<4x16xf32>
    %473 = tpu.matmul %448, %216, %cst_173 {dimension_numbers = #tpu.dot_dimension_numbers<[1], [0], [0], [1], [0, 0, 1, 1], [], []>} : vector<4x4xbf16>, vector<4x16xbf16>, vector<4x16xf32> -> vector<4x16xf32>
    %474 = arith.addf %440, %473 : vector<4x16xf32>
    %cst_174 = arith.constant dense<0.000000e+00> : vector<4x16xf32>
    %475 = tpu.matmul %448, %218, %cst_174 {dimension_numbers = #tpu.dot_dimension_numbers<[1], [0], [0], [1], [0, 0, 1, 1], [], []>} : vector<4x4xbf16>, vector<4x16xbf16>, vector<4x16xf32> -> vector<4x16xf32>
    %476 = arith.addf %442, %475 : vector<4x16xf32>
    %cst_175 = arith.constant dense<0.000000e+00> : vector<4x16xf32>
    %477 = tpu.matmul %448, %220, %cst_175 {dimension_numbers = #tpu.dot_dimension_numbers<[1], [0], [0], [1], [0, 0, 1, 1], [], []>} : vector<4x4xbf16>, vector<4x16xbf16>, vector<4x16xf32> -> vector<4x16xf32>
    %478 = arith.addf %444, %477 : vector<4x16xf32>
    %cst_176 = arith.constant dense<0.000000e+00> : vector<4x16xf32>
    %479 = tpu.matmul %448, %222, %cst_176 {dimension_numbers = #tpu.dot_dimension_numbers<[1], [0], [0], [1], [0, 0, 1, 1], [], []>} : vector<4x4xbf16>, vector<4x16xbf16>, vector<4x16xf32> -> vector<4x16xf32>
    %480 = arith.addf %446, %479 : vector<4x16xf32>
    %c8 = arith.constant 8 : index
    %c0_177 = arith.constant 0 : index
    %c0_178 = arith.constant 0 : index
    %481 = vector.load %arg10[%c8, %c0_177, %c0_178] : memref<9x4x4xbf16, #tpu.memory_space<vmem>>, vector<1x4x4xbf16>
    %482 = vector.shape_cast %481 : vector<1x4x4xbf16> to vector<4x4xbf16>
    %cst_179 = arith.constant dense<0.000000e+00> : vector<4x16xf32>
    %483 = tpu.matmul %482, %182, %cst_179 {dimension_numbers = #tpu.dot_dimension_numbers<[1], [0], [0], [1], [0, 0, 1, 1], [], []>} : vector<4x4xbf16>, vector<4x16xbf16>, vector<4x16xf32> -> vector<4x16xf32>
    %484 = arith.addf %450, %483 : vector<4x16xf32>
    %cst_180 = arith.constant dense<0.000000e+00> : vector<4x16xf32>
    %485 = tpu.matmul %482, %184, %cst_180 {dimension_numbers = #tpu.dot_dimension_numbers<[1], [0], [0], [1], [0, 0, 1, 1], [], []>} : vector<4x4xbf16>, vector<4x16xbf16>, vector<4x16xf32> -> vector<4x16xf32>
    %486 = arith.addf %452, %485 : vector<4x16xf32>
    %cst_181 = arith.constant dense<0.000000e+00> : vector<4x16xf32>
    %487 = tpu.matmul %482, %186, %cst_181 {dimension_numbers = #tpu.dot_dimension_numbers<[1], [0], [0], [1], [0, 0, 1, 1], [], []>} : vector<4x4xbf16>, vector<4x16xbf16>, vector<4x16xf32> -> vector<4x16xf32>
    %488 = arith.addf %454, %487 : vector<4x16xf32>
    %cst_182 = arith.constant dense<0.000000e+00> : vector<4x16xf32>
    %489 = tpu.matmul %482, %188, %cst_182 {dimension_numbers = #tpu.dot_dimension_numbers<[1], [0], [0], [1], [0, 0, 1, 1], [], []>} : vector<4x4xbf16>, vector<4x16xbf16>, vector<4x16xf32> -> vector<4x16xf32>
    %490 = arith.addf %456, %489 : vector<4x16xf32>
    %cst_183 = arith.constant dense<0.000000e+00> : vector<4x16xf32>
    %491 = tpu.matmul %482, %194, %cst_183 {dimension_numbers = #tpu.dot_dimension_numbers<[1], [0], [0], [1], [0, 0, 1, 1], [], []>} : vector<4x4xbf16>, vector<4x16xbf16>, vector<4x16xf32> -> vector<4x16xf32>
    %492 = arith.addf %458, %491 : vector<4x16xf32>
    %cst_184 = arith.constant dense<0.000000e+00> : vector<4x16xf32>
    %493 = tpu.matmul %482, %196, %cst_184 {dimension_numbers = #tpu.dot_dimension_numbers<[1], [0], [0], [1], [0, 0, 1, 1], [], []>} : vector<4x4xbf16>, vector<4x16xbf16>, vector<4x16xf32> -> vector<4x16xf32>
    %494 = arith.addf %460, %493 : vector<4x16xf32>
    %cst_185 = arith.constant dense<0.000000e+00> : vector<4x16xf32>
    %495 = tpu.matmul %482, %198, %cst_185 {dimension_numbers = #tpu.dot_dimension_numbers<[1], [0], [0], [1], [0, 0, 1, 1], [], []>} : vector<4x4xbf16>, vector<4x16xbf16>, vector<4x16xf32> -> vector<4x16xf32>
    %496 = arith.addf %462, %495 : vector<4x16xf32>
    %cst_186 = arith.constant dense<0.000000e+00> : vector<4x16xf32>
    %497 = tpu.matmul %482, %200, %cst_186 {dimension_numbers = #tpu.dot_dimension_numbers<[1], [0], [0], [1], [0, 0, 1, 1], [], []>} : vector<4x4xbf16>, vector<4x16xbf16>, vector<4x16xf32> -> vector<4x16xf32>
    %498 = arith.addf %464, %497 : vector<4x16xf32>
    %cst_187 = arith.constant dense<0.000000e+00> : vector<4x16xf32>
    %499 = tpu.matmul %482, %206, %cst_187 {dimension_numbers = #tpu.dot_dimension_numbers<[1], [0], [0], [1], [0, 0, 1, 1], [], []>} : vector<4x4xbf16>, vector<4x16xbf16>, vector<4x16xf32> -> vector<4x16xf32>
    %500 = arith.addf %466, %499 : vector<4x16xf32>
    %cst_188 = arith.constant dense<0.000000e+00> : vector<4x16xf32>
    %501 = tpu.matmul %482, %208, %cst_188 {dimension_numbers = #tpu.dot_dimension_numbers<[1], [0], [0], [1], [0, 0, 1, 1], [], []>} : vector<4x4xbf16>, vector<4x16xbf16>, vector<4x16xf32> -> vector<4x16xf32>
    %502 = arith.addf %468, %501 : vector<4x16xf32>
    %cst_189 = arith.constant dense<0.000000e+00> : vector<4x16xf32>
    %503 = tpu.matmul %482, %210, %cst_189 {dimension_numbers = #tpu.dot_dimension_numbers<[1], [0], [0], [1], [0, 0, 1, 1], [], []>} : vector<4x4xbf16>, vector<4x16xbf16>, vector<4x16xf32> -> vector<4x16xf32>
    %504 = arith.addf %470, %503 : vector<4x16xf32>
    %cst_190 = arith.constant dense<0.000000e+00> : vector<4x16xf32>
    %505 = tpu.matmul %482, %212, %cst_190 {dimension_numbers = #tpu.dot_dimension_numbers<[1], [0], [0], [1], [0, 0, 1, 1], [], []>} : vector<4x4xbf16>, vector<4x16xbf16>, vector<4x16xf32> -> vector<4x16xf32>
    %506 = arith.addf %472, %505 : vector<4x16xf32>
    %cst_191 = arith.constant dense<0.000000e+00> : vector<4x16xf32>
    %507 = tpu.matmul %482, %218, %cst_191 {dimension_numbers = #tpu.dot_dimension_numbers<[1], [0], [0], [1], [0, 0, 1, 1], [], []>} : vector<4x4xbf16>, vector<4x16xbf16>, vector<4x16xf32> -> vector<4x16xf32>
    %508 = arith.addf %474, %507 : vector<4x16xf32>
    %cst_192 = arith.constant dense<0.000000e+00> : vector<4x16xf32>
    %509 = tpu.matmul %482, %220, %cst_192 {dimension_numbers = #tpu.dot_dimension_numbers<[1], [0], [0], [1], [0, 0, 1, 1], [], []>} : vector<4x4xbf16>, vector<4x16xbf16>, vector<4x16xf32> -> vector<4x16xf32>
    %510 = arith.addf %476, %509 : vector<4x16xf32>
    %cst_193 = arith.constant dense<0.000000e+00> : vector<4x16xf32>
    %511 = tpu.matmul %482, %222, %cst_193 {dimension_numbers = #tpu.dot_dimension_numbers<[1], [0], [0], [1], [0, 0, 1, 1], [], []>} : vector<4x4xbf16>, vector<4x16xbf16>, vector<4x16xf32> -> vector<4x16xf32>
    %512 = arith.addf %478, %511 : vector<4x16xf32>
    %cst_194 = arith.constant dense<0.000000e+00> : vector<4x16xf32>
    %513 = tpu.matmul %482, %224, %cst_194 {dimension_numbers = #tpu.dot_dimension_numbers<[1], [0], [0], [1], [0, 0, 1, 1], [], []>} : vector<4x4xbf16>, vector<4x16xbf16>, vector<4x16xf32> -> vector<4x16xf32>
    %514 = arith.addf %480, %513 : vector<4x16xf32>
    %cst_195 = arith.constant 2.000000e-01 : f32
    %515 = vector.broadcast %cst_195 : f32 to vector<4x16xf32>
    %516 = arith.mulf %515, %484 : vector<4x16xf32>
    %517 = arith.maximumf %484, %516 : vector<4x16xf32>
    %518 = arith.truncf %517 : vector<4x16xf32> to vector<4x16xbf16>
    %cst_196 = arith.constant 2.000000e-01 : f32
    %519 = vector.broadcast %cst_196 : f32 to vector<4x16xf32>
    %520 = arith.mulf %519, %486 : vector<4x16xf32>
    %521 = arith.maximumf %486, %520 : vector<4x16xf32>
    %522 = arith.truncf %521 : vector<4x16xf32> to vector<4x16xbf16>
    %cst_197 = arith.constant 2.000000e-01 : f32
    %523 = vector.broadcast %cst_197 : f32 to vector<4x16xf32>
    %524 = arith.mulf %523, %488 : vector<4x16xf32>
    %525 = arith.maximumf %488, %524 : vector<4x16xf32>
    %526 = arith.truncf %525 : vector<4x16xf32> to vector<4x16xbf16>
    %cst_198 = arith.constant 2.000000e-01 : f32
    %527 = vector.broadcast %cst_198 : f32 to vector<4x16xf32>
    %528 = arith.mulf %527, %490 : vector<4x16xf32>
    %529 = arith.maximumf %490, %528 : vector<4x16xf32>
    %530 = arith.truncf %529 : vector<4x16xf32> to vector<4x16xbf16>
    %cst_199 = arith.constant 2.000000e-01 : f32
    %531 = vector.broadcast %cst_199 : f32 to vector<4x16xf32>
    %532 = arith.mulf %531, %492 : vector<4x16xf32>
    %533 = arith.maximumf %492, %532 : vector<4x16xf32>
    %534 = arith.truncf %533 : vector<4x16xf32> to vector<4x16xbf16>
    %cst_200 = arith.constant 2.000000e-01 : f32
    %535 = vector.broadcast %cst_200 : f32 to vector<4x16xf32>
    %536 = arith.mulf %535, %494 : vector<4x16xf32>
    %537 = arith.maximumf %494, %536 : vector<4x16xf32>
    %538 = arith.truncf %537 : vector<4x16xf32> to vector<4x16xbf16>
    %cst_201 = arith.constant 2.000000e-01 : f32
    %539 = vector.broadcast %cst_201 : f32 to vector<4x16xf32>
    %540 = arith.mulf %539, %496 : vector<4x16xf32>
    %541 = arith.maximumf %496, %540 : vector<4x16xf32>
    %542 = arith.truncf %541 : vector<4x16xf32> to vector<4x16xbf16>
    %cst_202 = arith.constant 2.000000e-01 : f32
    %543 = vector.broadcast %cst_202 : f32 to vector<4x16xf32>
    %544 = arith.mulf %543, %498 : vector<4x16xf32>
    %545 = arith.maximumf %498, %544 : vector<4x16xf32>
    %546 = arith.truncf %545 : vector<4x16xf32> to vector<4x16xbf16>
    %cst_203 = arith.constant 2.000000e-01 : f32
    %547 = vector.broadcast %cst_203 : f32 to vector<4x16xf32>
    %548 = arith.mulf %547, %500 : vector<4x16xf32>
    %549 = arith.maximumf %500, %548 : vector<4x16xf32>
    %550 = arith.truncf %549 : vector<4x16xf32> to vector<4x16xbf16>
    %cst_204 = arith.constant 2.000000e-01 : f32
    %551 = vector.broadcast %cst_204 : f32 to vector<4x16xf32>
    %552 = arith.mulf %551, %502 : vector<4x16xf32>
    %553 = arith.maximumf %502, %552 : vector<4x16xf32>
    %554 = arith.truncf %553 : vector<4x16xf32> to vector<4x16xbf16>
    %cst_205 = arith.constant 2.000000e-01 : f32
    %555 = vector.broadcast %cst_205 : f32 to vector<4x16xf32>
    %556 = arith.mulf %555, %504 : vector<4x16xf32>
    %557 = arith.maximumf %504, %556 : vector<4x16xf32>
    %558 = arith.truncf %557 : vector<4x16xf32> to vector<4x16xbf16>
    %cst_206 = arith.constant 2.000000e-01 : f32
    %559 = vector.broadcast %cst_206 : f32 to vector<4x16xf32>
    %560 = arith.mulf %559, %506 : vector<4x16xf32>
    %561 = arith.maximumf %506, %560 : vector<4x16xf32>
    %562 = arith.truncf %561 : vector<4x16xf32> to vector<4x16xbf16>
    %cst_207 = arith.constant 2.000000e-01 : f32
    %563 = vector.broadcast %cst_207 : f32 to vector<4x16xf32>
    %564 = arith.mulf %563, %508 : vector<4x16xf32>
    %565 = arith.maximumf %508, %564 : vector<4x16xf32>
    %566 = arith.truncf %565 : vector<4x16xf32> to vector<4x16xbf16>
    %cst_208 = arith.constant 2.000000e-01 : f32
    %567 = vector.broadcast %cst_208 : f32 to vector<4x16xf32>
    %568 = arith.mulf %567, %510 : vector<4x16xf32>
    %569 = arith.maximumf %510, %568 : vector<4x16xf32>
    %570 = arith.truncf %569 : vector<4x16xf32> to vector<4x16xbf16>
    %cst_209 = arith.constant 2.000000e-01 : f32
    %571 = vector.broadcast %cst_209 : f32 to vector<4x16xf32>
    %572 = arith.mulf %571, %512 : vector<4x16xf32>
    %573 = arith.maximumf %512, %572 : vector<4x16xf32>
    %574 = arith.truncf %573 : vector<4x16xf32> to vector<4x16xbf16>
    %cst_210 = arith.constant 2.000000e-01 : f32
    %575 = vector.broadcast %cst_210 : f32 to vector<4x16xf32>
    %576 = arith.mulf %575, %514 : vector<4x16xf32>
    %577 = arith.maximumf %514, %576 : vector<4x16xf32>
    %578 = arith.truncf %577 : vector<4x16xf32> to vector<4x16xbf16>
    %c0_211 = arith.constant 0 : index
    %c0_212 = arith.constant 0 : index
    %c0_213 = arith.constant 0 : index
    %579 = vector.load %arg11[%c0_211, %c0_212, %c0_213] : memref<9x4x4xbf16, #tpu.memory_space<vmem>>, vector<1x4x4xbf16>
    %580 = vector.shape_cast %579 : vector<1x4x4xbf16> to vector<4x4xbf16>
    %cst_214 = arith.constant dense<0.000000e+00> : vector<4x16xf32>
    %581 = tpu.matmul %580, %518, %cst_214 {dimension_numbers = #tpu.dot_dimension_numbers<[1], [0], [0], [1], [0, 0, 1, 1], [], []>} : vector<4x4xbf16>, vector<4x16xbf16>, vector<4x16xf32> -> vector<4x16xf32>
    %cst_215 = arith.constant dense<0.000000e+00> : vector<4x16xf32>
    %582 = tpu.matmul %580, %522, %cst_215 {dimension_numbers = #tpu.dot_dimension_numbers<[1], [0], [0], [1], [0, 0, 1, 1], [], []>} : vector<4x4xbf16>, vector<4x16xbf16>, vector<4x16xf32> -> vector<4x16xf32>
    %cst_216 = arith.constant dense<0.000000e+00> : vector<4x16xf32>
    %583 = tpu.matmul %580, %534, %cst_216 {dimension_numbers = #tpu.dot_dimension_numbers<[1], [0], [0], [1], [0, 0, 1, 1], [], []>} : vector<4x4xbf16>, vector<4x16xbf16>, vector<4x16xf32> -> vector<4x16xf32>
    %cst_217 = arith.constant dense<0.000000e+00> : vector<4x16xf32>
    %584 = tpu.matmul %580, %538, %cst_217 {dimension_numbers = #tpu.dot_dimension_numbers<[1], [0], [0], [1], [0, 0, 1, 1], [], []>} : vector<4x4xbf16>, vector<4x16xbf16>, vector<4x16xf32> -> vector<4x16xf32>
    %c1_218 = arith.constant 1 : index
    %c0_219 = arith.constant 0 : index
    %c0_220 = arith.constant 0 : index
    %585 = vector.load %arg11[%c1_218, %c0_219, %c0_220] : memref<9x4x4xbf16, #tpu.memory_space<vmem>>, vector<1x4x4xbf16>
    %586 = vector.shape_cast %585 : vector<1x4x4xbf16> to vector<4x4xbf16>
    %cst_221 = arith.constant dense<0.000000e+00> : vector<4x16xf32>
    %587 = tpu.matmul %586, %522, %cst_221 {dimension_numbers = #tpu.dot_dimension_numbers<[1], [0], [0], [1], [0, 0, 1, 1], [], []>} : vector<4x4xbf16>, vector<4x16xbf16>, vector<4x16xf32> -> vector<4x16xf32>
    %588 = arith.addf %581, %587 : vector<4x16xf32>
    %cst_222 = arith.constant dense<0.000000e+00> : vector<4x16xf32>
    %589 = tpu.matmul %586, %526, %cst_222 {dimension_numbers = #tpu.dot_dimension_numbers<[1], [0], [0], [1], [0, 0, 1, 1], [], []>} : vector<4x4xbf16>, vector<4x16xbf16>, vector<4x16xf32> -> vector<4x16xf32>
    %590 = arith.addf %582, %589 : vector<4x16xf32>
    %cst_223 = arith.constant dense<0.000000e+00> : vector<4x16xf32>
    %591 = tpu.matmul %586, %538, %cst_223 {dimension_numbers = #tpu.dot_dimension_numbers<[1], [0], [0], [1], [0, 0, 1, 1], [], []>} : vector<4x4xbf16>, vector<4x16xbf16>, vector<4x16xf32> -> vector<4x16xf32>
    %592 = arith.addf %583, %591 : vector<4x16xf32>
    %cst_224 = arith.constant dense<0.000000e+00> : vector<4x16xf32>
    %593 = tpu.matmul %586, %542, %cst_224 {dimension_numbers = #tpu.dot_dimension_numbers<[1], [0], [0], [1], [0, 0, 1, 1], [], []>} : vector<4x4xbf16>, vector<4x16xbf16>, vector<4x16xf32> -> vector<4x16xf32>
    %594 = arith.addf %584, %593 : vector<4x16xf32>
    %c2_225 = arith.constant 2 : index
    %c0_226 = arith.constant 0 : index
    %c0_227 = arith.constant 0 : index
    %595 = vector.load %arg11[%c2_225, %c0_226, %c0_227] : memref<9x4x4xbf16, #tpu.memory_space<vmem>>, vector<1x4x4xbf16>
    %596 = vector.shape_cast %595 : vector<1x4x4xbf16> to vector<4x4xbf16>
    %cst_228 = arith.constant dense<0.000000e+00> : vector<4x16xf32>
    %597 = tpu.matmul %596, %526, %cst_228 {dimension_numbers = #tpu.dot_dimension_numbers<[1], [0], [0], [1], [0, 0, 1, 1], [], []>} : vector<4x4xbf16>, vector<4x16xbf16>, vector<4x16xf32> -> vector<4x16xf32>
    %598 = arith.addf %588, %597 : vector<4x16xf32>
    %cst_229 = arith.constant dense<0.000000e+00> : vector<4x16xf32>
    %599 = tpu.matmul %596, %530, %cst_229 {dimension_numbers = #tpu.dot_dimension_numbers<[1], [0], [0], [1], [0, 0, 1, 1], [], []>} : vector<4x4xbf16>, vector<4x16xbf16>, vector<4x16xf32> -> vector<4x16xf32>
    %600 = arith.addf %590, %599 : vector<4x16xf32>
    %cst_230 = arith.constant dense<0.000000e+00> : vector<4x16xf32>
    %601 = tpu.matmul %596, %542, %cst_230 {dimension_numbers = #tpu.dot_dimension_numbers<[1], [0], [0], [1], [0, 0, 1, 1], [], []>} : vector<4x4xbf16>, vector<4x16xbf16>, vector<4x16xf32> -> vector<4x16xf32>
    %602 = arith.addf %592, %601 : vector<4x16xf32>
    %cst_231 = arith.constant dense<0.000000e+00> : vector<4x16xf32>
    %603 = tpu.matmul %596, %546, %cst_231 {dimension_numbers = #tpu.dot_dimension_numbers<[1], [0], [0], [1], [0, 0, 1, 1], [], []>} : vector<4x4xbf16>, vector<4x16xbf16>, vector<4x16xf32> -> vector<4x16xf32>
    %604 = arith.addf %594, %603 : vector<4x16xf32>
    %c3_232 = arith.constant 3 : index
    %c0_233 = arith.constant 0 : index
    %c0_234 = arith.constant 0 : index
    %605 = vector.load %arg11[%c3_232, %c0_233, %c0_234] : memref<9x4x4xbf16, #tpu.memory_space<vmem>>, vector<1x4x4xbf16>
    %606 = vector.shape_cast %605 : vector<1x4x4xbf16> to vector<4x4xbf16>
    %cst_235 = arith.constant dense<0.000000e+00> : vector<4x16xf32>
    %607 = tpu.matmul %606, %534, %cst_235 {dimension_numbers = #tpu.dot_dimension_numbers<[1], [0], [0], [1], [0, 0, 1, 1], [], []>} : vector<4x4xbf16>, vector<4x16xbf16>, vector<4x16xf32> -> vector<4x16xf32>
    %608 = arith.addf %598, %607 : vector<4x16xf32>
    %cst_236 = arith.constant dense<0.000000e+00> : vector<4x16xf32>
    %609 = tpu.matmul %606, %538, %cst_236 {dimension_numbers = #tpu.dot_dimension_numbers<[1], [0], [0], [1], [0, 0, 1, 1], [], []>} : vector<4x4xbf16>, vector<4x16xbf16>, vector<4x16xf32> -> vector<4x16xf32>
    %610 = arith.addf %600, %609 : vector<4x16xf32>
    %cst_237 = arith.constant dense<0.000000e+00> : vector<4x16xf32>
    %611 = tpu.matmul %606, %550, %cst_237 {dimension_numbers = #tpu.dot_dimension_numbers<[1], [0], [0], [1], [0, 0, 1, 1], [], []>} : vector<4x4xbf16>, vector<4x16xbf16>, vector<4x16xf32> -> vector<4x16xf32>
    %612 = arith.addf %602, %611 : vector<4x16xf32>
    %cst_238 = arith.constant dense<0.000000e+00> : vector<4x16xf32>
    %613 = tpu.matmul %606, %554, %cst_238 {dimension_numbers = #tpu.dot_dimension_numbers<[1], [0], [0], [1], [0, 0, 1, 1], [], []>} : vector<4x4xbf16>, vector<4x16xbf16>, vector<4x16xf32> -> vector<4x16xf32>
    %614 = arith.addf %604, %613 : vector<4x16xf32>
    %c4_239 = arith.constant 4 : index
    %c0_240 = arith.constant 0 : index
    %c0_241 = arith.constant 0 : index
    %615 = vector.load %arg11[%c4_239, %c0_240, %c0_241] : memref<9x4x4xbf16, #tpu.memory_space<vmem>>, vector<1x4x4xbf16>
    %616 = vector.shape_cast %615 : vector<1x4x4xbf16> to vector<4x4xbf16>
    %cst_242 = arith.constant dense<0.000000e+00> : vector<4x16xf32>
    %617 = tpu.matmul %616, %538, %cst_242 {dimension_numbers = #tpu.dot_dimension_numbers<[1], [0], [0], [1], [0, 0, 1, 1], [], []>} : vector<4x4xbf16>, vector<4x16xbf16>, vector<4x16xf32> -> vector<4x16xf32>
    %618 = arith.addf %608, %617 : vector<4x16xf32>
    %cst_243 = arith.constant dense<0.000000e+00> : vector<4x16xf32>
    %619 = tpu.matmul %616, %542, %cst_243 {dimension_numbers = #tpu.dot_dimension_numbers<[1], [0], [0], [1], [0, 0, 1, 1], [], []>} : vector<4x4xbf16>, vector<4x16xbf16>, vector<4x16xf32> -> vector<4x16xf32>
    %620 = arith.addf %610, %619 : vector<4x16xf32>
    %cst_244 = arith.constant dense<0.000000e+00> : vector<4x16xf32>
    %621 = tpu.matmul %616, %554, %cst_244 {dimension_numbers = #tpu.dot_dimension_numbers<[1], [0], [0], [1], [0, 0, 1, 1], [], []>} : vector<4x4xbf16>, vector<4x16xbf16>, vector<4x16xf32> -> vector<4x16xf32>
    %622 = arith.addf %612, %621 : vector<4x16xf32>
    %cst_245 = arith.constant dense<0.000000e+00> : vector<4x16xf32>
    %623 = tpu.matmul %616, %558, %cst_245 {dimension_numbers = #tpu.dot_dimension_numbers<[1], [0], [0], [1], [0, 0, 1, 1], [], []>} : vector<4x4xbf16>, vector<4x16xbf16>, vector<4x16xf32> -> vector<4x16xf32>
    %624 = arith.addf %614, %623 : vector<4x16xf32>
    %c5_246 = arith.constant 5 : index
    %c0_247 = arith.constant 0 : index
    %c0_248 = arith.constant 0 : index
    %625 = vector.load %arg11[%c5_246, %c0_247, %c0_248] : memref<9x4x4xbf16, #tpu.memory_space<vmem>>, vector<1x4x4xbf16>
    %626 = vector.shape_cast %625 : vector<1x4x4xbf16> to vector<4x4xbf16>
    %cst_249 = arith.constant dense<0.000000e+00> : vector<4x16xf32>
    %627 = tpu.matmul %626, %542, %cst_249 {dimension_numbers = #tpu.dot_dimension_numbers<[1], [0], [0], [1], [0, 0, 1, 1], [], []>} : vector<4x4xbf16>, vector<4x16xbf16>, vector<4x16xf32> -> vector<4x16xf32>
    %628 = arith.addf %618, %627 : vector<4x16xf32>
    %cst_250 = arith.constant dense<0.000000e+00> : vector<4x16xf32>
    %629 = tpu.matmul %626, %546, %cst_250 {dimension_numbers = #tpu.dot_dimension_numbers<[1], [0], [0], [1], [0, 0, 1, 1], [], []>} : vector<4x4xbf16>, vector<4x16xbf16>, vector<4x16xf32> -> vector<4x16xf32>
    %630 = arith.addf %620, %629 : vector<4x16xf32>
    %cst_251 = arith.constant dense<0.000000e+00> : vector<4x16xf32>
    %631 = tpu.matmul %626, %558, %cst_251 {dimension_numbers = #tpu.dot_dimension_numbers<[1], [0], [0], [1], [0, 0, 1, 1], [], []>} : vector<4x4xbf16>, vector<4x16xbf16>, vector<4x16xf32> -> vector<4x16xf32>
    %632 = arith.addf %622, %631 : vector<4x16xf32>
    %cst_252 = arith.constant dense<0.000000e+00> : vector<4x16xf32>
    %633 = tpu.matmul %626, %562, %cst_252 {dimension_numbers = #tpu.dot_dimension_numbers<[1], [0], [0], [1], [0, 0, 1, 1], [], []>} : vector<4x4xbf16>, vector<4x16xbf16>, vector<4x16xf32> -> vector<4x16xf32>
    %634 = arith.addf %624, %633 : vector<4x16xf32>
    %c6_253 = arith.constant 6 : index
    %c0_254 = arith.constant 0 : index
    %c0_255 = arith.constant 0 : index
    %635 = vector.load %arg11[%c6_253, %c0_254, %c0_255] : memref<9x4x4xbf16, #tpu.memory_space<vmem>>, vector<1x4x4xbf16>
    %636 = vector.shape_cast %635 : vector<1x4x4xbf16> to vector<4x4xbf16>
    %cst_256 = arith.constant dense<0.000000e+00> : vector<4x16xf32>
    %637 = tpu.matmul %636, %550, %cst_256 {dimension_numbers = #tpu.dot_dimension_numbers<[1], [0], [0], [1], [0, 0, 1, 1], [], []>} : vector<4x4xbf16>, vector<4x16xbf16>, vector<4x16xf32> -> vector<4x16xf32>
    %638 = arith.addf %628, %637 : vector<4x16xf32>
    %cst_257 = arith.constant dense<0.000000e+00> : vector<4x16xf32>
    %639 = tpu.matmul %636, %554, %cst_257 {dimension_numbers = #tpu.dot_dimension_numbers<[1], [0], [0], [1], [0, 0, 1, 1], [], []>} : vector<4x4xbf16>, vector<4x16xbf16>, vector<4x16xf32> -> vector<4x16xf32>
    %640 = arith.addf %630, %639 : vector<4x16xf32>
    %cst_258 = arith.constant dense<0.000000e+00> : vector<4x16xf32>
    %641 = tpu.matmul %636, %566, %cst_258 {dimension_numbers = #tpu.dot_dimension_numbers<[1], [0], [0], [1], [0, 0, 1, 1], [], []>} : vector<4x4xbf16>, vector<4x16xbf16>, vector<4x16xf32> -> vector<4x16xf32>
    %642 = arith.addf %632, %641 : vector<4x16xf32>
    %cst_259 = arith.constant dense<0.000000e+00> : vector<4x16xf32>
    %643 = tpu.matmul %636, %570, %cst_259 {dimension_numbers = #tpu.dot_dimension_numbers<[1], [0], [0], [1], [0, 0, 1, 1], [], []>} : vector<4x4xbf16>, vector<4x16xbf16>, vector<4x16xf32> -> vector<4x16xf32>
    %644 = arith.addf %634, %643 : vector<4x16xf32>
    %c7_260 = arith.constant 7 : index
    %c0_261 = arith.constant 0 : index
    %c0_262 = arith.constant 0 : index
    %645 = vector.load %arg11[%c7_260, %c0_261, %c0_262] : memref<9x4x4xbf16, #tpu.memory_space<vmem>>, vector<1x4x4xbf16>
    %646 = vector.shape_cast %645 : vector<1x4x4xbf16> to vector<4x4xbf16>
    %cst_263 = arith.constant dense<0.000000e+00> : vector<4x16xf32>
    %647 = tpu.matmul %646, %554, %cst_263 {dimension_numbers = #tpu.dot_dimension_numbers<[1], [0], [0], [1], [0, 0, 1, 1], [], []>} : vector<4x4xbf16>, vector<4x16xbf16>, vector<4x16xf32> -> vector<4x16xf32>
    %648 = arith.addf %638, %647 : vector<4x16xf32>
    %cst_264 = arith.constant dense<0.000000e+00> : vector<4x16xf32>
    %649 = tpu.matmul %646, %558, %cst_264 {dimension_numbers = #tpu.dot_dimension_numbers<[1], [0], [0], [1], [0, 0, 1, 1], [], []>} : vector<4x4xbf16>, vector<4x16xbf16>, vector<4x16xf32> -> vector<4x16xf32>
    %650 = arith.addf %640, %649 : vector<4x16xf32>
    %cst_265 = arith.constant dense<0.000000e+00> : vector<4x16xf32>
    %651 = tpu.matmul %646, %570, %cst_265 {dimension_numbers = #tpu.dot_dimension_numbers<[1], [0], [0], [1], [0, 0, 1, 1], [], []>} : vector<4x4xbf16>, vector<4x16xbf16>, vector<4x16xf32> -> vector<4x16xf32>
    %652 = arith.addf %642, %651 : vector<4x16xf32>
    %cst_266 = arith.constant dense<0.000000e+00> : vector<4x16xf32>
    %653 = tpu.matmul %646, %574, %cst_266 {dimension_numbers = #tpu.dot_dimension_numbers<[1], [0], [0], [1], [0, 0, 1, 1], [], []>} : vector<4x4xbf16>, vector<4x16xbf16>, vector<4x16xf32> -> vector<4x16xf32>
    %654 = arith.addf %644, %653 : vector<4x16xf32>
    %c8_267 = arith.constant 8 : index
    %c0_268 = arith.constant 0 : index
    %c0_269 = arith.constant 0 : index
    %655 = vector.load %arg11[%c8_267, %c0_268, %c0_269] : memref<9x4x4xbf16, #tpu.memory_space<vmem>>, vector<1x4x4xbf16>
    %656 = vector.shape_cast %655 : vector<1x4x4xbf16> to vector<4x4xbf16>
    %cst_270 = arith.constant dense<0.000000e+00> : vector<4x16xf32>
    %657 = tpu.matmul %656, %558, %cst_270 {dimension_numbers = #tpu.dot_dimension_numbers<[1], [0], [0], [1], [0, 0, 1, 1], [], []>} : vector<4x4xbf16>, vector<4x16xbf16>, vector<4x16xf32> -> vector<4x16xf32>
    %658 = arith.addf %648, %657 : vector<4x16xf32>
    %cst_271 = arith.constant dense<0.000000e+00> : vector<4x16xf32>
    %659 = tpu.matmul %656, %562, %cst_271 {dimension_numbers = #tpu.dot_dimension_numbers<[1], [0], [0], [1], [0, 0, 1, 1], [], []>} : vector<4x4xbf16>, vector<4x16xbf16>, vector<4x16xf32> -> vector<4x16xf32>
    %660 = arith.addf %650, %659 : vector<4x16xf32>
    %cst_272 = arith.constant dense<0.000000e+00> : vector<4x16xf32>
    %661 = tpu.matmul %656, %574, %cst_272 {dimension_numbers = #tpu.dot_dimension_numbers<[1], [0], [0], [1], [0, 0, 1, 1], [], []>} : vector<4x4xbf16>, vector<4x16xbf16>, vector<4x16xf32> -> vector<4x16xf32>
    %662 = arith.addf %652, %661 : vector<4x16xf32>
    %cst_273 = arith.constant dense<0.000000e+00> : vector<4x16xf32>
    %663 = tpu.matmul %656, %578, %cst_273 {dimension_numbers = #tpu.dot_dimension_numbers<[1], [0], [0], [1], [0, 0, 1, 1], [], []>} : vector<4x4xbf16>, vector<4x16xbf16>, vector<4x16xf32> -> vector<4x16xf32>
    %664 = arith.addf %654, %663 : vector<4x16xf32>
    %cst_274 = arith.constant 2.000000e-01 : f32
    %665 = vector.broadcast %cst_274 : f32 to vector<4x16xf32>
    %666 = arith.mulf %665, %658 : vector<4x16xf32>
    %667 = arith.maximumf %658, %666 : vector<4x16xf32>
    %668 = arith.truncf %667 : vector<4x16xf32> to vector<4x16xbf16>
    %cst_275 = arith.constant 2.000000e-01 : f32
    %669 = vector.broadcast %cst_275 : f32 to vector<4x16xf32>
    %670 = arith.mulf %669, %660 : vector<4x16xf32>
    %671 = arith.maximumf %660, %670 : vector<4x16xf32>
    %672 = arith.truncf %671 : vector<4x16xf32> to vector<4x16xbf16>
    %cst_276 = arith.constant 2.000000e-01 : f32
    %673 = vector.broadcast %cst_276 : f32 to vector<4x16xf32>
    %674 = arith.mulf %673, %662 : vector<4x16xf32>
    %675 = arith.maximumf %662, %674 : vector<4x16xf32>
    %676 = arith.truncf %675 : vector<4x16xf32> to vector<4x16xbf16>
    %cst_277 = arith.constant 2.000000e-01 : f32
    %677 = vector.broadcast %cst_277 : f32 to vector<4x16xf32>
    %678 = arith.mulf %677, %664 : vector<4x16xf32>
    %679 = arith.maximumf %664, %678 : vector<4x16xf32>
    %680 = arith.truncf %679 : vector<4x16xf32> to vector<4x16xbf16>
    %c0_278 = arith.constant 0 : index
    %c0_279 = arith.constant 0 : index
    %c0_280 = arith.constant 0 : index
    %681 = vector.load %arg12[%c0_278, %c0_279, %c0_280] : memref<4x8x4xbf16, #tpu.memory_space<vmem>>, vector<1x8x4xbf16>
    %682 = vector.shape_cast %681 : vector<1x8x4xbf16> to vector<8x4xbf16>
    %cst_281 = arith.constant dense<0.000000e+00> : vector<8x16xf32>
    %683 = tpu.matmul %682, %668, %cst_281 {dimension_numbers = #tpu.dot_dimension_numbers<[1], [0], [0], [1], [0, 0, 1, 1], [], []>} : vector<8x4xbf16>, vector<4x16xbf16>, vector<8x16xf32> -> vector<8x16xf32>
    %c1_282 = arith.constant 1 : index
    %c0_283 = arith.constant 0 : index
    %c0_284 = arith.constant 0 : index
    %684 = vector.load %arg12[%c1_282, %c0_283, %c0_284] : memref<4x8x4xbf16, #tpu.memory_space<vmem>>, vector<1x8x4xbf16>
    %685 = vector.shape_cast %684 : vector<1x8x4xbf16> to vector<8x4xbf16>
    %cst_285 = arith.constant dense<0.000000e+00> : vector<8x16xf32>
    %686 = tpu.matmul %685, %672, %cst_285 {dimension_numbers = #tpu.dot_dimension_numbers<[1], [0], [0], [1], [0, 0, 1, 1], [], []>} : vector<8x4xbf16>, vector<4x16xbf16>, vector<8x16xf32> -> vector<8x16xf32>
    %687 = arith.addf %683, %686 : vector<8x16xf32>
    %c2_286 = arith.constant 2 : index
    %c0_287 = arith.constant 0 : index
    %c0_288 = arith.constant 0 : index
    %688 = vector.load %arg12[%c2_286, %c0_287, %c0_288] : memref<4x8x4xbf16, #tpu.memory_space<vmem>>, vector<1x8x4xbf16>
    %689 = vector.shape_cast %688 : vector<1x8x4xbf16> to vector<8x4xbf16>
    %cst_289 = arith.constant dense<0.000000e+00> : vector<8x16xf32>
    %690 = tpu.matmul %689, %676, %cst_289 {dimension_numbers = #tpu.dot_dimension_numbers<[1], [0], [0], [1], [0, 0, 1, 1], [], []>} : vector<8x4xbf16>, vector<4x16xbf16>, vector<8x16xf32> -> vector<8x16xf32>
    %691 = arith.addf %687, %690 : vector<8x16xf32>
    %c3_290 = arith.constant 3 : index
    %c0_291 = arith.constant 0 : index
    %c0_292 = arith.constant 0 : index
    %692 = vector.load %arg12[%c3_290, %c0_291, %c0_292] : memref<4x8x4xbf16, #tpu.memory_space<vmem>>, vector<1x8x4xbf16>
    %693 = vector.shape_cast %692 : vector<1x8x4xbf16> to vector<8x4xbf16>
    %cst_293 = arith.constant dense<0.000000e+00> : vector<8x16xf32>
    %694 = tpu.matmul %693, %680, %cst_293 {dimension_numbers = #tpu.dot_dimension_numbers<[1], [0], [0], [1], [0, 0, 1, 1], [], []>} : vector<8x4xbf16>, vector<4x16xbf16>, vector<8x16xf32> -> vector<8x16xf32>
    %695 = arith.addf %691, %694 : vector<8x16xf32>
    %cst_294 = arith.constant 2.000000e-01 : f32
    %696 = vector.broadcast %cst_294 : f32 to vector<8x16xf32>
    %697 = arith.mulf %696, %695 : vector<8x16xf32>
    %698 = arith.maximumf %695, %697 : vector<8x16xf32>
    %c0_295 = arith.constant 0 : index
    %c0_296 = arith.constant 0 : index
    %c0_297 = arith.constant 0 : index
    %699 = vector.load %arg13[%c0_295, %c0_296, %c0_297] : memref<1x8x16xf32, #tpu.memory_space<vmem>>, vector<1x8x16xf32>
    %700 = vector.shape_cast %699 : vector<1x8x16xf32> to vector<8x16xf32>
    %701 = vector.shape_cast %698 : vector<8x16xf32> to vector<1x8x16xf32>
    tpu.vector_store %arg13[%c0_295, %c0_296, %c0_297], %701 {strides = array<i32>} : memref<1x8x16xf32, #tpu.memory_space<vmem>>, vector<1x8x16xf32>,
    return
  }
  func.func @transform_0(%arg0: i32, %arg1: i32) -> (i32, i32, i32, i32) {
    %c0_i32 = arith.constant 0 : i32
    %c0_i32_0 = arith.constant 0 : i32
    %c0_i32_1 = arith.constant 0 : i32
    return %arg0, %arg1, %c0_i32, %c0_i32_0 : i32, i32, i32, i32
  }
  func.func @transform_1(%arg0: i32, %arg1: i32) -> (i32, i32, i32, i32) {
    %c0_i32 = arith.constant 0 : i32
    %c0_i32_0 = arith.constant 0 : i32
    %c0_i32_1 = arith.constant 0 : i32
    return %arg0, %c0_i32, %c0_i32_0, %arg1 : i32, i32, i32, i32
  }
  func.func @transform_2(%arg0: i32, %arg1: i32) -> (i32, i32) {
    %c0_i32 = arith.constant 0 : i32
    %c0_i32_0 = arith.constant 0 : i32
    %c0_i32_1 = arith.constant 0 : i32
    return %c0_i32, %c0_i32_0 : i32, i32
  }
  func.func @transform_3(%arg0: i32, %arg1: i32) -> (i32, i32) {
    %c0_i32 = arith.constant 0 : i32
    %c0_i32_0 = arith.constant 0 : i32
    %c0_i32_1 = arith.constant 0 : i32
    return %c0_i32, %c0_i32_0 : i32, i32
  }
  func.func @transform_4(%arg0: i32, %arg1: i32) -> (i32, i32) {
    %c0_i32 = arith.constant 0 : i32
    %c0_i32_0 = arith.constant 0 : i32
    %c0_i32_1 = arith.constant 0 : i32
    return %c0_i32, %c0_i32_0 : i32, i32
  }
  func.func @transform_5(%arg0: i32, %arg1: i32) -> (i32, i32) {
    %c0_i32 = arith.constant 0 : i32
    %c0_i32_0 = arith.constant 0 : i32
    %c0_i32_1 = arith.constant 0 : i32
    return %c0_i32, %c0_i32_0 : i32, i32
  }
  func.func @transform_6(%arg0: i32, %arg1: i32) -> (i32, i32) {
    %c0_i32 = arith.constant 0 : i32
    %c0_i32_0 = arith.constant 0 : i32
    %c0_i32_1 = arith.constant 0 : i32
    return %c0_i32, %c0_i32_0 : i32, i32
  }
  func.func @transform_7(%arg0: i32, %arg1: i32) -> (i32, i32) {
    %c0_i32 = arith.constant 0 : i32
    %c0_i32_0 = arith.constant 0 : i32
    %c0_i32_1 = arith.constant 0 : i32
    return %c0_i32, %c0_i32_0 : i32, i32
  }
  func.func @transform_8(%arg0: i32, %arg1: i32) -> (i32, i32, i32) {
    %c0_i32 = arith.constant 0 : i32
    %c0_i32_0 = arith.constant 0 : i32
    %c0_i32_1 = arith.constant 0 : i32
    %c0_i32_2 = arith.constant 0 : i32
    return %c0_i32, %c0_i32_0, %c0_i32_1 : i32, i32, i32
  }
  func.func @transform_9(%arg0: i32, %arg1: i32) -> (i32, i32, i32) {
    %c0_i32 = arith.constant 0 : i32
    %c0_i32_0 = arith.constant 0 : i32
    %c0_i32_1 = arith.constant 0 : i32
    %c0_i32_2 = arith.constant 0 : i32
    return %c0_i32, %c0_i32_0, %c0_i32_1 : i32, i32, i32
  }
  func.func @transform_10(%arg0: i32, %arg1: i32) -> (i32, i32, i32) {
    %c0_i32 = arith.constant 0 : i32
    %c0_i32_0 = arith.constant 0 : i32
    %c0_i32_1 = arith.constant 0 : i32
    %c0_i32_2 = arith.constant 0 : i32
    return %c0_i32, %c0_i32_0, %c0_i32_1 : i32, i32, i32
  }
  func.func @transform_11(%arg0: i32, %arg1: i32) -> (i32, i32, i32) {
    %c0_i32 = arith.constant 0 : i32
    %c0_i32_0 = arith.constant 0 : i32
    return %arg0, %c0_i32, %arg1 : i32, i32, i32
  }
}

</mosaic_0001>

<llo_original>
// kernel: tpu_custom_call.1
$region0: #{tpu_custom_call.1}
  #allocation0 [shape = 'u32[]', space=smem, size = 0x4, offset = 0x4, fixed_abs, tag = 'smem constant byte address 0x4 - core index']
  #allocation1 [shape = 'u32[72,128]{1,0:T(1,128)}', space=vmem, size = 0x9000, scoped, tag = 'internal scratch']
  %s0 = inlined_call_operand.vmem [shape: bf16[2,1,3,128], index: 0, kind: input, shape index: {}]
  %s1 = inlined_call_operand.vmem [shape: bf16[2,8,4,16], index: 1, kind: input, shape index: {}]
  %s2 = inlined_call_operand.vmem [shape: bf16[8,3], index: 2, kind: input, shape index: {}]
  %s3 = inlined_call_operand.vmem [shape: bf16[16,8], index: 3, kind: input, shape index: {}]
  %s4 = inlined_call_operand.vmem [shape: bf16[16,16], index: 4, kind: input, shape index: {}]
  %s5 = inlined_call_operand.vmem [shape: bf16[32,16], index: 5, kind: input, shape index: {}]
  %s6 = inlined_call_operand.vmem [shape: bf16[36,32], index: 6, kind: input, shape index: {}]
  %s7 = inlined_call_operand.vmem [shape: f32[4,1], index: 7, kind: input, shape index: {}]
  %s8 = inlined_call_operand.vmem [shape: bf16[9,4,4], index: 8, kind: input, shape index: {}]
  %s9 = inlined_call_operand.vmem [shape: bf16[9,4,4], index: 9, kind: input, shape index: {}]
  %s10 = inlined_call_operand.vmem [shape: bf16[4,8,4], index: 10, kind: input, shape index: {}]
  %s11 = inlined_call_operand.hbm [shape: f32[2,8,16], index: 11, kind: output, shape index: {}]
  %s12 = sld [smem:[#allocation0]]
  $region77: #{tpu_custom_call.1} parent=0
    _
  %s14 = ssub.s32 1, %s12
  %s15 = scalar_select 0, %s14, %s12
  $region1: #{tpu_custom_call.1} parent=0
    #allocation2 [shape = 'u8[8192]{0}', space=vmem, size = 0x2000, scoped, tag = 'output window, operand 0']
    #allocation3 [shape = 's32[2]{0}', space=sflag, size = 0x8, scoped, tag = 'scoped memory for tpu_custom_call.1']
    %16 = vsyncpa [#allocation3], 0
    %s17 = scalar_lea.sflag [#allocation3], 1
    %18 = vsyncpa %s17, 0
    loop: start=0, step=1, limit=4
    $region2: #{tpu_custom_call.1} parent=1 // loop_pre_header
      _
    $region3: #{tpu_custom_call.1} parent=1 // loop_header
      %s20 = sphi 0, %s24
      %p21 = scmp.ge.s32.totalorder %s20, 4
      %s27 = sphi 0, %s39
      %s28 = sphi 0, %s35
      %s29 = sphi 0, %s27
      %s30 = sphi 0, %s28
      %s31 = sphi 0, %s29
      %s32 = sphi 0, %s30
      %s44 = sphi 0, %s46
      %s47 = sphi 0, %s44
      %s48 = sphi 0, %s47
      %s64 = sphi 0, %s48
      %s72 = sphi 0, %s74
      %s75 = sphi 0, %s72
      %s76 = sphi 0, %s75
      %s92 = sphi 0, %s76
      %s96 = sphi 0, %s96
      %s98 = sphi 0, %s96
      %s99 = sphi 0, %s98
      %s113 = sphi 0, %s99
      %s117 = sphi 0, %s117
      %s119 = sphi 0, %s117
      %s120 = sphi 0, %s119
      %s134 = sphi 0, %s120
      %s138 = sphi 0, %s138
      %s140 = sphi 0, %s138
      %s141 = sphi 0, %s140
      %s155 = sphi 0, %s141
      %s159 = sphi 0, %s159
      %s161 = sphi 0, %s159
      %s162 = sphi 0, %s161
      %s176 = sphi 0, %s162
      %s180 = sphi 0, %s180
      %s182 = sphi 0, %s180
      %s183 = sphi 0, %s182
      %s197 = sphi 0, %s183
      %s201 = sphi 0, %s201
      %s203 = sphi 0, %s201
      %s204 = sphi 0, %s203
      %s218 = sphi 0, %s204
      %s222 = sphi 0, %s222
      %s224 = sphi 0, %s222
      %s225 = sphi 0, %s224
      %s239 = sphi 0, %s225
      %s243 = sphi 0, %s243
      %s245 = sphi 0, %s243
      %s246 = sphi 0, %s245
      %s260 = sphi 0, %s246
      %s264 = sphi 0, %s264
      %s266 = sphi 0, %s264
      %s267 = sphi 0, %s266
      %s281 = sphi 0, %s267
      %s289 = sphi 0, %s291
      %s292 = sphi 0, %s289
      %s293 = sphi 0, %s292
      %s309 = sphi 0, %s293
    $region4: #{tpu_custom_call.1} parent=1 // loop_header_branch
      %23 = sbr.rel (%p21) target = $region8
    $region5: #{tpu_custom_call.1} parent=1 // loop_body
      %s25 = ssub.s32 %s20, 1
      %s26 = ssub.s32 %s20, 2
      %s33 = sadd.s32 1, %s28
      %p34 = scmp.ge.s32.totalorder %s33, 1
      %s35 = scalar_select %p34, 0, %s33
      %s36 = sadd.s32 1, %s27
      %s37 = scalar_select %p34, %s36, %s27
      %p38 = scmp.ge.s32.totalorder %s37, 2
      %s39 = scalar_select %p38, 0, %s37
      %s40 = ssub.s32 %s27, %s39
      %s41 = ssub.s32 %s28, %s35
      %s42 = sor.u32 %s40, %s41
      %p43 = scmp.eq.s32.totalorder %s42, 0
      %s45 = sadd.s32 %s44, 1
      %s46 = scalar_select %p43, %s44, %s45
      %p49 = pneg %p43
      %p50 = scmp.eq.s32.totalorder %s20, 1
      %p51 = por %p49, %p50
      %p52 = scmp.ne.s32.totalorder %s44, %s47
      %p53 = scmp.eq.s32.totalorder %s20, 0
      %p54 = por %p52, %p53
      %p55 = scmp.ne.s32.totalorder %s44, %s47
      %p56 = scmp.eq.s32.totalorder %s25, 1
      %p57 = por %p55, %p56
      %p58 = scmp.ne.s32.totalorder %s47, %s48
      %p59 = scmp.eq.s32.totalorder %s25, 0
      %p60 = por %p58, %p59
      %p61 = scmp.ne.s32.totalorder %s47, %s48
      %p62 = scmp.eq.s32.totalorder %s26, 1
      %p63 = por %p61, %p62
      %p65 = scmp.ne.s32.totalorder %s48, %s64
      %p66 = scmp.eq.s32.totalorder %s26, 0
      %p67 = por %p65, %p66
      %s68 = ssub.s32 %s27, %s39
      %s69 = ssub.s32 %s28, %s35
      %s70 = sor.u32 %s68, %s69
      %p71 = scmp.eq.s32.totalorder %s70, 0
      %s73 = sadd.s32 %s72, 1
      %s74 = scalar_select %p71, %s72, %s73
      %p77 = pneg %p71
      %p78 = scmp.eq.s32.totalorder %s20, 1
      %p79 = por %p77, %p78
      %p80 = scmp.ne.s32.totalorder %s72, %s75
      %p81 = scmp.eq.s32.totalorder %s20, 0
      %p82 = por %p80, %p81
      %p83 = scmp.ne.s32.totalorder %s72, %s75
      %p84 = scmp.eq.s32.totalorder %s25, 1
      %p85 = por %p83, %p84
      %p86 = scmp.ne.s32.totalorder %s75, %s76
      %p87 = scmp.eq.s32.totalorder %s25, 0
      %p88 = por %p86, %p87
      %p89 = scmp.ne.s32.totalorder %s75, %s76
      %p90 = scmp.eq.s32.totalorder %s26, 1
      %p91 = por %p89, %p90
      %p93 = scmp.ne.s32.totalorder %s76, %s92
      %p94 = scmp.eq.s32.totalorder %s26, 0
      %p95 = por %p93, %p94
      %s97 = sadd.s32 %s96, 1
      %p100 = scmp.eq.s32.totalorder %s20, 1
      %p101 = scmp.ne.s32.totalorder %s96, %s98
      %p102 = scmp.eq.s32.totalorder %s20, 0
      %p103 = por %p101, %p102
      %p104 = scmp.ne.s32.totalorder %s96, %s98
      %p105 = scmp.eq.s32.totalorder %s25, 1
      %p106 = por %p104, %p105
      %p107 = scmp.ne.s32.totalorder %s98, %s99
      %p108 = scmp.eq.s32.totalorder %s25, 0
      %p109 = por %p107, %p108
      %p110 = scmp.ne.s32.totalorder %s98, %s99
      %p111 = scmp.eq.s32.totalorder %s26, 1
      %p112 = por %p110, %p111
      %p114 = scmp.ne.s32.totalorder %s99, %s113
      %p115 = scmp.eq.s32.totalorder %s26, 0
      %p116 = por %p114, %p115
      %s118 = sadd.s32 %s117, 1
      %p121 = scmp.eq.s32.totalorder %s20, 1
      %p122 = scmp.ne.s32.totalorder %s117, %s119
      %p123 = scmp.eq.s32.totalorder %s20, 0
      %p124 = por %p122, %p123
      %p125 = scmp.ne.s32.totalorder %s117, %s119
      %p126 = scmp.eq.s32.totalorder %s25, 1
      %p127 = por %p125, %p126
      %p128 = scmp.ne.s32.totalorder %s119, %s120
      %p129 = scmp.eq.s32.totalorder %s25, 0
      %p130 = por %p128, %p129
      %p131 = scmp.ne.s32.totalorder %s119, %s120
      %p132 = scmp.eq.s32.totalorder %s26, 1
      %p133 = por %p131, %p132
      %p135 = scmp.ne.s32.totalorder %s120, %s134
      %p136 = scmp.eq.s32.totalorder %s26, 0
      %p137 = por %p135, %p136
      %s139 = sadd.s32 %s138, 1
      %p142 = scmp.eq.s32.totalorder %s20, 1
      %p143 = scmp.ne.s32.totalorder %s138, %s140
      %p144 = scmp.eq.s32.totalorder %s20, 0
      %p145 = por %p143, %p144
      %p146 = scmp.ne.s32.totalorder %s138, %s140
      %p147 = scmp.eq.s32.totalorder %s25, 1
      %p148 = por %p146, %p147
      %p149 = scmp.ne.s32.totalorder %s140, %s141
      %p150 = scmp.eq.s32.totalorder %s25, 0
      %p151 = por %p149, %p150
      %p152 = scmp.ne.s32.totalorder %s140, %s141
      %p153 = scmp.eq.s32.totalorder %s26, 1
      %p154 = por %p152, %p153
      %p156 = scmp.ne.s32.totalorder %s141, %s155
      %p157 = scmp.eq.s32.totalorder %s26, 0
      %p158 = por %p156, %p157
      %s160 = sadd.s32 %s159, 1
      %p163 = scmp.eq.s32.totalorder %s20, 1
      %p164 = scmp.ne.s32.totalorder %s159, %s161
      %p165 = scmp.eq.s32.totalorder %s20, 0
      %p166 = por %p164, %p165
      %p167 = scmp.ne.s32.totalorder %s159, %s161
      %p168 = scmp.eq.s32.totalorder %s25, 1
      %p169 = por %p167, %p168
      %p170 = scmp.ne.s32.totalorder %s161, %s162
      %p171 = scmp.eq.s32.totalorder %s25, 0
      %p172 = por %p170, %p171
      %p173 = scmp.ne.s32.totalorder %s161, %s162
      %p174 = scmp.eq.s32.totalorder %s26, 1
      %p175 = por %p173, %p174
      %p177 = scmp.ne.s32.totalorder %s162, %s176
      %p178 = scmp.eq.s32.totalorder %s26, 0
      %p179 = por %p177, %p178
      %s181 = sadd.s32 %s180, 1
      %p184 = scmp.eq.s32.totalorder %s20, 1
      %p185 = scmp.ne.s32.totalorder %s180, %s182
      %p186 = scmp.eq.s32.totalorder %s20, 0
      %p187 = por %p185, %p186
      %p188 = scmp.ne.s32.totalorder %s180, %s182
      %p189 = scmp.eq.s32.totalorder %s25, 1
      %p190 = por %p188, %p189
      %p191 = scmp.ne.s32.totalorder %s182, %s183
      %p192 = scmp.eq.s32.totalorder %s25, 0
      %p193 = por %p191, %p192
      %p194 = scmp.ne.s32.totalorder %s182, %s183
      %p195 = scmp.eq.s32.totalorder %s26, 1
      %p196 = por %p194, %p195
      %p198 = scmp.ne.s32.totalorder %s183, %s197
      %p199 = scmp.eq.s32.totalorder %s26, 0
      %p200 = por %p198, %p199
      %s202 = sadd.s32 %s201, 1
      %p205 = scmp.eq.s32.totalorder %s20, 1
      %p206 = scmp.ne.s32.totalorder %s201, %s203
      %p207 = scmp.eq.s32.totalorder %s20, 0
      %p208 = por %p206, %p207
      %p209 = scmp.ne.s32.totalorder %s201, %s203
      %p210 = scmp.eq.s32.totalorder %s25, 1
      %p211 = por %p209, %p210
      %p212 = scmp.ne.s32.totalorder %s203, %s204
      %p213 = scmp.eq.s32.totalorder %s25, 0
      %p214 = por %p212, %p213
      %p215 = scmp.ne.s32.totalorder %s203, %s204
      %p216 = scmp.eq.s32.totalorder %s26, 1
      %p217 = por %p215, %p216
      %p219 = scmp.ne.s32.totalorder %s204, %s218
      %p220 = scmp.eq.s32.totalorder %s26, 0
      %p221 = por %p219, %p220
      %s223 = sadd.s32 %s222, 1
      %p226 = scmp.eq.s32.totalorder %s20, 1
      %p227 = scmp.ne.s32.totalorder %s222, %s224
      %p228 = scmp.eq.s32.totalorder %s20, 0
      %p229 = por %p227, %p228
      %p230 = scmp.ne.s32.totalorder %s222, %s224
      %p231 = scmp.eq.s32.totalorder %s25, 1
      %p232 = por %p230, %p231
      %p233 = scmp.ne.s32.totalorder %s224, %s225
      %p234 = scmp.eq.s32.totalorder %s25, 0
      %p235 = por %p233, %p234
      %p236 = scmp.ne.s32.totalorder %s224, %s225
      %p237 = scmp.eq.s32.totalorder %s26, 1
      %p238 = por %p236, %p237
      %p240 = scmp.ne.s32.totalorder %s225, %s239
      %p241 = scmp.eq.s32.totalorder %s26, 0
      %p242 = por %p240, %p241
      %s244 = sadd.s32 %s243, 1
      %p247 = scmp.eq.s32.totalorder %s20, 1
      %p248 = scmp.ne.s32.totalorder %s243, %s245
      %p249 = scmp.eq.s32.totalorder %s20, 0
      %p250 = por %p248, %p249
      %p251 = scmp.ne.s32.totalorder %s243, %s245
      %p252 = scmp.eq.s32.totalorder %s25, 1
      %p253 = por %p251, %p252
      %p254 = scmp.ne.s32.totalorder %s245, %s246
      %p255 = scmp.eq.s32.totalorder %s25, 0
      %p256 = por %p254, %p255
      %p257 = scmp.ne.s32.totalorder %s245, %s246
      %p258 = scmp.eq.s32.totalorder %s26, 1
      %p259 = por %p257, %p258
      %p261 = scmp.ne.s32.totalorder %s246, %s260
      %p262 = scmp.eq.s32.totalorder %s26, 0
      %p263 = por %p261, %p262
      %s265 = sadd.s32 %s264, 1
      %p268 = scmp.eq.s32.totalorder %s20, 1
      %p269 = scmp.ne.s32.totalorder %s264, %s266
      %p270 = scmp.eq.s32.totalorder %s20, 0
      %p271 = por %p269, %p270
      %p272 = scmp.ne.s32.totalorder %s264, %s266
      %p273 = scmp.eq.s32.totalorder %s25, 1
      %p274 = por %p272, %p273
      %p275 = scmp.ne.s32.totalorder %s266, %s267
      %p276 = scmp.eq.s32.totalorder %s25, 0
      %p277 = por %p275, %p276
      %p278 = scmp.ne.s32.totalorder %s266, %s267
      %p279 = scmp.eq.s32.totalorder %s26, 1
      %p280 = por %p278, %p279
      %p282 = scmp.ne.s32.totalorder %s267, %s281
      %p283 = scmp.eq.s32.totalorder %s26, 0
      %p284 = por %p282, %p283
      %s285 = ssub.s32 %s27, %s39
      %s286 = ssub.s32 %s28, %s35
      %s287 = sor.u32 %s285, %s286
      %p288 = scmp.eq.s32.totalorder %s287, 0
      %s290 = sadd.s32 %s289, 1
      %s291 = scalar_select %p288, %s289, %s290
      %p294 = pneg %p288
      %p295 = scmp.eq.s32.totalorder %s20, 1
      %p296 = por %p294, %p295
      %p297 = scmp.ne.s32.totalorder %s289, %s292
      %p298 = scmp.eq.s32.totalorder %s20, 0
      %p299 = por %p297, %p298
      %p300 = scmp.ne.s32.totalorder %s289, %s292
      %p301 = scmp.eq.s32.totalorder %s25, 1
      %p302 = por %p300, %p301
      %p303 = scmp.ne.s32.totalorder %s292, %s293
      %p304 = scmp.eq.s32.totalorder %s25, 0
      %p305 = por %p303, %p304
      %p306 = scmp.ne.s32.totalorder %s292, %s293
      %p307 = scmp.eq.s32.totalorder %s26, 1
      %p308 = por %p306, %p307
      %p310 = scmp.ne.s32.totalorder %s293, %s309
      %p311 = scmp.eq.s32.totalorder %s26, 0
      %p312 = por %p310, %p311
      %p313 = scmp.le.s32.totalorder 1, %s20
      %p314 = scmp.lt.s32.totalorder %s20, 3
      %p315 = pnand %p313, %p314
      %p316 = pneg %p315
      // Predicated region
      $region9: #{tpu_custom_call.1} parent=5 // pred_check
        _
      $region10: #{tpu_custom_call.1} parent=5 // pred_check_branch
        %318 = sbr.rel (%p315) target = $region12
      $region11: #{tpu_custom_call.1} parent=5 // pred_region
        %s319 = ssub.s32 %s20, 1
        // Predicated region
        $region13: #{tpu_custom_call.1} parent=11 // pred_check
          %p320 = pneg %p109
        $region14: #{tpu_custom_call.1} parent=11 // pred_check_branch
          %322 = sbr.rel (%p320) target = $region16
        $region15: #{tpu_custom_call.1} parent=11 // pred_region
          _
        $region16: #{tpu_custom_call.1} parent=11 // pred_fallthru
          _
        // Predicated region
        $region17: #{tpu_custom_call.1} parent=11 // pred_check
          %p323 = pneg %p130
        $region18: #{tpu_custom_call.1} parent=11 // pred_check_branch
          %325 = sbr.rel (%p323) target = $region20
        $region19: #{tpu_custom_call.1} parent=11 // pred_region
          _
        $region20: #{tpu_custom_call.1} parent=11 // pred_fallthru
          _
        // Predicated region
        $region21: #{tpu_custom_call.1} parent=11 // pred_check
          %p326 = pneg %p151
        $region22: #{tpu_custom_call.1} parent=11 // pred_check_branch
          %328 = sbr.rel (%p326) target = $region24
        $region23: #{tpu_custom_call.1} parent=11 // pred_region
          _
        $region24: #{tpu_custom_call.1} parent=11 // pred_fallthru
          _
        // Predicated region
        $region25: #{tpu_custom_call.1} parent=11 // pred_check
          %p329 = pneg %p172
        $region26: #{tpu_custom_call.1} parent=11 // pred_check_branch
          %331 = sbr.rel (%p329) target = $region28
        $region27: #{tpu_custom_call.1} parent=11 // pred_region
          _
        $region28: #{tpu_custom_call.1} parent=11 // pred_fallthru
          _
        // Predicated region
        $region29: #{tpu_custom_call.1} parent=11 // pred_check
          %p332 = pneg %p193
        $region30: #{tpu_custom_call.1} parent=11 // pred_check_branch
          %334 = sbr.rel (%p332) target = $region32
        $region31: #{tpu_custom_call.1} parent=11 // pred_region
          _
        $region32: #{tpu_custom_call.1} parent=11 // pred_fallthru
          _
        // Predicated region
        $region33: #{tpu_custom_call.1} parent=11 // pred_check
          %p335 = pneg %p214
        $region34: #{tpu_custom_call.1} parent=11 // pred_check_branch
          %337 = sbr.rel (%p335) target = $region36
        $region35: #{tpu_custom_call.1} parent=11 // pred_region
          _
        $region36: #{tpu_custom_call.1} parent=11 // pred_fallthru
          _
        // Predicated region
        $region37: #{tpu_custom_call.1} parent=11 // pred_check
          %p338 = pneg %p235
        $region38: #{tpu_custom_call.1} parent=11 // pred_check_branch
          %340 = sbr.rel (%p338) target = $region40
        $region39: #{tpu_custom_call.1} parent=11 // pred_region
          _
        $region40: #{tpu_custom_call.1} parent=11 // pred_fallthru
          _
        // Predicated region
        $region41: #{tpu_custom_call.1} parent=11 // pred_check
          %p341 = pneg %p256
        $region42: #{tpu_custom_call.1} parent=11 // pred_check_branch
          %343 = sbr.rel (%p341) target = $region44
        $region43: #{tpu_custom_call.1} parent=11 // pred_region
          _
        $region44: #{tpu_custom_call.1} parent=11 // pred_fallthru
          _
        // Predicated region
        $region45: #{tpu_custom_call.1} parent=11 // pred_check
          %p344 = pneg %p277
        $region46: #{tpu_custom_call.1} parent=11 // pred_check_branch
          %346 = sbr.rel (%p344) target = $region48
        $region47: #{tpu_custom_call.1} parent=11 // pred_region
          _
        $region48: #{tpu_custom_call.1} parent=11 // pred_fallthru
          _
      $region12: #{tpu_custom_call.1} parent=5 // pred_fallthru
        _
      %p347 = scmp.lt.s32.totalorder %s20, 2
      // Predicated region
      $region49: #{tpu_custom_call.1} parent=5 // pred_check
        %p348 = pneg %p347
      $region50: #{tpu_custom_call.1} parent=5 // pred_check_branch
        %350 = sbr.rel (%p348) target = $region52
      $region51: #{tpu_custom_call.1} parent=5 // pred_region
        // Predicated region
        $region53: #{tpu_custom_call.1} parent=51 // pred_check
          %p351 = pneg %p54
        $region54: #{tpu_custom_call.1} parent=51 // pred_check_branch
          %353 = sbr.rel (%p351) target = $region56
        $region55: #{tpu_custom_call.1} parent=51 // pred_region
          %p354 = scmp.lt.s32.totalorder %s27, 1
          %s355 = scalar_select %p354, %s27, 1
          %p356 = scmp.lt.s32.totalorder %s28, 0
          %s357 = scalar_select %p356, %s28, 0
          %s358 = sadd.s32 %s357, %s355
          %s359 = smul.addr %s358, 2
          %s360 = scalar_lea.vmem %s0, %s359
        $region56: #{tpu_custom_call.1} parent=51 // pred_fallthru
          _
        // Predicated region
        $region57: #{tpu_custom_call.1} parent=51 // pred_check
          %p361 = pneg %p82
        $region58: #{tpu_custom_call.1} parent=51 // pred_check_branch
          %363 = sbr.rel (%p361) target = $region60
        $region59: #{tpu_custom_call.1} parent=51 // pred_region
          %p364 = scmp.lt.s32.totalorder %s27, 1
          %s365 = scalar_select %p364, %s27, 1
          %p366 = scmp.lt.s32.totalorder %s28, 0
          %s367 = scalar_select %p366, %s28, 0
          %s368 = smul.addr %s365, 8
          %s369 = sadd.s32 %s367, %s368
          %s370 = smul.addr %s369, 2
          %s371 = scalar_lea.vmem %s1, %s370
        $region60: #{tpu_custom_call.1} parent=51 // pred_fallthru
          _
      $region52: #{tpu_custom_call.1} parent=5 // pred_fallthru
        _
      %p372 = scmp.le.s32.totalorder 1, %s20
      %p373 = scmp.lt.s32.totalorder %s20, 3
      %p374 = pnand %p372, %p373
      %p375 = pneg %p374
      // Predicated region
      $region61: #{tpu_custom_call.1} parent=5 // pred_check
        _
      $region62: #{tpu_custom_call.1} parent=5 // pred_check_branch
        %377 = sbr.rel (%p374) target = $region64
      $region63: #{tpu_custom_call.1} parent=5 // pred_region
        %s378 = ssub.s32 %s20, 1
        %p379 = scmp.lt.s32.totalorder %s29, 1
        %s380 = scalar_select %p379, %s29, 1
        %p381 = scmp.lt.s32.totalorder %s30, 0
        %s382 = scalar_select %p381, %s30, 0
        %s383 = sadd.s32 %s382, %s380
        %s384 = smul.addr %s383, 2
        %s385 = scalar_lea.vmem %s0, %s384
        %p386 = pneg %p60
        %p387 = pneg %p57
        %p388 = scmp.lt.s32.totalorder %s29, 1
        %s389 = scalar_select %p388, %s29, 1
        %p390 = scmp.lt.s32.totalorder %s30, 0
        %s391 = scalar_select %p390, %s30, 0
        %s392 = smul.addr %s389, 8
        %s393 = sadd.s32 %s391, %s392
        %s394 = smul.addr %s393, 2
        %s395 = scalar_lea.vmem %s1, %s394
        %p396 = pneg %p88
        %p397 = pneg %p85
        %p398 = pneg %p109
        %p399 = pneg %p106
        %p400 = pneg %p130
        %p401 = pneg %p127
        %p402 = pneg %p151
        %p403 = pneg %p148
        %p404 = pneg %p172
        %p405 = pneg %p169
        %p406 = pneg %p193
        %p407 = pneg %p190
        %p408 = pneg %p214
        %p409 = pneg %p211
        %p410 = pneg %p235
        %p411 = pneg %p232
        %p412 = pneg %p256
        %p413 = pneg %p253
        %p414 = pneg %p277
        %p415 = pneg %p274
        %p416 = pneg %p305
        %p417 = pneg %p302
        %s418 = sand.u32 %s292, 1
        %s419 = scalar_lea.sflag [#allocation3], %s418
        %s420 = sand.u32 %s292, 1
        %s421 = smul.addr %s420, 8
        %s422 = scalar_lea.vmem [#allocation2], %s421
        %p423 = scmp.lt.s32.totalorder %s29, 1
        %s424 = scalar_select %p423, %s29, 1
        %p425 = scmp.lt.s32.totalorder %s30, 0
        %s426 = scalar_select %p425, %s30, 0
        %s427 = sadd.s32 %s426, %s424
        %s428 = smul.addr %s427, 2
        %s429 = scalar_lea.vmem %s0, %s428
        %p430 = scmp.lt.s32.totalorder %s29, 1
        %s431 = scalar_select %p430, %s29, 1
        %p432 = scmp.lt.s32.totalorder %s30, 0
        %s433 = scalar_select %p432, %s30, 0
        %s434 = smul.addr %s431, 8
        %s435 = sadd.s32 %s433, %s434
        %s436 = smul.addr %s435, 2
        %s437 = scalar_lea.vmem %s1, %s436
        %v439 = vld [vmem:[%s429] sm:$0x3]
        %v440 = vld [vmem:[%s2] sm:$0xf]
        %vm441 = vcmask 23552
        %v443 = vsel %vm441, %v440, 0
        %vm445 = vcmask 1040384
        %vm446 = vcmask 1041408
        %v447 = vsel %vm445, 4294967295, 65535
        %v448 = vsel %vm446, %v447, 0
        %v450 = vand.u32 %v439, %v448
        %452 = vmatpush.bf16.msra.mxu0 0
        %453 = vmatpush.bf16.msra.mxu0 0
        %454 = vmatpush.bf16.msra.mxu0 0
        %455 = vmatpush.bf16.msra.mxu0 0
        %456 = vmatpush.bf16.msra.mxu0 0
        %457 = vmatpush.bf16.msra.mxu0 0
        %458 = vmatpush.bf16.msra.mxu0 0
        %459 = vmatpush.bf16.msra.mxu0 %v450
        %460 = vmatmul.bf16.gmra.mxu0 %v443
        %v461 = vpop.f32.mrf.mxu0
        %v462 = vadd.f32 0.0, %v461
        %v463 = vpop.f32.mrf.mxu0
        %464 = vdwg.mxu0
        %v465 = vmul.f32 %v462, 0.2
        %v466 = vmax.f32 %v462, %v465
        %v467 = vld [vmem:[%s3] sm:$0xf]
        %v468 = vld [vmem:[%s3 + $0x4] sm:$0xf]
        %v469 = vpack.c.bf16 %v466, %v466
        %v472 = vunpack.c.l.b16 %v467
        %v473 = vunpack.c.l.b16 %v468
        %v474 = vpack.c.b16 %v473, %v472
        %vm475 = vcmask 64512
        %v477 = vsel %vm475, %v474, 0
        %vm479 = vcmask 1043456
        %v481 = vsel %vm479, %v469, 0
        %483 = vmatpush.bf16.msra.mxu0 0
        %484 = vmatpush.bf16.msra.mxu0 0
        %485 = vmatpush.bf16.msra.mxu0 0
        %486 = vmatpush.bf16.msra.mxu0 0
        %487 = vmatpush.bf16.msra.mxu0 0
        %488 = vmatpush.bf16.msra.mxu0 0
        %489 = vmatpush.bf16.msra.mxu0 0
        %490 = vmatpush.bf16.msra.mxu0 %v481
        %491 = vmatmul.bf16.gmra.mxu0 %v477
        %v492 = vpop.f32.mrf.mxu0
        %v493 = vadd.f32 0.0, %v492
        %v494 = vpop.f32.mrf.mxu0
        %v495 = vadd.f32 0.0, %v494
        %496 = vdwg.mxu0
        %v497 = vmul.f32 %v493, 0.2
        %v498 = vmul.f32 %v495, 0.2
        %v499 = vmax.f32 %v493, %v497
        %v500 = vmax.f32 %v495, %v498
        %v501 = vld [vmem:[%s4] sm:$0xf]
        %v502 = vld [vmem:[%s4 + $0x4] sm:$0xf]
        %v503 = vpack.c.bf16 %v500, %v499
        %v506 = vunpack.c.l.b16 %v501
        %v507 = vunpack.c.l.b16 %v502
        %v508 = vpack.c.b16 %v507, %v506
        %vm509 = vcmask 130048
        %v511 = vsel %vm509, %v508, 0
        %513 = vmatpush.bf16.msra.mxu0 0
        %514 = vmatpush.bf16.msra.mxu0 0
        %515 = vmatpush.bf16.msra.mxu0 0
        %516 = vmatpush.bf16.msra.mxu0 0
        %517 = vmatpush.bf16.msra.mxu0 0
        %518 = vmatpush.bf16.msra.mxu0 0
        %519 = vmatpush.bf16.msra.mxu0 0
        %520 = vmatpush.bf16.msra.mxu0 %v503
        %521 = vmatmul.bf16.gmra.mxu0 %v511
        %v522 = vpop.f32.mrf.mxu0
        %v523 = vadd.f32 0.0, %v522
        %v524 = vpop.f32.mrf.mxu0
        %v525 = vadd.f32 0.0, %v524
        %526 = vdwg.mxu0
        %v527 = vmul.f32 %v523, 0.2
        %v528 = vmul.f32 %v525, 0.2
        %v529 = vmax.f32 %v523, %v527
        %v530 = vmax.f32 %v525, %v528
        %v531 = vld [vmem:[%s5] sm:$0xf]
        %v532 = vld [vmem:[%s5 + $0x4] sm:$0xf]
        %v533 = vld [vmem:[%s5 + $0x8] sm:$0xf]
        %v534 = vld [vmem:[%s5 + $0xc] sm:$0xf]
        %v535 = vpack.c.bf16 %v530, %v529
        %v540 = vunpack.c.l.b16 %v531
        %v541 = vunpack.c.l.b16 %v532
        %v542 = vunpack.c.l.b16 %v533
        %v543 = vunpack.c.l.b16 %v534
        %v544 = vpack.c.b16 %v541, %v540
        %v545 = vpack.c.b16 %v543, %v542
        %v547 = vsel %vm509, %v544, 0
        %v550 = vsel %vm509, %v545, 0
        %552 = vmatpush.bf16.msra.mxu0 0
        %553 = vmatpush.bf16.msra.mxu0 0
        %554 = vmatpush.bf16.msra.mxu0 0
        %555 = vmatpush.bf16.msra.mxu0 0
        %556 = vmatpush.bf16.msra.mxu0 0
        %557 = vmatpush.bf16.msra.mxu0 0
        %558 = vmatpush.bf16.msra.mxu0 0
        %559 = vmatpush.bf16.msra.mxu0 %v535
        %560 = vmatmul.bf16.gmra.mxu0 %v547
        %v561 = vpop.f32.mrf.mxu0
        %v562 = vadd.f32 0.0, %v561
        %v563 = vpop.f32.mrf.mxu0
        %v564 = vadd.f32 0.0, %v563
        %565 = vmatmul.bf16.gmra.mxu0 %v550
        %v566 = vpop.f32.mrf.mxu0
        %v567 = vadd.f32 0.0, %v566
        %v568 = vpop.f32.mrf.mxu0
        %v569 = vadd.f32 0.0, %v568
        %570 = vdwg.mxu0
        %v571 = vmul.f32 %v562, 0.2
        %v572 = vmul.f32 %v564, 0.2
        %v573 = vmul.f32 %v567, 0.2
        %v574 = vmul.f32 %v569, 0.2
        %v575 = vmax.f32 %v562, %v571
        %v576 = vmax.f32 %v564, %v572
        %v577 = vmax.f32 %v567, %v573
        %v578 = vmax.f32 %v569, %v574
        %v579 = vld [vmem:[%s6] sm:$0xf]
        %v580 = vld [vmem:[%s6 + $0x4] sm:$0xf]
        %v581 = vld [vmem:[%s6 + $0x8] sm:$0xf]
        %v582 = vld [vmem:[%s6 + $0xc] sm:$0xf]
        %v583 = vld [vmem:[%s6 + $0x10] sm:$0x3]
        %v584 = vpack.c.bf16 %v576, %v575
        %v585 = vpack.c.bf16 %v578, %v577
        %v591 = vunpack.c.l.b16 %v579
        %v592 = vunpack.c.l.b16 %v580
        %v593 = vunpack.c.l.b16 %v581
        %v594 = vunpack.c.l.b16 %v582
        %v595 = vunpack.c.l.b16 %v583
        %v596 = vpack.c.b16 %v592, %v591
        %v597 = vpack.c.b16 %v594, %v593
        %v598 = vpack.c.b16 %v595, %v595
        %vm599 = vcmask 261120
        %v601 = vsel %vm599, %v596, 0
        %v604 = vsel %vm599, %v597, 0
        %v607 = vsel %vm599, %v598, 0
        %609 = vmatpush.bf16.msra.mxu0 0
        %610 = vmatpush.bf16.msra.mxu0 0
        %611 = vmatpush.bf16.msra.mxu0 0
        %612 = vmatpush.bf16.msra.mxu0 0
        %613 = vmatpush.bf16.msra.mxu0 0
        %614 = vmatpush.bf16.msra.mxu0 0
        %615 = vmatpush.bf16.msra.mxu0 %v585
        %616 = vmatpush.bf16.msra.mxu0 %v584
        %617 = vmatmul.bf16.gmra.mxu0 %v601
        %v618 = vpop.f32.mrf.mxu0
        %v619 = vadd.f32 0.0, %v618
        %v620 = vpop.f32.mrf.mxu0
        %v621 = vadd.f32 0.0, %v620
        %622 = vmatmul.bf16.gmra.mxu0 %v604
        %v623 = vpop.f32.mrf.mxu0
        %v624 = vadd.f32 0.0, %v623
        %v625 = vpop.f32.mrf.mxu0
        %v626 = vadd.f32 0.0, %v625
        %627 = vmatmul.bf16.gmra.mxu0 %v607
        %v628 = vpop.f32.mrf.mxu0
        %v629 = vadd.f32 0.0, %v628
        %v630 = vpop.f32.mrf.mxu0
        %631 = vdwg.mxu0
        %v632 = vmul.f32 %v619, %v619
        %v633 = vmul.f32 %v621, %v621
        %v634 = vmul.f32 %v624, %v624
        %v635 = vmul.f32 %v626, %v626
        %v636 = vmul.f32 %v629, %v629
        %v637 = vadd.f32 %v632, %v633
        %v638 = vadd.f32 %v637, %v634
        %v639 = vadd.f32 %v638, %v635
        %v640 = vsel %vm479, %v636, 0.0
        %v641 = vadd.f32 %v639, %v640
        %v642 = vrot.slane %v641, 4
        %v643 = vadd.f32 %v641, %v642
        %v644 = vrot.slane %v643, 2
        %v645 = vadd.f32 %v643, %v644
        %v646 = vrot.slane %v645, 1
        %v647 = vadd.f32 %v645, %v646
        %v648 = vmax.f32 %v647, 1e-08
        %v649 = vrsqrt.pop %v648
        %v650 = vmul.f32 %v649, %v648
        %v651 = vmul.f32 %v650, %v649
        %v652 = vmul.f32 0.5, %v651
        %v653 = vsub.f32 1.5, %v652
        %v654 = vmul.f32 %v649, %v653
        %vm655 = vweird.f32 %v648
        %vm656 = vweird.f32 %v649
        %vm657 = vmor %vm655, %vm656
        %v658 = vsel %vm657, %v649, %v654
        %v659 = vmul.f32 %v619, %v658
        %v660 = vmul.f32 %v621, %v658
        %v661 = vmul.f32 %v624, %v658
        %v662 = vmul.f32 %v626, %v658
        %v663 = vmul.f32 %v629, %v658
        %669 = vrot.lane.b32.xlu0 %v632, 112
        %v670 = vpop.permute.xlu0 %669
        %671 = vrot.lane.b32.xlu0 %v633, 112
        %v672 = vpop.permute.xlu0 %671
        %673 = vrot.lane.b32.xlu0 %v634, 112
        %v674 = vpop.permute.xlu0 %673
        %675 = vrot.lane.b32.xlu0 %v635, 112
        %v676 = vpop.permute.xlu0 %675
        %677 = vrot.lane.b32.xlu0 %v636, 112
        %v678 = vpop.permute.xlu0 %677
        %v684 = vadd.f32 %v632, %v670
        %v685 = vadd.f32 %v633, %v672
        %v686 = vadd.f32 %v634, %v674
        %v687 = vadd.f32 %v635, %v676
        %v688 = vadd.f32 %v636, %v678
        %689 = vrot.lane.b32.xlu0 %v632, 96
        %v690 = vpop.permute.xlu0 %689
        %691 = vrot.lane.b32.xlu0 %v633, 96
        %v692 = vpop.permute.xlu0 %691
        %693 = vrot.lane.b32.xlu0 %v634, 96
        %v694 = vpop.permute.xlu0 %693
        %695 = vrot.lane.b32.xlu0 %v635, 96
        %v696 = vpop.permute.xlu0 %695
        %697 = vrot.lane.b32.xlu0 %v636, 96
        %v698 = vpop.permute.xlu0 %697
        %v704 = vadd.f32 %v684, %v690
        %v705 = vadd.f32 %v685, %v692
        %v706 = vadd.f32 %v686, %v694
        %v707 = vadd.f32 %v687, %v696
        %v708 = vadd.f32 %v688, %v698
        %709 = vrot.lane.b32.xlu0 %v632, 80
        %v710 = vpop.permute.xlu0 %709
        %711 = vrot.lane.b32.xlu0 %v633, 80
        %v712 = vpop.permute.xlu0 %711
        %713 = vrot.lane.b32.xlu0 %v634, 80
        %v714 = vpop.permute.xlu0 %713
        %715 = vrot.lane.b32.xlu0 %v635, 80
        %v716 = vpop.permute.xlu0 %715
        %717 = vrot.lane.b32.xlu0 %v636, 80
        %v718 = vpop.permute.xlu0 %717
        %v724 = vadd.f32 %v704, %v710
        %v725 = vadd.f32 %v705, %v712
        %v726 = vadd.f32 %v706, %v714
        %v727 = vadd.f32 %v707, %v716
        %v728 = vadd.f32 %v708, %v718
        %729 = vrot.lane.b32.xlu0 %v632, 64
        %v730 = vpop.permute.xlu0 %729
        %731 = vrot.lane.b32.xlu0 %v633, 64
        %v732 = vpop.permute.xlu0 %731
        %733 = vrot.lane.b32.xlu0 %v634, 64
        %v734 = vpop.permute.xlu0 %733
        %735 = vrot.lane.b32.xlu0 %v635, 64
        %v736 = vpop.permute.xlu0 %735
        %737 = vrot.lane.b32.xlu0 %v636, 64
        %v738 = vpop.permute.xlu0 %737
        %v744 = vadd.f32 %v724, %v730
        %v745 = vadd.f32 %v725, %v732
        %v746 = vadd.f32 %v726, %v734
        %v747 = vadd.f32 %v727, %v736
        %v748 = vadd.f32 %v728, %v738
        %749 = vrot.lane.b32.xlu0 %v632, 48
        %v750 = vpop.permute.xlu0 %749
        %751 = vrot.lane.b32.xlu0 %v633, 48
        %v752 = vpop.permute.xlu0 %751
        %753 = vrot.lane.b32.xlu0 %v634, 48
        %v754 = vpop.permute.xlu0 %753
        %755 = vrot.lane.b32.xlu0 %v635, 48
        %v756 = vpop.permute.xlu0 %755
        %757 = vrot.lane.b32.xlu0 %v636, 48
        %v758 = vpop.permute.xlu0 %757
        %v764 = vadd.f32 %v744, %v750
        %v765 = vadd.f32 %v745, %v752
        %v766 = vadd.f32 %v746, %v754
        %v767 = vadd.f32 %v747, %v756
        %v768 = vadd.f32 %v748, %v758
        %769 = vrot.lane.b32.xlu0 %v632, 32
        %v770 = vpop.permute.xlu0 %769
        %771 = vrot.lane.b32.xlu0 %v633, 32
        %v772 = vpop.permute.xlu0 %771
        %773 = vrot.lane.b32.xlu0 %v634, 32
        %v774 = vpop.permute.xlu0 %773
        %775 = vrot.lane.b32.xlu0 %v635, 32
        %v776 = vpop.permute.xlu0 %775
        %777 = vrot.lane.b32.xlu0 %v636, 32
        %v778 = vpop.permute.xlu0 %777
        %v784 = vadd.f32 %v764, %v770
        %v785 = vadd.f32 %v765, %v772
        %v786 = vadd.f32 %v766, %v774
        %v787 = vadd.f32 %v767, %v776
        %v788 = vadd.f32 %v768, %v778
        %789 = vrot.lane.b32.xlu0 %v632, 16
        %v790 = vpop.permute.xlu0 %789
        %791 = vrot.lane.b32.xlu0 %v633, 16
        %v792 = vpop.permute.xlu0 %791
        %793 = vrot.lane.b32.xlu0 %v634, 16
        %v794 = vpop.permute.xlu0 %793
        %795 = vrot.lane.b32.xlu0 %v635, 16
        %v796 = vpop.permute.xlu0 %795
        %797 = vrot.lane.b32.xlu0 %v636, 16
        %v798 = vpop.permute.xlu0 %797
        %v804 = vadd.f32 %v784, %v790
        %v805 = vadd.f32 %v785, %v792
        %v806 = vadd.f32 %v786, %v794
        %v807 = vadd.f32 %v787, %v796
        %v808 = vadd.f32 %v788, %v798
        %v809 = vmax.f32 %v804, 1e-08
        %v810 = vmax.f32 %v805, 1e-08
        %v811 = vmax.f32 %v806, 1e-08
        %v812 = vmax.f32 %v807, 1e-08
        %v813 = vmax.f32 %v808, 1e-08
        %v814 = vrsqrt.pop %v809
        %v815 = vmul.f32 %v814, %v809
        %v816 = vmul.f32 %v815, %v814
        %v817 = vmul.f32 0.5, %v816
        %v818 = vsub.f32 1.5, %v817
        %v819 = vmul.f32 %v814, %v818
        %vm820 = vweird.f32 %v809
        %vm821 = vweird.f32 %v814
        %vm822 = vmor %vm820, %vm821
        %v823 = vsel %vm822, %v814, %v819
        %v824 = vrsqrt.pop %v810
        %v825 = vmul.f32 %v824, %v810
        %v826 = vmul.f32 %v825, %v824
        %v827 = vmul.f32 0.5, %v826
        %v828 = vsub.f32 1.5, %v827
        %v829 = vmul.f32 %v824, %v828
        %vm830 = vweird.f32 %v810
        %vm831 = vweird.f32 %v824
        %vm832 = vmor %vm830, %vm831
        %v833 = vsel %vm832, %v824, %v829
        %v834 = vrsqrt.pop %v811
        %v835 = vmul.f32 %v834, %v811
        %v836 = vmul.f32 %v835, %v834
        %v837 = vmul.f32 0.5, %v836
        %v838 = vsub.f32 1.5, %v837
        %v839 = vmul.f32 %v834, %v838
        %vm840 = vweird.f32 %v811
        %vm841 = vweird.f32 %v834
        %vm842 = vmor %vm840, %vm841
        %v843 = vsel %vm842, %v834, %v839
        %v844 = vrsqrt.pop %v812
        %v845 = vmul.f32 %v844, %v812
        %v846 = vmul.f32 %v845, %v844
        %v847 = vmul.f32 0.5, %v846
        %v848 = vsub.f32 1.5, %v847
        %v849 = vmul.f32 %v844, %v848
        %vm850 = vweird.f32 %v812
        %vm851 = vweird.f32 %v844
        %vm852 = vmor %vm850, %vm851
        %v853 = vsel %vm852, %v844, %v849
        %v854 = vrsqrt.pop %v813
        %v855 = vmul.f32 %v854, %v813
        %v856 = vmul.f32 %v855, %v854
        %v857 = vmul.f32 0.5, %v856
        %v858 = vsub.f32 1.5, %v857
        %v859 = vmul.f32 %v854, %v858
        %vm860 = vweird.f32 %v813
        %vm861 = vweird.f32 %v854
        %vm862 = vmor %vm860, %vm861
        %v863 = vsel %vm862, %v854, %v859
        %v864 = vmin.f32 %v823, 1.0
        %v865 = vmin.f32 %v833, 1.0
        %v866 = vmin.f32 %v843, 1.0
        %v867 = vmin.f32 %v853, 1.0
        %v868 = vmin.f32 %v863, 1.0
        %v869 = vld [vmem:[%s437] sm:$0x3]
        %v870 = vld [vmem:[%s437 + $0x2] sm:$0x3]
        %v871 = vld [vmem:[%s437 + $0x4] sm:$0x3]
        %v872 = vld [vmem:[%s437 + $0x6] sm:$0x3]
        %v873 = vld [vmem:[%s437 + $0x8] sm:$0x3]
        %v874 = vld [vmem:[%s437 + $0xa] sm:$0x3]
        %v875 = vld [vmem:[%s437 + $0xc] sm:$0x3]
        %v876 = vld [vmem:[%s437 + $0xe] sm:$0x3]
        %v877 = vmul.f32 %v659, %v864
        %v878 = vmul.f32 %v660, %v865
        %v879 = vmul.f32 %v661, %v866
        %v880 = vmul.f32 %v662, %v867
        %v881 = vmul.f32 %v663, %v868
        %v887 = vrot.slane %v877, 1
        %v888 = vrot.slane %v877, 2
        %v889 = vrot.slane %v877, 3
        %v890 = vrot.slane %v877, 4
        %v891 = vrot.slane %v877, 5
        %v892 = vrot.slane %v877, 6
        %v893 = vrot.slane %v877, 7
        %v894 = vrot.slane %v878, 1
        %v895 = vrot.slane %v878, 2
        %v896 = vrot.slane %v878, 3
        %v897 = vrot.slane %v878, 4
        %v898 = vrot.slane %v878, 5
        %v899 = vrot.slane %v878, 6
        %v900 = vrot.slane %v878, 7
        %v901 = vrot.slane %v879, 1
        %v902 = vrot.slane %v879, 2
        %v903 = vrot.slane %v879, 3
        %v904 = vrot.slane %v879, 4
        %v905 = vrot.slane %v879, 5
        %v906 = vrot.slane %v879, 6
        %v907 = vrot.slane %v879, 7
        %v908 = vrot.slane %v880, 1
        %v909 = vrot.slane %v880, 2
        %v910 = vrot.slane %v880, 3
        %v911 = vrot.slane %v880, 4
        %v912 = vrot.slane %v880, 5
        %v913 = vrot.slane %v880, 6
        %v914 = vrot.slane %v880, 7
        %v915 = vrot.slane %v881, 1
        %v916 = vrot.slane %v881, 2
        %v917 = vrot.slane %v881, 3
        %v918 = vunpack.c.l.bf16 %v869
        %v919 = vperm.slane %v877, 0
        %v920 = vperm.slane %v887, 0
        %v921 = vperm.slane %v888, 0
        %v922 = vperm.slane %v889, 0
        %v923 = vperm.slane %v890, 0
        %v924 = vperm.slane %v891, 0
        %v925 = vperm.slane %v892, 0
        %v926 = vperm.slane %v893, 0
        %v927 = vperm.slane %v878, 0
        %v928 = vperm.slane %v894, 0
        %v929 = vperm.slane %v895, 0
        %v930 = vperm.slane %v896, 0
        %v931 = vperm.slane %v897, 0
        %v932 = vperm.slane %v898, 0
        %v933 = vperm.slane %v899, 0
        %v934 = vperm.slane %v900, 0
        %v935 = vperm.slane %v879, 0
        %v936 = vperm.slane %v901, 0
        %v937 = vperm.slane %v902, 0
        %v938 = vperm.slane %v903, 0
        %v939 = vperm.slane %v904, 0
        %v940 = vperm.slane %v905, 0
        %v941 = vperm.slane %v906, 0
        %v942 = vperm.slane %v907, 0
        %v943 = vperm.slane %v880, 0
        %v944 = vperm.slane %v908, 0
        %v945 = vperm.slane %v909, 0
        %v946 = vperm.slane %v910, 0
        %v947 = vperm.slane %v911, 0
        %v948 = vperm.slane %v912, 0
        %v949 = vperm.slane %v913, 0
        %v950 = vperm.slane %v914, 0
        %v951 = vperm.slane %v881, 0
        %v952 = vperm.slane %v915, 0
        %v953 = vperm.slane %v916, 0
        %v954 = vperm.slane %v917, 0
        %v991 = vmul.f32 %v919, %v918
        %v992 = vmul.f32 %v920, %v918
        %v993 = vmul.f32 %v921, %v918
        %v994 = vmul.f32 %v922, %v918
        %v995 = vmul.f32 %v923, %v918
        %v996 = vmul.f32 %v924, %v918
        %v997 = vmul.f32 %v925, %v918
        %v998 = vmul.f32 %v926, %v918
        %v999 = vmul.f32 %v927, %v918
        %v1000 = vmul.f32 %v928, %v918
        %v1001 = vmul.f32 %v929, %v918
        %v1002 = vmul.f32 %v930, %v918
        %v1003 = vmul.f32 %v931, %v918
        %v1004 = vmul.f32 %v932, %v918
        %v1005 = vmul.f32 %v933, %v918
        %v1006 = vmul.f32 %v934, %v918
        %v1007 = vmul.f32 %v935, %v918
        %v1008 = vmul.f32 %v936, %v918
        %v1009 = vmul.f32 %v937, %v918
        %v1010 = vmul.f32 %v938, %v918
        %v1011 = vmul.f32 %v939, %v918
        %v1012 = vmul.f32 %v940, %v918
        %v1013 = vmul.f32 %v941, %v918
        %v1014 = vmul.f32 %v942, %v918
        %v1015 = vmul.f32 %v943, %v918
        %v1016 = vmul.f32 %v944, %v918
        %v1017 = vmul.f32 %v945, %v918
        %v1018 = vmul.f32 %v946, %v918
        %v1019 = vmul.f32 %v947, %v918
        %v1020 = vmul.f32 %v948, %v918
        %v1021 = vmul.f32 %v949, %v918
        %v1022 = vmul.f32 %v950, %v918
        %v1023 = vmul.f32 %v951, %v918
        %v1024 = vmul.f32 %v952, %v918
        %v1025 = vmul.f32 %v953, %v918
        %v1026 = vmul.f32 %v954, %v918
        %1032 = vrot.lane.b32.xlu0 %v864, 16
        %v1033 = vpop.permute.xlu0 %1032
        %1034 = vrot.lane.b32.xlu0 %v865, 16
        %v1035 = vpop.permute.xlu0 %1034
        %1036 = vrot.lane.b32.xlu0 %v866, 16
        %v1037 = vpop.permute.xlu0 %1036
        %1038 = vrot.lane.b32.xlu0 %v867, 16
        %v1039 = vpop.permute.xlu0 %1038
        %1040 = vrot.lane.b32.xlu0 %v868, 16
        %v1041 = vpop.permute.xlu0 %1040
        %v1047 = vmul.f32 %v659, %v1033
        %v1048 = vmul.f32 %v660, %v1035
        %v1049 = vmul.f32 %v661, %v1037
        %v1050 = vmul.f32 %v662, %v1039
        %v1051 = vmul.f32 %v663, %v1041
        %v1057 = vrot.slane %v1047, 1
        %v1058 = vrot.slane %v1047, 2
        %v1059 = vrot.slane %v1047, 3
        %v1060 = vrot.slane %v1047, 4
        %v1061 = vrot.slane %v1047, 5
        %v1062 = vrot.slane %v1047, 6
        %v1063 = vrot.slane %v1047, 7
        %v1064 = vrot.slane %v1048, 1
        %v1065 = vrot.slane %v1048, 2
        %v1066 = vrot.slane %v1048, 3
        %v1067 = vrot.slane %v1048, 4
        %v1068 = vrot.slane %v1048, 5
        %v1069 = vrot.slane %v1048, 6
        %v1070 = vrot.slane %v1048, 7
        %v1071 = vrot.slane %v1049, 1
        %v1072 = vrot.slane %v1049, 2
        %v1073 = vrot.slane %v1049, 3
        %v1074 = vrot.slane %v1049, 4
        %v1075 = vrot.slane %v1049, 5
        %v1076 = vrot.slane %v1049, 6
        %v1077 = vrot.slane %v1049, 7
        %v1078 = vrot.slane %v1050, 1
        %v1079 = vrot.slane %v1050, 2
        %v1080 = vrot.slane %v1050, 3
        %v1081 = vrot.slane %v1050, 4
        %v1082 = vrot.slane %v1050, 5
        %v1083 = vrot.slane %v1050, 6
        %v1084 = vrot.slane %v1050, 7
        %v1085 = vrot.slane %v1051, 1
        %v1086 = vrot.slane %v1051, 2
        %v1087 = vrot.slane %v1051, 3
        %v1088 = vunpack.c.l.bf16 %v870
        %v1089 = vperm.slane %v1047, 0
        %v1090 = vperm.slane %v1057, 0
        %v1091 = vperm.slane %v1058, 0
        %v1092 = vperm.slane %v1059, 0
        %v1093 = vperm.slane %v1060, 0
        %v1094 = vperm.slane %v1061, 0
        %v1095 = vperm.slane %v1062, 0
        %v1096 = vperm.slane %v1063, 0
        %v1097 = vperm.slane %v1048, 0
        %v1098 = vperm.slane %v1064, 0
        %v1099 = vperm.slane %v1065, 0
        %v1100 = vperm.slane %v1066, 0
        %v1101 = vperm.slane %v1067, 0
        %v1102 = vperm.slane %v1068, 0
        %v1103 = vperm.slane %v1069, 0
        %v1104 = vperm.slane %v1070, 0
        %v1105 = vperm.slane %v1049, 0
        %v1106 = vperm.slane %v1071, 0
        %v1107 = vperm.slane %v1072, 0
        %v1108 = vperm.slane %v1073, 0
        %v1109 = vperm.slane %v1074, 0
        %v1110 = vperm.slane %v1075, 0
        %v1111 = vperm.slane %v1076, 0
        %v1112 = vperm.slane %v1077, 0
        %v1113 = vperm.slane %v1050, 0
        %v1114 = vperm.slane %v1078, 0
        %v1115 = vperm.slane %v1079, 0
        %v1116 = vperm.slane %v1080, 0
        %v1117 = vperm.slane %v1081, 0
        %v1118 = vperm.slane %v1082, 0
        %v1119 = vperm.slane %v1083, 0
        %v1120 = vperm.slane %v1084, 0
        %v1121 = vperm.slane %v1051, 0
        %v1122 = vperm.slane %v1085, 0
        %v1123 = vperm.slane %v1086, 0
        %v1124 = vperm.slane %v1087, 0
        %1162 = vst [vmem:[#allocation1] ss:$2 sm:$0xff] %v1088
        %v1163 = vld.sshfl [vmem:[#allocation1] sm:$0xff pattern:$0x75316420]
        %s1164 = scalar_lea.vmem [#allocation1], 16
        %1165 = vst [vmem:[%s1164] ss:$2 sm:$0xff] %v1088
        %v1166 = vld.sshfl [vmem:[#allocation1 + $0x10] sm:$0xff pattern:$0x75316420]
        %s1167 = scalar_lea.vmem [#allocation1], 32
        %1168 = vst [vmem:[%s1167] ss:$2 sm:$0xff] %v1088
        %v1169 = vld.sshfl [vmem:[#allocation1 + $0x20] sm:$0xff pattern:$0x75316420]
        %s1170 = scalar_lea.vmem [#allocation1], 48
        %1171 = vst [vmem:[%s1170] ss:$2 sm:$0xff] %v1088
        %v1172 = vld.sshfl [vmem:[#allocation1 + $0x30] sm:$0xff pattern:$0x75316420]
        %1173 = vst [vmem:[#allocation1] ss:$2 sm:$0xff] %v1088
        %v1174 = vld.sshfl [vmem:[#allocation1] sm:$0xff pattern:$0x75316420]
        %1175 = vst [vmem:[%s1164] ss:$2 sm:$0xff] %v1088
        %v1176 = vld.sshfl [vmem:[#allocation1 + $0x10] sm:$0xff pattern:$0x75316420]
        %1177 = vst [vmem:[%s1167] ss:$2 sm:$0xff] %v1088
        %v1178 = vld.sshfl [vmem:[#allocation1 + $0x20] sm:$0xff pattern:$0x75316420]
        %1179 = vst [vmem:[%s1170] ss:$2 sm:$0xff] %v1088
        %v1180 = vld.sshfl [vmem:[#allocation1 + $0x30] sm:$0xff pattern:$0x75316420]
        %1181 = vst [vmem:[#allocation1] ss:$2 sm:$0xff] %v1088
        %v1182 = vld.sshfl [vmem:[#allocation1] sm:$0xff pattern:$0x75316420]
        %1183 = vst [vmem:[%s1164] ss:$2 sm:$0xff] %v1088
        %v1184 = vld.sshfl [vmem:[#allocation1 + $0x10] sm:$0xff pattern:$0x75316420]
        %1185 = vst [vmem:[%s1167] ss:$2 sm:$0xff] %v1088
        %v1186 = vld.sshfl [vmem:[#allocation1 + $0x20] sm:$0xff pattern:$0x75316420]
        %1187 = vst [vmem:[%s1170] ss:$2 sm:$0xff] %v1088
        %v1188 = vld.sshfl [vmem:[#allocation1 + $0x30] sm:$0xff pattern:$0x75316420]
        %1189 = vst [vmem:[#allocation1] ss:$2 sm:$0xff] %v1088
        %v1190 = vld.sshfl [vmem:[#allocation1] sm:$0xff pattern:$0x75316420]
        %1191 = vst [vmem:[%s1164] ss:$2 sm:$0xff] %v1088
        %v1192 = vld.sshfl [vmem:[#allocation1 + $0x10] sm:$0xff pattern:$0x75316420]
        %1193 = vst [vmem:[%s1167] ss:$2 sm:$0xff] %v1088
        %v1194 = vld.sshfl [vmem:[#allocation1 + $0x20] sm:$0xff pattern:$0x75316420]
        %1195 = vst [vmem:[%s1170] ss:$2 sm:$0xff] %v1088
        %v1196 = vld.sshfl [vmem:[#allocation1 + $0x30] sm:$0xff pattern:$0x75316420]
        %1197 = vst [vmem:[#allocation1] ss:$2 sm:$0xff] %v1088
        %v1198 = vld.sshfl [vmem:[#allocation1] sm:$0xff pattern:$0x75316420]
        %1199 = vst [vmem:[%s1164] ss:$2 sm:$0xff] %v1088
        %v1200 = vld.sshfl [vmem:[#allocation1 + $0x10] sm:$0xff pattern:$0x75316420]
        %1201 = vst [vmem:[%s1167] ss:$2 sm:$0xff] %v1088
        %v1202 = vld.sshfl [vmem:[#allocation1 + $0x20] sm:$0xff pattern:$0x75316420]
        %1203 = vst [vmem:[%s1170] ss:$2 sm:$0xff] %v1088
        %v1204 = vld.sshfl [vmem:[#allocation1 + $0x30] sm:$0xff pattern:$0x75316420]
        %1205 = vst [vmem:[#allocation1] ss:$2 sm:$0xff] %v1088
        %v1206 = vld.sshfl [vmem:[#allocation1] sm:$0xff pattern:$0x75316420]
        %1207 = vst [vmem:[%s1164] ss:$2 sm:$0xff] %v1088
        %v1208 = vld.sshfl [vmem:[#allocation1 + $0x10] sm:$0xff pattern:$0x75316420]
        %1209 = vst [vmem:[%s1167] ss:$2 sm:$0xff] %v1088
        %v1210 = vld.sshfl [vmem:[#allocation1 + $0x20] sm:$0xff pattern:$0x75316420]
        %1211 = vst [vmem:[%s1170] ss:$2 sm:$0xff] %v1088
        %v1212 = vld.sshfl [vmem:[#allocation1 + $0x30] sm:$0xff pattern:$0x75316420]
        %1213 = vst [vmem:[#allocation1] ss:$2 sm:$0xff] %v1088
        %v1214 = vld.sshfl [vmem:[#allocation1] sm:$0xff pattern:$0x75316420]
        %1215 = vst [vmem:[%s1164] ss:$2 sm:$0xff] %v1088
        %v1216 = vld.sshfl [vmem:[#allocation1 + $0x10] sm:$0xff pattern:$0x75316420]
        %1217 = vst [vmem:[%s1167] ss:$2 sm:$0xff] %v1088
        %v1218 = vld.sshfl [vmem:[#allocation1 + $0x20] sm:$0xff pattern:$0x75316420]
        %1219 = vst [vmem:[%s1170] ss:$2 sm:$0xff] %v1088
        %v1220 = vld.sshfl [vmem:[#allocation1 + $0x30] sm:$0xff pattern:$0x75316420]
        %1221 = vst [vmem:[#allocation1] ss:$2 sm:$0xff] %v1088
        %v1222 = vld.sshfl [vmem:[#allocation1] sm:$0xff pattern:$0x75316420]
        %1223 = vst [vmem:[%s1164] ss:$2 sm:$0xff] %v1088
        %v1224 = vld.sshfl [vmem:[#allocation1 + $0x10] sm:$0xff pattern:$0x75316420]
        %1225 = vst [vmem:[%s1167] ss:$2 sm:$0xff] %v1088
        %v1226 = vld.sshfl [vmem:[#allocation1 + $0x20] sm:$0xff pattern:$0x75316420]
        %1227 = vst [vmem:[%s1170] ss:$2 sm:$0xff] %v1088
        %v1228 = vld.sshfl [vmem:[#allocation1 + $0x30] sm:$0xff pattern:$0x75316420]
        %1229 = vst [vmem:[#allocation1] ss:$2 sm:$0xff] %v1088
        %v1230 = vld.sshfl [vmem:[#allocation1] sm:$0xff pattern:$0x75316420]
        %1231 = vst [vmem:[%s1164] ss:$2 sm:$0xff] %v1088
        %v1232 = vld.sshfl [vmem:[#allocation1 + $0x10] sm:$0xff pattern:$0x75316420]
        %1233 = vst [vmem:[%s1167] ss:$2 sm:$0xff] %v1088
        %v1234 = vld.sshfl [vmem:[#allocation1 + $0x20] sm:$0xff pattern:$0x75316420]
        %1235 = vst [vmem:[%s1170] ss:$2 sm:$0xff] %v1088
        %v1236 = vld.sshfl [vmem:[#allocation1 + $0x30] sm:$0xff pattern:$0x75316420]
        %1237 = vrot.lane.b32.xlu0 %v1163, 16
        %v1238 = vpop.permute.xlu0 %1237
        %1239 = vrot.lane.b32.xlu0 %v1166, 16
        %v1240 = vpop.permute.xlu0 %1239
        %1241 = vrot.lane.b32.xlu0 %v1169, 16
        %v1242 = vpop.permute.xlu0 %1241
        %1243 = vrot.lane.b32.xlu0 %v1172, 16
        %v1244 = vpop.permute.xlu0 %1243
        %1245 = vrot.lane.b32.xlu0 %v1174, 16
        %v1246 = vpop.permute.xlu0 %1245
        %1247 = vrot.lane.b32.xlu0 %v1176, 16
        %v1248 = vpop.permute.xlu0 %1247
        %1249 = vrot.lane.b32.xlu0 %v1178, 16
        %v1250 = vpop.permute.xlu0 %1249
        %1251 = vrot.lane.b32.xlu0 %v1180, 16
        %v1252 = vpop.permute.xlu0 %1251
        %1253 = vrot.lane.b32.xlu0 %v1182, 16
        %v1254 = vpop.permute.xlu0 %1253
        %1255 = vrot.lane.b32.xlu0 %v1184, 16
        %v1256 = vpop.permute.xlu0 %1255
        %1257 = vrot.lane.b32.xlu0 %v1186, 16
        %v1258 = vpop.permute.xlu0 %1257
        %1259 = vrot.lane.b32.xlu0 %v1188, 16
        %v1260 = vpop.permute.xlu0 %1259
        %1261 = vrot.lane.b32.xlu0 %v1190, 16
        %v1262 = vpop.permute.xlu0 %1261
        %1263 = vrot.lane.b32.xlu0 %v1192, 16
        %v1264 = vpop.permute.xlu0 %1263
        %1265 = vrot.lane.b32.xlu0 %v1194, 16
        %v1266 = vpop.permute.xlu0 %1265
        %1267 = vrot.lane.b32.xlu0 %v1196, 16
        %v1268 = vpop.permute.xlu0 %1267
        %1269 = vrot.lane.b32.xlu0 %v1198, 16
        %v1270 = vpop.permute.xlu0 %1269
        %1271 = vrot.lane.b32.xlu0 %v1200, 16
        %v1272 = vpop.permute.xlu0 %1271
        %1273 = vrot.lane.b32.xlu0 %v1202, 16
        %v1274 = vpop.permute.xlu0 %1273
        %1275 = vrot.lane.b32.xlu0 %v1204, 16
        %v1276 = vpop.permute.xlu0 %1275
        %1277 = vrot.lane.b32.xlu0 %v1206, 16
        %v1278 = vpop.permute.xlu0 %1277
        %1279 = vrot.lane.b32.xlu0 %v1208, 16
        %v1280 = vpop.permute.xlu0 %1279
        %1281 = vrot.lane.b32.xlu0 %v1210, 16
        %v1282 = vpop.permute.xlu0 %1281
        %1283 = vrot.lane.b32.xlu0 %v1212, 16
        %v1284 = vpop.permute.xlu0 %1283
        %1285 = vrot.lane.b32.xlu0 %v1214, 16
        %v1286 = vpop.permute.xlu0 %1285
        %1287 = vrot.lane.b32.xlu0 %v1216, 16
        %v1288 = vpop.permute.xlu0 %1287
        %1289 = vrot.lane.b32.xlu0 %v1218, 16
        %v1290 = vpop.permute.xlu0 %1289
        %1291 = vrot.lane.b32.xlu0 %v1220, 16
        %v1292 = vpop.permute.xlu0 %1291
        %1293 = vrot.lane.b32.xlu0 %v1222, 16
        %v1294 = vpop.permute.xlu0 %1293
        %1295 = vrot.lane.b32.xlu0 %v1224, 16
        %v1296 = vpop.permute.xlu0 %1295
        %1297 = vrot.lane.b32.xlu0 %v1226, 16
        %v1298 = vpop.permute.xlu0 %1297
        %1299 = vrot.lane.b32.xlu0 %v1228, 16
        %v1300 = vpop.permute.xlu0 %1299
        %1301 = vrot.lane.b32.xlu0 %v1230, 16
        %v1302 = vpop.permute.xlu0 %1301
        %1303 = vrot.lane.b32.xlu0 %v1232, 16
        %v1304 = vpop.permute.xlu0 %1303
        %1305 = vrot.lane.b32.xlu0 %v1234, 16
        %v1306 = vpop.permute.xlu0 %1305
        %1307 = vrot.lane.b32.xlu0 %v1236, 16
        %v1308 = vpop.permute.xlu0 %1307
        %v1345 = vmul.f32 %v1089, %v1238
        %v1346 = vmul.f32 %v1090, %v1240
        %v1347 = vmul.f32 %v1091, %v1242
        %v1348 = vmul.f32 %v1092, %v1244
        %v1349 = vmul.f32 %v1093, %v1246
        %v1350 = vmul.f32 %v1094, %v1248
        %v1351 = vmul.f32 %v1095, %v1250
        %v1352 = vmul.f32 %v1096, %v1252
        %v1353 = vmul.f32 %v1097, %v1254
        %v1354 = vmul.f32 %v1098, %v1256
        %v1355 = vmul.f32 %v1099, %v1258
        %v1356 = vmul.f32 %v1100, %v1260
        %v1357 = vmul.f32 %v1101, %v1262
        %v1358 = vmul.f32 %v1102, %v1264
        %v1359 = vmul.f32 %v1103, %v1266
        %v1360 = vmul.f32 %v1104, %v1268
        %v1361 = vmul.f32 %v1105, %v1270
        %v1362 = vmul.f32 %v1106, %v1272
        %v1363 = vmul.f32 %v1107, %v1274
        %v1364 = vmul.f32 %v1108, %v1276
        %v1365 = vmul.f32 %v1109, %v1278
        %v1366 = vmul.f32 %v1110, %v1280
        %v1367 = vmul.f32 %v1111, %v1282
        %v1368 = vmul.f32 %v1112, %v1284
        %v1369 = vmul.f32 %v1113, %v1286
        %v1370 = vmul.f32 %v1114, %v1288
        %v1371 = vmul.f32 %v1115, %v1290
        %v1372 = vmul.f32 %v1116, %v1292
        %v1373 = vmul.f32 %v1117, %v1294
        %v1374 = vmul.f32 %v1118, %v1296
        %v1375 = vmul.f32 %v1119, %v1298
        %v1376 = vmul.f32 %v1120, %v1300
        %v1377 = vmul.f32 %v1121, %v1302
        %v1378 = vmul.f32 %v1122, %v1304
        %v1379 = vmul.f32 %v1123, %v1306
        %v1380 = vmul.f32 %v1124, %v1308
        %1417 = vrot.lane.b32.xlu0 %v1345, 112
        %v1418 = vpop.permute.xlu0 %1417
        %1419 = vrot.lane.b32.xlu0 %v1346, 112
        %v1420 = vpop.permute.xlu0 %1419
        %1421 = vrot.lane.b32.xlu0 %v1347, 112
        %v1422 = vpop.permute.xlu0 %1421
        %1423 = vrot.lane.b32.xlu0 %v1348, 112
        %v1424 = vpop.permute.xlu0 %1423
        %1425 = vrot.lane.b32.xlu0 %v1349, 112
        %v1426 = vpop.permute.xlu0 %1425
        %1427 = vrot.lane.b32.xlu0 %v1350, 112
        %v1428 = vpop.permute.xlu0 %1427
        %1429 = vrot.lane.b32.xlu0 %v1351, 112
        %v1430 = vpop.permute.xlu0 %1429
        %1431 = vrot.lane.b32.xlu0 %v1352, 112
        %v1432 = vpop.permute.xlu0 %1431
        %1433 = vrot.lane.b32.xlu0 %v1353, 112
        %v1434 = vpop.permute.xlu0 %1433
        %1435 = vrot.lane.b32.xlu0 %v1354, 112
        %v1436 = vpop.permute.xlu0 %1435
        %1437 = vrot.lane.b32.xlu0 %v1355, 112
        %v1438 = vpop.permute.xlu0 %1437
        %1439 = vrot.lane.b32.xlu0 %v1356, 112
        %v1440 = vpop.permute.xlu0 %1439
        %1441 = vrot.lane.b32.xlu0 %v1357, 112
        %v1442 = vpop.permute.xlu0 %1441
        %1443 = vrot.lane.b32.xlu0 %v1358, 112
        %v1444 = vpop.permute.xlu0 %1443
        %1445 = vrot.lane.b32.xlu0 %v1359, 112
        %v1446 = vpop.permute.xlu0 %1445
        %1447 = vrot.lane.b32.xlu0 %v1360, 112
        %v1448 = vpop.permute.xlu0 %1447
        %1449 = vrot.lane.b32.xlu0 %v1361, 112
        %v1450 = vpop.permute.xlu0 %1449
        %1451 = vrot.lane.b32.xlu0 %v1362, 112
        %v1452 = vpop.permute.xlu0 %1451
        %1453 = vrot.lane.b32.xlu0 %v1363, 112
        %v1454 = vpop.permute.xlu0 %1453
        %1455 = vrot.lane.b32.xlu0 %v1364, 112
        %v1456 = vpop.permute.xlu0 %1455
        %1457 = vrot.lane.b32.xlu0 %v1365, 112
        %v1458 = vpop.permute.xlu0 %1457
        %1459 = vrot.lane.b32.xlu0 %v1366, 112
        %v1460 = vpop.permute.xlu0 %1459
        %1461 = vrot.lane.b32.xlu0 %v1367, 112
        %v1462 = vpop.permute.xlu0 %1461
        %1463 = vrot.lane.b32.xlu0 %v1368, 112
        %v1464 = vpop.permute.xlu0 %1463
        %1465 = vrot.lane.b32.xlu0 %v1369, 112
        %v1466 = vpop.permute.xlu0 %1465
        %1467 = vrot.lane.b32.xlu0 %v1370, 112
        %v1468 = vpop.permute.xlu0 %1467
        %1469 = vrot.lane.b32.xlu0 %v1371, 112
        %v1470 = vpop.permute.xlu0 %1469
        %1471 = vrot.lane.b32.xlu0 %v1372, 112
        %v1472 = vpop.permute.xlu0 %1471
        %1473 = vrot.lane.b32.xlu0 %v1373, 112
        %v1474 = vpop.permute.xlu0 %1473
        %1475 = vrot.lane.b32.xlu0 %v1374, 112
        %v1476 = vpop.permute.xlu0 %1475
        %1477 = vrot.lane.b32.xlu0 %v1375, 112
        %v1478 = vpop.permute.xlu0 %1477
        %1479 = vrot.lane.b32.xlu0 %v1376, 112
        %v1480 = vpop.permute.xlu0 %1479
        %1481 = vrot.lane.b32.xlu0 %v1377, 112
        %v1482 = vpop.permute.xlu0 %1481
        %1483 = vrot.lane.b32.xlu0 %v1378, 112
        %v1484 = vpop.permute.xlu0 %1483
        %1485 = vrot.lane.b32.xlu0 %v1379, 112
        %v1486 = vpop.permute.xlu0 %1485
        %1487 = vrot.lane.b32.xlu0 %v1380, 112
        %v1488 = vpop.permute.xlu0 %1487
        %v1525 = vadd.f32 %v991, %v1418
        %v1526 = vadd.f32 %v992, %v1420
        %v1527 = vadd.f32 %v993, %v1422
        %v1528 = vadd.f32 %v994, %v1424
        %v1529 = vadd.f32 %v995, %v1426
        %v1530 = vadd.f32 %v996, %v1428
        %v1531 = vadd.f32 %v997, %v1430
        %v1532 = vadd.f32 %v998, %v1432
        %v1533 = vadd.f32 %v999, %v1434
        %v1534 = vadd.f32 %v1000, %v1436
        %v1535 = vadd.f32 %v1001, %v1438
        %v1536 = vadd.f32 %v1002, %v1440
        %v1537 = vadd.f32 %v1003, %v1442
        %v1538 = vadd.f32 %v1004, %v1444
        %v1539 = vadd.f32 %v1005, %v1446
        %v1540 = vadd.f32 %v1006, %v1448
        %v1541 = vadd.f32 %v1007, %v1450
        %v1542 = vadd.f32 %v1008, %v1452
        %v1543 = vadd.f32 %v1009, %v1454
        %v1544 = vadd.f32 %v1010, %v1456
        %v1545 = vadd.f32 %v1011, %v1458
        %v1546 = vadd.f32 %v1012, %v1460
        %v1547 = vadd.f32 %v1013, %v1462
        %v1548 = vadd.f32 %v1014, %v1464
        %v1549 = vadd.f32 %v1015, %v1466
        %v1550 = vadd.f32 %v1016, %v1468
        %v1551 = vadd.f32 %v1017, %v1470
        %v1552 = vadd.f32 %v1018, %v1472
        %v1553 = vadd.f32 %v1019, %v1474
        %v1554 = vadd.f32 %v1020, %v1476
        %v1555 = vadd.f32 %v1021, %v1478
        %v1556 = vadd.f32 %v1022, %v1480
        %v1557 = vadd.f32 %v1023, %v1482
        %v1558 = vadd.f32 %v1024, %v1484
        %v1559 = vadd.f32 %v1025, %v1486
        %v1560 = vadd.f32 %v1026, %v1488
        %1561 = vrot.lane.b32.xlu0 %v864, 32
        %v1562 = vpop.permute.xlu0 %1561
        %1563 = vrot.lane.b32.xlu0 %v865, 32
        %v1564 = vpop.permute.xlu0 %1563
        %1565 = vrot.lane.b32.xlu0 %v866, 32
        %v1566 = vpop.permute.xlu0 %1565
        %1567 = vrot.lane.b32.xlu0 %v867, 32
        %v1568 = vpop.permute.xlu0 %1567
        %1569 = vrot.lane.b32.xlu0 %v868, 32
        %v1570 = vpop.permute.xlu0 %1569
        %v1576 = vmul.f32 %v659, %v1562
        %v1577 = vmul.f32 %v660, %v1564
        %v1578 = vmul.f32 %v661, %v1566
        %v1579 = vmul.f32 %v662, %v1568
        %v1580 = vmul.f32 %v663, %v1570
        %v1586 = vrot.slane %v1576, 1
        %v1587 = vrot.slane %v1576, 2
        %v1588 = vrot.slane %v1576, 3
        %v1589 = vrot.slane %v1576, 4
        %v1590 = vrot.slane %v1576, 5
        %v1591 = vrot.slane %v1576, 6
        %v1592 = vrot.slane %v1576, 7
        %v1593 = vrot.slane %v1577, 1
        %v1594 = vrot.slane %v1577, 2
        %v1595 = vrot.slane %v1577, 3
        %v1596 = vrot.slane %v1577, 4
        %v1597 = vrot.slane %v1577, 5
        %v1598 = vrot.slane %v1577, 6
        %v1599 = vrot.slane %v1577, 7
        %v1600 = vrot.slane %v1578, 1
        %v1601 = vrot.slane %v1578, 2
        %v1602 = vrot.slane %v1578, 3
        %v1603 = vrot.slane %v1578, 4
        %v1604 = vrot.slane %v1578, 5
        %v1605 = vrot.slane %v1578, 6
        %v1606 = vrot.slane %v1578, 7
        %v1607 = vrot.slane %v1579, 1
        %v1608 = vrot.slane %v1579, 2
        %v1609 = vrot.slane %v1579, 3
        %v1610 = vrot.slane %v1579, 4
        %v1611 = vrot.slane %v1579, 5
        %v1612 = vrot.slane %v1579, 6
        %v1613 = vrot.slane %v1579, 7
        %v1614 = vrot.slane %v1580, 1
        %v1615 = vrot.slane %v1580, 2
        %v1616 = vrot.slane %v1580, 3
        %v1617 = vunpack.c.l.bf16 %v871
        %v1618 = vperm.slane %v1576, 0
        %v1619 = vperm.slane %v1586, 0
        %v1620 = vperm.slane %v1587, 0
        %v1621 = vperm.slane %v1588, 0
        %v1622 = vperm.slane %v1589, 0
        %v1623 = vperm.slane %v1590, 0
        %v1624 = vperm.slane %v1591, 0
        %v1625 = vperm.slane %v1592, 0
        %v1626 = vperm.slane %v1577, 0
        %v1627 = vperm.slane %v1593, 0
        %v1628 = vperm.slane %v1594, 0
        %v1629 = vperm.slane %v1595, 0
        %v1630 = vperm.slane %v1596, 0
        %v1631 = vperm.slane %v1597, 0
        %v1632 = vperm.slane %v1598, 0
        %v1633 = vperm.slane %v1599, 0
        %v1634 = vperm.slane %v1578, 0
        %v1635 = vperm.slane %v1600, 0
        %v1636 = vperm.slane %v1601, 0
        %v1637 = vperm.slane %v1602, 0
        %v1638 = vperm.slane %v1603, 0
        %v1639 = vperm.slane %v1604, 0
        %v1640 = vperm.slane %v1605, 0
        %v1641 = vperm.slane %v1606, 0
        %v1642 = vperm.slane %v1579, 0
        %v1643 = vperm.slane %v1607, 0
        %v1644 = vperm.slane %v1608, 0
        %v1645 = vperm.slane %v1609, 0
        %v1646 = vperm.slane %v1610, 0
        %v1647 = vperm.slane %v1611, 0
        %v1648 = vperm.slane %v1612, 0
        %v1649 = vperm.slane %v1613, 0
        %v1650 = vperm.slane %v1580, 0
        %v1651 = vperm.slane %v1614, 0
        %v1652 = vperm.slane %v1615, 0
        %v1653 = vperm.slane %v1616, 0
        %1691 = vst [vmem:[#allocation1] ss:$2 sm:$0xff] %v1617
        %v1692 = vld.sshfl [vmem:[#allocation1] sm:$0xff pattern:$0x75316420]
        %s1693 = scalar_lea.vmem [#allocation1], 16
        %1694 = vst [vmem:[%s1693] ss:$2 sm:$0xff] %v1617
        %v1695 = vld.sshfl [vmem:[#allocation1 + $0x10] sm:$0xff pattern:$0x75316420]
        %s1696 = scalar_lea.vmem [#allocation1], 32
        %1697 = vst [vmem:[%s1696] ss:$2 sm:$0xff] %v1617
        %v1698 = vld.sshfl [vmem:[#allocation1 + $0x20] sm:$0xff pattern:$0x75316420]
        %s1699 = scalar_lea.vmem [#allocation1], 48
        %1700 = vst [vmem:[%s1699] ss:$2 sm:$0xff] %v1617
        %v1701 = vld.sshfl [vmem:[#allocation1 + $0x30] sm:$0xff pattern:$0x75316420]
        %1702 = vst [vmem:[#allocation1] ss:$2 sm:$0xff] %v1617
        %v1703 = vld.sshfl [vmem:[#allocation1] sm:$0xff pattern:$0x75316420]
        %1704 = vst [vmem:[%s1693] ss:$2 sm:$0xff] %v1617
        %v1705 = vld.sshfl [vmem:[#allocation1 + $0x10] sm:$0xff pattern:$0x75316420]
        %1706 = vst [vmem:[%s1696] ss:$2 sm:$0xff] %v1617
        %v1707 = vld.sshfl [vmem:[#allocation1 + $0x20] sm:$0xff pattern:$0x75316420]
        %1708 = vst [vmem:[%s1699] ss:$2 sm:$0xff] %v1617
        %v1709 = vld.sshfl [vmem:[#allocation1 + $0x30] sm:$0xff pattern:$0x75316420]
        %1710 = vst [vmem:[#allocation1] ss:$2 sm:$0xff] %v1617
        %v1711 = vld.sshfl [vmem:[#allocation1] sm:$0xff pattern:$0x75316420]
        %1712 = vst [vmem:[%s1693] ss:$2 sm:$0xff] %v1617
        %v1713 = vld.sshfl [vmem:[#allocation1 + $0x10] sm:$0xff pattern:$0x75316420]
        %1714 = vst [vmem:[%s1696] ss:$2 sm:$0xff] %v1617
        %v1715 = vld.sshfl [vmem:[#allocation1 + $0x20] sm:$0xff pattern:$0x75316420]
        %1716 = vst [vmem:[%s1699] ss:$2 sm:$0xff] %v1617
        %v1717 = vld.sshfl [vmem:[#allocation1 + $0x30] sm:$0xff pattern:$0x75316420]
        %1718 = vst [vmem:[#allocation1] ss:$2 sm:$0xff] %v1617
        %v1719 = vld.sshfl [vmem:[#allocation1] sm:$0xff pattern:$0x75316420]
        %1720 = vst [vmem:[%s1693] ss:$2 sm:$0xff] %v1617
        %v1721 = vld.sshfl [vmem:[#allocation1 + $0x10] sm:$0xff pattern:$0x75316420]
        %1722 = vst [vmem:[%s1696] ss:$2 sm:$0xff] %v1617
        %v1723 = vld.sshfl [vmem:[#allocation1 + $0x20] sm:$0xff pattern:$0x75316420]
        %1724 = vst [vmem:[%s1699] ss:$2 sm:$0xff] %v1617
        %v1725 = vld.sshfl [vmem:[#allocation1 + $0x30] sm:$0xff pattern:$0x75316420]
        %1726 = vst [vmem:[#allocation1] ss:$2 sm:$0xff] %v1617
        %v1727 = vld.sshfl [vmem:[#allocation1] sm:$0xff pattern:$0x75316420]
        %1728 = vst [vmem:[%s1693] ss:$2 sm:$0xff] %v1617
        %v1729 = vld.sshfl [vmem:[#allocation1 + $0x10] sm:$0xff pattern:$0x75316420]
        %1730 = vst [vmem:[%s1696] ss:$2 sm:$0xff] %v1617
        %v1731 = vld.sshfl [vmem:[#allocation1 + $0x20] sm:$0xff pattern:$0x75316420]
        %1732 = vst [vmem:[%s1699] ss:$2 sm:$0xff] %v1617
        %v1733 = vld.sshfl [vmem:[#allocation1 + $0x30] sm:$0xff pattern:$0x75316420]
        %1734 = vst [vmem:[#allocation1] ss:$2 sm:$0xff] %v1617
        %v1735 = vld.sshfl [vmem:[#allocation1] sm:$0xff pattern:$0x75316420]
        %1736 = vst [vmem:[%s1693] ss:$2 sm:$0xff] %v1617
        %v1737 = vld.sshfl [vmem:[#allocation1 + $0x10] sm:$0xff pattern:$0x75316420]
        %1738 = vst [vmem:[%s1696] ss:$2 sm:$0xff] %v1617
        %v1739 = vld.sshfl [vmem:[#allocation1 + $0x20] sm:$0xff pattern:$0x75316420]
        %1740 = vst [vmem:[%s1699] ss:$2 sm:$0xff] %v1617
        %v1741 = vld.sshfl [vmem:[#allocation1 + $0x30] sm:$0xff pattern:$0x75316420]
        %1742 = vst [vmem:[#allocation1] ss:$2 sm:$0xff] %v1617
        %v1743 = vld.sshfl [vmem:[#allocation1] sm:$0xff pattern:$0x75316420]
        %1744 = vst [vmem:[%s1693] ss:$2 sm:$0xff] %v1617
        %v1745 = vld.sshfl [vmem:[#allocation1 + $0x10] sm:$0xff pattern:$0x75316420]
        %1746 = vst [vmem:[%s1696] ss:$2 sm:$0xff] %v1617
        %v1747 = vld.sshfl [vmem:[#allocation1 + $0x20] sm:$0xff pattern:$0x75316420]
        %1748 = vst [vmem:[%s1699] ss:$2 sm:$0xff] %v1617
        %v1749 = vld.sshfl [vmem:[#allocation1 + $0x30] sm:$0xff pattern:$0x75316420]
        %1750 = vst [vmem:[#allocation1] ss:$2 sm:$0xff] %v1617
        %v1751 = vld.sshfl [vmem:[#allocation1] sm:$0xff pattern:$0x75316420]
        %1752 = vst [vmem:[%s1693] ss:$2 sm:$0xff] %v1617
        %v1753 = vld.sshfl [vmem:[#allocation1 + $0x10] sm:$0xff pattern:$0x75316420]
        %1754 = vst [vmem:[%s1696] ss:$2 sm:$0xff] %v1617
        %v1755 = vld.sshfl [vmem:[#allocation1 + $0x20] sm:$0xff pattern:$0x75316420]
        %1756 = vst [vmem:[%s1699] ss:$2 sm:$0xff] %v1617
        %v1757 = vld.sshfl [vmem:[#allocation1 + $0x30] sm:$0xff pattern:$0x75316420]
        %1758 = vst [vmem:[#allocation1] ss:$2 sm:$0xff] %v1617
        %v1759 = vld.sshfl [vmem:[#allocation1] sm:$0xff pattern:$0x75316420]
        %1760 = vst [vmem:[%s1693] ss:$2 sm:$0xff] %v1617
        %v1761 = vld.sshfl [vmem:[#allocation1 + $0x10] sm:$0xff pattern:$0x75316420]
        %1762 = vst [vmem:[%s1696] ss:$2 sm:$0xff] %v1617
        %v1763 = vld.sshfl [vmem:[#allocation1 + $0x20] sm:$0xff pattern:$0x75316420]
        %1764 = vst [vmem:[%s1699] ss:$2 sm:$0xff] %v1617
        %v1765 = vld.sshfl [vmem:[#allocation1 + $0x30] sm:$0xff pattern:$0x75316420]
        %1766 = vrot.lane.b32.xlu0 %v1692, 32
        %v1767 = vpop.permute.xlu0 %1766
        %1768 = vrot.lane.b32.xlu0 %v1695, 32
        %v1769 = vpop.permute.xlu0 %1768
        %1770 = vrot.lane.b32.xlu0 %v1698, 32
        %v1771 = vpop.permute.xlu0 %1770
        %1772 = vrot.lane.b32.xlu0 %v1701, 32
        %v1773 = vpop.permute.xlu0 %1772
        %1774 = vrot.lane.b32.xlu0 %v1703, 32
        %v1775 = vpop.permute.xlu0 %1774
        %1776 = vrot.lane.b32.xlu0 %v1705, 32
        %v1777 = vpop.permute.xlu0 %1776
        %1778 = vrot.lane.b32.xlu0 %v1707, 32
        %v1779 = vpop.permute.xlu0 %1778
        %1780 = vrot.lane.b32.xlu0 %v1709, 32
        %v1781 = vpop.permute.xlu0 %1780
        %1782 = vrot.lane.b32.xlu0 %v1711, 32
        %v1783 = vpop.permute.xlu0 %1782
        %1784 = vrot.lane.b32.xlu0 %v1713, 32
        %v1785 = vpop.permute.xlu0 %1784
        %1786 = vrot.lane.b32.xlu0 %v1715, 32
        %v1787 = vpop.permute.xlu0 %1786
        %1788 = vrot.lane.b32.xlu0 %v1717, 32
        %v1789 = vpop.permute.xlu0 %1788
        %1790 = vrot.lane.b32.xlu0 %v1719, 32
        %v1791 = vpop.permute.xlu0 %1790
        %1792 = vrot.lane.b32.xlu0 %v1721, 32
        %v1793 = vpop.permute.xlu0 %1792
        %1794 = vrot.lane.b32.xlu0 %v1723, 32
        %v1795 = vpop.permute.xlu0 %1794
        %1796 = vrot.lane.b32.xlu0 %v1725, 32
        %v1797 = vpop.permute.xlu0 %1796
        %1798 = vrot.lane.b32.xlu0 %v1727, 32
        %v1799 = vpop.permute.xlu0 %1798
        %1800 = vrot.lane.b32.xlu0 %v1729, 32
        %v1801 = vpop.permute.xlu0 %1800
        %1802 = vrot.lane.b32.xlu0 %v1731, 32
        %v1803 = vpop.permute.xlu0 %1802
        %1804 = vrot.lane.b32.xlu0 %v1733, 32
        %v1805 = vpop.permute.xlu0 %1804
        %1806 = vrot.lane.b32.xlu0 %v1735, 32
        %v1807 = vpop.permute.xlu0 %1806
        %1808 = vrot.lane.b32.xlu0 %v1737, 32
        %v1809 = vpop.permute.xlu0 %1808
        %1810 = vrot.lane.b32.xlu0 %v1739, 32
        %v1811 = vpop.permute.xlu0 %1810
        %1812 = vrot.lane.b32.xlu0 %v1741, 32
        %v1813 = vpop.permute.xlu0 %1812
        %1814 = vrot.lane.b32.xlu0 %v1743, 32
        %v1815 = vpop.permute.xlu0 %1814
        %1816 = vrot.lane.b32.xlu0 %v1745, 32
        %v1817 = vpop.permute.xlu0 %1816
        %1818 = vrot.lane.b32.xlu0 %v1747, 32
        %v1819 = vpop.permute.xlu0 %1818
        %1820 = vrot.lane.b32.xlu0 %v1749, 32
        %v1821 = vpop.permute.xlu0 %1820
        %1822 = vrot.lane.b32.xlu0 %v1751, 32
        %v1823 = vpop.permute.xlu0 %1822
        %1824 = vrot.lane.b32.xlu0 %v1753, 32
        %v1825 = vpop.permute.xlu0 %1824
        %1826 = vrot.lane.b32.xlu0 %v1755, 32
        %v1827 = vpop.permute.xlu0 %1826
        %1828 = vrot.lane.b32.xlu0 %v1757, 32
        %v1829 = vpop.permute.xlu0 %1828
        %1830 = vrot.lane.b32.xlu0 %v1759, 32
        %v1831 = vpop.permute.xlu0 %1830
        %1832 = vrot.lane.b32.xlu0 %v1761, 32
        %v1833 = vpop.permute.xlu0 %1832
        %1834 = vrot.lane.b32.xlu0 %v1763, 32
        %v1835 = vpop.permute.xlu0 %1834
        %1836 = vrot.lane.b32.xlu0 %v1765, 32
        %v1837 = vpop.permute.xlu0 %1836
        %v1874 = vmul.f32 %v1618, %v1767
        %v1875 = vmul.f32 %v1619, %v1769
        %v1876 = vmul.f32 %v1620, %v1771
        %v1877 = vmul.f32 %v1621, %v1773
        %v1878 = vmul.f32 %v1622, %v1775
        %v1879 = vmul.f32 %v1623, %v1777
        %v1880 = vmul.f32 %v1624, %v1779
        %v1881 = vmul.f32 %v1625, %v1781
        %v1882 = vmul.f32 %v1626, %v1783
        %v1883 = vmul.f32 %v1627, %v1785
        %v1884 = vmul.f32 %v1628, %v1787
        %v1885 = vmul.f32 %v1629, %v1789
        %v1886 = vmul.f32 %v1630, %v1791
        %v1887 = vmul.f32 %v1631, %v1793
        %v1888 = vmul.f32 %v1632, %v1795
        %v1889 = vmul.f32 %v1633, %v1797
        %v1890 = vmul.f32 %v1634, %v1799
        %v1891 = vmul.f32 %v1635, %v1801
        %v1892 = vmul.f32 %v1636, %v1803
        %v1893 = vmul.f32 %v1637, %v1805
        %v1894 = vmul.f32 %v1638, %v1807
        %v1895 = vmul.f32 %v1639, %v1809
        %v1896 = vmul.f32 %v1640, %v1811
        %v1897 = vmul.f32 %v1641, %v1813
        %v1898 = vmul.f32 %v1642, %v1815
        %v1899 = vmul.f32 %v1643, %v1817
        %v1900 = vmul.f32 %v1644, %v1819
        %v1901 = vmul.f32 %v1645, %v1821
        %v1902 = vmul.f32 %v1646, %v1823
        %v1903 = vmul.f32 %v1647, %v1825
        %v1904 = vmul.f32 %v1648, %v1827
        %v1905 = vmul.f32 %v1649, %v1829
        %v1906 = vmul.f32 %v1650, %v1831
        %v1907 = vmul.f32 %v1651, %v1833
        %v1908 = vmul.f32 %v1652, %v1835
        %v1909 = vmul.f32 %v1653, %v1837
        %1946 = vrot.lane.b32.xlu0 %v1874, 96
        %v1947 = vpop.permute.xlu0 %1946
        %1948 = vrot.lane.b32.xlu0 %v1875, 96
        %v1949 = vpop.permute.xlu0 %1948
        %1950 = vrot.lane.b32.xlu0 %v1876, 96
        %v1951 = vpop.permute.xlu0 %1950
        %1952 = vrot.lane.b32.xlu0 %v1877, 96
        %v1953 = vpop.permute.xlu0 %1952
        %1954 = vrot.lane.b32.xlu0 %v1878, 96
        %v1955 = vpop.permute.xlu0 %1954
        %1956 = vrot.lane.b32.xlu0 %v1879, 96
        %v1957 = vpop.permute.xlu0 %1956
        %1958 = vrot.lane.b32.xlu0 %v1880, 96
        %v1959 = vpop.permute.xlu0 %1958
        %1960 = vrot.lane.b32.xlu0 %v1881, 96
        %v1961 = vpop.permute.xlu0 %1960
        %1962 = vrot.lane.b32.xlu0 %v1882, 96
        %v1963 = vpop.permute.xlu0 %1962
        %1964 = vrot.lane.b32.xlu0 %v1883, 96
        %v1965 = vpop.permute.xlu0 %1964
        %1966 = vrot.lane.b32.xlu0 %v1884, 96
        %v1967 = vpop.permute.xlu0 %1966
        %1968 = vrot.lane.b32.xlu0 %v1885, 96
        %v1969 = vpop.permute.xlu0 %1968
        %1970 = vrot.lane.b32.xlu0 %v1886, 96
        %v1971 = vpop.permute.xlu0 %1970
        %1972 = vrot.lane.b32.xlu0 %v1887, 96
        %v1973 = vpop.permute.xlu0 %1972
        %1974 = vrot.lane.b32.xlu0 %v1888, 96
        %v1975 = vpop.permute.xlu0 %1974
        %1976 = vrot.lane.b32.xlu0 %v1889, 96
        %v1977 = vpop.permute.xlu0 %1976
        %1978 = vrot.lane.b32.xlu0 %v1890, 96
        %v1979 = vpop.permute.xlu0 %1978
        %1980 = vrot.lane.b32.xlu0 %v1891, 96
        %v1981 = vpop.permute.xlu0 %1980
        %1982 = vrot.lane.b32.xlu0 %v1892, 96
        %v1983 = vpop.permute.xlu0 %1982
        %1984 = vrot.lane.b32.xlu0 %v1893, 96
        %v1985 = vpop.permute.xlu0 %1984
        %1986 = vrot.lane.b32.xlu0 %v1894, 96
        %v1987 = vpop.permute.xlu0 %1986
        %1988 = vrot.lane.b32.xlu0 %v1895, 96
        %v1989 = vpop.permute.xlu0 %1988
        %1990 = vrot.lane.b32.xlu0 %v1896, 96
        %v1991 = vpop.permute.xlu0 %1990
        %1992 = vrot.lane.b32.xlu0 %v1897, 96
        %v1993 = vpop.permute.xlu0 %1992
        %1994 = vrot.lane.b32.xlu0 %v1898, 96
        %v1995 = vpop.permute.xlu0 %1994
        %1996 = vrot.lane.b32.xlu0 %v1899, 96
        %v1997 = vpop.permute.xlu0 %1996
        %1998 = vrot.lane.b32.xlu0 %v1900, 96
        %v1999 = vpop.permute.xlu0 %1998
        %2000 = vrot.lane.b32.xlu0 %v1901, 96
        %v2001 = vpop.permute.xlu0 %2000
        %2002 = vrot.lane.b32.xlu0 %v1902, 96
        %v2003 = vpop.permute.xlu0 %2002
        %2004 = vrot.lane.b32.xlu0 %v1903, 96
        %v2005 = vpop.permute.xlu0 %2004
        %2006 = vrot.lane.b32.xlu0 %v1904, 96
        %v2007 = vpop.permute.xlu0 %2006
        %2008 = vrot.lane.b32.xlu0 %v1905, 96
        %v2009 = vpop.permute.xlu0 %2008
        %2010 = vrot.lane.b32.xlu0 %v1906, 96
        %v2011 = vpop.permute.xlu0 %2010
        %2012 = vrot.lane.b32.xlu0 %v1907, 96
        %v2013 = vpop.permute.xlu0 %2012
        %2014 = vrot.lane.b32.xlu0 %v1908, 96
        %v2015 = vpop.permute.xlu0 %2014
        %2016 = vrot.lane.b32.xlu0 %v1909, 96
        %v2017 = vpop.permute.xlu0 %2016
        %v2054 = vadd.f32 %v1525, %v1947
        %v2055 = vadd.f32 %v1526, %v1949
        %v2056 = vadd.f32 %v1527, %v1951
        %v2057 = vadd.f32 %v1528, %v1953
        %v2058 = vadd.f32 %v1529, %v1955
        %v2059 = vadd.f32 %v1530, %v1957
        %v2060 = vadd.f32 %v1531, %v1959
        %v2061 = vadd.f32 %v1532, %v1961
        %v2062 = vadd.f32 %v1533, %v1963
        %v2063 = vadd.f32 %v1534, %v1965
        %v2064 = vadd.f32 %v1535, %v1967
        %v2065 = vadd.f32 %v1536, %v1969
        %v2066 = vadd.f32 %v1537, %v1971
        %v2067 = vadd.f32 %v1538, %v1973
        %v2068 = vadd.f32 %v1539, %v1975
        %v2069 = vadd.f32 %v1540, %v1977
        %v2070 = vadd.f32 %v1541, %v1979
        %v2071 = vadd.f32 %v1542, %v1981
        %v2072 = vadd.f32 %v1543, %v1983
        %v2073 = vadd.f32 %v1544, %v1985
        %v2074 = vadd.f32 %v1545, %v1987
        %v2075 = vadd.f32 %v1546, %v1989
        %v2076 = vadd.f32 %v1547, %v1991
        %v2077 = vadd.f32 %v1548, %v1993
        %v2078 = vadd.f32 %v1549, %v1995
        %v2079 = vadd.f32 %v1550, %v1997
        %v2080 = vadd.f32 %v1551, %v1999
        %v2081 = vadd.f32 %v1552, %v2001
        %v2082 = vadd.f32 %v1553, %v2003
        %v2083 = vadd.f32 %v1554, %v2005
        %v2084 = vadd.f32 %v1555, %v2007
        %v2085 = vadd.f32 %v1556, %v2009
        %v2086 = vadd.f32 %v1557, %v2011
        %v2087 = vadd.f32 %v1558, %v2013
        %v2088 = vadd.f32 %v1559, %v2015
        %v2089 = vadd.f32 %v1560, %v2017
        %2090 = vrot.lane.b32.xlu0 %v864, 48
        %v2091 = vpop.permute.xlu0 %2090
        %2092 = vrot.lane.b32.xlu0 %v865, 48
        %v2093 = vpop.permute.xlu0 %2092
        %2094 = vrot.lane.b32.xlu0 %v866, 48
        %v2095 = vpop.permute.xlu0 %2094
        %2096 = vrot.lane.b32.xlu0 %v867, 48
        %v2097 = vpop.permute.xlu0 %2096
        %2098 = vrot.lane.b32.xlu0 %v868, 48
        %v2099 = vpop.permute.xlu0 %2098
        %v2105 = vmul.f32 %v659, %v2091
        %v2106 = vmul.f32 %v660, %v2093
        %v2107 = vmul.f32 %v661, %v2095
        %v2108 = vmul.f32 %v662, %v2097
        %v2109 = vmul.f32 %v663, %v2099
        %v2115 = vrot.slane %v2105, 1
        %v2116 = vrot.slane %v2105, 2
        %v2117 = vrot.slane %v2105, 3
        %v2118 = vrot.slane %v2105, 4
        %v2119 = vrot.slane %v2105, 5
        %v2120 = vrot.slane %v2105, 6
        %v2121 = vrot.slane %v2105, 7
        %v2122 = vrot.slane %v2106, 1
        %v2123 = vrot.slane %v2106, 2
        %v2124 = vrot.slane %v2106, 3
        %v2125 = vrot.slane %v2106, 4
        %v2126 = vrot.slane %v2106, 5
        %v2127 = vrot.slane %v2106, 6
        %v2128 = vrot.slane %v2106, 7
        %v2129 = vrot.slane %v2107, 1
        %v2130 = vrot.slane %v2107, 2
        %v2131 = vrot.slane %v2107, 3
        %v2132 = vrot.slane %v2107, 4
        %v2133 = vrot.slane %v2107, 5
        %v2134 = vrot.slane %v2107, 6
        %v2135 = vrot.slane %v2107, 7
        %v2136 = vrot.slane %v2108, 1
        %v2137 = vrot.slane %v2108, 2
        %v2138 = vrot.slane %v2108, 3
        %v2139 = vrot.slane %v2108, 4
        %v2140 = vrot.slane %v2108, 5
        %v2141 = vrot.slane %v2108, 6
        %v2142 = vrot.slane %v2108, 7
        %v2143 = vrot.slane %v2109, 1
        %v2144 = vrot.slane %v2109, 2
        %v2145 = vrot.slane %v2109, 3
        %v2146 = vunpack.c.l.bf16 %v872
        %v2147 = vperm.slane %v2105, 0
        %v2148 = vperm.slane %v2115, 0
        %v2149 = vperm.slane %v2116, 0
        %v2150 = vperm.slane %v2117, 0
        %v2151 = vperm.slane %v2118, 0
        %v2152 = vperm.slane %v2119, 0
        %v2153 = vperm.slane %v2120, 0
        %v2154 = vperm.slane %v2121, 0
        %v2155 = vperm.slane %v2106, 0
        %v2156 = vperm.slane %v2122, 0
        %v2157 = vperm.slane %v2123, 0
        %v2158 = vperm.slane %v2124, 0
        %v2159 = vperm.slane %v2125, 0
        %v2160 = vperm.slane %v2126, 0
        %v2161 = vperm.slane %v2127, 0
        %v2162 = vperm.slane %v2128, 0
        %v2163 = vperm.slane %v2107, 0
        %v2164 = vperm.slane %v2129, 0
        %v2165 = vperm.slane %v2130, 0
        %v2166 = vperm.slane %v2131, 0
        %v2167 = vperm.slane %v2132, 0
        %v2168 = vperm.slane %v2133, 0
        %v2169 = vperm.slane %v2134, 0
        %v2170 = vperm.slane %v2135, 0
        %v2171 = vperm.slane %v2108, 0
        %v2172 = vperm.slane %v2136, 0
        %v2173 = vperm.slane %v2137, 0
        %v2174 = vperm.slane %v2138, 0
        %v2175 = vperm.slane %v2139, 0
        %v2176 = vperm.slane %v2140, 0
        %v2177 = vperm.slane %v2141, 0
        %v2178 = vperm.slane %v2142, 0
        %v2179 = vperm.slane %v2109, 0
        %v2180 = vperm.slane %v2143, 0
        %v2181 = vperm.slane %v2144, 0
        %v2182 = vperm.slane %v2145, 0
        %2220 = vst [vmem:[#allocation1] ss:$2 sm:$0xff] %v2146
        %v2221 = vld.sshfl [vmem:[#allocation1] sm:$0xff pattern:$0x75316420]
        %s2222 = scalar_lea.vmem [#allocation1], 16
        %2223 = vst [vmem:[%s2222] ss:$2 sm:$0xff] %v2146
        %v2224 = vld.sshfl [vmem:[#allocation1 + $0x10] sm:$0xff pattern:$0x75316420]
        %s2225 = scalar_lea.vmem [#allocation1], 32
        %2226 = vst [vmem:[%s2225] ss:$2 sm:$0xff] %v2146
        %v2227 = vld.sshfl [vmem:[#allocation1 + $0x20] sm:$0xff pattern:$0x75316420]
        %s2228 = scalar_lea.vmem [#allocation1], 48
        %2229 = vst [vmem:[%s2228] ss:$2 sm:$0xff] %v2146
        %v2230 = vld.sshfl [vmem:[#allocation1 + $0x30] sm:$0xff pattern:$0x75316420]
        %2231 = vst [vmem:[#allocation1] ss:$2 sm:$0xff] %v2146
        %v2232 = vld.sshfl [vmem:[#allocation1] sm:$0xff pattern:$0x75316420]
        %2233 = vst [vmem:[%s2222] ss:$2 sm:$0xff] %v2146
        %v2234 = vld.sshfl [vmem:[#allocation1 + $0x10] sm:$0xff pattern:$0x75316420]
        %2235 = vst [vmem:[%s2225] ss:$2 sm:$0xff] %v2146
        %v2236 = vld.sshfl [vmem:[#allocation1 + $0x20] sm:$0xff pattern:$0x75316420]
        %2237 = vst [vmem:[%s2228] ss:$2 sm:$0xff] %v2146
        %v2238 = vld.sshfl [vmem:[#allocation1 + $0x30] sm:$0xff pattern:$0x75316420]
        %2239 = vst [vmem:[#allocation1] ss:$2 sm:$0xff] %v2146
        %v2240 = vld.sshfl [vmem:[#allocation1] sm:$0xff pattern:$0x75316420]
        %2241 = vst [vmem:[%s2222] ss:$2 sm:$0xff] %v2146
        %v2242 = vld.sshfl [vmem:[#allocation1 + $0x10] sm:$0xff pattern:$0x75316420]
        %2243 = vst [vmem:[%s2225] ss:$2 sm:$0xff] %v2146
        %v2244 = vld.sshfl [vmem:[#allocation1 + $0x20] sm:$0xff pattern:$0x75316420]
        %2245 = vst [vmem:[%s2228] ss:$2 sm:$0xff] %v2146
        %v2246 = vld.sshfl [vmem:[#allocation1 + $0x30] sm:$0xff pattern:$0x75316420]
        %2247 = vst [vmem:[#allocation1] ss:$2 sm:$0xff] %v2146
        %v2248 = vld.sshfl [vmem:[#allocation1] sm:$0xff pattern:$0x75316420]
        %2249 = vst [vmem:[%s2222] ss:$2 sm:$0xff] %v2146
        %v2250 = vld.sshfl [vmem:[#allocation1 + $0x10] sm:$0xff pattern:$0x75316420]
        %2251 = vst [vmem:[%s2225] ss:$2 sm:$0xff] %v2146
        %v2252 = vld.sshfl [vmem:[#allocation1 + $0x20] sm:$0xff pattern:$0x75316420]
        %2253 = vst [vmem:[%s2228] ss:$2 sm:$0xff] %v2146
        %v2254 = vld.sshfl [vmem:[#allocation1 + $0x30] sm:$0xff pattern:$0x75316420]
        %2255 = vst [vmem:[#allocation1] ss:$2 sm:$0xff] %v2146
        %v2256 = vld.sshfl [vmem:[#allocation1] sm:$0xff pattern:$0x75316420]
        %2257 = vst [vmem:[%s2222] ss:$2 sm:$0xff] %v2146
        %v2258 = vld.sshfl [vmem:[#allocation1 + $0x10] sm:$0xff pattern:$0x75316420]
        %2259 = vst [vmem:[%s2225] ss:$2 sm:$0xff] %v2146
        %v2260 = vld.sshfl [vmem:[#allocation1 + $0x20] sm:$0xff pattern:$0x75316420]
        %2261 = vst [vmem:[%s2228] ss:$2 sm:$0xff] %v2146
        %v2262 = vld.sshfl [vmem:[#allocation1 + $0x30] sm:$0xff pattern:$0x75316420]
        %2263 = vst [vmem:[#allocation1] ss:$2 sm:$0xff] %v2146
        %v2264 = vld.sshfl [vmem:[#allocation1] sm:$0xff pattern:$0x75316420]
        %2265 = vst [vmem:[%s2222] ss:$2 sm:$0xff] %v2146
        %v2266 = vld.sshfl [vmem:[#allocation1 + $0x10] sm:$0xff pattern:$0x75316420]
        %2267 = vst [vmem:[%s2225] ss:$2 sm:$0xff] %v2146
        %v2268 = vld.sshfl [vmem:[#allocation1 + $0x20] sm:$0xff pattern:$0x75316420]
        %2269 = vst [vmem:[%s2228] ss:$2 sm:$0xff] %v2146
        %v2270 = vld.sshfl [vmem:[#allocation1 + $0x30] sm:$0xff pattern:$0x75316420]
        %2271 = vst [vmem:[#allocation1] ss:$2 sm:$0xff] %v2146
        %v2272 = vld.sshfl [vmem:[#allocation1] sm:$0xff pattern:$0x75316420]
        %2273 = vst [vmem:[%s2222] ss:$2 sm:$0xff] %v2146
        %v2274 = vld.sshfl [vmem:[#allocation1 + $0x10] sm:$0xff pattern:$0x75316420]
        %2275 = vst [vmem:[%s2225] ss:$2 sm:$0xff] %v2146
        %v2276 = vld.sshfl [vmem:[#allocation1 + $0x20] sm:$0xff pattern:$0x75316420]
        %2277 = vst [vmem:[%s2228] ss:$2 sm:$0xff] %v2146
        %v2278 = vld.sshfl [vmem:[#allocation1 + $0x30] sm:$0xff pattern:$0x75316420]
        %2279 = vst [vmem:[#allocation1] ss:$2 sm:$0xff] %v2146
        %v2280 = vld.sshfl [vmem:[#allocation1] sm:$0xff pattern:$0x75316420]
        %2281 = vst [vmem:[%s2222] ss:$2 sm:$0xff] %v2146
        %v2282 = vld.sshfl [vmem:[#allocation1 + $0x10] sm:$0xff pattern:$0x75316420]
        %2283 = vst [vmem:[%s2225] ss:$2 sm:$0xff] %v2146
        %v2284 = vld.sshfl [vmem:[#allocation1 + $0x20] sm:$0xff pattern:$0x75316420]
        %2285 = vst [vmem:[%s2228] ss:$2 sm:$0xff] %v2146
        %v2286 = vld.sshfl [vmem:[#allocation1 + $0x30] sm:$0xff pattern:$0x75316420]
        %2287 = vst [vmem:[#allocation1] ss:$2 sm:$0xff] %v2146
        %v2288 = vld.sshfl [vmem:[#allocation1] sm:$0xff pattern:$0x75316420]
        %2289 = vst [vmem:[%s2222] ss:$2 sm:$0xff] %v2146
        %v2290 = vld.sshfl [vmem:[#allocation1 + $0x10] sm:$0xff pattern:$0x75316420]
        %2291 = vst [vmem:[%s2225] ss:$2 sm:$0xff] %v2146
        %v2292 = vld.sshfl [vmem:[#allocation1 + $0x20] sm:$0xff pattern:$0x75316420]
        %2293 = vst [vmem:[%s2228] ss:$2 sm:$0xff] %v2146
        %v2294 = vld.sshfl [vmem:[#allocation1 + $0x30] sm:$0xff pattern:$0x75316420]
        %2295 = vrot.lane.b32.xlu0 %v2221, 48
        %v2296 = vpop.permute.xlu0 %2295
        %2297 = vrot.lane.b32.xlu0 %v2224, 48
        %v2298 = vpop.permute.xlu0 %2297
        %2299 = vrot.lane.b32.xlu0 %v2227, 48
        %v2300 = vpop.permute.xlu0 %2299
        %2301 = vrot.lane.b32.xlu0 %v2230, 48
        %v2302 = vpop.permute.xlu0 %2301
        %2303 = vrot.lane.b32.xlu0 %v2232, 48
        %v2304 = vpop.permute.xlu0 %2303
        %2305 = vrot.lane.b32.xlu0 %v2234, 48
        %v2306 = vpop.permute.xlu0 %2305
        %2307 = vrot.lane.b32.xlu0 %v2236, 48
        %v2308 = vpop.permute.xlu0 %2307
        %2309 = vrot.lane.b32.xlu0 %v2238, 48
        %v2310 = vpop.permute.xlu0 %2309
        %2311 = vrot.lane.b32.xlu0 %v2240, 48
        %v2312 = vpop.permute.xlu0 %2311
        %2313 = vrot.lane.b32.xlu0 %v2242, 48
        %v2314 = vpop.permute.xlu0 %2313
        %2315 = vrot.lane.b32.xlu0 %v2244, 48
        %v2316 = vpop.permute.xlu0 %2315
        %2317 = vrot.lane.b32.xlu0 %v2246, 48
        %v2318 = vpop.permute.xlu0 %2317
        %2319 = vrot.lane.b32.xlu0 %v2248, 48
        %v2320 = vpop.permute.xlu0 %2319
        %2321 = vrot.lane.b32.xlu0 %v2250, 48
        %v2322 = vpop.permute.xlu0 %2321
        %2323 = vrot.lane.b32.xlu0 %v2252, 48
        %v2324 = vpop.permute.xlu0 %2323
        %2325 = vrot.lane.b32.xlu0 %v2254, 48
        %v2326 = vpop.permute.xlu0 %2325
        %2327 = vrot.lane.b32.xlu0 %v2256, 48
        %v2328 = vpop.permute.xlu0 %2327
        %2329 = vrot.lane.b32.xlu0 %v2258, 48
        %v2330 = vpop.permute.xlu0 %2329
        %2331 = vrot.lane.b32.xlu0 %v2260, 48
        %v2332 = vpop.permute.xlu0 %2331
        %2333 = vrot.lane.b32.xlu0 %v2262, 48
        %v2334 = vpop.permute.xlu0 %2333
        %2335 = vrot.lane.b32.xlu0 %v2264, 48
        %v2336 = vpop.permute.xlu0 %2335
        %2337 = vrot.lane.b32.xlu0 %v2266, 48
        %v2338 = vpop.permute.xlu0 %2337
        %2339 = vrot.lane.b32.xlu0 %v2268, 48
        %v2340 = vpop.permute.xlu0 %2339
        %2341 = vrot.lane.b32.xlu0 %v2270, 48
        %v2342 = vpop.permute.xlu0 %2341
        %2343 = vrot.lane.b32.xlu0 %v2272, 48
        %v2344 = vpop.permute.xlu0 %2343
        %2345 = vrot.lane.b32.xlu0 %v2274, 48
        %v2346 = vpop.permute.xlu0 %2345
        %2347 = vrot.lane.b32.xlu0 %v2276, 48
        %v2348 = vpop.permute.xlu0 %2347
        %2349 = vrot.lane.b32.xlu0 %v2278, 48
        %v2350 = vpop.permute.xlu0 %2349
        %2351 = vrot.lane.b32.xlu0 %v2280, 48
        %v2352 = vpop.permute.xlu0 %2351
        %2353 = vrot.lane.b32.xlu0 %v2282, 48
        %v2354 = vpop.permute.xlu0 %2353
        %2355 = vrot.lane.b32.xlu0 %v2284, 48
        %v2356 = vpop.permute.xlu0 %2355
        %2357 = vrot.lane.b32.xlu0 %v2286, 48
        %v2358 = vpop.permute.xlu0 %2357
        %2359 = vrot.lane.b32.xlu0 %v2288, 48
        %v2360 = vpop.permute.xlu0 %2359
        %2361 = vrot.lane.b32.xlu0 %v2290, 48
        %v2362 = vpop.permute.xlu0 %2361
        %2363 = vrot.lane.b32.xlu0 %v2292, 48
        %v2364 = vpop.permute.xlu0 %2363
        %2365 = vrot.lane.b32.xlu0 %v2294, 48
        %v2366 = vpop.permute.xlu0 %2365
        %v2403 = vmul.f32 %v2147, %v2296
        %v2404 = vmul.f32 %v2148, %v2298
        %v2405 = vmul.f32 %v2149, %v2300
        %v2406 = vmul.f32 %v2150, %v2302
        %v2407 = vmul.f32 %v2151, %v2304
        %v2408 = vmul.f32 %v2152, %v2306
        %v2409 = vmul.f32 %v2153, %v2308
        %v2410 = vmul.f32 %v2154, %v2310
        %v2411 = vmul.f32 %v2155, %v2312
        %v2412 = vmul.f32 %v2156, %v2314
        %v2413 = vmul.f32 %v2157, %v2316
        %v2414 = vmul.f32 %v2158, %v2318
        %v2415 = vmul.f32 %v2159, %v2320
        %v2416 = vmul.f32 %v2160, %v2322
        %v2417 = vmul.f32 %v2161, %v2324
        %v2418 = vmul.f32 %v2162, %v2326
        %v2419 = vmul.f32 %v2163, %v2328
        %v2420 = vmul.f32 %v2164, %v2330
        %v2421 = vmul.f32 %v2165, %v2332
        %v2422 = vmul.f32 %v2166, %v2334
        %v2423 = vmul.f32 %v2167, %v2336
        %v2424 = vmul.f32 %v2168, %v2338
        %v2425 = vmul.f32 %v2169, %v2340
        %v2426 = vmul.f32 %v2170, %v2342
        %v2427 = vmul.f32 %v2171, %v2344
        %v2428 = vmul.f32 %v2172, %v2346
        %v2429 = vmul.f32 %v2173, %v2348
        %v2430 = vmul.f32 %v2174, %v2350
        %v2431 = vmul.f32 %v2175, %v2352
        %v2432 = vmul.f32 %v2176, %v2354
        %v2433 = vmul.f32 %v2177, %v2356
        %v2434 = vmul.f32 %v2178, %v2358
        %v2435 = vmul.f32 %v2179, %v2360
        %v2436 = vmul.f32 %v2180, %v2362
        %v2437 = vmul.f32 %v2181, %v2364
        %v2438 = vmul.f32 %v2182, %v2366
        %2475 = vrot.lane.b32.xlu0 %v2403, 80
        %v2476 = vpop.permute.xlu0 %2475
        %2477 = vrot.lane.b32.xlu0 %v2404, 80
        %v2478 = vpop.permute.xlu0 %2477
        %2479 = vrot.lane.b32.xlu0 %v2405, 80
        %v2480 = vpop.permute.xlu0 %2479
        %2481 = vrot.lane.b32.xlu0 %v2406, 80
        %v2482 = vpop.permute.xlu0 %2481
        %2483 = vrot.lane.b32.xlu0 %v2407, 80
        %v2484 = vpop.permute.xlu0 %2483
        %2485 = vrot.lane.b32.xlu0 %v2408, 80
        %v2486 = vpop.permute.xlu0 %2485
        %2487 = vrot.lane.b32.xlu0 %v2409, 80
        %v2488 = vpop.permute.xlu0 %2487
        %2489 = vrot.lane.b32.xlu0 %v2410, 80
        %v2490 = vpop.permute.xlu0 %2489
        %2491 = vrot.lane.b32.xlu0 %v2411, 80
        %v2492 = vpop.permute.xlu0 %2491
        %2493 = vrot.lane.b32.xlu0 %v2412, 80
        %v2494 = vpop.permute.xlu0 %2493
        %2495 = vrot.lane.b32.xlu0 %v2413, 80
        %v2496 = vpop.permute.xlu0 %2495
        %2497 = vrot.lane.b32.xlu0 %v2414, 80
        %v2498 = vpop.permute.xlu0 %2497
        %2499 = vrot.lane.b32.xlu0 %v2415, 80
        %v2500 = vpop.permute.xlu0 %2499
        %2501 = vrot.lane.b32.xlu0 %v2416, 80
        %v2502 = vpop.permute.xlu0 %2501
        %2503 = vrot.lane.b32.xlu0 %v2417, 80
        %v2504 = vpop.permute.xlu0 %2503
        %2505 = vrot.lane.b32.xlu0 %v2418, 80
        %v2506 = vpop.permute.xlu0 %2505
        %2507 = vrot.lane.b32.xlu0 %v2419, 80
        %v2508 = vpop.permute.xlu0 %2507
        %2509 = vrot.lane.b32.xlu0 %v2420, 80
        %v2510 = vpop.permute.xlu0 %2509
        %2511 = vrot.lane.b32.xlu0 %v2421, 80
        %v2512 = vpop.permute.xlu0 %2511
        %2513 = vrot.lane.b32.xlu0 %v2422, 80
        %v2514 = vpop.permute.xlu0 %2513
        %2515 = vrot.lane.b32.xlu0 %v2423, 80
        %v2516 = vpop.permute.xlu0 %2515
        %2517 = vrot.lane.b32.xlu0 %v2424, 80
        %v2518 = vpop.permute.xlu0 %2517
        %2519 = vrot.lane.b32.xlu0 %v2425, 80
        %v2520 = vpop.permute.xlu0 %2519
        %2521 = vrot.lane.b32.xlu0 %v2426, 80
        %v2522 = vpop.permute.xlu0 %2521
        %2523 = vrot.lane.b32.xlu0 %v2427, 80
        %v2524 = vpop.permute.xlu0 %2523
        %2525 = vrot.lane.b32.xlu0 %v2428, 80
        %v2526 = vpop.permute.xlu0 %2525
        %2527 = vrot.lane.b32.xlu0 %v2429, 80
        %v2528 = vpop.permute.xlu0 %2527
        %2529 = vrot.lane.b32.xlu0 %v2430, 80
        %v2530 = vpop.permute.xlu0 %2529
        %2531 = vrot.lane.b32.xlu0 %v2431, 80
        %v2532 = vpop.permute.xlu0 %2531
        %2533 = vrot.lane.b32.xlu0 %v2432, 80
        %v2534 = vpop.permute.xlu0 %2533
        %2535 = vrot.lane.b32.xlu0 %v2433, 80
        %v2536 = vpop.permute.xlu0 %2535
        %2537 = vrot.lane.b32.xlu0 %v2434, 80
        %v2538 = vpop.permute.xlu0 %2537
        %2539 = vrot.lane.b32.xlu0 %v2435, 80
        %v2540 = vpop.permute.xlu0 %2539
        %2541 = vrot.lane.b32.xlu0 %v2436, 80
        %v2542 = vpop.permute.xlu0 %2541
        %2543 = vrot.lane.b32.xlu0 %v2437, 80
        %v2544 = vpop.permute.xlu0 %2543
        %2545 = vrot.lane.b32.xlu0 %v2438, 80
        %v2546 = vpop.permute.xlu0 %2545
        %v2583 = vadd.f32 %v2054, %v2476
        %v2584 = vadd.f32 %v2055, %v2478
        %v2585 = vadd.f32 %v2056, %v2480
        %v2586 = vadd.f32 %v2057, %v2482
        %v2587 = vadd.f32 %v2058, %v2484
        %v2588 = vadd.f32 %v2059, %v2486
        %v2589 = vadd.f32 %v2060, %v2488
        %v2590 = vadd.f32 %v2061, %v2490
        %v2591 = vadd.f32 %v2062, %v2492
        %v2592 = vadd.f32 %v2063, %v2494
        %v2593 = vadd.f32 %v2064, %v2496
        %v2594 = vadd.f32 %v2065, %v2498
        %v2595 = vadd.f32 %v2066, %v2500
        %v2596 = vadd.f32 %v2067, %v2502
        %v2597 = vadd.f32 %v2068, %v2504
        %v2598 = vadd.f32 %v2069, %v2506
        %v2599 = vadd.f32 %v2070, %v2508
        %v2600 = vadd.f32 %v2071, %v2510
        %v2601 = vadd.f32 %v2072, %v2512
        %v2602 = vadd.f32 %v2073, %v2514
        %v2603 = vadd.f32 %v2074, %v2516
        %v2604 = vadd.f32 %v2075, %v2518
        %v2605 = vadd.f32 %v2076, %v2520
        %v2606 = vadd.f32 %v2077, %v2522
        %v2607 = vadd.f32 %v2078, %v2524
        %v2608 = vadd.f32 %v2079, %v2526
        %v2609 = vadd.f32 %v2080, %v2528
        %v2610 = vadd.f32 %v2081, %v2530
        %v2611 = vadd.f32 %v2082, %v2532
        %v2612 = vadd.f32 %v2083, %v2534
        %v2613 = vadd.f32 %v2084, %v2536
        %v2614 = vadd.f32 %v2085, %v2538
        %v2615 = vadd.f32 %v2086, %v2540
        %v2616 = vadd.f32 %v2087, %v2542
        %v2617 = vadd.f32 %v2088, %v2544
        %v2618 = vadd.f32 %v2089, %v2546
        %2619 = vrot.lane.b32.xlu0 %v864, 64
        %v2620 = vpop.permute.xlu0 %2619
        %2621 = vrot.lane.b32.xlu0 %v865, 64
        %v2622 = vpop.permute.xlu0 %2621
        %2623 = vrot.lane.b32.xlu0 %v866, 64
        %v2624 = vpop.permute.xlu0 %2623
        %2625 = vrot.lane.b32.xlu0 %v867, 64
        %v2626 = vpop.permute.xlu0 %2625
        %2627 = vrot.lane.b32.xlu0 %v868, 64
        %v2628 = vpop.permute.xlu0 %2627
        %v2634 = vmul.f32 %v659, %v2620
        %v2635 = vmul.f32 %v660, %v2622
        %v2636 = vmul.f32 %v661, %v2624
        %v2637 = vmul.f32 %v662, %v2626
        %v2638 = vmul.f32 %v663, %v2628
        %v2644 = vrot.slane %v2634, 1
        %v2645 = vrot.slane %v2634, 2
        %v2646 = vrot.slane %v2634, 3
        %v2647 = vrot.slane %v2634, 4
        %v2648 = vrot.slane %v2634, 5
        %v2649 = vrot.slane %v2634, 6
        %v2650 = vrot.slane %v2634, 7
        %v2651 = vrot.slane %v2635, 1
        %v2652 = vrot.slane %v2635, 2
        %v2653 = vrot.slane %v2635, 3
        %v2654 = vrot.slane %v2635, 4
        %v2655 = vrot.slane %v2635, 5
        %v2656 = vrot.slane %v2635, 6
        %v2657 = vrot.slane %v2635, 7
        %v2658 = vrot.slane %v2636, 1
        %v2659 = vrot.slane %v2636, 2
        %v2660 = vrot.slane %v2636, 3
        %v2661 = vrot.slane %v2636, 4
        %v2662 = vrot.slane %v2636, 5
        %v2663 = vrot.slane %v2636, 6
        %v2664 = vrot.slane %v2636, 7
        %v2665 = vrot.slane %v2637, 1
        %v2666 = vrot.slane %v2637, 2
        %v2667 = vrot.slane %v2637, 3
        %v2668 = vrot.slane %v2637, 4
        %v2669 = vrot.slane %v2637, 5
        %v2670 = vrot.slane %v2637, 6
        %v2671 = vrot.slane %v2637, 7
        %v2672 = vrot.slane %v2638, 1
        %v2673 = vrot.slane %v2638, 2
        %v2674 = vrot.slane %v2638, 3
        %v2675 = vunpack.c.l.bf16 %v873
        %v2676 = vperm.slane %v2634, 0
        %v2677 = vperm.slane %v2644, 0
        %v2678 = vperm.slane %v2645, 0
        %v2679 = vperm.slane %v2646, 0
        %v2680 = vperm.slane %v2647, 0
        %v2681 = vperm.slane %v2648, 0
        %v2682 = vperm.slane %v2649, 0
        %v2683 = vperm.slane %v2650, 0
        %v2684 = vperm.slane %v2635, 0
        %v2685 = vperm.slane %v2651, 0
        %v2686 = vperm.slane %v2652, 0
        %v2687 = vperm.slane %v2653, 0
        %v2688 = vperm.slane %v2654, 0
        %v2689 = vperm.slane %v2655, 0
        %v2690 = vperm.slane %v2656, 0
        %v2691 = vperm.slane %v2657, 0
        %v2692 = vperm.slane %v2636, 0
        %v2693 = vperm.slane %v2658, 0
        %v2694 = vperm.slane %v2659, 0
        %v2695 = vperm.slane %v2660, 0
        %v2696 = vperm.slane %v2661, 0
        %v2697 = vperm.slane %v2662, 0
        %v2698 = vperm.slane %v2663, 0
        %v2699 = vperm.slane %v2664, 0
        %v2700 = vperm.slane %v2637, 0
        %v2701 = vperm.slane %v2665, 0
        %v2702 = vperm.slane %v2666, 0
        %v2703 = vperm.slane %v2667, 0
        %v2704 = vperm.slane %v2668, 0
        %v2705 = vperm.slane %v2669, 0
        %v2706 = vperm.slane %v2670, 0
        %v2707 = vperm.slane %v2671, 0
        %v2708 = vperm.slane %v2638, 0
        %v2709 = vperm.slane %v2672, 0
        %v2710 = vperm.slane %v2673, 0
        %v2711 = vperm.slane %v2674, 0
        %2749 = vst [vmem:[#allocation1] ss:$2 sm:$0xff] %v2675
        %v2750 = vld.sshfl [vmem:[#allocation1] sm:$0xff pattern:$0x75316420]
        %s2751 = scalar_lea.vmem [#allocation1], 16
        %2752 = vst [vmem:[%s2751] ss:$2 sm:$0xff] %v2675
        %v2753 = vld.sshfl [vmem:[#allocation1 + $0x10] sm:$0xff pattern:$0x75316420]
        %s2754 = scalar_lea.vmem [#allocation1], 32
        %2755 = vst [vmem:[%s2754] ss:$2 sm:$0xff] %v2675
        %v2756 = vld.sshfl [vmem:[#allocation1 + $0x20] sm:$0xff pattern:$0x75316420]
        %s2757 = scalar_lea.vmem [#allocation1], 48
        %2758 = vst [vmem:[%s2757] ss:$2 sm:$0xff] %v2675
        %v2759 = vld.sshfl [vmem:[#allocation1 + $0x30] sm:$0xff pattern:$0x75316420]
        %2760 = vst [vmem:[#allocation1] ss:$2 sm:$0xff] %v2675
        %v2761 = vld.sshfl [vmem:[#allocation1] sm:$0xff pattern:$0x75316420]
        %2762 = vst [vmem:[%s2751] ss:$2 sm:$0xff] %v2675
        %v2763 = vld.sshfl [vmem:[#allocation1 + $0x10] sm:$0xff pattern:$0x75316420]
        %2764 = vst [vmem:[%s2754] ss:$2 sm:$0xff] %v2675
        %v2765 = vld.sshfl [vmem:[#allocation1 + $0x20] sm:$0xff pattern:$0x75316420]
        %2766 = vst [vmem:[%s2757] ss:$2 sm:$0xff] %v2675
        %v2767 = vld.sshfl [vmem:[#allocation1 + $0x30] sm:$0xff pattern:$0x75316420]
        %2768 = vst [vmem:[#allocation1] ss:$2 sm:$0xff] %v2675
        %v2769 = vld.sshfl [vmem:[#allocation1] sm:$0xff pattern:$0x75316420]
        %2770 = vst [vmem:[%s2751] ss:$2 sm:$0xff] %v2675
        %v2771 = vld.sshfl [vmem:[#allocation1 + $0x10] sm:$0xff pattern:$0x75316420]
        %2772 = vst [vmem:[%s2754] ss:$2 sm:$0xff] %v2675
        %v2773 = vld.sshfl [vmem:[#allocation1 + $0x20] sm:$0xff pattern:$0x75316420]
        %2774 = vst [vmem:[%s2757] ss:$2 sm:$0xff] %v2675
        %v2775 = vld.sshfl [vmem:[#allocation1 + $0x30] sm:$0xff pattern:$0x75316420]
        %2776 = vst [vmem:[#allocation1] ss:$2 sm:$0xff] %v2675
        %v2777 = vld.sshfl [vmem:[#allocation1] sm:$0xff pattern:$0x75316420]
        %2778 = vst [vmem:[%s2751] ss:$2 sm:$0xff] %v2675
        %v2779 = vld.sshfl [vmem:[#allocation1 + $0x10] sm:$0xff pattern:$0x75316420]
        %2780 = vst [vmem:[%s2754] ss:$2 sm:$0xff] %v2675
        %v2781 = vld.sshfl [vmem:[#allocation1 + $0x20] sm:$0xff pattern:$0x75316420]
        %2782 = vst [vmem:[%s2757] ss:$2 sm:$0xff] %v2675
        %v2783 = vld.sshfl [vmem:[#allocation1 + $0x30] sm:$0xff pattern:$0x75316420]
        %2784 = vst [vmem:[#allocation1] ss:$2 sm:$0xff] %v2675
        %v2785 = vld.sshfl [vmem:[#allocation1] sm:$0xff pattern:$0x75316420]
        %2786 = vst [vmem:[%s2751] ss:$2 sm:$0xff] %v2675
        %v2787 = vld.sshfl [vmem:[#allocation1 + $0x10] sm:$0xff pattern:$0x75316420]
        %2788 = vst [vmem:[%s2754] ss:$2 sm:$0xff] %v2675
        %v2789 = vld.sshfl [vmem:[#allocation1 + $0x20] sm:$0xff pattern:$0x75316420]
        %2790 = vst [vmem:[%s2757] ss:$2 sm:$0xff] %v2675
        %v2791 = vld.sshfl [vmem:[#allocation1 + $0x30] sm:$0xff pattern:$0x75316420]
        %2792 = vst [vmem:[#allocation1] ss:$2 sm:$0xff] %v2675
        %v2793 = vld.sshfl [vmem:[#allocation1] sm:$0xff pattern:$0x75316420]
        %2794 = vst [vmem:[%s2751] ss:$2 sm:$0xff] %v2675
        %v2795 = vld.sshfl [vmem:[#allocation1 + $0x10] sm:$0xff pattern:$0x75316420]
        %2796 = vst [vmem:[%s2754] ss:$2 sm:$0xff] %v2675
        %v2797 = vld.sshfl [vmem:[#allocation1 + $0x20] sm:$0xff pattern:$0x75316420]
        %2798 = vst [vmem:[%s2757] ss:$2 sm:$0xff] %v2675
        %v2799 = vld.sshfl [vmem:[#allocation1 + $0x30] sm:$0xff pattern:$0x75316420]
        %2800 = vst [vmem:[#allocation1] ss:$2 sm:$0xff] %v2675
        %v2801 = vld.sshfl [vmem:[#allocation1] sm:$0xff pattern:$0x75316420]
        %2802 = vst [vmem:[%s2751] ss:$2 sm:$0xff] %v2675
        %v2803 = vld.sshfl [vmem:[#allocation1 + $0x10] sm:$0xff pattern:$0x75316420]
        %2804 = vst [vmem:[%s2754] ss:$2 sm:$0xff] %v2675
        %v2805 = vld.sshfl [vmem:[#allocation1 + $0x20] sm:$0xff pattern:$0x75316420]
        %2806 = vst [vmem:[%s2757] ss:$2 sm:$0xff] %v2675
        %v2807 = vld.sshfl [vmem:[#allocation1 + $0x30] sm:$0xff pattern:$0x75316420]
        %2808 = vst [vmem:[#allocation1] ss:$2 sm:$0xff] %v2675
        %v2809 = vld.sshfl [vmem:[#allocation1] sm:$0xff pattern:$0x75316420]
        %2810 = vst [vmem:[%s2751] ss:$2 sm:$0xff] %v2675
        %v2811 = vld.sshfl [vmem:[#allocation1 + $0x10] sm:$0xff pattern:$0x75316420]
        %2812 = vst [vmem:[%s2754] ss:$2 sm:$0xff] %v2675
        %v2813 = vld.sshfl [vmem:[#allocation1 + $0x20] sm:$0xff pattern:$0x75316420]
        %2814 = vst [vmem:[%s2757] ss:$2 sm:$0xff] %v2675
        %v2815 = vld.sshfl [vmem:[#allocation1 + $0x30] sm:$0xff pattern:$0x75316420]
        %2816 = vst [vmem:[#allocation1] ss:$2 sm:$0xff] %v2675
        %v2817 = vld.sshfl [vmem:[#allocation1] sm:$0xff pattern:$0x75316420]
        %2818 = vst [vmem:[%s2751] ss:$2 sm:$0xff] %v2675
        %v2819 = vld.sshfl [vmem:[#allocation1 + $0x10] sm:$0xff pattern:$0x75316420]
        %2820 = vst [vmem:[%s2754] ss:$2 sm:$0xff] %v2675
        %v2821 = vld.sshfl [vmem:[#allocation1 + $0x20] sm:$0xff pattern:$0x75316420]
        %2822 = vst [vmem:[%s2757] ss:$2 sm:$0xff] %v2675
        %v2823 = vld.sshfl [vmem:[#allocation1 + $0x30] sm:$0xff pattern:$0x75316420]
        %2824 = vrot.lane.b32.xlu0 %v2750, 64
        %v2825 = vpop.permute.xlu0 %2824
        %2826 = vrot.lane.b32.xlu0 %v2753, 64
        %v2827 = vpop.permute.xlu0 %2826
        %2828 = vrot.lane.b32.xlu0 %v2756, 64
        %v2829 = vpop.permute.xlu0 %2828
        %2830 = vrot.lane.b32.xlu0 %v2759, 64
        %v2831 = vpop.permute.xlu0 %2830
        %2832 = vrot.lane.b32.xlu0 %v2761, 64
        %v2833 = vpop.permute.xlu0 %2832
        %2834 = vrot.lane.b32.xlu0 %v2763, 64
        %v2835 = vpop.permute.xlu0 %2834
        %2836 = vrot.lane.b32.xlu0 %v2765, 64
        %v2837 = vpop.permute.xlu0 %2836
        %2838 = vrot.lane.b32.xlu0 %v2767, 64
        %v2839 = vpop.permute.xlu0 %2838
        %2840 = vrot.lane.b32.xlu0 %v2769, 64
        %v2841 = vpop.permute.xlu0 %2840
        %2842 = vrot.lane.b32.xlu0 %v2771, 64
        %v2843 = vpop.permute.xlu0 %2842
        %2844 = vrot.lane.b32.xlu0 %v2773, 64
        %v2845 = vpop.permute.xlu0 %2844
        %2846 = vrot.lane.b32.xlu0 %v2775, 64
        %v2847 = vpop.permute.xlu0 %2846
        %2848 = vrot.lane.b32.xlu0 %v2777, 64
        %v2849 = vpop.permute.xlu0 %2848
        %2850 = vrot.lane.b32.xlu0 %v2779, 64
        %v2851 = vpop.permute.xlu0 %2850
        %2852 = vrot.lane.b32.xlu0 %v2781, 64
        %v2853 = vpop.permute.xlu0 %2852
        %2854 = vrot.lane.b32.xlu0 %v2783, 64
        %v2855 = vpop.permute.xlu0 %2854
        %2856 = vrot.lane.b32.xlu0 %v2785, 64
        %v2857 = vpop.permute.xlu0 %2856
        %2858 = vrot.lane.b32.xlu0 %v2787, 64
        %v2859 = vpop.permute.xlu0 %2858
        %2860 = vrot.lane.b32.xlu0 %v2789, 64
        %v2861 = vpop.permute.xlu0 %2860
        %2862 = vrot.lane.b32.xlu0 %v2791, 64
        %v2863 = vpop.permute.xlu0 %2862
        %2864 = vrot.lane.b32.xlu0 %v2793, 64
        %v2865 = vpop.permute.xlu0 %2864
        %2866 = vrot.lane.b32.xlu0 %v2795, 64
        %v2867 = vpop.permute.xlu0 %2866
        %2868 = vrot.lane.b32.xlu0 %v2797, 64
        %v2869 = vpop.permute.xlu0 %2868
        %2870 = vrot.lane.b32.xlu0 %v2799, 64
        %v2871 = vpop.permute.xlu0 %2870
        %2872 = vrot.lane.b32.xlu0 %v2801, 64
        %v2873 = vpop.permute.xlu0 %2872
        %2874 = vrot.lane.b32.xlu0 %v2803, 64
        %v2875 = vpop.permute.xlu0 %2874
        %2876 = vrot.lane.b32.xlu0 %v2805, 64
        %v2877 = vpop.permute.xlu0 %2876
        %2878 = vrot.lane.b32.xlu0 %v2807, 64
        %v2879 = vpop.permute.xlu0 %2878
        %2880 = vrot.lane.b32.xlu0 %v2809, 64
        %v2881 = vpop.permute.xlu0 %2880
        %2882 = vrot.lane.b32.xlu0 %v2811, 64
        %v2883 = vpop.permute.xlu0 %2882
        %2884 = vrot.lane.b32.xlu0 %v2813, 64
        %v2885 = vpop.permute.xlu0 %2884
        %2886 = vrot.lane.b32.xlu0 %v2815, 64
        %v2887 = vpop.permute.xlu0 %2886
        %2888 = vrot.lane.b32.xlu0 %v2817, 64
        %v2889 = vpop.permute.xlu0 %2888
        %2890 = vrot.lane.b32.xlu0 %v2819, 64
        %v2891 = vpop.permute.xlu0 %2890
        %2892 = vrot.lane.b32.xlu0 %v2821, 64
        %v2893 = vpop.permute.xlu0 %2892
        %2894 = vrot.lane.b32.xlu0 %v2823, 64
        %v2895 = vpop.permute.xlu0 %2894
        %v2932 = vmul.f32 %v2676, %v2825
        %v2933 = vmul.f32 %v2677, %v2827
        %v2934 = vmul.f32 %v2678, %v2829
        %v2935 = vmul.f32 %v2679, %v2831
        %v2936 = vmul.f32 %v2680, %v2833
        %v2937 = vmul.f32 %v2681, %v2835
        %v2938 = vmul.f32 %v2682, %v2837
        %v2939 = vmul.f32 %v2683, %v2839
        %v2940 = vmul.f32 %v2684, %v2841
        %v2941 = vmul.f32 %v2685, %v2843
        %v2942 = vmul.f32 %v2686, %v2845
        %v2943 = vmul.f32 %v2687, %v2847
        %v2944 = vmul.f32 %v2688, %v2849
        %v2945 = vmul.f32 %v2689, %v2851
        %v2946 = vmul.f32 %v2690, %v2853
        %v2947 = vmul.f32 %v2691, %v2855
        %v2948 = vmul.f32 %v2692, %v2857
        %v2949 = vmul.f32 %v2693, %v2859
        %v2950 = vmul.f32 %v2694, %v2861
        %v2951 = vmul.f32 %v2695, %v2863
        %v2952 = vmul.f32 %v2696, %v2865
        %v2953 = vmul.f32 %v2697, %v2867
        %v2954 = vmul.f32 %v2698, %v2869
        %v2955 = vmul.f32 %v2699, %v2871
        %v2956 = vmul.f32 %v2700, %v2873
        %v2957 = vmul.f32 %v2701, %v2875
        %v2958 = vmul.f32 %v2702, %v2877
        %v2959 = vmul.f32 %v2703, %v2879
        %v2960 = vmul.f32 %v2704, %v2881
        %v2961 = vmul.f32 %v2705, %v2883
        %v2962 = vmul.f32 %v2706, %v2885
        %v2963 = vmul.f32 %v2707, %v2887
        %v2964 = vmul.f32 %v2708, %v2889
        %v2965 = vmul.f32 %v2709, %v2891
        %v2966 = vmul.f32 %v2710, %v2893
        %v2967 = vmul.f32 %v2711, %v2895
        %3004 = vrot.lane.b32.xlu0 %v2932, 64
        %v3005 = vpop.permute.xlu0 %3004
        %3006 = vrot.lane.b32.xlu0 %v2933, 64
        %v3007 = vpop.permute.xlu0 %3006
        %3008 = vrot.lane.b32.xlu0 %v2934, 64
        %v3009 = vpop.permute.xlu0 %3008
        %3010 = vrot.lane.b32.xlu0 %v2935, 64
        %v3011 = vpop.permute.xlu0 %3010
        %3012 = vrot.lane.b32.xlu0 %v2936, 64
        %v3013 = vpop.permute.xlu0 %3012
        %3014 = vrot.lane.b32.xlu0 %v2937, 64
        %v3015 = vpop.permute.xlu0 %3014
        %3016 = vrot.lane.b32.xlu0 %v2938, 64
        %v3017 = vpop.permute.xlu0 %3016
        %3018 = vrot.lane.b32.xlu0 %v2939, 64
        %v3019 = vpop.permute.xlu0 %3018
        %3020 = vrot.lane.b32.xlu0 %v2940, 64
        %v3021 = vpop.permute.xlu0 %3020
        %3022 = vrot.lane.b32.xlu0 %v2941, 64
        %v3023 = vpop.permute.xlu0 %3022
        %3024 = vrot.lane.b32.xlu0 %v2942, 64
        %v3025 = vpop.permute.xlu0 %3024
        %3026 = vrot.lane.b32.xlu0 %v2943, 64
        %v3027 = vpop.permute.xlu0 %3026
        %3028 = vrot.lane.b32.xlu0 %v2944, 64
        %v3029 = vpop.permute.xlu0 %3028
        %3030 = vrot.lane.b32.xlu0 %v2945, 64
        %v3031 = vpop.permute.xlu0 %3030
        %3032 = vrot.lane.b32.xlu0 %v2946, 64
        %v3033 = vpop.permute.xlu0 %3032
        %3034 = vrot.lane.b32.xlu0 %v2947, 64
        %v3035 = vpop.permute.xlu0 %3034
        %3036 = vrot.lane.b32.xlu0 %v2948, 64
        %v3037 = vpop.permute.xlu0 %3036
        %3038 = vrot.lane.b32.xlu0 %v2949, 64
        %v3039 = vpop.permute.xlu0 %3038
        %3040 = vrot.lane.b32.xlu0 %v2950, 64
        %v3041 = vpop.permute.xlu0 %3040
        %3042 = vrot.lane.b32.xlu0 %v2951, 64
        %v3043 = vpop.permute.xlu0 %3042
        %3044 = vrot.lane.b32.xlu0 %v2952, 64
        %v3045 = vpop.permute.xlu0 %3044
        %3046 = vrot.lane.b32.xlu0 %v2953, 64
        %v3047 = vpop.permute.xlu0 %3046
        %3048 = vrot.lane.b32.xlu0 %v2954, 64
        %v3049 = vpop.permute.xlu0 %3048
        %3050 = vrot.lane.b32.xlu0 %v2955, 64
        %v3051 = vpop.permute.xlu0 %3050
        %3052 = vrot.lane.b32.xlu0 %v2956, 64
        %v3053 = vpop.permute.xlu0 %3052
        %3054 = vrot.lane.b32.xlu0 %v2957, 64
        %v3055 = vpop.permute.xlu0 %3054
        %3056 = vrot.lane.b32.xlu0 %v2958, 64
        %v3057 = vpop.permute.xlu0 %3056
        %3058 = vrot.lane.b32.xlu0 %v2959, 64
        %v3059 = vpop.permute.xlu0 %3058
        %3060 = vrot.lane.b32.xlu0 %v2960, 64
        %v3061 = vpop.permute.xlu0 %3060
        %3062 = vrot.lane.b32.xlu0 %v2961, 64
        %v3063 = vpop.permute.xlu0 %3062
        %3064 = vrot.lane.b32.xlu0 %v2962, 64
        %v3065 = vpop.permute.xlu0 %3064
        %3066 = vrot.lane.b32.xlu0 %v2963, 64
        %v3067 = vpop.permute.xlu0 %3066
        %3068 = vrot.lane.b32.xlu0 %v2964, 64
        %v3069 = vpop.permute.xlu0 %3068
        %3070 = vrot.lane.b32.xlu0 %v2965, 64
        %v3071 = vpop.permute.xlu0 %3070
        %3072 = vrot.lane.b32.xlu0 %v2966, 64
        %v3073 = vpop.permute.xlu0 %3072
        %3074 = vrot.lane.b32.xlu0 %v2967, 64
        %v3075 = vpop.permute.xlu0 %3074
        %v3112 = vadd.f32 %v2583, %v3005
        %v3113 = vadd.f32 %v2584, %v3007
        %v3114 = vadd.f32 %v2585, %v3009
        %v3115 = vadd.f32 %v2586, %v3011
        %v3116 = vadd.f32 %v2587, %v3013
        %v3117 = vadd.f32 %v2588, %v3015
        %v3118 = vadd.f32 %v2589, %v3017
        %v3119 = vadd.f32 %v2590, %v3019
        %v3120 = vadd.f32 %v2591, %v3021
        %v3121 = vadd.f32 %v2592, %v3023
        %v3122 = vadd.f32 %v2593, %v3025
        %v3123 = vadd.f32 %v2594, %v3027
        %v3124 = vadd.f32 %v2595, %v3029
        %v3125 = vadd.f32 %v2596, %v3031
        %v3126 = vadd.f32 %v2597, %v3033
        %v3127 = vadd.f32 %v2598, %v3035
        %v3128 = vadd.f32 %v2599, %v3037
        %v3129 = vadd.f32 %v2600, %v3039
        %v3130 = vadd.f32 %v2601, %v3041
        %v3131 = vadd.f32 %v2602, %v3043
        %v3132 = vadd.f32 %v2603, %v3045
        %v3133 = vadd.f32 %v2604, %v3047
        %v3134 = vadd.f32 %v2605, %v3049
        %v3135 = vadd.f32 %v2606, %v3051
        %v3136 = vadd.f32 %v2607, %v3053
        %v3137 = vadd.f32 %v2608, %v3055
        %v3138 = vadd.f32 %v2609, %v3057
        %v3139 = vadd.f32 %v2610, %v3059
        %v3140 = vadd.f32 %v2611, %v3061
        %v3141 = vadd.f32 %v2612, %v3063
        %v3142 = vadd.f32 %v2613, %v3065
        %v3143 = vadd.f32 %v2614, %v3067
        %v3144 = vadd.f32 %v2615, %v3069
        %v3145 = vadd.f32 %v2616, %v3071
        %v3146 = vadd.f32 %v2617, %v3073
        %v3147 = vadd.f32 %v2618, %v3075
        %3148 = vrot.lane.b32.xlu0 %v864, 80
        %v3149 = vpop.permute.xlu0 %3148
        %3150 = vrot.lane.b32.xlu0 %v865, 80
        %v3151 = vpop.permute.xlu0 %3150
        %3152 = vrot.lane.b32.xlu0 %v866, 80
        %v3153 = vpop.permute.xlu0 %3152
        %3154 = vrot.lane.b32.xlu0 %v867, 80
        %v3155 = vpop.permute.xlu0 %3154
        %3156 = vrot.lane.b32.xlu0 %v868, 80
        %v3157 = vpop.permute.xlu0 %3156
        %v3163 = vmul.f32 %v659, %v3149
        %v3164 = vmul.f32 %v660, %v3151
        %v3165 = vmul.f32 %v661, %v3153
        %v3166 = vmul.f32 %v662, %v3155
        %v3167 = vmul.f32 %v663, %v3157
        %v3173 = vrot.slane %v3163, 1
        %v3174 = vrot.slane %v3163, 2
        %v3175 = vrot.slane %v3163, 3
        %v3176 = vrot.slane %v3163, 4
        %v3177 = vrot.slane %v3163, 5
        %v3178 = vrot.slane %v3163, 6
        %v3179 = vrot.slane %v3163, 7
        %v3180 = vrot.slane %v3164, 1
        %v3181 = vrot.slane %v3164, 2
        %v3182 = vrot.slane %v3164, 3
        %v3183 = vrot.slane %v3164, 4
        %v3184 = vrot.slane %v3164, 5
        %v3185 = vrot.slane %v3164, 6
        %v3186 = vrot.slane %v3164, 7
        %v3187 = vrot.slane %v3165, 1
        %v3188 = vrot.slane %v3165, 2
        %v3189 = vrot.slane %v3165, 3
        %v3190 = vrot.slane %v3165, 4
        %v3191 = vrot.slane %v3165, 5
        %v3192 = vrot.slane %v3165, 6
        %v3193 = vrot.slane %v3165, 7
        %v3194 = vrot.slane %v3166, 1
        %v3195 = vrot.slane %v3166, 2
        %v3196 = vrot.slane %v3166, 3
        %v3197 = vrot.slane %v3166, 4
        %v3198 = vrot.slane %v3166, 5
        %v3199 = vrot.slane %v3166, 6
        %v3200 = vrot.slane %v3166, 7
        %v3201 = vrot.slane %v3167, 1
        %v3202 = vrot.slane %v3167, 2
        %v3203 = vrot.slane %v3167, 3
        %v3204 = vunpack.c.l.bf16 %v874
        %v3205 = vperm.slane %v3163, 0
        %v3206 = vperm.slane %v3173, 0
        %v3207 = vperm.slane %v3174, 0
        %v3208 = vperm.slane %v3175, 0
        %v3209 = vperm.slane %v3176, 0
        %v3210 = vperm.slane %v3177, 0
        %v3211 = vperm.slane %v3178, 0
        %v3212 = vperm.slane %v3179, 0
        %v3213 = vperm.slane %v3164, 0
        %v3214 = vperm.slane %v3180, 0
        %v3215 = vperm.slane %v3181, 0
        %v3216 = vperm.slane %v3182, 0
        %v3217 = vperm.slane %v3183, 0
        %v3218 = vperm.slane %v3184, 0
        %v3219 = vperm.slane %v3185, 0
        %v3220 = vperm.slane %v3186, 0
        %v3221 = vperm.slane %v3165, 0
        %v3222 = vperm.slane %v3187, 0
        %v3223 = vperm.slane %v3188, 0
        %v3224 = vperm.slane %v3189, 0
        %v3225 = vperm.slane %v3190, 0
        %v3226 = vperm.slane %v3191, 0
        %v3227 = vperm.slane %v3192, 0
        %v3228 = vperm.slane %v3193, 0
        %v3229 = vperm.slane %v3166, 0
        %v3230 = vperm.slane %v3194, 0
        %v3231 = vperm.slane %v3195, 0
        %v3232 = vperm.slane %v3196, 0
        %v3233 = vperm.slane %v3197, 0
        %v3234 = vperm.slane %v3198, 0
        %v3235 = vperm.slane %v3199, 0
        %v3236 = vperm.slane %v3200, 0
        %v3237 = vperm.slane %v3167, 0
        %v3238 = vperm.slane %v3201, 0
        %v3239 = vperm.slane %v3202, 0
        %v3240 = vperm.slane %v3203, 0
        %3278 = vst [vmem:[#allocation1] ss:$2 sm:$0xff] %v3204
        %v3279 = vld.sshfl [vmem:[#allocation1] sm:$0xff pattern:$0x75316420]
        %s3280 = scalar_lea.vmem [#allocation1], 16
        %3281 = vst [vmem:[%s3280] ss:$2 sm:$0xff] %v3204
        %v3282 = vld.sshfl [vmem:[#allocation1 + $0x10] sm:$0xff pattern:$0x75316420]
        %s3283 = scalar_lea.vmem [#allocation1], 32
        %3284 = vst [vmem:[%s3283] ss:$2 sm:$0xff] %v3204
        %v3285 = vld.sshfl [vmem:[#allocation1 + $0x20] sm:$0xff pattern:$0x75316420]
        %s3286 = scalar_lea.vmem [#allocation1], 48
        %3287 = vst [vmem:[%s3286] ss:$2 sm:$0xff] %v3204
        %v3288 = vld.sshfl [vmem:[#allocation1 + $0x30] sm:$0xff pattern:$0x75316420]
        %3289 = vst [vmem:[#allocation1] ss:$2 sm:$0xff] %v3204
        %v3290 = vld.sshfl [vmem:[#allocation1] sm:$0xff pattern:$0x75316420]
        %3291 = vst [vmem:[%s3280] ss:$2 sm:$0xff] %v3204
        %v3292 = vld.sshfl [vmem:[#allocation1 + $0x10] sm:$0xff pattern:$0x75316420]
        %3293 = vst [vmem:[%s3283] ss:$2 sm:$0xff] %v3204
        %v3294 = vld.sshfl [vmem:[#allocation1 + $0x20] sm:$0xff pattern:$0x75316420]
        %3295 = vst [vmem:[%s3286] ss:$2 sm:$0xff] %v3204
        %v3296 = vld.sshfl [vmem:[#allocation1 + $0x30] sm:$0xff pattern:$0x75316420]
        %3297 = vst [vmem:[#allocation1] ss:$2 sm:$0xff] %v3204
        %v3298 = vld.sshfl [vmem:[#allocation1] sm:$0xff pattern:$0x75316420]
        %3299 = vst [vmem:[%s3280] ss:$2 sm:$0xff] %v3204
        %v3300 = vld.sshfl [vmem:[#allocation1 + $0x10] sm:$0xff pattern:$0x75316420]
        %3301 = vst [vmem:[%s3283] ss:$2 sm:$0xff] %v3204
        %v3302 = vld.sshfl [vmem:[#allocation1 + $0x20] sm:$0xff pattern:$0x75316420]
        %3303 = vst [vmem:[%s3286] ss:$2 sm:$0xff] %v3204
        %v3304 = vld.sshfl [vmem:[#allocation1 + $0x30] sm:$0xff pattern:$0x75316420]
        %3305 = vst [vmem:[#allocation1] ss:$2 sm:$0xff] %v3204
        %v3306 = vld.sshfl [vmem:[#allocation1] sm:$0xff pattern:$0x75316420]
        %3307 = vst [vmem:[%s3280] ss:$2 sm:$0xff] %v3204
        %v3308 = vld.sshfl [vmem:[#allocation1 + $0x10] sm:$0xff pattern:$0x75316420]
        %3309 = vst [vmem:[%s3283] ss:$2 sm:$0xff] %v3204
        %v3310 = vld.sshfl [vmem:[#allocation1 + $0x20] sm:$0xff pattern:$0x75316420]
        %3311 = vst [vmem:[%s3286] ss:$2 sm:$0xff] %v3204
        %v3312 = vld.sshfl [vmem:[#allocation1 + $0x30] sm:$0xff pattern:$0x75316420]
        %3313 = vst [vmem:[#allocation1] ss:$2 sm:$0xff] %v3204
        %v3314 = vld.sshfl [vmem:[#allocation1] sm:$0xff pattern:$0x75316420]
        %3315 = vst [vmem:[%s3280] ss:$2 sm:$0xff] %v3204
        %v3316 = vld.sshfl [vmem:[#allocation1 + $0x10] sm:$0xff pattern:$0x75316420]
        %3317 = vst [vmem:[%s3283] ss:$2 sm:$0xff] %v3204
        %v3318 = vld.sshfl [vmem:[#allocation1 + $0x20] sm:$0xff pattern:$0x75316420]
        %3319 = vst [vmem:[%s3286] ss:$2 sm:$0xff] %v3204
        %v3320 = vld.sshfl [vmem:[#allocation1 + $0x30] sm:$0xff pattern:$0x75316420]
        %3321 = vst [vmem:[#allocation1] ss:$2 sm:$0xff] %v3204
        %v3322 = vld.sshfl [vmem:[#allocation1] sm:$0xff pattern:$0x75316420]
        %3323 = vst [vmem:[%s3280] ss:$2 sm:$0xff] %v3204
        %v3324 = vld.sshfl [vmem:[#allocation1 + $0x10] sm:$0xff pattern:$0x75316420]
        %3325 = vst [vmem:[%s3283] ss:$2 sm:$0xff] %v3204
        %v3326 = vld.sshfl [vmem:[#allocation1 + $0x20] sm:$0xff pattern:$0x75316420]
        %3327 = vst [vmem:[%s3286] ss:$2 sm:$0xff] %v3204
        %v3328 = vld.sshfl [vmem:[#allocation1 + $0x30] sm:$0xff pattern:$0x75316420]
        %3329 = vst [vmem:[#allocation1] ss:$2 sm:$0xff] %v3204
        %v3330 = vld.sshfl [vmem:[#allocation1] sm:$0xff pattern:$0x75316420]
        %3331 = vst [vmem:[%s3280] ss:$2 sm:$0xff] %v3204
        %v3332 = vld.sshfl [vmem:[#allocation1 + $0x10] sm:$0xff pattern:$0x75316420]
        %3333 = vst [vmem:[%s3283] ss:$2 sm:$0xff] %v3204
        %v3334 = vld.sshfl [vmem:[#allocation1 + $0x20] sm:$0xff pattern:$0x75316420]
        %3335 = vst [vmem:[%s3286] ss:$2 sm:$0xff] %v3204
        %v3336 = vld.sshfl [vmem:[#allocation1 + $0x30] sm:$0xff pattern:$0x75316420]
        %3337 = vst [vmem:[#allocation1] ss:$2 sm:$0xff] %v3204
        %v3338 = vld.sshfl [vmem:[#allocation1] sm:$0xff pattern:$0x75316420]
        %3339 = vst [vmem:[%s3280] ss:$2 sm:$0xff] %v3204
        %v3340 = vld.sshfl [vmem:[#allocation1 + $0x10] sm:$0xff pattern:$0x75316420]
        %3341 = vst [vmem:[%s3283] ss:$2 sm:$0xff] %v3204
        %v3342 = vld.sshfl [vmem:[#allocation1 + $0x20] sm:$0xff pattern:$0x75316420]
        %3343 = vst [vmem:[%s3286] ss:$2 sm:$0xff] %v3204
        %v3344 = vld.sshfl [vmem:[#allocation1 + $0x30] sm:$0xff pattern:$0x75316420]
        %3345 = vst [vmem:[#allocation1] ss:$2 sm:$0xff] %v3204
        %v3346 = vld.sshfl [vmem:[#allocation1] sm:$0xff pattern:$0x75316420]
        %3347 = vst [vmem:[%s3280] ss:$2 sm:$0xff] %v3204
        %v3348 = vld.sshfl [vmem:[#allocation1 + $0x10] sm:$0xff pattern:$0x75316420]
        %3349 = vst [vmem:[%s3283] ss:$2 sm:$0xff] %v3204
        %v3350 = vld.sshfl [vmem:[#allocation1 + $0x20] sm:$0xff pattern:$0x75316420]
        %3351 = vst [vmem:[%s3286] ss:$2 sm:$0xff] %v3204
        %v3352 = vld.sshfl [vmem:[#allocation1 + $0x30] sm:$0xff pattern:$0x75316420]
        %3353 = vrot.lane.b32.xlu0 %v3279, 80
        %v3354 = vpop.permute.xlu0 %3353
        %3355 = vrot.lane.b32.xlu0 %v3282, 80
        %v3356 = vpop.permute.xlu0 %3355
        %3357 = vrot.lane.b32.xlu0 %v3285, 80
        %v3358 = vpop.permute.xlu0 %3357
        %3359 = vrot.lane.b32.xlu0 %v3288, 80
        %v3360 = vpop.permute.xlu0 %3359
        %3361 = vrot.lane.b32.xlu0 %v3290, 80
        %v3362 = vpop.permute.xlu0 %3361
        %3363 = vrot.lane.b32.xlu0 %v3292, 80
        %v3364 = vpop.permute.xlu0 %3363
        %3365 = vrot.lane.b32.xlu0 %v3294, 80
        %v3366 = vpop.permute.xlu0 %3365
        %3367 = vrot.lane.b32.xlu0 %v3296, 80
        %v3368 = vpop.permute.xlu0 %3367
        %3369 = vrot.lane.b32.xlu0 %v3298, 80
        %v3370 = vpop.permute.xlu0 %3369
        %3371 = vrot.lane.b32.xlu0 %v3300, 80
        %v3372 = vpop.permute.xlu0 %3371
        %3373 = vrot.lane.b32.xlu0 %v3302, 80
        %v3374 = vpop.permute.xlu0 %3373
        %3375 = vrot.lane.b32.xlu0 %v3304, 80
        %v3376 = vpop.permute.xlu0 %3375
        %3377 = vrot.lane.b32.xlu0 %v3306, 80
        %v3378 = vpop.permute.xlu0 %3377
        %3379 = vrot.lane.b32.xlu0 %v3308, 80
        %v3380 = vpop.permute.xlu0 %3379
        %3381 = vrot.lane.b32.xlu0 %v3310, 80
        %v3382 = vpop.permute.xlu0 %3381
        %3383 = vrot.lane.b32.xlu0 %v3312, 80
        %v3384 = vpop.permute.xlu0 %3383
        %3385 = vrot.lane.b32.xlu0 %v3314, 80
        %v3386 = vpop.permute.xlu0 %3385
        %3387 = vrot.lane.b32.xlu0 %v3316, 80
        %v3388 = vpop.permute.xlu0 %3387
        %3389 = vrot.lane.b32.xlu0 %v3318, 80
        %v3390 = vpop.permute.xlu0 %3389
        %3391 = vrot.lane.b32.xlu0 %v3320, 80
        %v3392 = vpop.permute.xlu0 %3391
        %3393 = vrot.lane.b32.xlu0 %v3322, 80
        %v3394 = vpop.permute.xlu0 %3393
        %3395 = vrot.lane.b32.xlu0 %v3324, 80
        %v3396 = vpop.permute.xlu0 %3395
        %3397 = vrot.lane.b32.xlu0 %v3326, 80
        %v3398 = vpop.permute.xlu0 %3397
        %3399 = vrot.lane.b32.xlu0 %v3328, 80
        %v3400 = vpop.permute.xlu0 %3399
        %3401 = vrot.lane.b32.xlu0 %v3330, 80
        %v3402 = vpop.permute.xlu0 %3401
        %3403 = vrot.lane.b32.xlu0 %v3332, 80
        %v3404 = vpop.permute.xlu0 %3403
        %3405 = vrot.lane.b32.xlu0 %v3334, 80
        %v3406 = vpop.permute.xlu0 %3405
        %3407 = vrot.lane.b32.xlu0 %v3336, 80
        %v3408 = vpop.permute.xlu0 %3407
        %3409 = vrot.lane.b32.xlu0 %v3338, 80
        %v3410 = vpop.permute.xlu0 %3409
        %3411 = vrot.lane.b32.xlu0 %v3340, 80
        %v3412 = vpop.permute.xlu0 %3411
        %3413 = vrot.lane.b32.xlu0 %v3342, 80
        %v3414 = vpop.permute.xlu0 %3413
        %3415 = vrot.lane.b32.xlu0 %v3344, 80
        %v3416 = vpop.permute.xlu0 %3415
        %3417 = vrot.lane.b32.xlu0 %v3346, 80
        %v3418 = vpop.permute.xlu0 %3417
        %3419 = vrot.lane.b32.xlu0 %v3348, 80
        %v3420 = vpop.permute.xlu0 %3419
        %3421 = vrot.lane.b32.xlu0 %v3350, 80
        %v3422 = vpop.permute.xlu0 %3421
        %3423 = vrot.lane.b32.xlu0 %v3352, 80
        %v3424 = vpop.permute.xlu0 %3423
        %v3461 = vmul.f32 %v3205, %v3354
        %v3462 = vmul.f32 %v3206, %v3356
        %v3463 = vmul.f32 %v3207, %v3358
        %v3464 = vmul.f32 %v3208, %v3360
        %v3465 = vmul.f32 %v3209, %v3362
        %v3466 = vmul.f32 %v3210, %v3364
        %v3467 = vmul.f32 %v3211, %v3366
        %v3468 = vmul.f32 %v3212, %v3368
        %v3469 = vmul.f32 %v3213, %v3370
        %v3470 = vmul.f32 %v3214, %v3372
        %v3471 = vmul.f32 %v3215, %v3374
        %v3472 = vmul.f32 %v3216, %v3376
        %v3473 = vmul.f32 %v3217, %v3378
        %v3474 = vmul.f32 %v3218, %v3380
        %v3475 = vmul.f32 %v3219, %v3382
        %v3476 = vmul.f32 %v3220, %v3384
        %v3477 = vmul.f32 %v3221, %v3386
        %v3478 = vmul.f32 %v3222, %v3388
        %v3479 = vmul.f32 %v3223, %v3390
        %v3480 = vmul.f32 %v3224, %v3392
        %v3481 = vmul.f32 %v3225, %v3394
        %v3482 = vmul.f32 %v3226, %v3396
        %v3483 = vmul.f32 %v3227, %v3398
        %v3484 = vmul.f32 %v3228, %v3400
        %v3485 = vmul.f32 %v3229, %v3402
        %v3486 = vmul.f32 %v3230, %v3404
        %v3487 = vmul.f32 %v3231, %v3406
        %v3488 = vmul.f32 %v3232, %v3408
        %v3489 = vmul.f32 %v3233, %v3410
        %v3490 = vmul.f32 %v3234, %v3412
        %v3491 = vmul.f32 %v3235, %v3414
        %v3492 = vmul.f32 %v3236, %v3416
        %v3493 = vmul.f32 %v3237, %v3418
        %v3494 = vmul.f32 %v3238, %v3420
        %v3495 = vmul.f32 %v3239, %v3422
        %v3496 = vmul.f32 %v3240, %v3424
        %3533 = vrot.lane.b32.xlu0 %v3461, 48
        %v3534 = vpop.permute.xlu0 %3533
        %3535 = vrot.lane.b32.xlu0 %v3462, 48
        %v3536 = vpop.permute.xlu0 %3535
        %3537 = vrot.lane.b32.xlu0 %v3463, 48
        %v3538 = vpop.permute.xlu0 %3537
        %3539 = vrot.lane.b32.xlu0 %v3464, 48
        %v3540 = vpop.permute.xlu0 %3539
        %3541 = vrot.lane.b32.xlu0 %v3465, 48
        %v3542 = vpop.permute.xlu0 %3541
        %3543 = vrot.lane.b32.xlu0 %v3466, 48
        %v3544 = vpop.permute.xlu0 %3543
        %3545 = vrot.lane.b32.xlu0 %v3467, 48
        %v3546 = vpop.permute.xlu0 %3545
        %3547 = vrot.lane.b32.xlu0 %v3468, 48
        %v3548 = vpop.permute.xlu0 %3547
        %3549 = vrot.lane.b32.xlu0 %v3469, 48
        %v3550 = vpop.permute.xlu0 %3549
        %3551 = vrot.lane.b32.xlu0 %v3470, 48
        %v3552 = vpop.permute.xlu0 %3551
        %3553 = vrot.lane.b32.xlu0 %v3471, 48
        %v3554 = vpop.permute.xlu0 %3553
        %3555 = vrot.lane.b32.xlu0 %v3472, 48
        %v3556 = vpop.permute.xlu0 %3555
        %3557 = vrot.lane.b32.xlu0 %v3473, 48
        %v3558 = vpop.permute.xlu0 %3557
        %3559 = vrot.lane.b32.xlu0 %v3474, 48
        %v3560 = vpop.permute.xlu0 %3559
        %3561 = vrot.lane.b32.xlu0 %v3475, 48
        %v3562 = vpop.permute.xlu0 %3561
        %3563 = vrot.lane.b32.xlu0 %v3476, 48
        %v3564 = vpop.permute.xlu0 %3563
        %3565 = vrot.lane.b32.xlu0 %v3477, 48
        %v3566 = vpop.permute.xlu0 %3565
        %3567 = vrot.lane.b32.xlu0 %v3478, 48
        %v3568 = vpop.permute.xlu0 %3567
        %3569 = vrot.lane.b32.xlu0 %v3479, 48
        %v3570 = vpop.permute.xlu0 %3569
        %3571 = vrot.lane.b32.xlu0 %v3480, 48
        %v3572 = vpop.permute.xlu0 %3571
        %3573 = vrot.lane.b32.xlu0 %v3481, 48
        %v3574 = vpop.permute.xlu0 %3573
        %3575 = vrot.lane.b32.xlu0 %v3482, 48
        %v3576 = vpop.permute.xlu0 %3575
        %3577 = vrot.lane.b32.xlu0 %v3483, 48
        %v3578 = vpop.permute.xlu0 %3577
        %3579 = vrot.lane.b32.xlu0 %v3484, 48
        %v3580 = vpop.permute.xlu0 %3579
        %3581 = vrot.lane.b32.xlu0 %v3485, 48
        %v3582 = vpop.permute.xlu0 %3581
        %3583 = vrot.lane.b32.xlu0 %v3486, 48
        %v3584 = vpop.permute.xlu0 %3583
        %3585 = vrot.lane.b32.xlu0 %v3487, 48
        %v3586 = vpop.permute.xlu0 %3585
        %3587 = vrot.lane.b32.xlu0 %v3488, 48
        %v3588 = vpop.permute.xlu0 %3587
        %3589 = vrot.lane.b32.xlu0 %v3489, 48
        %v3590 = vpop.permute.xlu0 %3589
        %3591 = vrot.lane.b32.xlu0 %v3490, 48
        %v3592 = vpop.permute.xlu0 %3591
        %3593 = vrot.lane.b32.xlu0 %v3491, 48
        %v3594 = vpop.permute.xlu0 %3593
        %3595 = vrot.lane.b32.xlu0 %v3492, 48
        %v3596 = vpop.permute.xlu0 %3595
        %3597 = vrot.lane.b32.xlu0 %v3493, 48
        %v3598 = vpop.permute.xlu0 %3597
        %3599 = vrot.lane.b32.xlu0 %v3494, 48
        %v3600 = vpop.permute.xlu0 %3599
        %3601 = vrot.lane.b32.xlu0 %v3495, 48
        %v3602 = vpop.permute.xlu0 %3601
        %3603 = vrot.lane.b32.xlu0 %v3496, 48
        %v3604 = vpop.permute.xlu0 %3603
        %v3641 = vadd.f32 %v3112, %v3534
        %v3642 = vadd.f32 %v3113, %v3536
        %v3643 = vadd.f32 %v3114, %v3538
        %v3644 = vadd.f32 %v3115, %v3540
        %v3645 = vadd.f32 %v3116, %v3542
        %v3646 = vadd.f32 %v3117, %v3544
        %v3647 = vadd.f32 %v3118, %v3546
        %v3648 = vadd.f32 %v3119, %v3548
        %v3649 = vadd.f32 %v3120, %v3550
        %v3650 = vadd.f32 %v3121, %v3552
        %v3651 = vadd.f32 %v3122, %v3554
        %v3652 = vadd.f32 %v3123, %v3556
        %v3653 = vadd.f32 %v3124, %v3558
        %v3654 = vadd.f32 %v3125, %v3560
        %v3655 = vadd.f32 %v3126, %v3562
        %v3656 = vadd.f32 %v3127, %v3564
        %v3657 = vadd.f32 %v3128, %v3566
        %v3658 = vadd.f32 %v3129, %v3568
        %v3659 = vadd.f32 %v3130, %v3570
        %v3660 = vadd.f32 %v3131, %v3572
        %v3661 = vadd.f32 %v3132, %v3574
        %v3662 = vadd.f32 %v3133, %v3576
        %v3663 = vadd.f32 %v3134, %v3578
        %v3664 = vadd.f32 %v3135, %v3580
        %v3665 = vadd.f32 %v3136, %v3582
        %v3666 = vadd.f32 %v3137, %v3584
        %v3667 = vadd.f32 %v3138, %v3586
        %v3668 = vadd.f32 %v3139, %v3588
        %v3669 = vadd.f32 %v3140, %v3590
        %v3670 = vadd.f32 %v3141, %v3592
        %v3671 = vadd.f32 %v3142, %v3594
        %v3672 = vadd.f32 %v3143, %v3596
        %v3673 = vadd.f32 %v3144, %v3598
        %v3674 = vadd.f32 %v3145, %v3600
        %v3675 = vadd.f32 %v3146, %v3602
        %v3676 = vadd.f32 %v3147, %v3604
        %3677 = vrot.lane.b32.xlu0 %v864, 96
        %v3678 = vpop.permute.xlu0 %3677
        %3679 = vrot.lane.b32.xlu0 %v865, 96
        %v3680 = vpop.permute.xlu0 %3679
        %3681 = vrot.lane.b32.xlu0 %v866, 96
        %v3682 = vpop.permute.xlu0 %3681
        %3683 = vrot.lane.b32.xlu0 %v867, 96
        %v3684 = vpop.permute.xlu0 %3683
        %3685 = vrot.lane.b32.xlu0 %v868, 96
        %v3686 = vpop.permute.xlu0 %3685
        %v3692 = vmul.f32 %v659, %v3678
        %v3693 = vmul.f32 %v660, %v3680
        %v3694 = vmul.f32 %v661, %v3682
        %v3695 = vmul.f32 %v662, %v3684
        %v3696 = vmul.f32 %v663, %v3686
        %v3702 = vrot.slane %v3692, 1
        %v3703 = vrot.slane %v3692, 2
        %v3704 = vrot.slane %v3692, 3
        %v3705 = vrot.slane %v3692, 4
        %v3706 = vrot.slane %v3692, 5
        %v3707 = vrot.slane %v3692, 6
        %v3708 = vrot.slane %v3692, 7
        %v3709 = vrot.slane %v3693, 1
        %v3710 = vrot.slane %v3693, 2
        %v3711 = vrot.slane %v3693, 3
        %v3712 = vrot.slane %v3693, 4
        %v3713 = vrot.slane %v3693, 5
        %v3714 = vrot.slane %v3693, 6
        %v3715 = vrot.slane %v3693, 7
        %v3716 = vrot.slane %v3694, 1
        %v3717 = vrot.slane %v3694, 2
        %v3718 = vrot.slane %v3694, 3
        %v3719 = vrot.slane %v3694, 4
        %v3720 = vrot.slane %v3694, 5
        %v3721 = vrot.slane %v3694, 6
        %v3722 = vrot.slane %v3694, 7
        %v3723 = vrot.slane %v3695, 1
        %v3724 = vrot.slane %v3695, 2
        %v3725 = vrot.slane %v3695, 3
        %v3726 = vrot.slane %v3695, 4
        %v3727 = vrot.slane %v3695, 5
        %v3728 = vrot.slane %v3695, 6
        %v3729 = vrot.slane %v3695, 7
        %v3730 = vrot.slane %v3696, 1
        %v3731 = vrot.slane %v3696, 2
        %v3732 = vrot.slane %v3696, 3
        %v3733 = vunpack.c.l.bf16 %v875
        %v3734 = vperm.slane %v3692, 0
        %v3735 = vperm.slane %v3702, 0
        %v3736 = vperm.slane %v3703, 0
        %v3737 = vperm.slane %v3704, 0
        %v3738 = vperm.slane %v3705, 0
        %v3739 = vperm.slane %v3706, 0
        %v3740 = vperm.slane %v3707, 0
        %v3741 = vperm.slane %v3708, 0
        %v3742 = vperm.slane %v3693, 0
        %v3743 = vperm.slane %v3709, 0
        %v3744 = vperm.slane %v3710, 0
        %v3745 = vperm.slane %v3711, 0
        %v3746 = vperm.slane %v3712, 0
        %v3747 = vperm.slane %v3713, 0
        %v3748 = vperm.slane %v3714, 0
        %v3749 = vperm.slane %v3715, 0
        %v3750 = vperm.slane %v3694, 0
        %v3751 = vperm.slane %v3716, 0
        %v3752 = vperm.slane %v3717, 0
        %v3753 = vperm.slane %v3718, 0
        %v3754 = vperm.slane %v3719, 0
        %v3755 = vperm.slane %v3720, 0
        %v3756 = vperm.slane %v3721, 0
        %v3757 = vperm.slane %v3722, 0
        %v3758 = vperm.slane %v3695, 0
        %v3759 = vperm.slane %v3723, 0
        %v3760 = vperm.slane %v3724, 0
        %v3761 = vperm.slane %v3725, 0
        %v3762 = vperm.slane %v3726, 0
        %v3763 = vperm.slane %v3727, 0
        %v3764 = vperm.slane %v3728, 0
        %v3765 = vperm.slane %v3729, 0
        %v3766 = vperm.slane %v3696, 0
        %v3767 = vperm.slane %v3730, 0
        %v3768 = vperm.slane %v3731, 0
        %v3769 = vperm.slane %v3732, 0
        %3807 = vst [vmem:[#allocation1] ss:$2 sm:$0xff] %v3733
        %v3808 = vld.sshfl [vmem:[#allocation1] sm:$0xff pattern:$0x75316420]
        %s3809 = scalar_lea.vmem [#allocation1], 16
        %3810 = vst [vmem:[%s3809] ss:$2 sm:$0xff] %v3733
        %v3811 = vld.sshfl [vmem:[#allocation1 + $0x10] sm:$0xff pattern:$0x75316420]
        %s3812 = scalar_lea.vmem [#allocation1], 32
        %3813 = vst [vmem:[%s3812] ss:$2 sm:$0xff] %v3733
        %v3814 = vld.sshfl [vmem:[#allocation1 + $0x20] sm:$0xff pattern:$0x75316420]
        %s3815 = scalar_lea.vmem [#allocation1], 48
        %3816 = vst [vmem:[%s3815] ss:$2 sm:$0xff] %v3733
        %v3817 = vld.sshfl [vmem:[#allocation1 + $0x30] sm:$0xff pattern:$0x75316420]
        %3818 = vst [vmem:[#allocation1] ss:$2 sm:$0xff] %v3733
        %v3819 = vld.sshfl [vmem:[#allocation1] sm:$0xff pattern:$0x75316420]
        %3820 = vst [vmem:[%s3809] ss:$2 sm:$0xff] %v3733
        %v3821 = vld.sshfl [vmem:[#allocation1 + $0x10] sm:$0xff pattern:$0x75316420]
        %3822 = vst [vmem:[%s3812] ss:$2 sm:$0xff] %v3733
        %v3823 = vld.sshfl [vmem:[#allocation1 + $0x20] sm:$0xff pattern:$0x75316420]
        %3824 = vst [vmem:[%s3815] ss:$2 sm:$0xff] %v3733
        %v3825 = vld.sshfl [vmem:[#allocation1 + $0x30] sm:$0xff pattern:$0x75316420]
        %3826 = vst [vmem:[#allocation1] ss:$2 sm:$0xff] %v3733
        %v3827 = vld.sshfl [vmem:[#allocation1] sm:$0xff pattern:$0x75316420]
        %3828 = vst [vmem:[%s3809] ss:$2 sm:$0xff] %v3733
        %v3829 = vld.sshfl [vmem:[#allocation1 + $0x10] sm:$0xff pattern:$0x75316420]
        %3830 = vst [vmem:[%s3812] ss:$2 sm:$0xff] %v3733
        %v3831 = vld.sshfl [vmem:[#allocation1 + $0x20] sm:$0xff pattern:$0x75316420]
        %3832 = vst [vmem:[%s3815] ss:$2 sm:$0xff] %v3733
        %v3833 = vld.sshfl [vmem:[#allocation1 + $0x30] sm:$0xff pattern:$0x75316420]
        %3834 = vst [vmem:[#allocation1] ss:$2 sm:$0xff] %v3733
        %v3835 = vld.sshfl [vmem:[#allocation1] sm:$0xff pattern:$0x75316420]
        %3836 = vst [vmem:[%s3809] ss:$2 sm:$0xff] %v3733
        %v3837 = vld.sshfl [vmem:[#allocation1 + $0x10] sm:$0xff pattern:$0x75316420]
        %3838 = vst [vmem:[%s3812] ss:$2 sm:$0xff] %v3733
        %v3839 = vld.sshfl [vmem:[#allocation1 + $0x20] sm:$0xff pattern:$0x75316420]
        %3840 = vst [vmem:[%s3815] ss:$2 sm:$0xff] %v3733
        %v3841 = vld.sshfl [vmem:[#allocation1 + $0x30] sm:$0xff pattern:$0x75316420]
        %3842 = vst [vmem:[#allocation1] ss:$2 sm:$0xff] %v3733
        %v3843 = vld.sshfl [vmem:[#allocation1] sm:$0xff pattern:$0x75316420]
        %3844 = vst [vmem:[%s3809] ss:$2 sm:$0xff] %v3733
        %v3845 = vld.sshfl [vmem:[#allocation1 + $0x10] sm:$0xff pattern:$0x75316420]
        %3846 = vst [vmem:[%s3812] ss:$2 sm:$0xff] %v3733
        %v3847 = vld.sshfl [vmem:[#allocation1 + $0x20] sm:$0xff pattern:$0x75316420]
        %3848 = vst [vmem:[%s3815] ss:$2 sm:$0xff] %v3733
        %v3849 = vld.sshfl [vmem:[#allocation1 + $0x30] sm:$0xff pattern:$0x75316420]
        %3850 = vst [vmem:[#allocation1] ss:$2 sm:$0xff] %v3733
        %v3851 = vld.sshfl [vmem:[#allocation1] sm:$0xff pattern:$0x75316420]
        %3852 = vst [vmem:[%s3809] ss:$2 sm:$0xff] %v3733
        %v3853 = vld.sshfl [vmem:[#allocation1 + $0x10] sm:$0xff pattern:$0x75316420]
        %3854 = vst [vmem:[%s3812] ss:$2 sm:$0xff] %v3733
        %v3855 = vld.sshfl [vmem:[#allocation1 + $0x20] sm:$0xff pattern:$0x75316420]
        %3856 = vst [vmem:[%s3815] ss:$2 sm:$0xff] %v3733
        %v3857 = vld.sshfl [vmem:[#allocation1 + $0x30] sm:$0xff pattern:$0x75316420]
        %3858 = vst [vmem:[#allocation1] ss:$2 sm:$0xff] %v3733
        %v3859 = vld.sshfl [vmem:[#allocation1] sm:$0xff pattern:$0x75316420]
        %3860 = vst [vmem:[%s3809] ss:$2 sm:$0xff] %v3733
        %v3861 = vld.sshfl [vmem:[#allocation1 + $0x10] sm:$0xff pattern:$0x75316420]
        %3862 = vst [vmem:[%s3812] ss:$2 sm:$0xff] %v3733
        %v3863 = vld.sshfl [vmem:[#allocation1 + $0x20] sm:$0xff pattern:$0x75316420]
        %3864 = vst [vmem:[%s3815] ss:$2 sm:$0xff] %v3733
        %v3865 = vld.sshfl [vmem:[#allocation1 + $0x30] sm:$0xff pattern:$0x75316420]
        %3866 = vst [vmem:[#allocation1] ss:$2 sm:$0xff] %v3733
        %v3867 = vld.sshfl [vmem:[#allocation1] sm:$0xff pattern:$0x75316420]
        %3868 = vst [vmem:[%s3809] ss:$2 sm:$0xff] %v3733
        %v3869 = vld.sshfl [vmem:[#allocation1 + $0x10] sm:$0xff pattern:$0x75316420]
        %3870 = vst [vmem:[%s3812] ss:$2 sm:$0xff] %v3733
        %v3871 = vld.sshfl [vmem:[#allocation1 + $0x20] sm:$0xff pattern:$0x75316420]
        %3872 = vst [vmem:[%s3815] ss:$2 sm:$0xff] %v3733
        %v3873 = vld.sshfl [vmem:[#allocation1 + $0x30] sm:$0xff pattern:$0x75316420]
        %3874 = vst [vmem:[#allocation1] ss:$2 sm:$0xff] %v3733
        %v3875 = vld.sshfl [vmem:[#allocation1] sm:$0xff pattern:$0x75316420]
        %3876 = vst [vmem:[%s3809] ss:$2 sm:$0xff] %v3733
        %v3877 = vld.sshfl [vmem:[#allocation1 + $0x10] sm:$0xff pattern:$0x75316420]
        %3878 = vst [vmem:[%s3812] ss:$2 sm:$0xff] %v3733
        %v3879 = vld.sshfl [vmem:[#allocation1 + $0x20] sm:$0xff pattern:$0x75316420]
        %3880 = vst [vmem:[%s3815] ss:$2 sm:$0xff] %v3733
        %v3881 = vld.sshfl [vmem:[#allocation1 + $0x30] sm:$0xff pattern:$0x75316420]
        %3882 = vrot.lane.b32.xlu0 %v3808, 96
        %v3883 = vpop.permute.xlu0 %3882
        %3884 = vrot.lane.b32.xlu0 %v3811, 96
        %v3885 = vpop.permute.xlu0 %3884
        %3886 = vrot.lane.b32.xlu0 %v3814, 96
        %v3887 = vpop.permute.xlu0 %3886
        %3888 = vrot.lane.b32.xlu0 %v3817, 96
        %v3889 = vpop.permute.xlu0 %3888
        %3890 = vrot.lane.b32.xlu0 %v3819, 96
        %v3891 = vpop.permute.xlu0 %3890
        %3892 = vrot.lane.b32.xlu0 %v3821, 96
        %v3893 = vpop.permute.xlu0 %3892
        %3894 = vrot.lane.b32.xlu0 %v3823, 96
        %v3895 = vpop.permute.xlu0 %3894
        %3896 = vrot.lane.b32.xlu0 %v3825, 96
        %v3897 = vpop.permute.xlu0 %3896
        %3898 = vrot.lane.b32.xlu0 %v3827, 96
        %v3899 = vpop.permute.xlu0 %3898
        %3900 = vrot.lane.b32.xlu0 %v3829, 96
        %v3901 = vpop.permute.xlu0 %3900
        %3902 = vrot.lane.b32.xlu0 %v3831, 96
        %v3903 = vpop.permute.xlu0 %3902
        %3904 = vrot.lane.b32.xlu0 %v3833, 96
        %v3905 = vpop.permute.xlu0 %3904
        %3906 = vrot.lane.b32.xlu0 %v3835, 96
        %v3907 = vpop.permute.xlu0 %3906
        %3908 = vrot.lane.b32.xlu0 %v3837, 96
        %v3909 = vpop.permute.xlu0 %3908
        %3910 = vrot.lane.b32.xlu0 %v3839, 96
        %v3911 = vpop.permute.xlu0 %3910
        %3912 = vrot.lane.b32.xlu0 %v3841, 96
        %v3913 = vpop.permute.xlu0 %3912
        %3914 = vrot.lane.b32.xlu0 %v3843, 96
        %v3915 = vpop.permute.xlu0 %3914
        %3916 = vrot.lane.b32.xlu0 %v3845, 96
        %v3917 = vpop.permute.xlu0 %3916
        %3918 = vrot.lane.b32.xlu0 %v3847, 96
        %v3919 = vpop.permute.xlu0 %3918
        %3920 = vrot.lane.b32.xlu0 %v3849, 96
        %v3921 = vpop.permute.xlu0 %3920
        %3922 = vrot.lane.b32.xlu0 %v3851, 96
        %v3923 = vpop.permute.xlu0 %3922
        %3924 = vrot.lane.b32.xlu0 %v3853, 96
        %v3925 = vpop.permute.xlu0 %3924
        %3926 = vrot.lane.b32.xlu0 %v3855, 96
        %v3927 = vpop.permute.xlu0 %3926
        %3928 = vrot.lane.b32.xlu0 %v3857, 96
        %v3929 = vpop.permute.xlu0 %3928
        %3930 = vrot.lane.b32.xlu0 %v3859, 96
        %v3931 = vpop.permute.xlu0 %3930
        %3932 = vrot.lane.b32.xlu0 %v3861, 96
        %v3933 = vpop.permute.xlu0 %3932
        %3934 = vrot.lane.b32.xlu0 %v3863, 96
        %v3935 = vpop.permute.xlu0 %3934
        %3936 = vrot.lane.b32.xlu0 %v3865, 96
        %v3937 = vpop.permute.xlu0 %3936
        %3938 = vrot.lane.b32.xlu0 %v3867, 96
        %v3939 = vpop.permute.xlu0 %3938
        %3940 = vrot.lane.b32.xlu0 %v3869, 96
        %v3941 = vpop.permute.xlu0 %3940
        %3942 = vrot.lane.b32.xlu0 %v3871, 96
        %v3943 = vpop.permute.xlu0 %3942
        %3944 = vrot.lane.b32.xlu0 %v3873, 96
        %v3945 = vpop.permute.xlu0 %3944
        %3946 = vrot.lane.b32.xlu0 %v3875, 96
        %v3947 = vpop.permute.xlu0 %3946
        %3948 = vrot.lane.b32.xlu0 %v3877, 96
        %v3949 = vpop.permute.xlu0 %3948
        %3950 = vrot.lane.b32.xlu0 %v3879, 96
        %v3951 = vpop.permute.xlu0 %3950
        %3952 = vrot.lane.b32.xlu0 %v3881, 96
        %v3953 = vpop.permute.xlu0 %3952
        %v3990 = vmul.f32 %v3734, %v3883
        %v3991 = vmul.f32 %v3735, %v3885
        %v3992 = vmul.f32 %v3736, %v3887
        %v3993 = vmul.f32 %v3737, %v3889
        %v3994 = vmul.f32 %v3738, %v3891
        %v3995 = vmul.f32 %v3739, %v3893
        %v3996 = vmul.f32 %v3740, %v3895
        %v3997 = vmul.f32 %v3741, %v3897
        %v3998 = vmul.f32 %v3742, %v3899
        %v3999 = vmul.f32 %v3743, %v3901
        %v4000 = vmul.f32 %v3744, %v3903
        %v4001 = vmul.f32 %v3745, %v3905
        %v4002 = vmul.f32 %v3746, %v3907
        %v4003 = vmul.f32 %v3747, %v3909
        %v4004 = vmul.f32 %v3748, %v3911
        %v4005 = vmul.f32 %v3749, %v3913
        %v4006 = vmul.f32 %v3750, %v3915
        %v4007 = vmul.f32 %v3751, %v3917
        %v4008 = vmul.f32 %v3752, %v3919
        %v4009 = vmul.f32 %v3753, %v3921
        %v4010 = vmul.f32 %v3754, %v3923
        %v4011 = vmul.f32 %v3755, %v3925
        %v4012 = vmul.f32 %v3756, %v3927
        %v4013 = vmul.f32 %v3757, %v3929
        %v4014 = vmul.f32 %v3758, %v3931
        %v4015 = vmul.f32 %v3759, %v3933
        %v4016 = vmul.f32 %v3760, %v3935
        %v4017 = vmul.f32 %v3761, %v3937
        %v4018 = vmul.f32 %v3762, %v3939
        %v4019 = vmul.f32 %v3763, %v3941
        %v4020 = vmul.f32 %v3764, %v3943
        %v4021 = vmul.f32 %v3765, %v3945
        %v4022 = vmul.f32 %v3766, %v3947
        %v4023 = vmul.f32 %v3767, %v3949
        %v4024 = vmul.f32 %v3768, %v3951
        %v4025 = vmul.f32 %v3769, %v3953
        %4062 = vrot.lane.b32.xlu0 %v3990, 32
        %v4063 = vpop.permute.xlu0 %4062
        %4064 = vrot.lane.b32.xlu0 %v3991, 32
        %v4065 = vpop.permute.xlu0 %4064
        %4066 = vrot.lane.b32.xlu0 %v3992, 32
        %v4067 = vpop.permute.xlu0 %4066
        %4068 = vrot.lane.b32.xlu0 %v3993, 32
        %v4069 = vpop.permute.xlu0 %4068
        %4070 = vrot.lane.b32.xlu0 %v3994, 32
        %v4071 = vpop.permute.xlu0 %4070
        %4072 = vrot.lane.b32.xlu0 %v3995, 32
        %v4073 = vpop.permute.xlu0 %4072
        %4074 = vrot.lane.b32.xlu0 %v3996, 32
        %v4075 = vpop.permute.xlu0 %4074
        %4076 = vrot.lane.b32.xlu0 %v3997, 32
        %v4077 = vpop.permute.xlu0 %4076
        %4078 = vrot.lane.b32.xlu0 %v3998, 32
        %v4079 = vpop.permute.xlu0 %4078
        %4080 = vrot.lane.b32.xlu0 %v3999, 32
        %v4081 = vpop.permute.xlu0 %4080
        %4082 = vrot.lane.b32.xlu0 %v4000, 32
        %v4083 = vpop.permute.xlu0 %4082
        %4084 = vrot.lane.b32.xlu0 %v4001, 32
        %v4085 = vpop.permute.xlu0 %4084
        %4086 = vrot.lane.b32.xlu0 %v4002, 32
        %v4087 = vpop.permute.xlu0 %4086
        %4088 = vrot.lane.b32.xlu0 %v4003, 32
        %v4089 = vpop.permute.xlu0 %4088
        %4090 = vrot.lane.b32.xlu0 %v4004, 32
        %v4091 = vpop.permute.xlu0 %4090
        %4092 = vrot.lane.b32.xlu0 %v4005, 32
        %v4093 = vpop.permute.xlu0 %4092
        %4094 = vrot.lane.b32.xlu0 %v4006, 32
        %v4095 = vpop.permute.xlu0 %4094
        %4096 = vrot.lane.b32.xlu0 %v4007, 32
        %v4097 = vpop.permute.xlu0 %4096
        %4098 = vrot.lane.b32.xlu0 %v4008, 32
        %v4099 = vpop.permute.xlu0 %4098
        %4100 = vrot.lane.b32.xlu0 %v4009, 32
        %v4101 = vpop.permute.xlu0 %4100
        %4102 = vrot.lane.b32.xlu0 %v4010, 32
        %v4103 = vpop.permute.xlu0 %4102
        %4104 = vrot.lane.b32.xlu0 %v4011, 32
        %v4105 = vpop.permute.xlu0 %4104
        %4106 = vrot.lane.b32.xlu0 %v4012, 32
        %v4107 = vpop.permute.xlu0 %4106
        %4108 = vrot.lane.b32.xlu0 %v4013, 32
        %v4109 = vpop.permute.xlu0 %4108
        %4110 = vrot.lane.b32.xlu0 %v4014, 32
        %v4111 = vpop.permute.xlu0 %4110
        %4112 = vrot.lane.b32.xlu0 %v4015, 32
        %v4113 = vpop.permute.xlu0 %4112
        %4114 = vrot.lane.b32.xlu0 %v4016, 32
        %v4115 = vpop.permute.xlu0 %4114
        %4116 = vrot.lane.b32.xlu0 %v4017, 32
        %v4117 = vpop.permute.xlu0 %4116
        %4118 = vrot.lane.b32.xlu0 %v4018, 32
        %v4119 = vpop.permute.xlu0 %4118
        %4120 = vrot.lane.b32.xlu0 %v4019, 32
        %v4121 = vpop.permute.xlu0 %4120
        %4122 = vrot.lane.b32.xlu0 %v4020, 32
        %v4123 = vpop.permute.xlu0 %4122
        %4124 = vrot.lane.b32.xlu0 %v4021, 32
        %v4125 = vpop.permute.xlu0 %4124
        %4126 = vrot.lane.b32.xlu0 %v4022, 32
        %v4127 = vpop.permute.xlu0 %4126
        %4128 = vrot.lane.b32.xlu0 %v4023, 32
        %v4129 = vpop.permute.xlu0 %4128
        %4130 = vrot.lane.b32.xlu0 %v4024, 32
        %v4131 = vpop.permute.xlu0 %4130
        %4132 = vrot.lane.b32.xlu0 %v4025, 32
        %v4133 = vpop.permute.xlu0 %4132
        %v4170 = vadd.f32 %v3641, %v4063
        %v4171 = vadd.f32 %v3642, %v4065
        %v4172 = vadd.f32 %v3643, %v4067
        %v4173 = vadd.f32 %v3644, %v4069
        %v4174 = vadd.f32 %v3645, %v4071
        %v4175 = vadd.f32 %v3646, %v4073
        %v4176 = vadd.f32 %v3647, %v4075
        %v4177 = vadd.f32 %v3648, %v4077
        %v4178 = vadd.f32 %v3649, %v4079
        %v4179 = vadd.f32 %v3650, %v4081
        %v4180 = vadd.f32 %v3651, %v4083
        %v4181 = vadd.f32 %v3652, %v4085
        %v4182 = vadd.f32 %v3653, %v4087
        %v4183 = vadd.f32 %v3654, %v4089
        %v4184 = vadd.f32 %v3655, %v4091
        %v4185 = vadd.f32 %v3656, %v4093
        %v4186 = vadd.f32 %v3657, %v4095
        %v4187 = vadd.f32 %v3658, %v4097
        %v4188 = vadd.f32 %v3659, %v4099
        %v4189 = vadd.f32 %v3660, %v4101
        %v4190 = vadd.f32 %v3661, %v4103
        %v4191 = vadd.f32 %v3662, %v4105
        %v4192 = vadd.f32 %v3663, %v4107
        %v4193 = vadd.f32 %v3664, %v4109
        %v4194 = vadd.f32 %v3665, %v4111
        %v4195 = vadd.f32 %v3666, %v4113
        %v4196 = vadd.f32 %v3667, %v4115
        %v4197 = vadd.f32 %v3668, %v4117
        %v4198 = vadd.f32 %v3669, %v4119
        %v4199 = vadd.f32 %v3670, %v4121
        %v4200 = vadd.f32 %v3671, %v4123
        %v4201 = vadd.f32 %v3672, %v4125
        %v4202 = vadd.f32 %v3673, %v4127
        %v4203 = vadd.f32 %v3674, %v4129
        %v4204 = vadd.f32 %v3675, %v4131
        %v4205 = vadd.f32 %v3676, %v4133
        %4206 = vrot.lane.b32.xlu0 %v864, 112
        %v4207 = vpop.permute.xlu0 %4206
        %4208 = vrot.lane.b32.xlu0 %v865, 112
        %v4209 = vpop.permute.xlu0 %4208
        %4210 = vrot.lane.b32.xlu0 %v866, 112
        %v4211 = vpop.permute.xlu0 %4210
        %4212 = vrot.lane.b32.xlu0 %v867, 112
        %v4213 = vpop.permute.xlu0 %4212
        %4214 = vrot.lane.b32.xlu0 %v868, 112
        %v4215 = vpop.permute.xlu0 %4214
        %v4221 = vmul.f32 %v659, %v4207
        %v4222 = vmul.f32 %v660, %v4209
        %v4223 = vmul.f32 %v661, %v4211
        %v4224 = vmul.f32 %v662, %v4213
        %v4225 = vmul.f32 %v663, %v4215
        %v4231 = vrot.slane %v4221, 1
        %v4232 = vrot.slane %v4221, 2
        %v4233 = vrot.slane %v4221, 3
        %v4234 = vrot.slane %v4221, 4
        %v4235 = vrot.slane %v4221, 5
        %v4236 = vrot.slane %v4221, 6
        %v4237 = vrot.slane %v4221, 7
        %v4238 = vrot.slane %v4222, 1
        %v4239 = vrot.slane %v4222, 2
        %v4240 = vrot.slane %v4222, 3
        %v4241 = vrot.slane %v4222, 4
        %v4242 = vrot.slane %v4222, 5
        %v4243 = vrot.slane %v4222, 6
        %v4244 = vrot.slane %v4222, 7
        %v4245 = vrot.slane %v4223, 1
        %v4246 = vrot.slane %v4223, 2
        %v4247 = vrot.slane %v4223, 3
        %v4248 = vrot.slane %v4223, 4
        %v4249 = vrot.slane %v4223, 5
        %v4250 = vrot.slane %v4223, 6
        %v4251 = vrot.slane %v4223, 7
        %v4252 = vrot.slane %v4224, 1
        %v4253 = vrot.slane %v4224, 2
        %v4254 = vrot.slane %v4224, 3
        %v4255 = vrot.slane %v4224, 4
        %v4256 = vrot.slane %v4224, 5
        %v4257 = vrot.slane %v4224, 6
        %v4258 = vrot.slane %v4224, 7
        %v4259 = vrot.slane %v4225, 1
        %v4260 = vrot.slane %v4225, 2
        %v4261 = vrot.slane %v4225, 3
        %v4262 = vunpack.c.l.bf16 %v876
        %v4263 = vperm.slane %v4221, 0
        %v4264 = vperm.slane %v4231, 0
        %v4265 = vperm.slane %v4232, 0
        %v4266 = vperm.slane %v4233, 0
        %v4267 = vperm.slane %v4234, 0
        %v4268 = vperm.slane %v4235, 0
        %v4269 = vperm.slane %v4236, 0
        %v4270 = vperm.slane %v4237, 0
        %v4271 = vperm.slane %v4222, 0
        %v4272 = vperm.slane %v4238, 0
        %v4273 = vperm.slane %v4239, 0
        %v4274 = vperm.slane %v4240, 0
        %v4275 = vperm.slane %v4241, 0
        %v4276 = vperm.slane %v4242, 0
        %v4277 = vperm.slane %v4243, 0
        %v4278 = vperm.slane %v4244, 0
        %v4279 = vperm.slane %v4223, 0
        %v4280 = vperm.slane %v4245, 0
        %v4281 = vperm.slane %v4246, 0
        %v4282 = vperm.slane %v4247, 0
        %v4283 = vperm.slane %v4248, 0
        %v4284 = vperm.slane %v4249, 0
        %v4285 = vperm.slane %v4250, 0
        %v4286 = vperm.slane %v4251, 0
        %v4287 = vperm.slane %v4224, 0
        %v4288 = vperm.slane %v4252, 0
        %v4289 = vperm.slane %v4253, 0
        %v4290 = vperm.slane %v4254, 0
        %v4291 = vperm.slane %v4255, 0
        %v4292 = vperm.slane %v4256, 0
        %v4293 = vperm.slane %v4257, 0
        %v4294 = vperm.slane %v4258, 0
        %v4295 = vperm.slane %v4225, 0
        %v4296 = vperm.slane %v4259, 0
        %v4297 = vperm.slane %v4260, 0
        %v4298 = vperm.slane %v4261, 0
        %4336 = vst [vmem:[#allocation1] ss:$2 sm:$0xff] %v4262
        %v4337 = vld.sshfl [vmem:[#allocation1] sm:$0xff pattern:$0x75316420]
        %s4338 = scalar_lea.vmem [#allocation1], 16
        %4339 = vst [vmem:[%s4338] ss:$2 sm:$0xff] %v4262
        %v4340 = vld.sshfl [vmem:[#allocation1 + $0x10] sm:$0xff pattern:$0x75316420]
        %s4341 = scalar_lea.vmem [#allocation1], 32
        %4342 = vst [vmem:[%s4341] ss:$2 sm:$0xff] %v4262
        %v4343 = vld.sshfl [vmem:[#allocation1 + $0x20] sm:$0xff pattern:$0x75316420]
        %s4344 = scalar_lea.vmem [#allocation1], 48
        %4345 = vst [vmem:[%s4344] ss:$2 sm:$0xff] %v4262
        %v4346 = vld.sshfl [vmem:[#allocation1 + $0x30] sm:$0xff pattern:$0x75316420]
        %4347 = vst [vmem:[#allocation1] ss:$2 sm:$0xff] %v4262
        %v4348 = vld.sshfl [vmem:[#allocation1] sm:$0xff pattern:$0x75316420]
        %4349 = vst [vmem:[%s4338] ss:$2 sm:$0xff] %v4262
        %v4350 = vld.sshfl [vmem:[#allocation1 + $0x10] sm:$0xff pattern:$0x75316420]
        %4351 = vst [vmem:[%s4341] ss:$2 sm:$0xff] %v4262
        %v4352 = vld.sshfl [vmem:[#allocation1 + $0x20] sm:$0xff pattern:$0x75316420]
        %4353 = vst [vmem:[%s4344] ss:$2 sm:$0xff] %v4262
        %v4354 = vld.sshfl [vmem:[#allocation1 + $0x30] sm:$0xff pattern:$0x75316420]
        %4355 = vst [vmem:[#allocation1] ss:$2 sm:$0xff] %v4262
        %v4356 = vld.sshfl [vmem:[#allocation1] sm:$0xff pattern:$0x75316420]
        %4357 = vst [vmem:[%s4338] ss:$2 sm:$0xff] %v4262
        %v4358 = vld.sshfl [vmem:[#allocation1 + $0x10] sm:$0xff pattern:$0x75316420]
        %4359 = vst [vmem:[%s4341] ss:$2 sm:$0xff] %v4262
        %v4360 = vld.sshfl [vmem:[#allocation1 + $0x20] sm:$0xff pattern:$0x75316420]
        %4361 = vst [vmem:[%s4344] ss:$2 sm:$0xff] %v4262
        %v4362 = vld.sshfl [vmem:[#allocation1 + $0x30] sm:$0xff pattern:$0x75316420]
        %4363 = vst [vmem:[#allocation1] ss:$2 sm:$0xff] %v4262
        %v4364 = vld.sshfl [vmem:[#allocation1] sm:$0xff pattern:$0x75316420]
        %4365 = vst [vmem:[%s4338] ss:$2 sm:$0xff] %v4262
        %v4366 = vld.sshfl [vmem:[#allocation1 + $0x10] sm:$0xff pattern:$0x75316420]
        %4367 = vst [vmem:[%s4341] ss:$2 sm:$0xff] %v4262
        %v4368 = vld.sshfl [vmem:[#allocation1 + $0x20] sm:$0xff pattern:$0x75316420]
        %4369 = vst [vmem:[%s4344] ss:$2 sm:$0xff] %v4262
        %v4370 = vld.sshfl [vmem:[#allocation1 + $0x30] sm:$0xff pattern:$0x75316420]
        %4371 = vst [vmem:[#allocation1] ss:$2 sm:$0xff] %v4262
        %v4372 = vld.sshfl [vmem:[#allocation1] sm:$0xff pattern:$0x75316420]
        %4373 = vst [vmem:[%s4338] ss:$2 sm:$0xff] %v4262
        %v4374 = vld.sshfl [vmem:[#allocation1 + $0x10] sm:$0xff pattern:$0x75316420]
        %4375 = vst [vmem:[%s4341] ss:$2 sm:$0xff] %v4262
        %v4376 = vld.sshfl [vmem:[#allocation1 + $0x20] sm:$0xff pattern:$0x75316420]
        %4377 = vst [vmem:[%s4344] ss:$2 sm:$0xff] %v4262
        %v4378 = vld.sshfl [vmem:[#allocation1 + $0x30] sm:$0xff pattern:$0x75316420]
        %4379 = vst [vmem:[#allocation1] ss:$2 sm:$0xff] %v4262
        %v4380 = vld.sshfl [vmem:[#allocation1] sm:$0xff pattern:$0x75316420]
        %4381 = vst [vmem:[%s4338] ss:$2 sm:$0xff] %v4262
        %v4382 = vld.sshfl [vmem:[#allocation1 + $0x10] sm:$0xff pattern:$0x75316420]
        %4383 = vst [vmem:[%s4341] ss:$2 sm:$0xff] %v4262
        %v4384 = vld.sshfl [vmem:[#allocation1 + $0x20] sm:$0xff pattern:$0x75316420]
        %4385 = vst [vmem:[%s4344] ss:$2 sm:$0xff] %v4262
        %v4386 = vld.sshfl [vmem:[#allocation1 + $0x30] sm:$0xff pattern:$0x75316420]
        %4387 = vst [vmem:[#allocation1] ss:$2 sm:$0xff] %v4262
        %v4388 = vld.sshfl [vmem:[#allocation1] sm:$0xff pattern:$0x75316420]
        %4389 = vst [vmem:[%s4338] ss:$2 sm:$0xff] %v4262
        %v4390 = vld.sshfl [vmem:[#allocation1 + $0x10] sm:$0xff pattern:$0x75316420]
        %4391 = vst [vmem:[%s4341] ss:$2 sm:$0xff] %v4262
        %v4392 = vld.sshfl [vmem:[#allocation1 + $0x20] sm:$0xff pattern:$0x75316420]
        %4393 = vst [vmem:[%s4344] ss:$2 sm:$0xff] %v4262
        %v4394 = vld.sshfl [vmem:[#allocation1 + $0x30] sm:$0xff pattern:$0x75316420]
        %4395 = vst [vmem:[#allocation1] ss:$2 sm:$0xff] %v4262
        %v4396 = vld.sshfl [vmem:[#allocation1] sm:$0xff pattern:$0x75316420]
        %4397 = vst [vmem:[%s4338] ss:$2 sm:$0xff] %v4262
        %v4398 = vld.sshfl [vmem:[#allocation1 + $0x10] sm:$0xff pattern:$0x75316420]
        %4399 = vst [vmem:[%s4341] ss:$2 sm:$0xff] %v4262
        %v4400 = vld.sshfl [vmem:[#allocation1 + $0x20] sm:$0xff pattern:$0x75316420]
        %4401 = vst [vmem:[%s4344] ss:$2 sm:$0xff] %v4262
        %v4402 = vld.sshfl [vmem:[#allocation1 + $0x30] sm:$0xff pattern:$0x75316420]
        %4403 = vst [vmem:[#allocation1] ss:$2 sm:$0xff] %v4262
        %v4404 = vld.sshfl [vmem:[#allocation1] sm:$0xff pattern:$0x75316420]
        %4405 = vst [vmem:[%s4338] ss:$2 sm:$0xff] %v4262
        %v4406 = vld.sshfl [vmem:[#allocation1 + $0x10] sm:$0xff pattern:$0x75316420]
        %4407 = vst [vmem:[%s4341] ss:$2 sm:$0xff] %v4262
        %v4408 = vld.sshfl [vmem:[#allocation1 + $0x20] sm:$0xff pattern:$0x75316420]
        %4409 = vst [vmem:[%s4344] ss:$2 sm:$0xff] %v4262
        %v4410 = vld.sshfl [vmem:[#allocation1 + $0x30] sm:$0xff pattern:$0x75316420]
        %4411 = vrot.lane.b32.xlu0 %v4337, 112
        %v4412 = vpop.permute.xlu0 %4411
        %4413 = vrot.lane.b32.xlu0 %v4340, 112
        %v4414 = vpop.permute.xlu0 %4413
        %4415 = vrot.lane.b32.xlu0 %v4343, 112
        %v4416 = vpop.permute.xlu0 %4415
        %4417 = vrot.lane.b32.xlu0 %v4346, 112
        %v4418 = vpop.permute.xlu0 %4417
        %4419 = vrot.lane.b32.xlu0 %v4348, 112
        %v4420 = vpop.permute.xlu0 %4419
        %4421 = vrot.lane.b32.xlu0 %v4350, 112
        %v4422 = vpop.permute.xlu0 %4421
        %4423 = vrot.lane.b32.xlu0 %v4352, 112
        %v4424 = vpop.permute.xlu0 %4423
        %4425 = vrot.lane.b32.xlu0 %v4354, 112
        %v4426 = vpop.permute.xlu0 %4425
        %4427 = vrot.lane.b32.xlu0 %v4356, 112
        %v4428 = vpop.permute.xlu0 %4427
        %4429 = vrot.lane.b32.xlu0 %v4358, 112
        %v4430 = vpop.permute.xlu0 %4429
        %4431 = vrot.lane.b32.xlu0 %v4360, 112
        %v4432 = vpop.permute.xlu0 %4431
        %4433 = vrot.lane.b32.xlu0 %v4362, 112
        %v4434 = vpop.permute.xlu0 %4433
        %4435 = vrot.lane.b32.xlu0 %v4364, 112
        %v4436 = vpop.permute.xlu0 %4435
        %4437 = vrot.lane.b32.xlu0 %v4366, 112
        %v4438 = vpop.permute.xlu0 %4437
        %4439 = vrot.lane.b32.xlu0 %v4368, 112
        %v4440 = vpop.permute.xlu0 %4439
        %4441 = vrot.lane.b32.xlu0 %v4370, 112
        %v4442 = vpop.permute.xlu0 %4441
        %4443 = vrot.lane.b32.xlu0 %v4372, 112
        %v4444 = vpop.permute.xlu0 %4443
        %4445 = vrot.lane.b32.xlu0 %v4374, 112
        %v4446 = vpop.permute.xlu0 %4445
        %4447 = vrot.lane.b32.xlu0 %v4376, 112
        %v4448 = vpop.permute.xlu0 %4447
        %4449 = vrot.lane.b32.xlu0 %v4378, 112
        %v4450 = vpop.permute.xlu0 %4449
        %4451 = vrot.lane.b32.xlu0 %v4380, 112
        %v4452 = vpop.permute.xlu0 %4451
        %4453 = vrot.lane.b32.xlu0 %v4382, 112
        %v4454 = vpop.permute.xlu0 %4453
        %4455 = vrot.lane.b32.xlu0 %v4384, 112
        %v4456 = vpop.permute.xlu0 %4455
        %4457 = vrot.lane.b32.xlu0 %v4386, 112
        %v4458 = vpop.permute.xlu0 %4457
        %4459 = vrot.lane.b32.xlu0 %v4388, 112
        %v4460 = vpop.permute.xlu0 %4459
        %4461 = vrot.lane.b32.xlu0 %v4390, 112
        %v4462 = vpop.permute.xlu0 %4461
        %4463 = vrot.lane.b32.xlu0 %v4392, 112
        %v4464 = vpop.permute.xlu0 %4463
        %4465 = vrot.lane.b32.xlu0 %v4394, 112
        %v4466 = vpop.permute.xlu0 %4465
        %4467 = vrot.lane.b32.xlu0 %v4396, 112
        %v4468 = vpop.permute.xlu0 %4467
        %4469 = vrot.lane.b32.xlu0 %v4398, 112
        %v4470 = vpop.permute.xlu0 %4469
        %4471 = vrot.lane.b32.xlu0 %v4400, 112
        %v4472 = vpop.permute.xlu0 %4471
        %4473 = vrot.lane.b32.xlu0 %v4402, 112
        %v4474 = vpop.permute.xlu0 %4473
        %4475 = vrot.lane.b32.xlu0 %v4404, 112
        %v4476 = vpop.permute.xlu0 %4475
        %4477 = vrot.lane.b32.xlu0 %v4406, 112
        %v4478 = vpop.permute.xlu0 %4477
        %4479 = vrot.lane.b32.xlu0 %v4408, 112
        %v4480 = vpop.permute.xlu0 %4479
        %4481 = vrot.lane.b32.xlu0 %v4410, 112
        %v4482 = vpop.permute.xlu0 %4481
        %v4519 = vmul.f32 %v4263, %v4412
        %v4520 = vmul.f32 %v4264, %v4414
        %v4521 = vmul.f32 %v4265, %v4416
        %v4522 = vmul.f32 %v4266, %v4418
        %v4523 = vmul.f32 %v4267, %v4420
        %v4524 = vmul.f32 %v4268, %v4422
        %v4525 = vmul.f32 %v4269, %v4424
        %v4526 = vmul.f32 %v4270, %v4426
        %v4527 = vmul.f32 %v4271, %v4428
        %v4528 = vmul.f32 %v4272, %v4430
        %v4529 = vmul.f32 %v4273, %v4432
        %v4530 = vmul.f32 %v4274, %v4434
        %v4531 = vmul.f32 %v4275, %v4436
        %v4532 = vmul.f32 %v4276, %v4438
        %v4533 = vmul.f32 %v4277, %v4440
        %v4534 = vmul.f32 %v4278, %v4442
        %v4535 = vmul.f32 %v4279, %v4444
        %v4536 = vmul.f32 %v4280, %v4446
        %v4537 = vmul.f32 %v4281, %v4448
        %v4538 = vmul.f32 %v4282, %v4450
        %v4539 = vmul.f32 %v4283, %v4452
        %v4540 = vmul.f32 %v4284, %v4454
        %v4541 = vmul.f32 %v4285, %v4456
        %v4542 = vmul.f32 %v4286, %v4458
        %v4543 = vmul.f32 %v4287, %v4460
        %v4544 = vmul.f32 %v4288, %v4462
        %v4545 = vmul.f32 %v4289, %v4464
        %v4546 = vmul.f32 %v4290, %v4466
        %v4547 = vmul.f32 %v4291, %v4468
        %v4548 = vmul.f32 %v4292, %v4470
        %v4549 = vmul.f32 %v4293, %v4472
        %v4550 = vmul.f32 %v4294, %v4474
        %v4551 = vmul.f32 %v4295, %v4476
        %v4552 = vmul.f32 %v4296, %v4478
        %v4553 = vmul.f32 %v4297, %v4480
        %v4554 = vmul.f32 %v4298, %v4482
        %4591 = vrot.lane.b32.xlu0 %v4519, 16
        %v4592 = vpop.permute.xlu0 %4591
        %4593 = vrot.lane.b32.xlu0 %v4520, 16
        %v4594 = vpop.permute.xlu0 %4593
        %4595 = vrot.lane.b32.xlu0 %v4521, 16
        %v4596 = vpop.permute.xlu0 %4595
        %4597 = vrot.lane.b32.xlu0 %v4522, 16
        %v4598 = vpop.permute.xlu0 %4597
        %4599 = vrot.lane.b32.xlu0 %v4523, 16
        %v4600 = vpop.permute.xlu0 %4599
        %4601 = vrot.lane.b32.xlu0 %v4524, 16
        %v4602 = vpop.permute.xlu0 %4601
        %4603 = vrot.lane.b32.xlu0 %v4525, 16
        %v4604 = vpop.permute.xlu0 %4603
        %4605 = vrot.lane.b32.xlu0 %v4526, 16
        %v4606 = vpop.permute.xlu0 %4605
        %4607 = vrot.lane.b32.xlu0 %v4527, 16
        %v4608 = vpop.permute.xlu0 %4607
        %4609 = vrot.lane.b32.xlu0 %v4528, 16
        %v4610 = vpop.permute.xlu0 %4609
        %4611 = vrot.lane.b32.xlu0 %v4529, 16
        %v4612 = vpop.permute.xlu0 %4611
        %4613 = vrot.lane.b32.xlu0 %v4530, 16
        %v4614 = vpop.permute.xlu0 %4613
        %4615 = vrot.lane.b32.xlu0 %v4531, 16
        %v4616 = vpop.permute.xlu0 %4615
        %4617 = vrot.lane.b32.xlu0 %v4532, 16
        %v4618 = vpop.permute.xlu0 %4617
        %4619 = vrot.lane.b32.xlu0 %v4533, 16
        %v4620 = vpop.permute.xlu0 %4619
        %4621 = vrot.lane.b32.xlu0 %v4534, 16
        %v4622 = vpop.permute.xlu0 %4621
        %4623 = vrot.lane.b32.xlu0 %v4535, 16
        %v4624 = vpop.permute.xlu0 %4623
        %4625 = vrot.lane.b32.xlu0 %v4536, 16
        %v4626 = vpop.permute.xlu0 %4625
        %4627 = vrot.lane.b32.xlu0 %v4537, 16
        %v4628 = vpop.permute.xlu0 %4627
        %4629 = vrot.lane.b32.xlu0 %v4538, 16
        %v4630 = vpop.permute.xlu0 %4629
        %4631 = vrot.lane.b32.xlu0 %v4539, 16
        %v4632 = vpop.permute.xlu0 %4631
        %4633 = vrot.lane.b32.xlu0 %v4540, 16
        %v4634 = vpop.permute.xlu0 %4633
        %4635 = vrot.lane.b32.xlu0 %v4541, 16
        %v4636 = vpop.permute.xlu0 %4635
        %4637 = vrot.lane.b32.xlu0 %v4542, 16
        %v4638 = vpop.permute.xlu0 %4637
        %4639 = vrot.lane.b32.xlu0 %v4543, 16
        %v4640 = vpop.permute.xlu0 %4639
        %4641 = vrot.lane.b32.xlu0 %v4544, 16
        %v4642 = vpop.permute.xlu0 %4641
        %4643 = vrot.lane.b32.xlu0 %v4545, 16
        %v4644 = vpop.permute.xlu0 %4643
        %4645 = vrot.lane.b32.xlu0 %v4546, 16
        %v4646 = vpop.permute.xlu0 %4645
        %4647 = vrot.lane.b32.xlu0 %v4547, 16
        %v4648 = vpop.permute.xlu0 %4647
        %4649 = vrot.lane.b32.xlu0 %v4548, 16
        %v4650 = vpop.permute.xlu0 %4649
        %4651 = vrot.lane.b32.xlu0 %v4549, 16
        %v4652 = vpop.permute.xlu0 %4651
        %4653 = vrot.lane.b32.xlu0 %v4550, 16
        %v4654 = vpop.permute.xlu0 %4653
        %4655 = vrot.lane.b32.xlu0 %v4551, 16
        %v4656 = vpop.permute.xlu0 %4655
        %4657 = vrot.lane.b32.xlu0 %v4552, 16
        %v4658 = vpop.permute.xlu0 %4657
        %4659 = vrot.lane.b32.xlu0 %v4553, 16
        %v4660 = vpop.permute.xlu0 %4659
        %4661 = vrot.lane.b32.xlu0 %v4554, 16
        %v4662 = vpop.permute.xlu0 %4661
        %v4699 = vadd.f32 %v4170, %v4592
        %v4700 = vadd.f32 %v4171, %v4594
        %v4701 = vadd.f32 %v4172, %v4596
        %v4702 = vadd.f32 %v4173, %v4598
        %v4703 = vadd.f32 %v4174, %v4600
        %v4704 = vadd.f32 %v4175, %v4602
        %v4705 = vadd.f32 %v4176, %v4604
        %v4706 = vadd.f32 %v4177, %v4606
        %v4707 = vadd.f32 %v4178, %v4608
        %v4708 = vadd.f32 %v4179, %v4610
        %v4709 = vadd.f32 %v4180, %v4612
        %v4710 = vadd.f32 %v4181, %v4614
        %v4711 = vadd.f32 %v4182, %v4616
        %v4712 = vadd.f32 %v4183, %v4618
        %v4713 = vadd.f32 %v4184, %v4620
        %v4714 = vadd.f32 %v4185, %v4622
        %v4715 = vadd.f32 %v4186, %v4624
        %v4716 = vadd.f32 %v4187, %v4626
        %v4717 = vadd.f32 %v4188, %v4628
        %v4718 = vadd.f32 %v4189, %v4630
        %v4719 = vadd.f32 %v4190, %v4632
        %v4720 = vadd.f32 %v4191, %v4634
        %v4721 = vadd.f32 %v4192, %v4636
        %v4722 = vadd.f32 %v4193, %v4638
        %v4723 = vadd.f32 %v4194, %v4640
        %v4724 = vadd.f32 %v4195, %v4642
        %v4725 = vadd.f32 %v4196, %v4644
        %v4726 = vadd.f32 %v4197, %v4646
        %v4727 = vadd.f32 %v4198, %v4648
        %v4728 = vadd.f32 %v4199, %v4650
        %v4729 = vadd.f32 %v4200, %v4652
        %v4730 = vadd.f32 %v4201, %v4654
        %v4731 = vadd.f32 %v4202, %v4656
        %v4732 = vadd.f32 %v4203, %v4658
        %v4733 = vadd.f32 %v4204, %v4660
        %v4734 = vadd.f32 %v4205, %v4662
        %v4735 = vld [vmem:[%s7] sm:$0xf]
        %4737 = vset.pattern.permute.xlu0 0
        %4738 = vperm.xlu0 %4737, %v4735
        %v4739 = vpop.permute.xlu0 %4738
        %v4741 = vadd.f32 %v4699, %v4739
        %v4742 = vadd.f32 %v4700, %v4739
        %v4743 = vadd.f32 %v4701, %v4739
        %v4744 = vadd.f32 %v4702, %v4739
        %v4745 = vadd.f32 %v4703, %v4739
        %v4746 = vadd.f32 %v4704, %v4739
        %v4747 = vadd.f32 %v4705, %v4739
        %v4748 = vadd.f32 %v4706, %v4739
        %v4749 = vadd.f32 %v4707, %v4739
        %v4750 = vadd.f32 %v4708, %v4739
        %v4751 = vadd.f32 %v4709, %v4739
        %v4752 = vadd.f32 %v4710, %v4739
        %v4753 = vadd.f32 %v4711, %v4739
        %v4754 = vadd.f32 %v4712, %v4739
        %v4755 = vadd.f32 %v4713, %v4739
        %v4756 = vadd.f32 %v4714, %v4739
        %v4757 = vadd.f32 %v4715, %v4739
        %v4758 = vadd.f32 %v4716, %v4739
        %v4759 = vadd.f32 %v4717, %v4739
        %v4760 = vadd.f32 %v4718, %v4739
        %v4761 = vadd.f32 %v4719, %v4739
        %v4762 = vadd.f32 %v4720, %v4739
        %v4763 = vadd.f32 %v4721, %v4739
        %v4764 = vadd.f32 %v4722, %v4739
        %v4765 = vadd.f32 %v4723, %v4739
        %v4766 = vadd.f32 %v4724, %v4739
        %v4767 = vadd.f32 %v4725, %v4739
        %v4768 = vadd.f32 %v4726, %v4739
        %v4769 = vadd.f32 %v4727, %v4739
        %v4770 = vadd.f32 %v4728, %v4739
        %v4771 = vadd.f32 %v4729, %v4739
        %v4772 = vadd.f32 %v4730, %v4739
        %v4773 = vadd.f32 %v4731, %v4739
        %v4774 = vadd.f32 %v4732, %v4739
        %v4775 = vadd.f32 %v4733, %v4739
        %v4776 = vadd.f32 %v4734, %v4739
        %v4777 = vmul.f32 %v4741, 0.2
        %v4778 = vmul.f32 %v4742, 0.2
        %v4779 = vmul.f32 %v4743, 0.2
        %v4780 = vmul.f32 %v4744, 0.2
        %v4781 = vmul.f32 %v4745, 0.2
        %v4782 = vmul.f32 %v4746, 0.2
        %v4783 = vmul.f32 %v4747, 0.2
        %v4784 = vmul.f32 %v4748, 0.2
        %v4785 = vmul.f32 %v4749, 0.2
        %v4786 = vmul.f32 %v4750, 0.2
        %v4787 = vmul.f32 %v4751, 0.2
        %v4788 = vmul.f32 %v4752, 0.2
        %v4789 = vmul.f32 %v4753, 0.2
        %v4790 = vmul.f32 %v4754, 0.2
        %v4791 = vmul.f32 %v4755, 0.2
        %v4792 = vmul.f32 %v4756, 0.2
        %v4793 = vmul.f32 %v4757, 0.2
        %v4794 = vmul.f32 %v4758, 0.2
        %v4795 = vmul.f32 %v4759, 0.2
        %v4796 = vmul.f32 %v4760, 0.2
        %v4797 = vmul.f32 %v4761, 0.2
        %v4798 = vmul.f32 %v4762, 0.2
        %v4799 = vmul.f32 %v4763, 0.2
        %v4800 = vmul.f32 %v4764, 0.2
        %v4801 = vmul.f32 %v4765, 0.2
        %v4802 = vmul.f32 %v4766, 0.2
        %v4803 = vmul.f32 %v4767, 0.2
        %v4804 = vmul.f32 %v4768, 0.2
        %v4805 = vmul.f32 %v4769, 0.2
        %v4806 = vmul.f32 %v4770, 0.2
        %v4807 = vmul.f32 %v4771, 0.2
        %v4808 = vmul.f32 %v4772, 0.2
        %v4809 = vmul.f32 %v4773, 0.2
        %v4810 = vmul.f32 %v4774, 0.2
        %v4811 = vmul.f32 %v4775, 0.2
        %v4812 = vmul.f32 %v4776, 0.2
        %v4813 = vmax.f32 %v4741, %v4777
        %v4814 = vmax.f32 %v4742, %v4778
        %v4815 = vmax.f32 %v4743, %v4779
        %v4816 = vmax.f32 %v4744, %v4780
        %v4817 = vmax.f32 %v4745, %v4781
        %v4818 = vmax.f32 %v4746, %v4782
        %v4819 = vmax.f32 %v4747, %v4783
        %v4820 = vmax.f32 %v4748, %v4784
        %v4821 = vmax.f32 %v4749, %v4785
        %v4822 = vmax.f32 %v4750, %v4786
        %v4823 = vmax.f32 %v4751, %v4787
        %v4824 = vmax.f32 %v4752, %v4788
        %v4825 = vmax.f32 %v4753, %v4789
        %v4826 = vmax.f32 %v4754, %v4790
        %v4827 = vmax.f32 %v4755, %v4791
        %v4828 = vmax.f32 %v4756, %v4792
        %v4829 = vmax.f32 %v4757, %v4793
        %v4830 = vmax.f32 %v4758, %v4794
        %v4831 = vmax.f32 %v4759, %v4795
        %v4832 = vmax.f32 %v4760, %v4796
        %v4833 = vmax.f32 %v4761, %v4797
        %v4834 = vmax.f32 %v4762, %v4798
        %v4835 = vmax.f32 %v4763, %v4799
        %v4836 = vmax.f32 %v4764, %v4800
        %v4837 = vmax.f32 %v4765, %v4801
        %v4838 = vmax.f32 %v4766, %v4802
        %v4839 = vmax.f32 %v4767, %v4803
        %v4840 = vmax.f32 %v4768, %v4804
        %v4841 = vmax.f32 %v4769, %v4805
        %v4842 = vmax.f32 %v4770, %v4806
        %v4843 = vmax.f32 %v4771, %v4807
        %v4844 = vmax.f32 %v4772, %v4808
        %v4845 = vmax.f32 %v4773, %v4809
        %v4846 = vmax.f32 %v4774, %v4810
        %v4847 = vmax.f32 %v4775, %v4811
        %v4848 = vmax.f32 %v4776, %v4812
        %v4849 = vpack.c.bf16 %v4813, %v4813
        %v4850 = vpack.c.bf16 %v4814, %v4814
        %v4851 = vpack.c.bf16 %v4815, %v4815
        %v4852 = vpack.c.bf16 %v4816, %v4816
        %v4853 = vpack.c.bf16 %v4817, %v4817
        %v4854 = vpack.c.bf16 %v4818, %v4818
        %v4855 = vpack.c.bf16 %v4819, %v4819
        %v4856 = vpack.c.bf16 %v4820, %v4820
        %v4857 = vpack.c.bf16 %v4821, %v4821
        %v4858 = vpack.c.bf16 %v4822, %v4822
        %v4859 = vpack.c.bf16 %v4823, %v4823
        %v4860 = vpack.c.bf16 %v4824, %v4824
        %v4861 = vpack.c.bf16 %v4825, %v4825
        %v4862 = vpack.c.bf16 %v4826, %v4826
        %v4863 = vpack.c.bf16 %v4827, %v4827
        %v4864 = vpack.c.bf16 %v4828, %v4828
        %v4865 = vpack.c.bf16 %v4829, %v4829
        %v4866 = vpack.c.bf16 %v4830, %v4830
        %v4867 = vpack.c.bf16 %v4831, %v4831
        %v4868 = vpack.c.bf16 %v4832, %v4832
        %v4869 = vpack.c.bf16 %v4833, %v4833
        %v4870 = vpack.c.bf16 %v4834, %v4834
        %v4871 = vpack.c.bf16 %v4835, %v4835
        %v4872 = vpack.c.bf16 %v4836, %v4836
        %v4873 = vpack.c.bf16 %v4837, %v4837
        %v4874 = vpack.c.bf16 %v4838, %v4838
        %v4875 = vpack.c.bf16 %v4839, %v4839
        %v4876 = vpack.c.bf16 %v4840, %v4840
        %v4877 = vpack.c.bf16 %v4841, %v4841
        %v4878 = vpack.c.bf16 %v4842, %v4842
        %v4879 = vpack.c.bf16 %v4843, %v4843
        %v4880 = vpack.c.bf16 %v4844, %v4844
        %v4881 = vpack.c.bf16 %v4845, %v4845
        %v4882 = vpack.c.bf16 %v4846, %v4846
        %v4883 = vpack.c.bf16 %v4847, %v4847
        %v4884 = vpack.c.bf16 %v4848, %v4848
        %v4885 = vld [vmem:[%s8] sm:$0x3]
        %s4886 = scalar_lea.vmem %s8, 2
        %v4887 = vld [vmem:[%s4886] sm:$0x3]
        %vm4888 = vcmask 31744
        %v4890 = vsel %vm4888, %v4887, 0
        %v4893 = vsel %vm446, %v4850, 0
        %4895 = vmatpush.bf16.msra.mxu0 0
        %4896 = vmatpush.bf16.msra.mxu0 0
        %4897 = vmatpush.bf16.msra.mxu0 0
        %4898 = vmatpush.bf16.msra.mxu0 0
        %4899 = vmatpush.bf16.msra.mxu0 0
        %4900 = vmatpush.bf16.msra.mxu0 0
        %4901 = vmatpush.bf16.msra.mxu0 0
        %4902 = vmatpush.bf16.msra.mxu0 %v4893
        %4903 = vmatmul.bf16.gmra.mxu0 %v4890
        %v4904 = vpop.f32.mrf.mxu0
        %v4905 = vadd.f32 0.0, %v4904
        %v4906 = vpop.f32.mrf.mxu0
        %4907 = vdwg.mxu0
        %v4909 = vsel %vm4888, %v4885, 0
        %v4912 = vsel %vm446, %v4849, 0
        %4914 = vmatpush.bf16.msra.mxu0 0
        %4915 = vmatpush.bf16.msra.mxu0 0
        %4916 = vmatpush.bf16.msra.mxu0 0
        %4917 = vmatpush.bf16.msra.mxu0 0
        %4918 = vmatpush.bf16.msra.mxu0 0
        %4919 = vmatpush.bf16.msra.mxu0 0
        %4920 = vmatpush.bf16.msra.mxu0 0
        %4921 = vmatpush.bf16.msra.mxu0 %v4912
        %4922 = vmatmul.bf16.gmra.mxu0 %v4909
        %v4923 = vpop.f32.mrf.mxu0
        %v4924 = vadd.f32 %v4905, %v4923
        %v4925 = vpop.f32.mrf.mxu0
        %4926 = vdwg.mxu0
        %v4928 = vsel %vm446, %v4851, 0
        %4930 = vmatpush.bf16.msra.mxu0 0
        %4931 = vmatpush.bf16.msra.mxu0 0
        %4932 = vmatpush.bf16.msra.mxu0 0
        %4933 = vmatpush.bf16.msra.mxu0 0
        %4934 = vmatpush.bf16.msra.mxu0 0
        %4935 = vmatpush.bf16.msra.mxu0 0
        %4936 = vmatpush.bf16.msra.mxu0 0
        %4937 = vmatpush.bf16.msra.mxu0 %v4928
        %4938 = vmatmul.bf16.gmra.mxu0 %v4890
        %v4939 = vpop.f32.mrf.mxu0
        %v4940 = vadd.f32 0.0, %v4939
        %v4941 = vpop.f32.mrf.mxu0
        %4942 = vdwg.mxu0
        %4943 = vmatpush.bf16.msra.mxu0 0
        %4944 = vmatpush.bf16.msra.mxu0 0
        %4945 = vmatpush.bf16.msra.mxu0 0
        %4946 = vmatpush.bf16.msra.mxu0 0
        %4947 = vmatpush.bf16.msra.mxu0 0
        %4948 = vmatpush.bf16.msra.mxu0 0
        %4949 = vmatpush.bf16.msra.mxu0 0
        %4950 = vmatpush.bf16.msra.mxu0 %v4893
        %4951 = vmatmul.bf16.gmra.mxu0 %v4909
        %v4952 = vpop.f32.mrf.mxu0
        %v4953 = vadd.f32 %v4940, %v4952
        %v4954 = vpop.f32.mrf.mxu0
        %4955 = vdwg.mxu0
        %v4957 = vsel %vm446, %v4852, 0
        %4959 = vmatpush.bf16.msra.mxu0 0
        %4960 = vmatpush.bf16.msra.mxu0 0
        %4961 = vmatpush.bf16.msra.mxu0 0
        %4962 = vmatpush.bf16.msra.mxu0 0
        %4963 = vmatpush.bf16.msra.mxu0 0
        %4964 = vmatpush.bf16.msra.mxu0 0
        %4965 = vmatpush.bf16.msra.mxu0 0
        %4966 = vmatpush.bf16.msra.mxu0 %v4957
        %4967 = vmatmul.bf16.gmra.mxu0 %v4890
        %v4968 = vpop.f32.mrf.mxu0
        %v4969 = vadd.f32 0.0, %v4968
        %v4970 = vpop.f32.mrf.mxu0
        %4971 = vdwg.mxu0
        %4972 = vmatpush.bf16.msra.mxu0 0
        %4973 = vmatpush.bf16.msra.mxu0 0
        %4974 = vmatpush.bf16.msra.mxu0 0
        %4975 = vmatpush.bf16.msra.mxu0 0
        %4976 = vmatpush.bf16.msra.mxu0 0
        %4977 = vmatpush.bf16.msra.mxu0 0
        %4978 = vmatpush.bf16.msra.mxu0 0
        %4979 = vmatpush.bf16.msra.mxu0 %v4928
        %4980 = vmatmul.bf16.gmra.mxu0 %v4909
        %v4981 = vpop.f32.mrf.mxu0
        %v4982 = vadd.f32 %v4969, %v4981
        %v4983 = vpop.f32.mrf.mxu0
        %4984 = vdwg.mxu0
        %v4986 = vsel %vm446, %v4853, 0
        %4988 = vmatpush.bf16.msra.mxu0 0
        %4989 = vmatpush.bf16.msra.mxu0 0
        %4990 = vmatpush.bf16.msra.mxu0 0
        %4991 = vmatpush.bf16.msra.mxu0 0
        %4992 = vmatpush.bf16.msra.mxu0 0
        %4993 = vmatpush.bf16.msra.mxu0 0
        %4994 = vmatpush.bf16.msra.mxu0 0
        %4995 = vmatpush.bf16.msra.mxu0 %v4986
        %4996 = vmatmul.bf16.gmra.mxu0 %v4890
        %v4997 = vpop.f32.mrf.mxu0
        %v4998 = vadd.f32 0.0, %v4997
        %v4999 = vpop.f32.mrf.mxu0
        %5000 = vdwg.mxu0
        %5001 = vmatpush.bf16.msra.mxu0 0
        %5002 = vmatpush.bf16.msra.mxu0 0
        %5003 = vmatpush.bf16.msra.mxu0 0
        %5004 = vmatpush.bf16.msra.mxu0 0
        %5005 = vmatpush.bf16.msra.mxu0 0
        %5006 = vmatpush.bf16.msra.mxu0 0
        %5007 = vmatpush.bf16.msra.mxu0 0
        %5008 = vmatpush.bf16.msra.mxu0 %v4957
        %5009 = vmatmul.bf16.gmra.mxu0 %v4909
        %v5010 = vpop.f32.mrf.mxu0
        %v5011 = vadd.f32 %v4998, %v5010
        %v5012 = vpop.f32.mrf.mxu0
        %5013 = vdwg.mxu0
        %v5015 = vsel %vm446, %v4856, 0
        %5017 = vmatpush.bf16.msra.mxu0 0
        %5018 = vmatpush.bf16.msra.mxu0 0
        %5019 = vmatpush.bf16.msra.mxu0 0
        %5020 = vmatpush.bf16.msra.mxu0 0
        %5021 = vmatpush.bf16.msra.mxu0 0
        %5022 = vmatpush.bf16.msra.mxu0 0
        %5023 = vmatpush.bf16.msra.mxu0 0
        %5024 = vmatpush.bf16.msra.mxu0 %v5015
        %5025 = vmatmul.bf16.gmra.mxu0 %v4890
        %v5026 = vpop.f32.mrf.mxu0
        %v5027 = vadd.f32 0.0, %v5026
        %v5028 = vpop.f32.mrf.mxu0
        %5029 = vdwg.mxu0
        %v5031 = vsel %vm446, %v4855, 0
        %5033 = vmatpush.bf16.msra.mxu0 0
        %5034 = vmatpush.bf16.msra.mxu0 0
        %5035 = vmatpush.bf16.msra.mxu0 0
        %5036 = vmatpush.bf16.msra.mxu0 0
        %5037 = vmatpush.bf16.msra.mxu0 0
        %5038 = vmatpush.bf16.msra.mxu0 0
        %5039 = vmatpush.bf16.msra.mxu0 0
        %5040 = vmatpush.bf16.msra.mxu0 %v5031
        %5041 = vmatmul.bf16.gmra.mxu0 %v4909
        %v5042 = vpop.f32.mrf.mxu0
        %v5043 = vadd.f32 %v5027, %v5042
        %v5044 = vpop.f32.mrf.mxu0
        %5045 = vdwg.mxu0
        %v5047 = vsel %vm446, %v4857, 0
        %5049 = vmatpush.bf16.msra.mxu0 0
        %5050 = vmatpush.bf16.msra.mxu0 0
        %5051 = vmatpush.bf16.msra.mxu0 0
        %5052 = vmatpush.bf16.msra.mxu0 0
        %5053 = vmatpush.bf16.msra.mxu0 0
        %5054 = vmatpush.bf16.msra.mxu0 0
        %5055 = vmatpush.bf16.msra.mxu0 0
        %5056 = vmatpush.bf16.msra.mxu0 %v5047
        %5057 = vmatmul.bf16.gmra.mxu0 %v4890
        %v5058 = vpop.f32.mrf.mxu0
        %v5059 = vadd.f32 0.0, %v5058
        %v5060 = vpop.f32.mrf.mxu0
        %5061 = vdwg.mxu0
        %5062 = vmatpush.bf16.msra.mxu0 0
        %5063 = vmatpush.bf16.msra.mxu0 0
        %5064 = vmatpush.bf16.msra.mxu0 0
        %5065 = vmatpush.bf16.msra.mxu0 0
        %5066 = vmatpush.bf16.msra.mxu0 0
        %5067 = vmatpush.bf16.msra.mxu0 0
        %5068 = vmatpush.bf16.msra.mxu0 0
        %5069 = vmatpush.bf16.msra.mxu0 %v5015
        %5070 = vmatmul.bf16.gmra.mxu0 %v4909
        %v5071 = vpop.f32.mrf.mxu0
        %v5072 = vadd.f32 %v5059, %v5071
        %v5073 = vpop.f32.mrf.mxu0
        %5074 = vdwg.mxu0
        %v5076 = vsel %vm446, %v4858, 0
        %5078 = vmatpush.bf16.msra.mxu0 0
        %5079 = vmatpush.bf16.msra.mxu0 0
        %5080 = vmatpush.bf16.msra.mxu0 0
        %5081 = vmatpush.bf16.msra.mxu0 0
        %5082 = vmatpush.bf16.msra.mxu0 0
        %5083 = vmatpush.bf16.msra.mxu0 0
        %5084 = vmatpush.bf16.msra.mxu0 0
        %5085 = vmatpush.bf16.msra.mxu0 %v5076
        %5086 = vmatmul.bf16.gmra.mxu0 %v4890
        %v5087 = vpop.f32.mrf.mxu0
        %v5088 = vadd.f32 0.0, %v5087
        %v5089 = vpop.f32.mrf.mxu0
        %5090 = vdwg.mxu0
        %5091 = vmatpush.bf16.msra.mxu0 0
        %5092 = vmatpush.bf16.msra.mxu0 0
        %5093 = vmatpush.bf16.msra.mxu0 0
        %5094 = vmatpush.bf16.msra.mxu0 0
        %5095 = vmatpush.bf16.msra.mxu0 0
        %5096 = vmatpush.bf16.msra.mxu0 0
        %5097 = vmatpush.bf16.msra.mxu0 0
        %5098 = vmatpush.bf16.msra.mxu0 %v5047
        %5099 = vmatmul.bf16.gmra.mxu0 %v4909
        %v5100 = vpop.f32.mrf.mxu0
        %v5101 = vadd.f32 %v5088, %v5100
        %v5102 = vpop.f32.mrf.mxu0
        %5103 = vdwg.mxu0
        %v5105 = vsel %vm446, %v4859, 0
        %5107 = vmatpush.bf16.msra.mxu0 0
        %5108 = vmatpush.bf16.msra.mxu0 0
        %5109 = vmatpush.bf16.msra.mxu0 0
        %5110 = vmatpush.bf16.msra.mxu0 0
        %5111 = vmatpush.bf16.msra.mxu0 0
        %5112 = vmatpush.bf16.msra.mxu0 0
        %5113 = vmatpush.bf16.msra.mxu0 0
        %5114 = vmatpush.bf16.msra.mxu0 %v5105
        %5115 = vmatmul.bf16.gmra.mxu0 %v4890
        %v5116 = vpop.f32.mrf.mxu0
        %v5117 = vadd.f32 0.0, %v5116
        %v5118 = vpop.f32.mrf.mxu0
        %5119 = vdwg.mxu0
        %5120 = vmatpush.bf16.msra.mxu0 0
        %5121 = vmatpush.bf16.msra.mxu0 0
        %5122 = vmatpush.bf16.msra.mxu0 0
        %5123 = vmatpush.bf16.msra.mxu0 0
        %5124 = vmatpush.bf16.msra.mxu0 0
        %5125 = vmatpush.bf16.msra.mxu0 0
        %5126 = vmatpush.bf16.msra.mxu0 0
        %5127 = vmatpush.bf16.msra.mxu0 %v5076
        %5128 = vmatmul.bf16.gmra.mxu0 %v4909
        %v5129 = vpop.f32.mrf.mxu0
        %v5130 = vadd.f32 %v5117, %v5129
        %v5131 = vpop.f32.mrf.mxu0
        %5132 = vdwg.mxu0
        %v5134 = vsel %vm446, %v4862, 0
        %5136 = vmatpush.bf16.msra.mxu0 0
        %5137 = vmatpush.bf16.msra.mxu0 0
        %5138 = vmatpush.bf16.msra.mxu0 0
        %5139 = vmatpush.bf16.msra.mxu0 0
        %5140 = vmatpush.bf16.msra.mxu0 0
        %5141 = vmatpush.bf16.msra.mxu0 0
        %5142 = vmatpush.bf16.msra.mxu0 0
        %5143 = vmatpush.bf16.msra.mxu0 %v5134
        %5144 = vmatmul.bf16.gmra.mxu0 %v4890
        %v5145 = vpop.f32.mrf.mxu0
        %v5146 = vadd.f32 0.0, %v5145
        %v5147 = vpop.f32.mrf.mxu0
        %5148 = vdwg.mxu0
        %v5150 = vsel %vm446, %v4861, 0
        %5152 = vmatpush.bf16.msra.mxu0 0
        %5153 = vmatpush.bf16.msra.mxu0 0
        %5154 = vmatpush.bf16.msra.mxu0 0
        %5155 = vmatpush.bf16.msra.mxu0 0
        %5156 = vmatpush.bf16.msra.mxu0 0
        %5157 = vmatpush.bf16.msra.mxu0 0
        %5158 = vmatpush.bf16.msra.mxu0 0
        %5159 = vmatpush.bf16.msra.mxu0 %v5150
        %5160 = vmatmul.bf16.gmra.mxu0 %v4909
        %v5161 = vpop.f32.mrf.mxu0
        %v5162 = vadd.f32 %v5146, %v5161
        %v5163 = vpop.f32.mrf.mxu0
        %5164 = vdwg.mxu0
        %v5166 = vsel %vm446, %v4863, 0
        %5168 = vmatpush.bf16.msra.mxu0 0
        %5169 = vmatpush.bf16.msra.mxu0 0
        %5170 = vmatpush.bf16.msra.mxu0 0
        %5171 = vmatpush.bf16.msra.mxu0 0
        %5172 = vmatpush.bf16.msra.mxu0 0
        %5173 = vmatpush.bf16.msra.mxu0 0
        %5174 = vmatpush.bf16.msra.mxu0 0
        %5175 = vmatpush.bf16.msra.mxu0 %v5166
        %5176 = vmatmul.bf16.gmra.mxu0 %v4890
        %v5177 = vpop.f32.mrf.mxu0
        %v5178 = vadd.f32 0.0, %v5177
        %v5179 = vpop.f32.mrf.mxu0
        %5180 = vdwg.mxu0
        %5181 = vmatpush.bf16.msra.mxu0 0
        %5182 = vmatpush.bf16.msra.mxu0 0
        %5183 = vmatpush.bf16.msra.mxu0 0
        %5184 = vmatpush.bf16.msra.mxu0 0
        %5185 = vmatpush.bf16.msra.mxu0 0
        %5186 = vmatpush.bf16.msra.mxu0 0
        %5187 = vmatpush.bf16.msra.mxu0 0
        %5188 = vmatpush.bf16.msra.mxu0 %v5134
        %5189 = vmatmul.bf16.gmra.mxu0 %v4909
        %v5190 = vpop.f32.mrf.mxu0
        %v5191 = vadd.f32 %v5178, %v5190
        %v5192 = vpop.f32.mrf.mxu0
        %5193 = vdwg.mxu0
        %v5195 = vsel %vm446, %v4864, 0
        %5197 = vmatpush.bf16.msra.mxu0 0
        %5198 = vmatpush.bf16.msra.mxu0 0
        %5199 = vmatpush.bf16.msra.mxu0 0
        %5200 = vmatpush.bf16.msra.mxu0 0
        %5201 = vmatpush.bf16.msra.mxu0 0
        %5202 = vmatpush.bf16.msra.mxu0 0
        %5203 = vmatpush.bf16.msra.mxu0 0
        %5204 = vmatpush.bf16.msra.mxu0 %v5195
        %5205 = vmatmul.bf16.gmra.mxu0 %v4890
        %v5206 = vpop.f32.mrf.mxu0
        %v5207 = vadd.f32 0.0, %v5206
        %v5208 = vpop.f32.mrf.mxu0
        %5209 = vdwg.mxu0
        %5210 = vmatpush.bf16.msra.mxu0 0
        %5211 = vmatpush.bf16.msra.mxu0 0
        %5212 = vmatpush.bf16.msra.mxu0 0
        %5213 = vmatpush.bf16.msra.mxu0 0
        %5214 = vmatpush.bf16.msra.mxu0 0
        %5215 = vmatpush.bf16.msra.mxu0 0
        %5216 = vmatpush.bf16.msra.mxu0 0
        %5217 = vmatpush.bf16.msra.mxu0 %v5166
        %5218 = vmatmul.bf16.gmra.mxu0 %v4909
        %v5219 = vpop.f32.mrf.mxu0
        %v5220 = vadd.f32 %v5207, %v5219
        %v5221 = vpop.f32.mrf.mxu0
        %5222 = vdwg.mxu0
        %v5224 = vsel %vm446, %v4865, 0
        %5226 = vmatpush.bf16.msra.mxu0 0
        %5227 = vmatpush.bf16.msra.mxu0 0
        %5228 = vmatpush.bf16.msra.mxu0 0
        %5229 = vmatpush.bf16.msra.mxu0 0
        %5230 = vmatpush.bf16.msra.mxu0 0
        %5231 = vmatpush.bf16.msra.mxu0 0
        %5232 = vmatpush.bf16.msra.mxu0 0
        %5233 = vmatpush.bf16.msra.mxu0 %v5224
        %5234 = vmatmul.bf16.gmra.mxu0 %v4890
        %v5235 = vpop.f32.mrf.mxu0
        %v5236 = vadd.f32 0.0, %v5235
        %v5237 = vpop.f32.mrf.mxu0
        %5238 = vdwg.mxu0
        %5239 = vmatpush.bf16.msra.mxu0 0
        %5240 = vmatpush.bf16.msra.mxu0 0
        %5241 = vmatpush.bf16.msra.mxu0 0
        %5242 = vmatpush.bf16.msra.mxu0 0
        %5243 = vmatpush.bf16.msra.mxu0 0
        %5244 = vmatpush.bf16.msra.mxu0 0
        %5245 = vmatpush.bf16.msra.mxu0 0
        %5246 = vmatpush.bf16.msra.mxu0 %v5195
        %5247 = vmatmul.bf16.gmra.mxu0 %v4909
        %v5248 = vpop.f32.mrf.mxu0
        %v5249 = vadd.f32 %v5236, %v5248
        %v5250 = vpop.f32.mrf.mxu0
        %5251 = vdwg.mxu0
        %v5253 = vsel %vm446, %v4868, 0
        %5255 = vmatpush.bf16.msra.mxu0 0
        %5256 = vmatpush.bf16.msra.mxu0 0
        %5257 = vmatpush.bf16.msra.mxu0 0
        %5258 = vmatpush.bf16.msra.mxu0 0
        %5259 = vmatpush.bf16.msra.mxu0 0
        %5260 = vmatpush.bf16.msra.mxu0 0
        %5261 = vmatpush.bf16.msra.mxu0 0
        %5262 = vmatpush.bf16.msra.mxu0 %v5253
        %5263 = vmatmul.bf16.gmra.mxu0 %v4890
        %v5264 = vpop.f32.mrf.mxu0
        %v5265 = vadd.f32 0.0, %v5264
        %v5266 = vpop.f32.mrf.mxu0
        %5267 = vdwg.mxu0
        %v5269 = vsel %vm446, %v4867, 0
        %5271 = vmatpush.bf16.msra.mxu0 0
        %5272 = vmatpush.bf16.msra.mxu0 0
        %5273 = vmatpush.bf16.msra.mxu0 0
        %5274 = vmatpush.bf16.msra.mxu0 0
        %5275 = vmatpush.bf16.msra.mxu0 0
        %5276 = vmatpush.bf16.msra.mxu0 0
        %5277 = vmatpush.bf16.msra.mxu0 0
        %5278 = vmatpush.bf16.msra.mxu0 %v5269
        %5279 = vmatmul.bf16.gmra.mxu0 %v4909
        %v5280 = vpop.f32.mrf.mxu0
        %v5281 = vadd.f32 %v5265, %v5280
        %v5282 = vpop.f32.mrf.mxu0
        %5283 = vdwg.mxu0
        %v5285 = vsel %vm446, %v4869, 0
        %5287 = vmatpush.bf16.msra.mxu0 0
        %5288 = vmatpush.bf16.msra.mxu0 0
        %5289 = vmatpush.bf16.msra.mxu0 0
        %5290 = vmatpush.bf16.msra.mxu0 0
        %5291 = vmatpush.bf16.msra.mxu0 0
        %5292 = vmatpush.bf16.msra.mxu0 0
        %5293 = vmatpush.bf16.msra.mxu0 0
        %5294 = vmatpush.bf16.msra.mxu0 %v5285
        %5295 = vmatmul.bf16.gmra.mxu0 %v4890
        %v5296 = vpop.f32.mrf.mxu0
        %v5297 = vadd.f32 0.0, %v5296
        %v5298 = vpop.f32.mrf.mxu0
        %5299 = vdwg.mxu0
        %5300 = vmatpush.bf16.msra.mxu0 0
        %5301 = vmatpush.bf16.msra.mxu0 0
        %5302 = vmatpush.bf16.msra.mxu0 0
        %5303 = vmatpush.bf16.msra.mxu0 0
        %5304 = vmatpush.bf16.msra.mxu0 0
        %5305 = vmatpush.bf16.msra.mxu0 0
        %5306 = vmatpush.bf16.msra.mxu0 0
        %5307 = vmatpush.bf16.msra.mxu0 %v5253
        %5308 = vmatmul.bf16.gmra.mxu0 %v4909
        %v5309 = vpop.f32.mrf.mxu0
        %v5310 = vadd.f32 %v5297, %v5309
        %v5311 = vpop.f32.mrf.mxu0
        %5312 = vdwg.mxu0
        %v5314 = vsel %vm446, %v4870, 0
        %5316 = vmatpush.bf16.msra.mxu0 0
        %5317 = vmatpush.bf16.msra.mxu0 0
        %5318 = vmatpush.bf16.msra.mxu0 0
        %5319 = vmatpush.bf16.msra.mxu0 0
        %5320 = vmatpush.bf16.msra.mxu0 0
        %5321 = vmatpush.bf16.msra.mxu0 0
        %5322 = vmatpush.bf16.msra.mxu0 0
        %5323 = vmatpush.bf16.msra.mxu0 %v5314
        %5324 = vmatmul.bf16.gmra.mxu0 %v4890
        %v5325 = vpop.f32.mrf.mxu0
        %v5326 = vadd.f32 0.0, %v5325
        %v5327 = vpop.f32.mrf.mxu0
        %5328 = vdwg.mxu0
        %5329 = vmatpush.bf16.msra.mxu0 0
        %5330 = vmatpush.bf16.msra.mxu0 0
        %5331 = vmatpush.bf16.msra.mxu0 0
        %5332 = vmatpush.bf16.msra.mxu0 0
        %5333 = vmatpush.bf16.msra.mxu0 0
        %5334 = vmatpush.bf16.msra.mxu0 0
        %5335 = vmatpush.bf16.msra.mxu0 0
        %5336 = vmatpush.bf16.msra.mxu0 %v5285
        %5337 = vmatmul.bf16.gmra.mxu0 %v4909
        %v5338 = vpop.f32.mrf.mxu0
        %v5339 = vadd.f32 %v5326, %v5338
        %v5340 = vpop.f32.mrf.mxu0
        %5341 = vdwg.mxu0
        %v5343 = vsel %vm446, %v4871, 0
        %5345 = vmatpush.bf16.msra.mxu0 0
        %5346 = vmatpush.bf16.msra.mxu0 0
        %5347 = vmatpush.bf16.msra.mxu0 0
        %5348 = vmatpush.bf16.msra.mxu0 0
        %5349 = vmatpush.bf16.msra.mxu0 0
        %5350 = vmatpush.bf16.msra.mxu0 0
        %5351 = vmatpush.bf16.msra.mxu0 0
        %5352 = vmatpush.bf16.msra.mxu0 %v5343
        %5353 = vmatmul.bf16.gmra.mxu0 %v4890
        %v5354 = vpop.f32.mrf.mxu0
        %v5355 = vadd.f32 0.0, %v5354
        %v5356 = vpop.f32.mrf.mxu0
        %5357 = vdwg.mxu0
        %5358 = vmatpush.bf16.msra.mxu0 0
        %5359 = vmatpush.bf16.msra.mxu0 0
        %5360 = vmatpush.bf16.msra.mxu0 0
        %5361 = vmatpush.bf16.msra.mxu0 0
        %5362 = vmatpush.bf16.msra.mxu0 0
        %5363 = vmatpush.bf16.msra.mxu0 0
        %5364 = vmatpush.bf16.msra.mxu0 0
        %5365 = vmatpush.bf16.msra.mxu0 %v5314
        %5366 = vmatmul.bf16.gmra.mxu0 %v4909
        %v5367 = vpop.f32.mrf.mxu0
        %v5368 = vadd.f32 %v5355, %v5367
        %v5369 = vpop.f32.mrf.mxu0
        %5370 = vdwg.mxu0
        %s5371 = scalar_lea.vmem %s8, 4
        %v5372 = vld [vmem:[%s5371] sm:$0x3]
        %v5374 = vsel %vm4888, %v5372, 0
        %5376 = vmatpush.bf16.msra.mxu0 0
        %5377 = vmatpush.bf16.msra.mxu0 0
        %5378 = vmatpush.bf16.msra.mxu0 0
        %5379 = vmatpush.bf16.msra.mxu0 0
        %5380 = vmatpush.bf16.msra.mxu0 0
        %5381 = vmatpush.bf16.msra.mxu0 0
        %5382 = vmatpush.bf16.msra.mxu0 0
        %5383 = vmatpush.bf16.msra.mxu0 %v4928
        %5384 = vmatmul.bf16.gmra.mxu0 %v5374
        %v5385 = vpop.f32.mrf.mxu0
        %v5386 = vadd.f32 0.0, %v5385
        %v5387 = vpop.f32.mrf.mxu0
        %5388 = vdwg.mxu0
        %v5389 = vadd.f32 %v4924, %v5386
        %5390 = vmatpush.bf16.msra.mxu0 0
        %5391 = vmatpush.bf16.msra.mxu0 0
        %5392 = vmatpush.bf16.msra.mxu0 0
        %5393 = vmatpush.bf16.msra.mxu0 0
        %5394 = vmatpush.bf16.msra.mxu0 0
        %5395 = vmatpush.bf16.msra.mxu0 0
        %5396 = vmatpush.bf16.msra.mxu0 0
        %5397 = vmatpush.bf16.msra.mxu0 %v4957
        %5398 = vmatmul.bf16.gmra.mxu0 %v5374
        %v5399 = vpop.f32.mrf.mxu0
        %v5400 = vadd.f32 0.0, %v5399
        %v5401 = vpop.f32.mrf.mxu0
        %5402 = vdwg.mxu0
        %v5403 = vadd.f32 %v4953, %v5400
        %5404 = vmatpush.bf16.msra.mxu0 0
        %5405 = vmatpush.bf16.msra.mxu0 0
        %5406 = vmatpush.bf16.msra.mxu0 0
        %5407 = vmatpush.bf16.msra.mxu0 0
        %5408 = vmatpush.bf16.msra.mxu0 0
        %5409 = vmatpush.bf16.msra.mxu0 0
        %5410 = vmatpush.bf16.msra.mxu0 0
        %5411 = vmatpush.bf16.msra.mxu0 %v4986
        %5412 = vmatmul.bf16.gmra.mxu0 %v5374
        %v5413 = vpop.f32.mrf.mxu0
        %v5414 = vadd.f32 0.0, %v5413
        %v5415 = vpop.f32.mrf.mxu0
        %5416 = vdwg.mxu0
        %v5417 = vadd.f32 %v4982, %v5414
        %v5419 = vsel %vm446, %v4854, 0
        %5421 = vmatpush.bf16.msra.mxu0 0
        %5422 = vmatpush.bf16.msra.mxu0 0
        %5423 = vmatpush.bf16.msra.mxu0 0
        %5424 = vmatpush.bf16.msra.mxu0 0
        %5425 = vmatpush.bf16.msra.mxu0 0
        %5426 = vmatpush.bf16.msra.mxu0 0
        %5427 = vmatpush.bf16.msra.mxu0 0
        %5428 = vmatpush.bf16.msra.mxu0 %v5419
        %5429 = vmatmul.bf16.gmra.mxu0 %v5374
        %v5430 = vpop.f32.mrf.mxu0
        %v5431 = vadd.f32 0.0, %v5430
        %v5432 = vpop.f32.mrf.mxu0
        %5433 = vdwg.mxu0
        %v5434 = vadd.f32 %v5011, %v5431
        %5435 = vmatpush.bf16.msra.mxu0 0
        %5436 = vmatpush.bf16.msra.mxu0 0
        %5437 = vmatpush.bf16.msra.mxu0 0
        %5438 = vmatpush.bf16.msra.mxu0 0
        %5439 = vmatpush.bf16.msra.mxu0 0
        %5440 = vmatpush.bf16.msra.mxu0 0
        %5441 = vmatpush.bf16.msra.mxu0 0
        %5442 = vmatpush.bf16.msra.mxu0 %v5047
        %5443 = vmatmul.bf16.gmra.mxu0 %v5374
        %v5444 = vpop.f32.mrf.mxu0
        %v5445 = vadd.f32 0.0, %v5444
        %v5446 = vpop.f32.mrf.mxu0
        %5447 = vdwg.mxu0
        %v5448 = vadd.f32 %v5043, %v5445
        %5449 = vmatpush.bf16.msra.mxu0 0
        %5450 = vmatpush.bf16.msra.mxu0 0
        %5451 = vmatpush.bf16.msra.mxu0 0
        %5452 = vmatpush.bf16.msra.mxu0 0
        %5453 = vmatpush.bf16.msra.mxu0 0
        %5454 = vmatpush.bf16.msra.mxu0 0
        %5455 = vmatpush.bf16.msra.mxu0 0
        %5456 = vmatpush.bf16.msra.mxu0 %v5076
        %5457 = vmatmul.bf16.gmra.mxu0 %v5374
        %v5458 = vpop.f32.mrf.mxu0
        %v5459 = vadd.f32 0.0, %v5458
        %v5460 = vpop.f32.mrf.mxu0
        %5461 = vdwg.mxu0
        %v5462 = vadd.f32 %v5072, %v5459
        %5463 = vmatpush.bf16.msra.mxu0 0
        %5464 = vmatpush.bf16.msra.mxu0 0
        %5465 = vmatpush.bf16.msra.mxu0 0
        %5466 = vmatpush.bf16.msra.mxu0 0
        %5467 = vmatpush.bf16.msra.mxu0 0
        %5468 = vmatpush.bf16.msra.mxu0 0
        %5469 = vmatpush.bf16.msra.mxu0 0
        %5470 = vmatpush.bf16.msra.mxu0 %v5105
        %5471 = vmatmul.bf16.gmra.mxu0 %v5374
        %v5472 = vpop.f32.mrf.mxu0
        %v5473 = vadd.f32 0.0, %v5472
        %v5474 = vpop.f32.mrf.mxu0
        %5475 = vdwg.mxu0
        %v5476 = vadd.f32 %v5101, %v5473
        %v5478 = vsel %vm446, %v4860, 0
        %5480 = vmatpush.bf16.msra.mxu0 0
        %5481 = vmatpush.bf16.msra.mxu0 0
        %5482 = vmatpush.bf16.msra.mxu0 0
        %5483 = vmatpush.bf16.msra.mxu0 0
        %5484 = vmatpush.bf16.msra.mxu0 0
        %5485 = vmatpush.bf16.msra.mxu0 0
        %5486 = vmatpush.bf16.msra.mxu0 0
        %5487 = vmatpush.bf16.msra.mxu0 %v5478
        %5488 = vmatmul.bf16.gmra.mxu0 %v5374
        %v5489 = vpop.f32.mrf.mxu0
        %v5490 = vadd.f32 0.0, %v5489
        %v5491 = vpop.f32.mrf.mxu0
        %5492 = vdwg.mxu0
        %v5493 = vadd.f32 %v5130, %v5490
        %5494 = vmatpush.bf16.msra.mxu0 0
        %5495 = vmatpush.bf16.msra.mxu0 0
        %5496 = vmatpush.bf16.msra.mxu0 0
        %5497 = vmatpush.bf16.msra.mxu0 0
        %5498 = vmatpush.bf16.msra.mxu0 0
        %5499 = vmatpush.bf16.msra.mxu0 0
        %5500 = vmatpush.bf16.msra.mxu0 0
        %5501 = vmatpush.bf16.msra.mxu0 %v5166
        %5502 = vmatmul.bf16.gmra.mxu0 %v5374
        %v5503 = vpop.f32.mrf.mxu0
        %v5504 = vadd.f32 0.0, %v5503
        %v5505 = vpop.f32.mrf.mxu0
        %5506 = vdwg.mxu0
        %v5507 = vadd.f32 %v5162, %v5504
        %5508 = vmatpush.bf16.msra.mxu0 0
        %5509 = vmatpush.bf16.msra.mxu0 0
        %5510 = vmatpush.bf16.msra.mxu0 0
        %5511 = vmatpush.bf16.msra.mxu0 0
        %5512 = vmatpush.bf16.msra.mxu0 0
        %5513 = vmatpush.bf16.msra.mxu0 0
        %5514 = vmatpush.bf16.msra.mxu0 0
        %5515 = vmatpush.bf16.msra.mxu0 %v5195
        %5516 = vmatmul.bf16.gmra.mxu0 %v5374
        %v5517 = vpop.f32.mrf.mxu0
        %v5518 = vadd.f32 0.0, %v5517
        %v5519 = vpop.f32.mrf.mxu0
        %5520 = vdwg.mxu0
        %v5521 = vadd.f32 %v5191, %v5518
        %5522 = vmatpush.bf16.msra.mxu0 0
        %5523 = vmatpush.bf16.msra.mxu0 0
        %5524 = vmatpush.bf16.msra.mxu0 0
        %5525 = vmatpush.bf16.msra.mxu0 0
        %5526 = vmatpush.bf16.msra.mxu0 0
        %5527 = vmatpush.bf16.msra.mxu0 0
        %5528 = vmatpush.bf16.msra.mxu0 0
        %5529 = vmatpush.bf16.msra.mxu0 %v5224
        %5530 = vmatmul.bf16.gmra.mxu0 %v5374
        %v5531 = vpop.f32.mrf.mxu0
        %v5532 = vadd.f32 0.0, %v5531
        %v5533 = vpop.f32.mrf.mxu0
        %5534 = vdwg.mxu0
        %v5535 = vadd.f32 %v5220, %v5532
        %v5537 = vsel %vm446, %v4866, 0
        %5539 = vmatpush.bf16.msra.mxu0 0
        %5540 = vmatpush.bf16.msra.mxu0 0
        %5541 = vmatpush.bf16.msra.mxu0 0
        %5542 = vmatpush.bf16.msra.mxu0 0
        %5543 = vmatpush.bf16.msra.mxu0 0
        %5544 = vmatpush.bf16.msra.mxu0 0
        %5545 = vmatpush.bf16.msra.mxu0 0
        %5546 = vmatpush.bf16.msra.mxu0 %v5537
        %5547 = vmatmul.bf16.gmra.mxu0 %v5374
        %v5548 = vpop.f32.mrf.mxu0
        %v5549 = vadd.f32 0.0, %v5548
        %v5550 = vpop.f32.mrf.mxu0
        %5551 = vdwg.mxu0
        %v5552 = vadd.f32 %v5249, %v5549
        %5553 = vmatpush.bf16.msra.mxu0 0
        %5554 = vmatpush.bf16.msra.mxu0 0
        %5555 = vmatpush.bf16.msra.mxu0 0
        %5556 = vmatpush.bf16.msra.mxu0 0
        %5557 = vmatpush.bf16.msra.mxu0 0
        %5558 = vmatpush.bf16.msra.mxu0 0
        %5559 = vmatpush.bf16.msra.mxu0 0
        %5560 = vmatpush.bf16.msra.mxu0 %v5285
        %5561 = vmatmul.bf16.gmra.mxu0 %v5374
        %v5562 = vpop.f32.mrf.mxu0
        %v5563 = vadd.f32 0.0, %v5562
        %v5564 = vpop.f32.mrf.mxu0
        %5565 = vdwg.mxu0
        %v5566 = vadd.f32 %v5281, %v5563
        %5567 = vmatpush.bf16.msra.mxu0 0
        %5568 = vmatpush.bf16.msra.mxu0 0
        %5569 = vmatpush.bf16.msra.mxu0 0
        %5570 = vmatpush.bf16.msra.mxu0 0
        %5571 = vmatpush.bf16.msra.mxu0 0
        %5572 = vmatpush.bf16.msra.mxu0 0
        %5573 = vmatpush.bf16.msra.mxu0 0
        %5574 = vmatpush.bf16.msra.mxu0 %v5314
        %5575 = vmatmul.bf16.gmra.mxu0 %v5374
        %v5576 = vpop.f32.mrf.mxu0
        %v5577 = vadd.f32 0.0, %v5576
        %v5578 = vpop.f32.mrf.mxu0
        %5579 = vdwg.mxu0
        %v5580 = vadd.f32 %v5310, %v5577
        %5581 = vmatpush.bf16.msra.mxu0 0
        %5582 = vmatpush.bf16.msra.mxu0 0
        %5583 = vmatpush.bf16.msra.mxu0 0
        %5584 = vmatpush.bf16.msra.mxu0 0
        %5585 = vmatpush.bf16.msra.mxu0 0
        %5586 = vmatpush.bf16.msra.mxu0 0
        %5587 = vmatpush.bf16.msra.mxu0 0
        %5588 = vmatpush.bf16.msra.mxu0 %v5343
        %5589 = vmatmul.bf16.gmra.mxu0 %v5374
        %v5590 = vpop.f32.mrf.mxu0
        %v5591 = vadd.f32 0.0, %v5590
        %v5592 = vpop.f32.mrf.mxu0
        %5593 = vdwg.mxu0
        %v5594 = vadd.f32 %v5339, %v5591
        %v5596 = vsel %vm446, %v4872, 0
        %5598 = vmatpush.bf16.msra.mxu0 0
        %5599 = vmatpush.bf16.msra.mxu0 0
        %5600 = vmatpush.bf16.msra.mxu0 0
        %5601 = vmatpush.bf16.msra.mxu0 0
        %5602 = vmatpush.bf16.msra.mxu0 0
        %5603 = vmatpush.bf16.msra.mxu0 0
        %5604 = vmatpush.bf16.msra.mxu0 0
        %5605 = vmatpush.bf16.msra.mxu0 %v5596
        %5606 = vmatmul.bf16.gmra.mxu0 %v5374
        %v5607 = vpop.f32.mrf.mxu0
        %v5608 = vadd.f32 0.0, %v5607
        %v5609 = vpop.f32.mrf.mxu0
        %5610 = vdwg.mxu0
        %v5611 = vadd.f32 %v5368, %v5608
        %s5612 = scalar_lea.vmem %s8, 6
        %v5613 = vld [vmem:[%s5612] sm:$0x3]
        %v5615 = vsel %vm4888, %v5613, 0
        %5617 = vmatpush.bf16.msra.mxu0 0
        %5618 = vmatpush.bf16.msra.mxu0 0
        %5619 = vmatpush.bf16.msra.mxu0 0
        %5620 = vmatpush.bf16.msra.mxu0 0
        %5621 = vmatpush.bf16.msra.mxu0 0
        %5622 = vmatpush.bf16.msra.mxu0 0
        %5623 = vmatpush.bf16.msra.mxu0 0
        %5624 = vmatpush.bf16.msra.mxu0 %v5031
        %5625 = vmatmul.bf16.gmra.mxu0 %v5615
        %v5626 = vpop.f32.mrf.mxu0
        %v5627 = vadd.f32 0.0, %v5626
        %v5628 = vpop.f32.mrf.mxu0
        %5629 = vdwg.mxu0
        %v5630 = vadd.f32 %v5389, %v5627
        %5631 = vmatpush.bf16.msra.mxu0 0
        %5632 = vmatpush.bf16.msra.mxu0 0
        %5633 = vmatpush.bf16.msra.mxu0 0
        %5634 = vmatpush.bf16.msra.mxu0 0
        %5635 = vmatpush.bf16.msra.mxu0 0
        %5636 = vmatpush.bf16.msra.mxu0 0
        %5637 = vmatpush.bf16.msra.mxu0 0
        %5638 = vmatpush.bf16.msra.mxu0 %v5015
        %5639 = vmatmul.bf16.gmra.mxu0 %v5615
        %v5640 = vpop.f32.mrf.mxu0
        %v5641 = vadd.f32 0.0, %v5640
        %v5642 = vpop.f32.mrf.mxu0
        %5643 = vdwg.mxu0
        %v5644 = vadd.f32 %v5403, %v5641
        %5645 = vmatpush.bf16.msra.mxu0 0
        %5646 = vmatpush.bf16.msra.mxu0 0
        %5647 = vmatpush.bf16.msra.mxu0 0
        %5648 = vmatpush.bf16.msra.mxu0 0
        %5649 = vmatpush.bf16.msra.mxu0 0
        %5650 = vmatpush.bf16.msra.mxu0 0
        %5651 = vmatpush.bf16.msra.mxu0 0
        %5652 = vmatpush.bf16.msra.mxu0 %v5047
        %5653 = vmatmul.bf16.gmra.mxu0 %v5615
        %v5654 = vpop.f32.mrf.mxu0
        %v5655 = vadd.f32 0.0, %v5654
        %v5656 = vpop.f32.mrf.mxu0
        %5657 = vdwg.mxu0
        %v5658 = vadd.f32 %v5417, %v5655
        %5659 = vmatpush.bf16.msra.mxu0 0
        %5660 = vmatpush.bf16.msra.mxu0 0
        %5661 = vmatpush.bf16.msra.mxu0 0
        %5662 = vmatpush.bf16.msra.mxu0 0
        %5663 = vmatpush.bf16.msra.mxu0 0
        %5664 = vmatpush.bf16.msra.mxu0 0
        %5665 = vmatpush.bf16.msra.mxu0 0
        %5666 = vmatpush.bf16.msra.mxu0 %v5076
        %5667 = vmatmul.bf16.gmra.mxu0 %v5615
        %v5668 = vpop.f32.mrf.mxu0
        %v5669 = vadd.f32 0.0, %v5668
        %v5670 = vpop.f32.mrf.mxu0
        %5671 = vdwg.mxu0
        %v5672 = vadd.f32 %v5434, %v5669
        %5673 = vmatpush.bf16.msra.mxu0 0
        %5674 = vmatpush.bf16.msra.mxu0 0
        %5675 = vmatpush.bf16.msra.mxu0 0
        %5676 = vmatpush.bf16.msra.mxu0 0
        %5677 = vmatpush.bf16.msra.mxu0 0
        %5678 = vmatpush.bf16.msra.mxu0 0
        %5679 = vmatpush.bf16.msra.mxu0 0
        %5680 = vmatpush.bf16.msra.mxu0 %v5150
        %5681 = vmatmul.bf16.gmra.mxu0 %v5615
        %v5682 = vpop.f32.mrf.mxu0
        %v5683 = vadd.f32 0.0, %v5682
        %v5684 = vpop.f32.mrf.mxu0
        %5685 = vdwg.mxu0
        %v5686 = vadd.f32 %v5448, %v5683
        %5687 = vmatpush.bf16.msra.mxu0 0
        %5688 = vmatpush.bf16.msra.mxu0 0
        %5689 = vmatpush.bf16.msra.mxu0 0
        %5690 = vmatpush.bf16.msra.mxu0 0
        %5691 = vmatpush.bf16.msra.mxu0 0
        %5692 = vmatpush.bf16.msra.mxu0 0
        %5693 = vmatpush.bf16.msra.mxu0 0
        %5694 = vmatpush.bf16.msra.mxu0 %v5134
        %5695 = vmatmul.bf16.gmra.mxu0 %v5615
        %v5696 = vpop.f32.mrf.mxu0
        %v5697 = vadd.f32 0.0, %v5696
        %v5698 = vpop.f32.mrf.mxu0
        %5699 = vdwg.mxu0
        %v5700 = vadd.f32 %v5462, %v5697
        %5701 = vmatpush.bf16.msra.mxu0 0
        %5702 = vmatpush.bf16.msra.mxu0 0
        %5703 = vmatpush.bf16.msra.mxu0 0
        %5704 = vmatpush.bf16.msra.mxu0 0
        %5705 = vmatpush.bf16.msra.mxu0 0
        %5706 = vmatpush.bf16.msra.mxu0 0
        %5707 = vmatpush.bf16.msra.mxu0 0
        %5708 = vmatpush.bf16.msra.mxu0 %v5166
        %5709 = vmatmul.bf16.gmra.mxu0 %v5615
        %v5710 = vpop.f32.mrf.mxu0
        %v5711 = vadd.f32 0.0, %v5710
        %v5712 = vpop.f32.mrf.mxu0
        %5713 = vdwg.mxu0
        %v5714 = vadd.f32 %v5476, %v5711
        %5715 = vmatpush.bf16.msra.mxu0 0
        %5716 = vmatpush.bf16.msra.mxu0 0
        %5717 = vmatpush.bf16.msra.mxu0 0
        %5718 = vmatpush.bf16.msra.mxu0 0
        %5719 = vmatpush.bf16.msra.mxu0 0
        %5720 = vmatpush.bf16.msra.mxu0 0
        %5721 = vmatpush.bf16.msra.mxu0 0
        %5722 = vmatpush.bf16.msra.mxu0 %v5195
        %5723 = vmatmul.bf16.gmra.mxu0 %v5615
        %v5724 = vpop.f32.mrf.mxu0
        %v5725 = vadd.f32 0.0, %v5724
        %v5726 = vpop.f32.mrf.mxu0
        %5727 = vdwg.mxu0
        %v5728 = vadd.f32 %v5493, %v5725
        %5729 = vmatpush.bf16.msra.mxu0 0
        %5730 = vmatpush.bf16.msra.mxu0 0
        %5731 = vmatpush.bf16.msra.mxu0 0
        %5732 = vmatpush.bf16.msra.mxu0 0
        %5733 = vmatpush.bf16.msra.mxu0 0
        %5734 = vmatpush.bf16.msra.mxu0 0
        %5735 = vmatpush.bf16.msra.mxu0 0
        %5736 = vmatpush.bf16.msra.mxu0 %v5269
        %5737 = vmatmul.bf16.gmra.mxu0 %v5615
        %v5738 = vpop.f32.mrf.mxu0
        %v5739 = vadd.f32 0.0, %v5738
        %v5740 = vpop.f32.mrf.mxu0
        %5741 = vdwg.mxu0
        %v5742 = vadd.f32 %v5507, %v5739
        %5743 = vmatpush.bf16.msra.mxu0 0
        %5744 = vmatpush.bf16.msra.mxu0 0
        %5745 = vmatpush.bf16.msra.mxu0 0
        %5746 = vmatpush.bf16.msra.mxu0 0
        %5747 = vmatpush.bf16.msra.mxu0 0
        %5748 = vmatpush.bf16.msra.mxu0 0
        %5749 = vmatpush.bf16.msra.mxu0 0
        %5750 = vmatpush.bf16.msra.mxu0 %v5253
        %5751 = vmatmul.bf16.gmra.mxu0 %v5615
        %v5752 = vpop.f32.mrf.mxu0
        %v5753 = vadd.f32 0.0, %v5752
        %v5754 = vpop.f32.mrf.mxu0
        %5755 = vdwg.mxu0
        %v5756 = vadd.f32 %v5521, %v5753
        %5757 = vmatpush.bf16.msra.mxu0 0
        %5758 = vmatpush.bf16.msra.mxu0 0
        %5759 = vmatpush.bf16.msra.mxu0 0
        %5760 = vmatpush.bf16.msra.mxu0 0
        %5761 = vmatpush.bf16.msra.mxu0 0
        %5762 = vmatpush.bf16.msra.mxu0 0
        %5763 = vmatpush.bf16.msra.mxu0 0
        %5764 = vmatpush.bf16.msra.mxu0 %v5285
        %5765 = vmatmul.bf16.gmra.mxu0 %v5615
        %v5766 = vpop.f32.mrf.mxu0
        %v5767 = vadd.f32 0.0, %v5766
        %v5768 = vpop.f32.mrf.mxu0
        %5769 = vdwg.mxu0
        %v5770 = vadd.f32 %v5535, %v5767
        %5771 = vmatpush.bf16.msra.mxu0 0
        %5772 = vmatpush.bf16.msra.mxu0 0
        %5773 = vmatpush.bf16.msra.mxu0 0
        %5774 = vmatpush.bf16.msra.mxu0 0
        %5775 = vmatpush.bf16.msra.mxu0 0
        %5776 = vmatpush.bf16.msra.mxu0 0
        %5777 = vmatpush.bf16.msra.mxu0 0
        %5778 = vmatpush.bf16.msra.mxu0 %v5314
        %5779 = vmatmul.bf16.gmra.mxu0 %v5615
        %v5780 = vpop.f32.mrf.mxu0
        %v5781 = vadd.f32 0.0, %v5780
        %v5782 = vpop.f32.mrf.mxu0
        %5783 = vdwg.mxu0
        %v5784 = vadd.f32 %v5552, %v5781
        %v5786 = vsel %vm446, %v4873, 0
        %5788 = vmatpush.bf16.msra.mxu0 0
        %5789 = vmatpush.bf16.msra.mxu0 0
        %5790 = vmatpush.bf16.msra.mxu0 0
        %5791 = vmatpush.bf16.msra.mxu0 0
        %5792 = vmatpush.bf16.msra.mxu0 0
        %5793 = vmatpush.bf16.msra.mxu0 0
        %5794 = vmatpush.bf16.msra.mxu0 0
        %5795 = vmatpush.bf16.msra.mxu0 %v5786
        %5796 = vmatmul.bf16.gmra.mxu0 %v5615
        %v5797 = vpop.f32.mrf.mxu0
        %v5798 = vadd.f32 0.0, %v5797
        %v5799 = vpop.f32.mrf.mxu0
        %5800 = vdwg.mxu0
        %v5801 = vadd.f32 %v5566, %v5798
        %v5803 = vsel %vm446, %v4874, 0
        %5805 = vmatpush.bf16.msra.mxu0 0
        %5806 = vmatpush.bf16.msra.mxu0 0
        %5807 = vmatpush.bf16.msra.mxu0 0
        %5808 = vmatpush.bf16.msra.mxu0 0
        %5809 = vmatpush.bf16.msra.mxu0 0
        %5810 = vmatpush.bf16.msra.mxu0 0
        %5811 = vmatpush.bf16.msra.mxu0 0
        %5812 = vmatpush.bf16.msra.mxu0 %v5803
        %5813 = vmatmul.bf16.gmra.mxu0 %v5615
        %v5814 = vpop.f32.mrf.mxu0
        %v5815 = vadd.f32 0.0, %v5814
        %v5816 = vpop.f32.mrf.mxu0
        %5817 = vdwg.mxu0
        %v5818 = vadd.f32 %v5580, %v5815
        %v5820 = vsel %vm446, %v4875, 0
        %5822 = vmatpush.bf16.msra.mxu0 0
        %5823 = vmatpush.bf16.msra.mxu0 0
        %5824 = vmatpush.bf16.msra.mxu0 0
        %5825 = vmatpush.bf16.msra.mxu0 0
        %5826 = vmatpush.bf16.msra.mxu0 0
        %5827 = vmatpush.bf16.msra.mxu0 0
        %5828 = vmatpush.bf16.msra.mxu0 0
        %5829 = vmatpush.bf16.msra.mxu0 %v5820
        %5830 = vmatmul.bf16.gmra.mxu0 %v5615
        %v5831 = vpop.f32.mrf.mxu0
        %v5832 = vadd.f32 0.0, %v5831
        %v5833 = vpop.f32.mrf.mxu0
        %5834 = vdwg.mxu0
        %v5835 = vadd.f32 %v5594, %v5832
        %v5837 = vsel %vm446, %v4876, 0
        %5839 = vmatpush.bf16.msra.mxu0 0
        %5840 = vmatpush.bf16.msra.mxu0 0
        %5841 = vmatpush.bf16.msra.mxu0 0
        %5842 = vmatpush.bf16.msra.mxu0 0
        %5843 = vmatpush.bf16.msra.mxu0 0
        %5844 = vmatpush.bf16.msra.mxu0 0
        %5845 = vmatpush.bf16.msra.mxu0 0
        %5846 = vmatpush.bf16.msra.mxu0 %v5837
        %5847 = vmatmul.bf16.gmra.mxu0 %v5615
        %v5848 = vpop.f32.mrf.mxu0
        %v5849 = vadd.f32 0.0, %v5848
        %v5850 = vpop.f32.mrf.mxu0
        %5851 = vdwg.mxu0
        %v5852 = vadd.f32 %v5611, %v5849
        %s5853 = scalar_lea.vmem %s8, 8
        %v5854 = vld [vmem:[%s5853] sm:$0x3]
        %v5856 = vsel %vm4888, %v5854, 0
        %5858 = vmatpush.bf16.msra.mxu0 0
        %5859 = vmatpush.bf16.msra.mxu0 0
        %5860 = vmatpush.bf16.msra.mxu0 0
        %5861 = vmatpush.bf16.msra.mxu0 0
        %5862 = vmatpush.bf16.msra.mxu0 0
        %5863 = vmatpush.bf16.msra.mxu0 0
        %5864 = vmatpush.bf16.msra.mxu0 0
        %5865 = vmatpush.bf16.msra.mxu0 %v5015
        %5866 = vmatmul.bf16.gmra.mxu0 %v5856
        %v5867 = vpop.f32.mrf.mxu0
        %v5868 = vadd.f32 0.0, %v5867
        %v5869 = vpop.f32.mrf.mxu0
        %5870 = vdwg.mxu0
        %v5871 = vadd.f32 %v5630, %v5868
        %5872 = vmatpush.bf16.msra.mxu0 0
        %5873 = vmatpush.bf16.msra.mxu0 0
        %5874 = vmatpush.bf16.msra.mxu0 0
        %5875 = vmatpush.bf16.msra.mxu0 0
        %5876 = vmatpush.bf16.msra.mxu0 0
        %5877 = vmatpush.bf16.msra.mxu0 0
        %5878 = vmatpush.bf16.msra.mxu0 0
        %5879 = vmatpush.bf16.msra.mxu0 %v5047
        %5880 = vmatmul.bf16.gmra.mxu0 %v5856
        %v5881 = vpop.f32.mrf.mxu0
        %v5882 = vadd.f32 0.0, %v5881
        %v5883 = vpop.f32.mrf.mxu0
        %5884 = vdwg.mxu0
        %v5885 = vadd.f32 %v5644, %v5882
        %5886 = vmatpush.bf16.msra.mxu0 0
        %5887 = vmatpush.bf16.msra.mxu0 0
        %5888 = vmatpush.bf16.msra.mxu0 0
        %5889 = vmatpush.bf16.msra.mxu0 0
        %5890 = vmatpush.bf16.msra.mxu0 0
        %5891 = vmatpush.bf16.msra.mxu0 0
        %5892 = vmatpush.bf16.msra.mxu0 0
        %5893 = vmatpush.bf16.msra.mxu0 %v5076
        %5894 = vmatmul.bf16.gmra.mxu0 %v5856
        %v5895 = vpop.f32.mrf.mxu0
        %v5896 = vadd.f32 0.0, %v5895
        %v5897 = vpop.f32.mrf.mxu0
        %5898 = vdwg.mxu0
        %v5899 = vadd.f32 %v5658, %v5896
        %5900 = vmatpush.bf16.msra.mxu0 0
        %5901 = vmatpush.bf16.msra.mxu0 0
        %5902 = vmatpush.bf16.msra.mxu0 0
        %5903 = vmatpush.bf16.msra.mxu0 0
        %5904 = vmatpush.bf16.msra.mxu0 0
        %5905 = vmatpush.bf16.msra.mxu0 0
        %5906 = vmatpush.bf16.msra.mxu0 0
        %5907 = vmatpush.bf16.msra.mxu0 %v5105
        %5908 = vmatmul.bf16.gmra.mxu0 %v5856
        %v5909 = vpop.f32.mrf.mxu0
        %v5910 = vadd.f32 0.0, %v5909
        %v5911 = vpop.f32.mrf.mxu0
        %5912 = vdwg.mxu0
        %v5913 = vadd.f32 %v5672, %v5910
        %5914 = vmatpush.bf16.msra.mxu0 0
        %5915 = vmatpush.bf16.msra.mxu0 0
        %5916 = vmatpush.bf16.msra.mxu0 0
        %5917 = vmatpush.bf16.msra.mxu0 0
        %5918 = vmatpush.bf16.msra.mxu0 0
        %5919 = vmatpush.bf16.msra.mxu0 0
        %5920 = vmatpush.bf16.msra.mxu0 0
        %5921 = vmatpush.bf16.msra.mxu0 %v5134
        %5922 = vmatmul.bf16.gmra.mxu0 %v5856
        %v5923 = vpop.f32.mrf.mxu0
        %v5924 = vadd.f32 0.0, %v5923
        %v5925 = vpop.f32.mrf.mxu0
        %5926 = vdwg.mxu0
        %v5927 = vadd.f32 %v5686, %v5924
        %5928 = vmatpush.bf16.msra.mxu0 0
        %5929 = vmatpush.bf16.msra.mxu0 0
        %5930 = vmatpush.bf16.msra.mxu0 0
        %5931 = vmatpush.bf16.msra.mxu0 0
        %5932 = vmatpush.bf16.msra.mxu0 0
        %5933 = vmatpush.bf16.msra.mxu0 0
        %5934 = vmatpush.bf16.msra.mxu0 0
        %5935 = vmatpush.bf16.msra.mxu0 %v5166
        %5936 = vmatmul.bf16.gmra.mxu0 %v5856
        %v5937 = vpop.f32.mrf.mxu0
        %v5938 = vadd.f32 0.0, %v5937
        %v5939 = vpop.f32.mrf.mxu0
        %5940 = vdwg.mxu0
        %v5941 = vadd.f32 %v5700, %v5938
        %5942 = vmatpush.bf16.msra.mxu0 0
        %5943 = vmatpush.bf16.msra.mxu0 0
        %5944 = vmatpush.bf16.msra.mxu0 0
        %5945 = vmatpush.bf16.msra.mxu0 0
        %5946 = vmatpush.bf16.msra.mxu0 0
        %5947 = vmatpush.bf16.msra.mxu0 0
        %5948 = vmatpush.bf16.msra.mxu0 0
        %5949 = vmatpush.bf16.msra.mxu0 %v5195
        %5950 = vmatmul.bf16.gmra.mxu0 %v5856
        %v5951 = vpop.f32.mrf.mxu0
        %v5952 = vadd.f32 0.0, %v5951
        %v5953 = vpop.f32.mrf.mxu0
        %5954 = vdwg.mxu0
        %v5955 = vadd.f32 %v5714, %v5952
        %5956 = vmatpush.bf16.msra.mxu0 0
        %5957 = vmatpush.bf16.msra.mxu0 0
        %5958 = vmatpush.bf16.msra.mxu0 0
        %5959 = vmatpush.bf16.msra.mxu0 0
        %5960 = vmatpush.bf16.msra.mxu0 0
        %5961 = vmatpush.bf16.msra.mxu0 0
        %5962 = vmatpush.bf16.msra.mxu0 0
        %5963 = vmatpush.bf16.msra.mxu0 %v5224
        %5964 = vmatmul.bf16.gmra.mxu0 %v5856
        %v5965 = vpop.f32.mrf.mxu0
        %v5966 = vadd.f32 0.0, %v5965
        %v5967 = vpop.f32.mrf.mxu0
        %5968 = vdwg.mxu0
        %v5969 = vadd.f32 %v5728, %v5966
        %5970 = vmatpush.bf16.msra.mxu0 0
        %5971 = vmatpush.bf16.msra.mxu0 0
        %5972 = vmatpush.bf16.msra.mxu0 0
        %5973 = vmatpush.bf16.msra.mxu0 0
        %5974 = vmatpush.bf16.msra.mxu0 0
        %5975 = vmatpush.bf16.msra.mxu0 0
        %5976 = vmatpush.bf16.msra.mxu0 0
        %5977 = vmatpush.bf16.msra.mxu0 %v5253
        %5978 = vmatmul.bf16.gmra.mxu0 %v5856
        %v5979 = vpop.f32.mrf.mxu0
        %v5980 = vadd.f32 0.0, %v5979
        %v5981 = vpop.f32.mrf.mxu0
        %5982 = vdwg.mxu0
        %v5983 = vadd.f32 %v5742, %v5980
        %5984 = vmatpush.bf16.msra.mxu0 0
        %5985 = vmatpush.bf16.msra.mxu0 0
        %5986 = vmatpush.bf16.msra.mxu0 0
        %5987 = vmatpush.bf16.msra.mxu0 0
        %5988 = vmatpush.bf16.msra.mxu0 0
        %5989 = vmatpush.bf16.msra.mxu0 0
        %5990 = vmatpush.bf16.msra.mxu0 0
        %5991 = vmatpush.bf16.msra.mxu0 %v5285
        %5992 = vmatmul.bf16.gmra.mxu0 %v5856
        %v5993 = vpop.f32.mrf.mxu0
        %v5994 = vadd.f32 0.0, %v5993
        %v5995 = vpop.f32.mrf.mxu0
        %5996 = vdwg.mxu0
        %v5997 = vadd.f32 %v5756, %v5994
        %5998 = vmatpush.bf16.msra.mxu0 0
        %5999 = vmatpush.bf16.msra.mxu0 0
        %6000 = vmatpush.bf16.msra.mxu0 0
        %6001 = vmatpush.bf16.msra.mxu0 0
        %6002 = vmatpush.bf16.msra.mxu0 0
        %6003 = vmatpush.bf16.msra.mxu0 0
        %6004 = vmatpush.bf16.msra.mxu0 0
        %6005 = vmatpush.bf16.msra.mxu0 %v5314
        %6006 = vmatmul.bf16.gmra.mxu0 %v5856
        %v6007 = vpop.f32.mrf.mxu0
        %v6008 = vadd.f32 0.0, %v6007
        %v6009 = vpop.f32.mrf.mxu0
        %6010 = vdwg.mxu0
        %v6011 = vadd.f32 %v5770, %v6008
        %6012 = vmatpush.bf16.msra.mxu0 0
        %6013 = vmatpush.bf16.msra.mxu0 0
        %6014 = vmatpush.bf16.msra.mxu0 0
        %6015 = vmatpush.bf16.msra.mxu0 0
        %6016 = vmatpush.bf16.msra.mxu0 0
        %6017 = vmatpush.bf16.msra.mxu0 0
        %6018 = vmatpush.bf16.msra.mxu0 0
        %6019 = vmatpush.bf16.msra.mxu0 %v5343
        %6020 = vmatmul.bf16.gmra.mxu0 %v5856
        %v6021 = vpop.f32.mrf.mxu0
        %v6022 = vadd.f32 0.0, %v6021
        %v6023 = vpop.f32.mrf.mxu0
        %6024 = vdwg.mxu0
        %v6025 = vadd.f32 %v5784, %v6022
        %6026 = vmatpush.bf16.msra.mxu0 0
        %6027 = vmatpush.bf16.msra.mxu0 0
        %6028 = vmatpush.bf16.msra.mxu0 0
        %6029 = vmatpush.bf16.msra.mxu0 0
        %6030 = vmatpush.bf16.msra.mxu0 0
        %6031 = vmatpush.bf16.msra.mxu0 0
        %6032 = vmatpush.bf16.msra.mxu0 0
        %6033 = vmatpush.bf16.msra.mxu0 %v5803
        %6034 = vmatmul.bf16.gmra.mxu0 %v5856
        %v6035 = vpop.f32.mrf.mxu0
        %v6036 = vadd.f32 0.0, %v6035
        %v6037 = vpop.f32.mrf.mxu0
        %6038 = vdwg.mxu0
        %v6039 = vadd.f32 %v5801, %v6036
        %6040 = vmatpush.bf16.msra.mxu0 0
        %6041 = vmatpush.bf16.msra.mxu0 0
        %6042 = vmatpush.bf16.msra.mxu0 0
        %6043 = vmatpush.bf16.msra.mxu0 0
        %6044 = vmatpush.bf16.msra.mxu0 0
        %6045 = vmatpush.bf16.msra.mxu0 0
        %6046 = vmatpush.bf16.msra.mxu0 0
        %6047 = vmatpush.bf16.msra.mxu0 %v5820
        %6048 = vmatmul.bf16.gmra.mxu0 %v5856
        %v6049 = vpop.f32.mrf.mxu0
        %v6050 = vadd.f32 0.0, %v6049
        %v6051 = vpop.f32.mrf.mxu0
        %6052 = vdwg.mxu0
        %v6053 = vadd.f32 %v5818, %v6050
        %6054 = vmatpush.bf16.msra.mxu0 0
        %6055 = vmatpush.bf16.msra.mxu0 0
        %6056 = vmatpush.bf16.msra.mxu0 0
        %6057 = vmatpush.bf16.msra.mxu0 0
        %6058 = vmatpush.bf16.msra.mxu0 0
        %6059 = vmatpush.bf16.msra.mxu0 0
        %6060 = vmatpush.bf16.msra.mxu0 0
        %6061 = vmatpush.bf16.msra.mxu0 %v5837
        %6062 = vmatmul.bf16.gmra.mxu0 %v5856
        %v6063 = vpop.f32.mrf.mxu0
        %v6064 = vadd.f32 0.0, %v6063
        %v6065 = vpop.f32.mrf.mxu0
        %6066 = vdwg.mxu0
        %v6067 = vadd.f32 %v5835, %v6064
        %v6069 = vsel %vm446, %v4877, 0
        %6071 = vmatpush.bf16.msra.mxu0 0
        %6072 = vmatpush.bf16.msra.mxu0 0
        %6073 = vmatpush.bf16.msra.mxu0 0
        %6074 = vmatpush.bf16.msra.mxu0 0
        %6075 = vmatpush.bf16.msra.mxu0 0
        %6076 = vmatpush.bf16.msra.mxu0 0
        %6077 = vmatpush.bf16.msra.mxu0 0
        %6078 = vmatpush.bf16.msra.mxu0 %v6069
        %6079 = vmatmul.bf16.gmra.mxu0 %v5856
        %v6080 = vpop.f32.mrf.mxu0
        %v6081 = vadd.f32 0.0, %v6080
        %v6082 = vpop.f32.mrf.mxu0
        %6083 = vdwg.mxu0
        %v6084 = vadd.f32 %v5852, %v6081
        %s6085 = scalar_lea.vmem %s8, 10
        %v6086 = vld [vmem:[%s6085] sm:$0x3]
        %v6088 = vsel %vm4888, %v6086, 0
        %6090 = vmatpush.bf16.msra.mxu0 0
        %6091 = vmatpush.bf16.msra.mxu0 0
        %6092 = vmatpush.bf16.msra.mxu0 0
        %6093 = vmatpush.bf16.msra.mxu0 0
        %6094 = vmatpush.bf16.msra.mxu0 0
        %6095 = vmatpush.bf16.msra.mxu0 0
        %6096 = vmatpush.bf16.msra.mxu0 0
        %6097 = vmatpush.bf16.msra.mxu0 %v5047
        %6098 = vmatmul.bf16.gmra.mxu0 %v6088
        %v6099 = vpop.f32.mrf.mxu0
        %v6100 = vadd.f32 0.0, %v6099
        %v6101 = vpop.f32.mrf.mxu0
        %6102 = vdwg.mxu0
        %v6103 = vadd.f32 %v5871, %v6100
        %6104 = vmatpush.bf16.msra.mxu0 0
        %6105 = vmatpush.bf16.msra.mxu0 0
        %6106 = vmatpush.bf16.msra.mxu0 0
        %6107 = vmatpush.bf16.msra.mxu0 0
        %6108 = vmatpush.bf16.msra.mxu0 0
        %6109 = vmatpush.bf16.msra.mxu0 0
        %6110 = vmatpush.bf16.msra.mxu0 0
        %6111 = vmatpush.bf16.msra.mxu0 %v5076
        %6112 = vmatmul.bf16.gmra.mxu0 %v6088
        %v6113 = vpop.f32.mrf.mxu0
        %v6114 = vadd.f32 0.0, %v6113
        %v6115 = vpop.f32.mrf.mxu0
        %6116 = vdwg.mxu0
        %v6117 = vadd.f32 %v5885, %v6114
        %6118 = vmatpush.bf16.msra.mxu0 0
        %6119 = vmatpush.bf16.msra.mxu0 0
        %6120 = vmatpush.bf16.msra.mxu0 0
        %6121 = vmatpush.bf16.msra.mxu0 0
        %6122 = vmatpush.bf16.msra.mxu0 0
        %6123 = vmatpush.bf16.msra.mxu0 0
        %6124 = vmatpush.bf16.msra.mxu0 0
        %6125 = vmatpush.bf16.msra.mxu0 %v5105
        %6126 = vmatmul.bf16.gmra.mxu0 %v6088
        %v6127 = vpop.f32.mrf.mxu0
        %v6128 = vadd.f32 0.0, %v6127
        %v6129 = vpop.f32.mrf.mxu0
        %6130 = vdwg.mxu0
        %v6131 = vadd.f32 %v5899, %v6128
        %6132 = vmatpush.bf16.msra.mxu0 0
        %6133 = vmatpush.bf16.msra.mxu0 0
        %6134 = vmatpush.bf16.msra.mxu0 0
        %6135 = vmatpush.bf16.msra.mxu0 0
        %6136 = vmatpush.bf16.msra.mxu0 0
        %6137 = vmatpush.bf16.msra.mxu0 0
        %6138 = vmatpush.bf16.msra.mxu0 0
        %6139 = vmatpush.bf16.msra.mxu0 %v5478
        %6140 = vmatmul.bf16.gmra.mxu0 %v6088
        %v6141 = vpop.f32.mrf.mxu0
        %v6142 = vadd.f32 0.0, %v6141
        %v6143 = vpop.f32.mrf.mxu0
        %6144 = vdwg.mxu0
        %v6145 = vadd.f32 %v5913, %v6142
        %6146 = vmatpush.bf16.msra.mxu0 0
        %6147 = vmatpush.bf16.msra.mxu0 0
        %6148 = vmatpush.bf16.msra.mxu0 0
        %6149 = vmatpush.bf16.msra.mxu0 0
        %6150 = vmatpush.bf16.msra.mxu0 0
        %6151 = vmatpush.bf16.msra.mxu0 0
        %6152 = vmatpush.bf16.msra.mxu0 0
        %6153 = vmatpush.bf16.msra.mxu0 %v5166
        %6154 = vmatmul.bf16.gmra.mxu0 %v6088
        %v6155 = vpop.f32.mrf.mxu0
        %v6156 = vadd.f32 0.0, %v6155
        %v6157 = vpop.f32.mrf.mxu0
        %6158 = vdwg.mxu0
        %v6159 = vadd.f32 %v5927, %v6156
        %6160 = vmatpush.bf16.msra.mxu0 0
        %6161 = vmatpush.bf16.msra.mxu0 0
        %6162 = vmatpush.bf16.msra.mxu0 0
        %6163 = vmatpush.bf16.msra.mxu0 0
        %6164 = vmatpush.bf16.msra.mxu0 0
        %6165 = vmatpush.bf16.msra.mxu0 0
        %6166 = vmatpush.bf16.msra.mxu0 0
        %6167 = vmatpush.bf16.msra.mxu0 %v5195
        %6168 = vmatmul.bf16.gmra.mxu0 %v6088
        %v6169 = vpop.f32.mrf.mxu0
        %v6170 = vadd.f32 0.0, %v6169
        %v6171 = vpop.f32.mrf.mxu0
        %6172 = vdwg.mxu0
        %v6173 = vadd.f32 %v5941, %v6170
        %6174 = vmatpush.bf16.msra.mxu0 0
        %6175 = vmatpush.bf16.msra.mxu0 0
        %6176 = vmatpush.bf16.msra.mxu0 0
        %6177 = vmatpush.bf16.msra.mxu0 0
        %6178 = vmatpush.bf16.msra.mxu0 0
        %6179 = vmatpush.bf16.msra.mxu0 0
        %6180 = vmatpush.bf16.msra.mxu0 0
        %6181 = vmatpush.bf16.msra.mxu0 %v5224
        %6182 = vmatmul.bf16.gmra.mxu0 %v6088
        %v6183 = vpop.f32.mrf.mxu0
        %v6184 = vadd.f32 0.0, %v6183
        %v6185 = vpop.f32.mrf.mxu0
        %6186 = vdwg.mxu0
        %v6187 = vadd.f32 %v5955, %v6184
        %6188 = vmatpush.bf16.msra.mxu0 0
        %6189 = vmatpush.bf16.msra.mxu0 0
        %6190 = vmatpush.bf16.msra.mxu0 0
        %6191 = vmatpush.bf16.msra.mxu0 0
        %6192 = vmatpush.bf16.msra.mxu0 0
        %6193 = vmatpush.bf16.msra.mxu0 0
        %6194 = vmatpush.bf16.msra.mxu0 0
        %6195 = vmatpush.bf16.msra.mxu0 %v5537
        %6196 = vmatmul.bf16.gmra.mxu0 %v6088
        %v6197 = vpop.f32.mrf.mxu0
        %v6198 = vadd.f32 0.0, %v6197
        %v6199 = vpop.f32.mrf.mxu0
        %6200 = vdwg.mxu0
        %v6201 = vadd.f32 %v5969, %v6198
        %6202 = vmatpush.bf16.msra.mxu0 0
        %6203 = vmatpush.bf16.msra.mxu0 0
        %6204 = vmatpush.bf16.msra.mxu0 0
        %6205 = vmatpush.bf16.msra.mxu0 0
        %6206 = vmatpush.bf16.msra.mxu0 0
        %6207 = vmatpush.bf16.msra.mxu0 0
        %6208 = vmatpush.bf16.msra.mxu0 0
        %6209 = vmatpush.bf16.msra.mxu0 %v5285
        %6210 = vmatmul.bf16.gmra.mxu0 %v6088
        %v6211 = vpop.f32.mrf.mxu0
        %v6212 = vadd.f32 0.0, %v6211
        %v6213 = vpop.f32.mrf.mxu0
        %6214 = vdwg.mxu0
        %v6215 = vadd.f32 %v5983, %v6212
        %6216 = vmatpush.bf16.msra.mxu0 0
        %6217 = vmatpush.bf16.msra.mxu0 0
        %6218 = vmatpush.bf16.msra.mxu0 0
        %6219 = vmatpush.bf16.msra.mxu0 0
        %6220 = vmatpush.bf16.msra.mxu0 0
        %6221 = vmatpush.bf16.msra.mxu0 0
        %6222 = vmatpush.bf16.msra.mxu0 0
        %6223 = vmatpush.bf16.msra.mxu0 %v5314
        %6224 = vmatmul.bf16.gmra.mxu0 %v6088
        %v6225 = vpop.f32.mrf.mxu0
        %v6226 = vadd.f32 0.0, %v6225
        %v6227 = vpop.f32.mrf.mxu0
        %6228 = vdwg.mxu0
        %v6229 = vadd.f32 %v5997, %v6226
        %6230 = vmatpush.bf16.msra.mxu0 0
        %6231 = vmatpush.bf16.msra.mxu0 0
        %6232 = vmatpush.bf16.msra.mxu0 0
        %6233 = vmatpush.bf16.msra.mxu0 0
        %6234 = vmatpush.bf16.msra.mxu0 0
        %6235 = vmatpush.bf16.msra.mxu0 0
        %6236 = vmatpush.bf16.msra.mxu0 0
        %6237 = vmatpush.bf16.msra.mxu0 %v5343
        %6238 = vmatmul.bf16.gmra.mxu0 %v6088
        %v6239 = vpop.f32.mrf.mxu0
        %v6240 = vadd.f32 0.0, %v6239
        %v6241 = vpop.f32.mrf.mxu0
        %6242 = vdwg.mxu0
        %v6243 = vadd.f32 %v6011, %v6240
        %6244 = vmatpush.bf16.msra.mxu0 0
        %6245 = vmatpush.bf16.msra.mxu0 0
        %6246 = vmatpush.bf16.msra.mxu0 0
        %6247 = vmatpush.bf16.msra.mxu0 0
        %6248 = vmatpush.bf16.msra.mxu0 0
        %6249 = vmatpush.bf16.msra.mxu0 0
        %6250 = vmatpush.bf16.msra.mxu0 0
        %6251 = vmatpush.bf16.msra.mxu0 %v5596
        %6252 = vmatmul.bf16.gmra.mxu0 %v6088
        %v6253 = vpop.f32.mrf.mxu0
        %v6254 = vadd.f32 0.0, %v6253
        %v6255 = vpop.f32.mrf.mxu0
        %6256 = vdwg.mxu0
        %v6257 = vadd.f32 %v6025, %v6254
        %6258 = vmatpush.bf16.msra.mxu0 0
        %6259 = vmatpush.bf16.msra.mxu0 0
        %6260 = vmatpush.bf16.msra.mxu0 0
        %6261 = vmatpush.bf16.msra.mxu0 0
        %6262 = vmatpush.bf16.msra.mxu0 0
        %6263 = vmatpush.bf16.msra.mxu0 0
        %6264 = vmatpush.bf16.msra.mxu0 0
        %6265 = vmatpush.bf16.msra.mxu0 %v5820
        %6266 = vmatmul.bf16.gmra.mxu0 %v6088
        %v6267 = vpop.f32.mrf.mxu0
        %v6268 = vadd.f32 0.0, %v6267
        %v6269 = vpop.f32.mrf.mxu0
        %6270 = vdwg.mxu0
        %v6271 = vadd.f32 %v6039, %v6268
        %6272 = vmatpush.bf16.msra.mxu0 0
        %6273 = vmatpush.bf16.msra.mxu0 0
        %6274 = vmatpush.bf16.msra.mxu0 0
        %6275 = vmatpush.bf16.msra.mxu0 0
        %6276 = vmatpush.bf16.msra.mxu0 0
        %6277 = vmatpush.bf16.msra.mxu0 0
        %6278 = vmatpush.bf16.msra.mxu0 0
        %6279 = vmatpush.bf16.msra.mxu0 %v5837
        %6280 = vmatmul.bf16.gmra.mxu0 %v6088
        %v6281 = vpop.f32.mrf.mxu0
        %v6282 = vadd.f32 0.0, %v6281
        %v6283 = vpop.f32.mrf.mxu0
        %6284 = vdwg.mxu0
        %v6285 = vadd.f32 %v6053, %v6282
        %6286 = vmatpush.bf16.msra.mxu0 0
        %6287 = vmatpush.bf16.msra.mxu0 0
        %6288 = vmatpush.bf16.msra.mxu0 0
        %6289 = vmatpush.bf16.msra.mxu0 0
        %6290 = vmatpush.bf16.msra.mxu0 0
        %6291 = vmatpush.bf16.msra.mxu0 0
        %6292 = vmatpush.bf16.msra.mxu0 0
        %6293 = vmatpush.bf16.msra.mxu0 %v6069
        %6294 = vmatmul.bf16.gmra.mxu0 %v6088
        %v6295 = vpop.f32.mrf.mxu0
        %v6296 = vadd.f32 0.0, %v6295
        %v6297 = vpop.f32.mrf.mxu0
        %6298 = vdwg.mxu0
        %v6299 = vadd.f32 %v6067, %v6296
        %v6301 = vsel %vm446, %v4878, 0
        %6303 = vmatpush.bf16.msra.mxu0 0
        %6304 = vmatpush.bf16.msra.mxu0 0
        %6305 = vmatpush.bf16.msra.mxu0 0
        %6306 = vmatpush.bf16.msra.mxu0 0
        %6307 = vmatpush.bf16.msra.mxu0 0
        %6308 = vmatpush.bf16.msra.mxu0 0
        %6309 = vmatpush.bf16.msra.mxu0 0
        %6310 = vmatpush.bf16.msra.mxu0 %v6301
        %6311 = vmatmul.bf16.gmra.mxu0 %v6088
        %v6312 = vpop.f32.mrf.mxu0
        %v6313 = vadd.f32 0.0, %v6312
        %v6314 = vpop.f32.mrf.mxu0
        %6315 = vdwg.mxu0
        %v6316 = vadd.f32 %v6084, %v6313
        %s6317 = scalar_lea.vmem %s8, 12
        %v6318 = vld [vmem:[%s6317] sm:$0x3]
        %v6320 = vsel %vm4888, %v6318, 0
        %6322 = vmatpush.bf16.msra.mxu0 0
        %6323 = vmatpush.bf16.msra.mxu0 0
        %6324 = vmatpush.bf16.msra.mxu0 0
        %6325 = vmatpush.bf16.msra.mxu0 0
        %6326 = vmatpush.bf16.msra.mxu0 0
        %6327 = vmatpush.bf16.msra.mxu0 0
        %6328 = vmatpush.bf16.msra.mxu0 0
        %6329 = vmatpush.bf16.msra.mxu0 %v5150
        %6330 = vmatmul.bf16.gmra.mxu0 %v6320
        %v6331 = vpop.f32.mrf.mxu0
        %v6332 = vadd.f32 0.0, %v6331
        %v6333 = vpop.f32.mrf.mxu0
        %6334 = vdwg.mxu0
        %v6335 = vadd.f32 %v6103, %v6332
        %6336 = vmatpush.bf16.msra.mxu0 0
        %6337 = vmatpush.bf16.msra.mxu0 0
        %6338 = vmatpush.bf16.msra.mxu0 0
        %6339 = vmatpush.bf16.msra.mxu0 0
        %6340 = vmatpush.bf16.msra.mxu0 0
        %6341 = vmatpush.bf16.msra.mxu0 0
        %6342 = vmatpush.bf16.msra.mxu0 0
        %6343 = vmatpush.bf16.msra.mxu0 %v5134
        %6344 = vmatmul.bf16.gmra.mxu0 %v6320
        %v6345 = vpop.f32.mrf.mxu0
        %v6346 = vadd.f32 0.0, %v6345
        %v6347 = vpop.f32.mrf.mxu0
        %6348 = vdwg.mxu0
        %v6349 = vadd.f32 %v6117, %v6346
        %6350 = vmatpush.bf16.msra.mxu0 0
        %6351 = vmatpush.bf16.msra.mxu0 0
        %6352 = vmatpush.bf16.msra.mxu0 0
        %6353 = vmatpush.bf16.msra.mxu0 0
        %6354 = vmatpush.bf16.msra.mxu0 0
        %6355 = vmatpush.bf16.msra.mxu0 0
        %6356 = vmatpush.bf16.msra.mxu0 0
        %6357 = vmatpush.bf16.msra.mxu0 %v5166
        %6358 = vmatmul.bf16.gmra.mxu0 %v6320
        %v6359 = vpop.f32.mrf.mxu0
        %v6360 = vadd.f32 0.0, %v6359
        %v6361 = vpop.f32.mrf.mxu0
        %6362 = vdwg.mxu0
        %v6363 = vadd.f32 %v6131, %v6360
        %6364 = vmatpush.bf16.msra.mxu0 0
        %6365 = vmatpush.bf16.msra.mxu0 0
        %6366 = vmatpush.bf16.msra.mxu0 0
        %6367 = vmatpush.bf16.msra.mxu0 0
        %6368 = vmatpush.bf16.msra.mxu0 0
        %6369 = vmatpush.bf16.msra.mxu0 0
        %6370 = vmatpush.bf16.msra.mxu0 0
        %6371 = vmatpush.bf16.msra.mxu0 %v5195
        %6372 = vmatmul.bf16.gmra.mxu0 %v6320
        %v6373 = vpop.f32.mrf.mxu0
        %v6374 = vadd.f32 0.0, %v6373
        %v6375 = vpop.f32.mrf.mxu0
        %6376 = vdwg.mxu0
        %v6377 = vadd.f32 %v6145, %v6374
        %6378 = vmatpush.bf16.msra.mxu0 0
        %6379 = vmatpush.bf16.msra.mxu0 0
        %6380 = vmatpush.bf16.msra.mxu0 0
        %6381 = vmatpush.bf16.msra.mxu0 0
        %6382 = vmatpush.bf16.msra.mxu0 0
        %6383 = vmatpush.bf16.msra.mxu0 0
        %6384 = vmatpush.bf16.msra.mxu0 0
        %6385 = vmatpush.bf16.msra.mxu0 %v5269
        %6386 = vmatmul.bf16.gmra.mxu0 %v6320
        %v6387 = vpop.f32.mrf.mxu0
        %v6388 = vadd.f32 0.0, %v6387
        %v6389 = vpop.f32.mrf.mxu0
        %6390 = vdwg.mxu0
        %v6391 = vadd.f32 %v6159, %v6388
        %6392 = vmatpush.bf16.msra.mxu0 0
        %6393 = vmatpush.bf16.msra.mxu0 0
        %6394 = vmatpush.bf16.msra.mxu0 0
        %6395 = vmatpush.bf16.msra.mxu0 0
        %6396 = vmatpush.bf16.msra.mxu0 0
        %6397 = vmatpush.bf16.msra.mxu0 0
        %6398 = vmatpush.bf16.msra.mxu0 0
        %6399 = vmatpush.bf16.msra.mxu0 %v5253
        %6400 = vmatmul.bf16.gmra.mxu0 %v6320
        %v6401 = vpop.f32.mrf.mxu0
        %v6402 = vadd.f32 0.0, %v6401
        %v6403 = vpop.f32.mrf.mxu0
        %6404 = vdwg.mxu0
        %v6405 = vadd.f32 %v6173, %v6402
        %6406 = vmatpush.bf16.msra.mxu0 0
        %6407 = vmatpush.bf16.msra.mxu0 0
        %6408 = vmatpush.bf16.msra.mxu0 0
        %6409 = vmatpush.bf16.msra.mxu0 0
        %6410 = vmatpush.bf16.msra.mxu0 0
        %6411 = vmatpush.bf16.msra.mxu0 0
        %6412 = vmatpush.bf16.msra.mxu0 0
        %6413 = vmatpush.bf16.msra.mxu0 %v5285
        %6414 = vmatmul.bf16.gmra.mxu0 %v6320
        %v6415 = vpop.f32.mrf.mxu0
        %v6416 = vadd.f32 0.0, %v6415
        %v6417 = vpop.f32.mrf.mxu0
        %6418 = vdwg.mxu0
        %v6419 = vadd.f32 %v6187, %v6416
        %6420 = vmatpush.bf16.msra.mxu0 0
        %6421 = vmatpush.bf16.msra.mxu0 0
        %6422 = vmatpush.bf16.msra.mxu0 0
        %6423 = vmatpush.bf16.msra.mxu0 0
        %6424 = vmatpush.bf16.msra.mxu0 0
        %6425 = vmatpush.bf16.msra.mxu0 0
        %6426 = vmatpush.bf16.msra.mxu0 0
        %6427 = vmatpush.bf16.msra.mxu0 %v5314
        %6428 = vmatmul.bf16.gmra.mxu0 %v6320
        %v6429 = vpop.f32.mrf.mxu0
        %v6430 = vadd.f32 0.0, %v6429
        %v6431 = vpop.f32.mrf.mxu0
        %6432 = vdwg.mxu0
        %v6433 = vadd.f32 %v6201, %v6430
        %6434 = vmatpush.bf16.msra.mxu0 0
        %6435 = vmatpush.bf16.msra.mxu0 0
        %6436 = vmatpush.bf16.msra.mxu0 0
        %6437 = vmatpush.bf16.msra.mxu0 0
        %6438 = vmatpush.bf16.msra.mxu0 0
        %6439 = vmatpush.bf16.msra.mxu0 0
        %6440 = vmatpush.bf16.msra.mxu0 0
        %6441 = vmatpush.bf16.msra.mxu0 %v5786
        %6442 = vmatmul.bf16.gmra.mxu0 %v6320
        %v6443 = vpop.f32.mrf.mxu0
        %v6444 = vadd.f32 0.0, %v6443
        %v6445 = vpop.f32.mrf.mxu0
        %6446 = vdwg.mxu0
        %v6447 = vadd.f32 %v6215, %v6444
        %6448 = vmatpush.bf16.msra.mxu0 0
        %6449 = vmatpush.bf16.msra.mxu0 0
        %6450 = vmatpush.bf16.msra.mxu0 0
        %6451 = vmatpush.bf16.msra.mxu0 0
        %6452 = vmatpush.bf16.msra.mxu0 0
        %6453 = vmatpush.bf16.msra.mxu0 0
        %6454 = vmatpush.bf16.msra.mxu0 0
        %6455 = vmatpush.bf16.msra.mxu0 %v5803
        %6456 = vmatmul.bf16.gmra.mxu0 %v6320
        %v6457 = vpop.f32.mrf.mxu0
        %v6458 = vadd.f32 0.0, %v6457
        %v6459 = vpop.f32.mrf.mxu0
        %6460 = vdwg.mxu0
        %v6461 = vadd.f32 %v6229, %v6458
        %6462 = vmatpush.bf16.msra.mxu0 0
        %6463 = vmatpush.bf16.msra.mxu0 0
        %6464 = vmatpush.bf16.msra.mxu0 0
        %6465 = vmatpush.bf16.msra.mxu0 0
        %6466 = vmatpush.bf16.msra.mxu0 0
        %6467 = vmatpush.bf16.msra.mxu0 0
        %6468 = vmatpush.bf16.msra.mxu0 0
        %6469 = vmatpush.bf16.msra.mxu0 %v5820
        %6470 = vmatmul.bf16.gmra.mxu0 %v6320
        %v6471 = vpop.f32.mrf.mxu0
        %v6472 = vadd.f32 0.0, %v6471
        %v6473 = vpop.f32.mrf.mxu0
        %6474 = vdwg.mxu0
        %v6475 = vadd.f32 %v6243, %v6472
        %6476 = vmatpush.bf16.msra.mxu0 0
        %6477 = vmatpush.bf16.msra.mxu0 0
        %6478 = vmatpush.bf16.msra.mxu0 0
        %6479 = vmatpush.bf16.msra.mxu0 0
        %6480 = vmatpush.bf16.msra.mxu0 0
        %6481 = vmatpush.bf16.msra.mxu0 0
        %6482 = vmatpush.bf16.msra.mxu0 0
        %6483 = vmatpush.bf16.msra.mxu0 %v5837
        %6484 = vmatmul.bf16.gmra.mxu0 %v6320
        %v6485 = vpop.f32.mrf.mxu0
        %v6486 = vadd.f32 0.0, %v6485
        %v6487 = vpop.f32.mrf.mxu0
        %6488 = vdwg.mxu0
        %v6489 = vadd.f32 %v6257, %v6486
        %v6491 = vsel %vm446, %v4879, 0
        %6493 = vmatpush.bf16.msra.mxu0 0
        %6494 = vmatpush.bf16.msra.mxu0 0
        %6495 = vmatpush.bf16.msra.mxu0 0
        %6496 = vmatpush.bf16.msra.mxu0 0
        %6497 = vmatpush.bf16.msra.mxu0 0
        %6498 = vmatpush.bf16.msra.mxu0 0
        %6499 = vmatpush.bf16.msra.mxu0 0
        %6500 = vmatpush.bf16.msra.mxu0 %v6491
        %6501 = vmatmul.bf16.gmra.mxu0 %v6320
        %v6502 = vpop.f32.mrf.mxu0
        %v6503 = vadd.f32 0.0, %v6502
        %v6504 = vpop.f32.mrf.mxu0
        %6505 = vdwg.mxu0
        %v6506 = vadd.f32 %v6271, %v6503
        %v6508 = vsel %vm446, %v4880, 0
        %6510 = vmatpush.bf16.msra.mxu0 0
        %6511 = vmatpush.bf16.msra.mxu0 0
        %6512 = vmatpush.bf16.msra.mxu0 0
        %6513 = vmatpush.bf16.msra.mxu0 0
        %6514 = vmatpush.bf16.msra.mxu0 0
        %6515 = vmatpush.bf16.msra.mxu0 0
        %6516 = vmatpush.bf16.msra.mxu0 0
        %6517 = vmatpush.bf16.msra.mxu0 %v6508
        %6518 = vmatmul.bf16.gmra.mxu0 %v6320
        %v6519 = vpop.f32.mrf.mxu0
        %v6520 = vadd.f32 0.0, %v6519
        %v6521 = vpop.f32.mrf.mxu0
        %6522 = vdwg.mxu0
        %v6523 = vadd.f32 %v6285, %v6520
        %v6525 = vsel %vm446, %v4881, 0
        %6527 = vmatpush.bf16.msra.mxu0 0
        %6528 = vmatpush.bf16.msra.mxu0 0
        %6529 = vmatpush.bf16.msra.mxu0 0
        %6530 = vmatpush.bf16.msra.mxu0 0
        %6531 = vmatpush.bf16.msra.mxu0 0
        %6532 = vmatpush.bf16.msra.mxu0 0
        %6533 = vmatpush.bf16.msra.mxu0 0
        %6534 = vmatpush.bf16.msra.mxu0 %v6525
        %6535 = vmatmul.bf16.gmra.mxu0 %v6320
        %v6536 = vpop.f32.mrf.mxu0
        %v6537 = vadd.f32 0.0, %v6536
        %v6538 = vpop.f32.mrf.mxu0
        %6539 = vdwg.mxu0
        %v6540 = vadd.f32 %v6299, %v6537
        %v6542 = vsel %vm446, %v4882, 0
        %6544 = vmatpush.bf16.msra.mxu0 0
        %6545 = vmatpush.bf16.msra.mxu0 0
        %6546 = vmatpush.bf16.msra.mxu0 0
        %6547 = vmatpush.bf16.msra.mxu0 0
        %6548 = vmatpush.bf16.msra.mxu0 0
        %6549 = vmatpush.bf16.msra.mxu0 0
        %6550 = vmatpush.bf16.msra.mxu0 0
        %6551 = vmatpush.bf16.msra.mxu0 %v6542
        %6552 = vmatmul.bf16.gmra.mxu0 %v6320
        %v6553 = vpop.f32.mrf.mxu0
        %v6554 = vadd.f32 0.0, %v6553
        %v6555 = vpop.f32.mrf.mxu0
        %6556 = vdwg.mxu0
        %v6557 = vadd.f32 %v6316, %v6554
        %s6558 = scalar_lea.vmem %s8, 14
        %v6559 = vld [vmem:[%s6558] sm:$0x3]
        %v6561 = vsel %vm4888, %v6559, 0
        %6563 = vmatpush.bf16.msra.mxu0 0
        %6564 = vmatpush.bf16.msra.mxu0 0
        %6565 = vmatpush.bf16.msra.mxu0 0
        %6566 = vmatpush.bf16.msra.mxu0 0
        %6567 = vmatpush.bf16.msra.mxu0 0
        %6568 = vmatpush.bf16.msra.mxu0 0
        %6569 = vmatpush.bf16.msra.mxu0 0
        %6570 = vmatpush.bf16.msra.mxu0 %v5134
        %6571 = vmatmul.bf16.gmra.mxu0 %v6561
        %v6572 = vpop.f32.mrf.mxu0
        %v6573 = vadd.f32 0.0, %v6572
        %v6574 = vpop.f32.mrf.mxu0
        %6575 = vdwg.mxu0
        %v6576 = vadd.f32 %v6335, %v6573
        %6577 = vmatpush.bf16.msra.mxu0 0
        %6578 = vmatpush.bf16.msra.mxu0 0
        %6579 = vmatpush.bf16.msra.mxu0 0
        %6580 = vmatpush.bf16.msra.mxu0 0
        %6581 = vmatpush.bf16.msra.mxu0 0
        %6582 = vmatpush.bf16.msra.mxu0 0
        %6583 = vmatpush.bf16.msra.mxu0 0
        %6584 = vmatpush.bf16.msra.mxu0 %v5166
        %6585 = vmatmul.bf16.gmra.mxu0 %v6561
        %v6586 = vpop.f32.mrf.mxu0
        %v6587 = vadd.f32 0.0, %v6586
        %v6588 = vpop.f32.mrf.mxu0
        %6589 = vdwg.mxu0
        %v6590 = vadd.f32 %v6349, %v6587
        %6591 = vmatpush.bf16.msra.mxu0 0
        %6592 = vmatpush.bf16.msra.mxu0 0
        %6593 = vmatpush.bf16.msra.mxu0 0
        %6594 = vmatpush.bf16.msra.mxu0 0
        %6595 = vmatpush.bf16.msra.mxu0 0
        %6596 = vmatpush.bf16.msra.mxu0 0
        %6597 = vmatpush.bf16.msra.mxu0 0
        %6598 = vmatpush.bf16.msra.mxu0 %v5195
        %6599 = vmatmul.bf16.gmra.mxu0 %v6561
        %v6600 = vpop.f32.mrf.mxu0
        %v6601 = vadd.f32 0.0, %v6600
        %v6602 = vpop.f32.mrf.mxu0
        %6603 = vdwg.mxu0
        %v6604 = vadd.f32 %v6363, %v6601
        %6605 = vmatpush.bf16.msra.mxu0 0
        %6606 = vmatpush.bf16.msra.mxu0 0
        %6607 = vmatpush.bf16.msra.mxu0 0
        %6608 = vmatpush.bf16.msra.mxu0 0
        %6609 = vmatpush.bf16.msra.mxu0 0
        %6610 = vmatpush.bf16.msra.mxu0 0
        %6611 = vmatpush.bf16.msra.mxu0 0
        %6612 = vmatpush.bf16.msra.mxu0 %v5224
        %6613 = vmatmul.bf16.gmra.mxu0 %v6561
        %v6614 = vpop.f32.mrf.mxu0
        %v6615 = vadd.f32 0.0, %v6614
        %v6616 = vpop.f32.mrf.mxu0
        %6617 = vdwg.mxu0
        %v6618 = vadd.f32 %v6377, %v6615
        %6619 = vmatpush.bf16.msra.mxu0 0
        %6620 = vmatpush.bf16.msra.mxu0 0
        %6621 = vmatpush.bf16.msra.mxu0 0
        %6622 = vmatpush.bf16.msra.mxu0 0
        %6623 = vmatpush.bf16.msra.mxu0 0
        %6624 = vmatpush.bf16.msra.mxu0 0
        %6625 = vmatpush.bf16.msra.mxu0 0
        %6626 = vmatpush.bf16.msra.mxu0 %v5253
        %6627 = vmatmul.bf16.gmra.mxu0 %v6561
        %v6628 = vpop.f32.mrf.mxu0
        %v6629 = vadd.f32 0.0, %v6628
        %v6630 = vpop.f32.mrf.mxu0
        %6631 = vdwg.mxu0
        %v6632 = vadd.f32 %v6391, %v6629
        %6633 = vmatpush.bf16.msra.mxu0 0
        %6634 = vmatpush.bf16.msra.mxu0 0
        %6635 = vmatpush.bf16.msra.mxu0 0
        %6636 = vmatpush.bf16.msra.mxu0 0
        %6637 = vmatpush.bf16.msra.mxu0 0
        %6638 = vmatpush.bf16.msra.mxu0 0
        %6639 = vmatpush.bf16.msra.mxu0 0
        %6640 = vmatpush.bf16.msra.mxu0 %v5285
        %6641 = vmatmul.bf16.gmra.mxu0 %v6561
        %v6642 = vpop.f32.mrf.mxu0
        %v6643 = vadd.f32 0.0, %v6642
        %v6644 = vpop.f32.mrf.mxu0
        %6645 = vdwg.mxu0
        %v6646 = vadd.f32 %v6405, %v6643
        %6647 = vmatpush.bf16.msra.mxu0 0
        %6648 = vmatpush.bf16.msra.mxu0 0
        %6649 = vmatpush.bf16.msra.mxu0 0
        %6650 = vmatpush.bf16.msra.mxu0 0
        %6651 = vmatpush.bf16.msra.mxu0 0
        %6652 = vmatpush.bf16.msra.mxu0 0
        %6653 = vmatpush.bf16.msra.mxu0 0
        %6654 = vmatpush.bf16.msra.mxu0 %v5314
        %6655 = vmatmul.bf16.gmra.mxu0 %v6561
        %v6656 = vpop.f32.mrf.mxu0
        %v6657 = vadd.f32 0.0, %v6656
        %v6658 = vpop.f32.mrf.mxu0
        %6659 = vdwg.mxu0
        %v6660 = vadd.f32 %v6419, %v6657
        %6661 = vmatpush.bf16.msra.mxu0 0
        %6662 = vmatpush.bf16.msra.mxu0 0
        %6663 = vmatpush.bf16.msra.mxu0 0
        %6664 = vmatpush.bf16.msra.mxu0 0
        %6665 = vmatpush.bf16.msra.mxu0 0
        %6666 = vmatpush.bf16.msra.mxu0 0
        %6667 = vmatpush.bf16.msra.mxu0 0
        %6668 = vmatpush.bf16.msra.mxu0 %v5343
        %6669 = vmatmul.bf16.gmra.mxu0 %v6561
        %v6670 = vpop.f32.mrf.mxu0
        %v6671 = vadd.f32 0.0, %v6670
        %v6672 = vpop.f32.mrf.mxu0
        %6673 = vdwg.mxu0
        %v6674 = vadd.f32 %v6433, %v6671
        %6675 = vmatpush.bf16.msra.mxu0 0
        %6676 = vmatpush.bf16.msra.mxu0 0
        %6677 = vmatpush.bf16.msra.mxu0 0
        %6678 = vmatpush.bf16.msra.mxu0 0
        %6679 = vmatpush.bf16.msra.mxu0 0
        %6680 = vmatpush.bf16.msra.mxu0 0
        %6681 = vmatpush.bf16.msra.mxu0 0
        %6682 = vmatpush.bf16.msra.mxu0 %v5803
        %6683 = vmatmul.bf16.gmra.mxu0 %v6561
        %v6684 = vpop.f32.mrf.mxu0
        %v6685 = vadd.f32 0.0, %v6684
        %v6686 = vpop.f32.mrf.mxu0
        %6687 = vdwg.mxu0
        %v6688 = vadd.f32 %v6447, %v6685
        %6689 = vmatpush.bf16.msra.mxu0 0
        %6690 = vmatpush.bf16.msra.mxu0 0
        %6691 = vmatpush.bf16.msra.mxu0 0
        %6692 = vmatpush.bf16.msra.mxu0 0
        %6693 = vmatpush.bf16.msra.mxu0 0
        %6694 = vmatpush.bf16.msra.mxu0 0
        %6695 = vmatpush.bf16.msra.mxu0 0
        %6696 = vmatpush.bf16.msra.mxu0 %v5820
        %6697 = vmatmul.bf16.gmra.mxu0 %v6561
        %v6698 = vpop.f32.mrf.mxu0
        %v6699 = vadd.f32 0.0, %v6698
        %v6700 = vpop.f32.mrf.mxu0
        %6701 = vdwg.mxu0
        %v6702 = vadd.f32 %v6461, %v6699
        %6703 = vmatpush.bf16.msra.mxu0 0
        %6704 = vmatpush.bf16.msra.mxu0 0
        %6705 = vmatpush.bf16.msra.mxu0 0
        %6706 = vmatpush.bf16.msra.mxu0 0
        %6707 = vmatpush.bf16.msra.mxu0 0
        %6708 = vmatpush.bf16.msra.mxu0 0
        %6709 = vmatpush.bf16.msra.mxu0 0
        %6710 = vmatpush.bf16.msra.mxu0 %v5837
        %6711 = vmatmul.bf16.gmra.mxu0 %v6561
        %v6712 = vpop.f32.mrf.mxu0
        %v6713 = vadd.f32 0.0, %v6712
        %v6714 = vpop.f32.mrf.mxu0
        %6715 = vdwg.mxu0
        %v6716 = vadd.f32 %v6475, %v6713
        %6717 = vmatpush.bf16.msra.mxu0 0
        %6718 = vmatpush.bf16.msra.mxu0 0
        %6719 = vmatpush.bf16.msra.mxu0 0
        %6720 = vmatpush.bf16.msra.mxu0 0
        %6721 = vmatpush.bf16.msra.mxu0 0
        %6722 = vmatpush.bf16.msra.mxu0 0
        %6723 = vmatpush.bf16.msra.mxu0 0
        %6724 = vmatpush.bf16.msra.mxu0 %v6069
        %6725 = vmatmul.bf16.gmra.mxu0 %v6561
        %v6726 = vpop.f32.mrf.mxu0
        %v6727 = vadd.f32 0.0, %v6726
        %v6728 = vpop.f32.mrf.mxu0
        %6729 = vdwg.mxu0
        %v6730 = vadd.f32 %v6489, %v6727
        %6731 = vmatpush.bf16.msra.mxu0 0
        %6732 = vmatpush.bf16.msra.mxu0 0
        %6733 = vmatpush.bf16.msra.mxu0 0
        %6734 = vmatpush.bf16.msra.mxu0 0
        %6735 = vmatpush.bf16.msra.mxu0 0
        %6736 = vmatpush.bf16.msra.mxu0 0
        %6737 = vmatpush.bf16.msra.mxu0 0
        %6738 = vmatpush.bf16.msra.mxu0 %v6508
        %6739 = vmatmul.bf16.gmra.mxu0 %v6561
        %v6740 = vpop.f32.mrf.mxu0
        %v6741 = vadd.f32 0.0, %v6740
        %v6742 = vpop.f32.mrf.mxu0
        %6743 = vdwg.mxu0
        %v6744 = vadd.f32 %v6506, %v6741
        %6745 = vmatpush.bf16.msra.mxu0 0
        %6746 = vmatpush.bf16.msra.mxu0 0
        %6747 = vmatpush.bf16.msra.mxu0 0
        %6748 = vmatpush.bf16.msra.mxu0 0
        %6749 = vmatpush.bf16.msra.mxu0 0
        %6750 = vmatpush.bf16.msra.mxu0 0
        %6751 = vmatpush.bf16.msra.mxu0 0
        %6752 = vmatpush.bf16.msra.mxu0 %v6525
        %6753 = vmatmul.bf16.gmra.mxu0 %v6561
        %v6754 = vpop.f32.mrf.mxu0
        %v6755 = vadd.f32 0.0, %v6754
        %v6756 = vpop.f32.mrf.mxu0
        %6757 = vdwg.mxu0
        %v6758 = vadd.f32 %v6523, %v6755
        %6759 = vmatpush.bf16.msra.mxu0 0
        %6760 = vmatpush.bf16.msra.mxu0 0
        %6761 = vmatpush.bf16.msra.mxu0 0
        %6762 = vmatpush.bf16.msra.mxu0 0
        %6763 = vmatpush.bf16.msra.mxu0 0
        %6764 = vmatpush.bf16.msra.mxu0 0
        %6765 = vmatpush.bf16.msra.mxu0 0
        %6766 = vmatpush.bf16.msra.mxu0 %v6542
        %6767 = vmatmul.bf16.gmra.mxu0 %v6561
        %v6768 = vpop.f32.mrf.mxu0
        %v6769 = vadd.f32 0.0, %v6768
        %v6770 = vpop.f32.mrf.mxu0
        %6771 = vdwg.mxu0
        %v6772 = vadd.f32 %v6540, %v6769
        %v6774 = vsel %vm446, %v4883, 0
        %6776 = vmatpush.bf16.msra.mxu0 0
        %6777 = vmatpush.bf16.msra.mxu0 0
        %6778 = vmatpush.bf16.msra.mxu0 0
        %6779 = vmatpush.bf16.msra.mxu0 0
        %6780 = vmatpush.bf16.msra.mxu0 0
        %6781 = vmatpush.bf16.msra.mxu0 0
        %6782 = vmatpush.bf16.msra.mxu0 0
        %6783 = vmatpush.bf16.msra.mxu0 %v6774
        %6784 = vmatmul.bf16.gmra.mxu0 %v6561
        %v6785 = vpop.f32.mrf.mxu0
        %v6786 = vadd.f32 0.0, %v6785
        %v6787 = vpop.f32.mrf.mxu0
        %6788 = vdwg.mxu0
        %v6789 = vadd.f32 %v6557, %v6786
        %s6790 = scalar_lea.vmem %s8, 16
        %v6791 = vld [vmem:[%s6790] sm:$0x3]
        %v6793 = vsel %vm4888, %v6791, 0
        %6795 = vmatpush.bf16.msra.mxu0 0
        %6796 = vmatpush.bf16.msra.mxu0 0
        %6797 = vmatpush.bf16.msra.mxu0 0
        %6798 = vmatpush.bf16.msra.mxu0 0
        %6799 = vmatpush.bf16.msra.mxu0 0
        %6800 = vmatpush.bf16.msra.mxu0 0
        %6801 = vmatpush.bf16.msra.mxu0 0
        %6802 = vmatpush.bf16.msra.mxu0 %v5166
        %6803 = vmatmul.bf16.gmra.mxu0 %v6793
        %v6804 = vpop.f32.mrf.mxu0
        %v6805 = vadd.f32 0.0, %v6804
        %v6806 = vpop.f32.mrf.mxu0
        %6807 = vdwg.mxu0
        %v6808 = vadd.f32 %v6576, %v6805
        %6809 = vmatpush.bf16.msra.mxu0 0
        %6810 = vmatpush.bf16.msra.mxu0 0
        %6811 = vmatpush.bf16.msra.mxu0 0
        %6812 = vmatpush.bf16.msra.mxu0 0
        %6813 = vmatpush.bf16.msra.mxu0 0
        %6814 = vmatpush.bf16.msra.mxu0 0
        %6815 = vmatpush.bf16.msra.mxu0 0
        %6816 = vmatpush.bf16.msra.mxu0 %v5195
        %6817 = vmatmul.bf16.gmra.mxu0 %v6793
        %v6818 = vpop.f32.mrf.mxu0
        %v6819 = vadd.f32 0.0, %v6818
        %v6820 = vpop.f32.mrf.mxu0
        %6821 = vdwg.mxu0
        %v6822 = vadd.f32 %v6590, %v6819
        %6823 = vmatpush.bf16.msra.mxu0 0
        %6824 = vmatpush.bf16.msra.mxu0 0
        %6825 = vmatpush.bf16.msra.mxu0 0
        %6826 = vmatpush.bf16.msra.mxu0 0
        %6827 = vmatpush.bf16.msra.mxu0 0
        %6828 = vmatpush.bf16.msra.mxu0 0
        %6829 = vmatpush.bf16.msra.mxu0 0
        %6830 = vmatpush.bf16.msra.mxu0 %v5224
        %6831 = vmatmul.bf16.gmra.mxu0 %v6793
        %v6832 = vpop.f32.mrf.mxu0
        %v6833 = vadd.f32 0.0, %v6832
        %v6834 = vpop.f32.mrf.mxu0
        %6835 = vdwg.mxu0
        %v6836 = vadd.f32 %v6604, %v6833
        %6837 = vmatpush.bf16.msra.mxu0 0
        %6838 = vmatpush.bf16.msra.mxu0 0
        %6839 = vmatpush.bf16.msra.mxu0 0
        %6840 = vmatpush.bf16.msra.mxu0 0
        %6841 = vmatpush.bf16.msra.mxu0 0
        %6842 = vmatpush.bf16.msra.mxu0 0
        %6843 = vmatpush.bf16.msra.mxu0 0
        %6844 = vmatpush.bf16.msra.mxu0 %v5537
        %6845 = vmatmul.bf16.gmra.mxu0 %v6793
        %v6846 = vpop.f32.mrf.mxu0
        %v6847 = vadd.f32 0.0, %v6846
        %v6848 = vpop.f32.mrf.mxu0
        %6849 = vdwg.mxu0
        %v6850 = vadd.f32 %v6618, %v6847
        %6851 = vmatpush.bf16.msra.mxu0 0
        %6852 = vmatpush.bf16.msra.mxu0 0
        %6853 = vmatpush.bf16.msra.mxu0 0
        %6854 = vmatpush.bf16.msra.mxu0 0
        %6855 = vmatpush.bf16.msra.mxu0 0
        %6856 = vmatpush.bf16.msra.mxu0 0
        %6857 = vmatpush.bf16.msra.mxu0 0
        %6858 = vmatpush.bf16.msra.mxu0 %v5285
        %6859 = vmatmul.bf16.gmra.mxu0 %v6793
        %v6860 = vpop.f32.mrf.mxu0
        %v6861 = vadd.f32 0.0, %v6860
        %v6862 = vpop.f32.mrf.mxu0
        %6863 = vdwg.mxu0
        %v6864 = vadd.f32 %v6632, %v6861
        %6865 = vmatpush.bf16.msra.mxu0 0
        %6866 = vmatpush.bf16.msra.mxu0 0
        %6867 = vmatpush.bf16.msra.mxu0 0
        %6868 = vmatpush.bf16.msra.mxu0 0
        %6869 = vmatpush.bf16.msra.mxu0 0
        %6870 = vmatpush.bf16.msra.mxu0 0
        %6871 = vmatpush.bf16.msra.mxu0 0
        %6872 = vmatpush.bf16.msra.mxu0 %v5314
        %6873 = vmatmul.bf16.gmra.mxu0 %v6793
        %v6874 = vpop.f32.mrf.mxu0
        %v6875 = vadd.f32 0.0, %v6874
        %v6876 = vpop.f32.mrf.mxu0
        %6877 = vdwg.mxu0
        %v6878 = vadd.f32 %v6646, %v6875
        %6879 = vmatpush.bf16.msra.mxu0 0
        %6880 = vmatpush.bf16.msra.mxu0 0
        %6881 = vmatpush.bf16.msra.mxu0 0
        %6882 = vmatpush.bf16.msra.mxu0 0
        %6883 = vmatpush.bf16.msra.mxu0 0
        %6884 = vmatpush.bf16.msra.mxu0 0
        %6885 = vmatpush.bf16.msra.mxu0 0
        %6886 = vmatpush.bf16.msra.mxu0 %v5343
        %6887 = vmatmul.bf16.gmra.mxu0 %v6793
        %v6888 = vpop.f32.mrf.mxu0
        %v6889 = vadd.f32 0.0, %v6888
        %v6890 = vpop.f32.mrf.mxu0
        %6891 = vdwg.mxu0
        %v6892 = vadd.f32 %v6660, %v6889
        %6893 = vmatpush.bf16.msra.mxu0 0
        %6894 = vmatpush.bf16.msra.mxu0 0
        %6895 = vmatpush.bf16.msra.mxu0 0
        %6896 = vmatpush.bf16.msra.mxu0 0
        %6897 = vmatpush.bf16.msra.mxu0 0
        %6898 = vmatpush.bf16.msra.mxu0 0
        %6899 = vmatpush.bf16.msra.mxu0 0
        %6900 = vmatpush.bf16.msra.mxu0 %v5596
        %6901 = vmatmul.bf16.gmra.mxu0 %v6793
        %v6902 = vpop.f32.mrf.mxu0
        %v6903 = vadd.f32 0.0, %v6902
        %v6904 = vpop.f32.mrf.mxu0
        %6905 = vdwg.mxu0
        %v6906 = vadd.f32 %v6674, %v6903
        %6907 = vmatpush.bf16.msra.mxu0 0
        %6908 = vmatpush.bf16.msra.mxu0 0
        %6909 = vmatpush.bf16.msra.mxu0 0
        %6910 = vmatpush.bf16.msra.mxu0 0
        %6911 = vmatpush.bf16.msra.mxu0 0
        %6912 = vmatpush.bf16.msra.mxu0 0
        %6913 = vmatpush.bf16.msra.mxu0 0
        %6914 = vmatpush.bf16.msra.mxu0 %v5820
        %6915 = vmatmul.bf16.gmra.mxu0 %v6793
        %v6916 = vpop.f32.mrf.mxu0
        %v6917 = vadd.f32 0.0, %v6916
        %v6918 = vpop.f32.mrf.mxu0
        %6919 = vdwg.mxu0
        %v6920 = vadd.f32 %v6688, %v6917
        %6921 = vmatpush.bf16.msra.mxu0 0
        %6922 = vmatpush.bf16.msra.mxu0 0
        %6923 = vmatpush.bf16.msra.mxu0 0
        %6924 = vmatpush.bf16.msra.mxu0 0
        %6925 = vmatpush.bf16.msra.mxu0 0
        %6926 = vmatpush.bf16.msra.mxu0 0
        %6927 = vmatpush.bf16.msra.mxu0 0
        %6928 = vmatpush.bf16.msra.mxu0 %v5837
        %6929 = vmatmul.bf16.gmra.mxu0 %v6793
        %v6930 = vpop.f32.mrf.mxu0
        %v6931 = vadd.f32 0.0, %v6930
        %v6932 = vpop.f32.mrf.mxu0
        %6933 = vdwg.mxu0
        %v6934 = vadd.f32 %v6702, %v6931
        %6935 = vmatpush.bf16.msra.mxu0 0
        %6936 = vmatpush.bf16.msra.mxu0 0
        %6937 = vmatpush.bf16.msra.mxu0 0
        %6938 = vmatpush.bf16.msra.mxu0 0
        %6939 = vmatpush.bf16.msra.mxu0 0
        %6940 = vmatpush.bf16.msra.mxu0 0
        %6941 = vmatpush.bf16.msra.mxu0 0
        %6942 = vmatpush.bf16.msra.mxu0 %v6069
        %6943 = vmatmul.bf16.gmra.mxu0 %v6793
        %v6944 = vpop.f32.mrf.mxu0
        %v6945 = vadd.f32 0.0, %v6944
        %v6946 = vpop.f32.mrf.mxu0
        %6947 = vdwg.mxu0
        %v6948 = vadd.f32 %v6716, %v6945
        %6949 = vmatpush.bf16.msra.mxu0 0
        %6950 = vmatpush.bf16.msra.mxu0 0
        %6951 = vmatpush.bf16.msra.mxu0 0
        %6952 = vmatpush.bf16.msra.mxu0 0
        %6953 = vmatpush.bf16.msra.mxu0 0
        %6954 = vmatpush.bf16.msra.mxu0 0
        %6955 = vmatpush.bf16.msra.mxu0 0
        %6956 = vmatpush.bf16.msra.mxu0 %v6301
        %6957 = vmatmul.bf16.gmra.mxu0 %v6793
        %v6958 = vpop.f32.mrf.mxu0
        %v6959 = vadd.f32 0.0, %v6958
        %v6960 = vpop.f32.mrf.mxu0
        %6961 = vdwg.mxu0
        %v6962 = vadd.f32 %v6730, %v6959
        %6963 = vmatpush.bf16.msra.mxu0 0
        %6964 = vmatpush.bf16.msra.mxu0 0
        %6965 = vmatpush.bf16.msra.mxu0 0
        %6966 = vmatpush.bf16.msra.mxu0 0
        %6967 = vmatpush.bf16.msra.mxu0 0
        %6968 = vmatpush.bf16.msra.mxu0 0
        %6969 = vmatpush.bf16.msra.mxu0 0
        %6970 = vmatpush.bf16.msra.mxu0 %v6525
        %6971 = vmatmul.bf16.gmra.mxu0 %v6793
        %v6972 = vpop.f32.mrf.mxu0
        %v6973 = vadd.f32 0.0, %v6972
        %v6974 = vpop.f32.mrf.mxu0
        %6975 = vdwg.mxu0
        %v6976 = vadd.f32 %v6744, %v6973
        %6977 = vmatpush.bf16.msra.mxu0 0
        %6978 = vmatpush.bf16.msra.mxu0 0
        %6979 = vmatpush.bf16.msra.mxu0 0
        %6980 = vmatpush.bf16.msra.mxu0 0
        %6981 = vmatpush.bf16.msra.mxu0 0
        %6982 = vmatpush.bf16.msra.mxu0 0
        %6983 = vmatpush.bf16.msra.mxu0 0
        %6984 = vmatpush.bf16.msra.mxu0 %v6542
        %6985 = vmatmul.bf16.gmra.mxu0 %v6793
        %v6986 = vpop.f32.mrf.mxu0
        %v6987 = vadd.f32 0.0, %v6986
        %v6988 = vpop.f32.mrf.mxu0
        %6989 = vdwg.mxu0
        %v6990 = vadd.f32 %v6758, %v6987
        %6991 = vmatpush.bf16.msra.mxu0 0
        %6992 = vmatpush.bf16.msra.mxu0 0
        %6993 = vmatpush.bf16.msra.mxu0 0
        %6994 = vmatpush.bf16.msra.mxu0 0
        %6995 = vmatpush.bf16.msra.mxu0 0
        %6996 = vmatpush.bf16.msra.mxu0 0
        %6997 = vmatpush.bf16.msra.mxu0 0
        %6998 = vmatpush.bf16.msra.mxu0 %v6774
        %6999 = vmatmul.bf16.gmra.mxu0 %v6793
        %v7000 = vpop.f32.mrf.mxu0
        %v7001 = vadd.f32 0.0, %v7000
        %v7002 = vpop.f32.mrf.mxu0
        %7003 = vdwg.mxu0
        %v7004 = vadd.f32 %v6772, %v7001
        %v7006 = vsel %vm446, %v4884, 0
        %7008 = vmatpush.bf16.msra.mxu0 0
        %7009 = vmatpush.bf16.msra.mxu0 0
        %7010 = vmatpush.bf16.msra.mxu0 0
        %7011 = vmatpush.bf16.msra.mxu0 0
        %7012 = vmatpush.bf16.msra.mxu0 0
        %7013 = vmatpush.bf16.msra.mxu0 0
        %7014 = vmatpush.bf16.msra.mxu0 0
        %7015 = vmatpush.bf16.msra.mxu0 %v7006
        %7016 = vmatmul.bf16.gmra.mxu0 %v6793
        %v7017 = vpop.f32.mrf.mxu0
        %v7018 = vadd.f32 0.0, %v7017
        %v7019 = vpop.f32.mrf.mxu0
        %7020 = vdwg.mxu0
        %v7021 = vadd.f32 %v6789, %v7018
        %v7022 = vmul.f32 %v6808, 0.2
        %v7023 = vmax.f32 %v6808, %v7022
        %v7024 = vpack.c.bf16 %v7023, %v7023
        %v7025 = vmul.f32 %v6822, 0.2
        %v7026 = vmax.f32 %v6822, %v7025
        %v7027 = vpack.c.bf16 %v7026, %v7026
        %v7028 = vmul.f32 %v6836, 0.2
        %v7029 = vmax.f32 %v6836, %v7028
        %v7030 = vpack.c.bf16 %v7029, %v7029
        %v7031 = vmul.f32 %v6850, 0.2
        %v7032 = vmax.f32 %v6850, %v7031
        %v7033 = vpack.c.bf16 %v7032, %v7032
        %v7034 = vmul.f32 %v6864, 0.2
        %v7035 = vmax.f32 %v6864, %v7034
        %v7036 = vpack.c.bf16 %v7035, %v7035
        %v7037 = vmul.f32 %v6878, 0.2
        %v7038 = vmax.f32 %v6878, %v7037
        %v7039 = vpack.c.bf16 %v7038, %v7038
        %v7040 = vmul.f32 %v6892, 0.2
        %v7041 = vmax.f32 %v6892, %v7040
        %v7042 = vpack.c.bf16 %v7041, %v7041
        %v7043 = vmul.f32 %v6906, 0.2
        %v7044 = vmax.f32 %v6906, %v7043
        %v7045 = vpack.c.bf16 %v7044, %v7044
        %v7046 = vmul.f32 %v6920, 0.2
        %v7047 = vmax.f32 %v6920, %v7046
        %v7048 = vpack.c.bf16 %v7047, %v7047
        %v7049 = vmul.f32 %v6934, 0.2
        %v7050 = vmax.f32 %v6934, %v7049
        %v7051 = vpack.c.bf16 %v7050, %v7050
        %v7052 = vmul.f32 %v6948, 0.2
        %v7053 = vmax.f32 %v6948, %v7052
        %v7054 = vpack.c.bf16 %v7053, %v7053
        %v7055 = vmul.f32 %v6962, 0.2
        %v7056 = vmax.f32 %v6962, %v7055
        %v7057 = vpack.c.bf16 %v7056, %v7056
        %v7058 = vmul.f32 %v6976, 0.2
        %v7059 = vmax.f32 %v6976, %v7058
        %v7060 = vpack.c.bf16 %v7059, %v7059
        %v7061 = vmul.f32 %v6990, 0.2
        %v7062 = vmax.f32 %v6990, %v7061
        %v7063 = vpack.c.bf16 %v7062, %v7062
        %v7064 = vmul.f32 %v7004, 0.2
        %v7065 = vmax.f32 %v7004, %v7064
        %v7066 = vpack.c.bf16 %v7065, %v7065
        %v7067 = vmul.f32 %v7021, 0.2
        %v7068 = vmax.f32 %v7021, %v7067
        %v7069 = vpack.c.bf16 %v7068, %v7068
        %v7070 = vld [vmem:[%s9] sm:$0x3]
        %s7071 = scalar_lea.vmem %s9, 2
        %v7072 = vld [vmem:[%s7071] sm:$0x3]
        %v7074 = vsel %vm4888, %v7072, 0
        %v7077 = vsel %vm446, %v7027, 0
        %7079 = vmatpush.bf16.msra.mxu0 0
        %7080 = vmatpush.bf16.msra.mxu0 0
        %7081 = vmatpush.bf16.msra.mxu0 0
        %7082 = vmatpush.bf16.msra.mxu0 0
        %7083 = vmatpush.bf16.msra.mxu0 0
        %7084 = vmatpush.bf16.msra.mxu0 0
        %7085 = vmatpush.bf16.msra.mxu0 0
        %7086 = vmatpush.bf16.msra.mxu0 %v7077
        %7087 = vmatmul.bf16.gmra.mxu0 %v7074
        %v7088 = vpop.f32.mrf.mxu0
        %v7089 = vadd.f32 0.0, %v7088
        %v7090 = vpop.f32.mrf.mxu0
        %7091 = vdwg.mxu0
        %v7093 = vsel %vm4888, %v7070, 0
        %v7096 = vsel %vm446, %v7024, 0
        %7098 = vmatpush.bf16.msra.mxu0 0
        %7099 = vmatpush.bf16.msra.mxu0 0
        %7100 = vmatpush.bf16.msra.mxu0 0
        %7101 = vmatpush.bf16.msra.mxu0 0
        %7102 = vmatpush.bf16.msra.mxu0 0
        %7103 = vmatpush.bf16.msra.mxu0 0
        %7104 = vmatpush.bf16.msra.mxu0 0
        %7105 = vmatpush.bf16.msra.mxu0 %v7096
        %7106 = vmatmul.bf16.gmra.mxu0 %v7093
        %v7107 = vpop.f32.mrf.mxu0
        %v7108 = vadd.f32 %v7089, %v7107
        %v7109 = vpop.f32.mrf.mxu0
        %7110 = vdwg.mxu0
        %v7112 = vsel %vm446, %v7030, 0
        %7114 = vmatpush.bf16.msra.mxu0 0
        %7115 = vmatpush.bf16.msra.mxu0 0
        %7116 = vmatpush.bf16.msra.mxu0 0
        %7117 = vmatpush.bf16.msra.mxu0 0
        %7118 = vmatpush.bf16.msra.mxu0 0
        %7119 = vmatpush.bf16.msra.mxu0 0
        %7120 = vmatpush.bf16.msra.mxu0 0
        %7121 = vmatpush.bf16.msra.mxu0 %v7112
        %7122 = vmatmul.bf16.gmra.mxu0 %v7074
        %v7123 = vpop.f32.mrf.mxu0
        %v7124 = vadd.f32 0.0, %v7123
        %v7125 = vpop.f32.mrf.mxu0
        %7126 = vdwg.mxu0
        %7127 = vmatpush.bf16.msra.mxu0 0
        %7128 = vmatpush.bf16.msra.mxu0 0
        %7129 = vmatpush.bf16.msra.mxu0 0
        %7130 = vmatpush.bf16.msra.mxu0 0
        %7131 = vmatpush.bf16.msra.mxu0 0
        %7132 = vmatpush.bf16.msra.mxu0 0
        %7133 = vmatpush.bf16.msra.mxu0 0
        %7134 = vmatpush.bf16.msra.mxu0 %v7077
        %7135 = vmatmul.bf16.gmra.mxu0 %v7093
        %v7136 = vpop.f32.mrf.mxu0
        %v7137 = vadd.f32 %v7124, %v7136
        %v7138 = vpop.f32.mrf.mxu0
        %7139 = vdwg.mxu0
        %v7141 = vsel %vm446, %v7039, 0
        %7143 = vmatpush.bf16.msra.mxu0 0
        %7144 = vmatpush.bf16.msra.mxu0 0
        %7145 = vmatpush.bf16.msra.mxu0 0
        %7146 = vmatpush.bf16.msra.mxu0 0
        %7147 = vmatpush.bf16.msra.mxu0 0
        %7148 = vmatpush.bf16.msra.mxu0 0
        %7149 = vmatpush.bf16.msra.mxu0 0
        %7150 = vmatpush.bf16.msra.mxu0 %v7141
        %7151 = vmatmul.bf16.gmra.mxu0 %v7074
        %v7152 = vpop.f32.mrf.mxu0
        %v7153 = vadd.f32 0.0, %v7152
        %v7154 = vpop.f32.mrf.mxu0
        %7155 = vdwg.mxu0
        %v7157 = vsel %vm446, %v7036, 0
        %7159 = vmatpush.bf16.msra.mxu0 0
        %7160 = vmatpush.bf16.msra.mxu0 0
        %7161 = vmatpush.bf16.msra.mxu0 0
        %7162 = vmatpush.bf16.msra.mxu0 0
        %7163 = vmatpush.bf16.msra.mxu0 0
        %7164 = vmatpush.bf16.msra.mxu0 0
        %7165 = vmatpush.bf16.msra.mxu0 0
        %7166 = vmatpush.bf16.msra.mxu0 %v7157
        %7167 = vmatmul.bf16.gmra.mxu0 %v7093
        %v7168 = vpop.f32.mrf.mxu0
        %v7169 = vadd.f32 %v7153, %v7168
        %v7170 = vpop.f32.mrf.mxu0
        %7171 = vdwg.mxu0
        %v7173 = vsel %vm446, %v7042, 0
        %7175 = vmatpush.bf16.msra.mxu0 0
        %7176 = vmatpush.bf16.msra.mxu0 0
        %7177 = vmatpush.bf16.msra.mxu0 0
        %7178 = vmatpush.bf16.msra.mxu0 0
        %7179 = vmatpush.bf16.msra.mxu0 0
        %7180 = vmatpush.bf16.msra.mxu0 0
        %7181 = vmatpush.bf16.msra.mxu0 0
        %7182 = vmatpush.bf16.msra.mxu0 %v7173
        %7183 = vmatmul.bf16.gmra.mxu0 %v7074
        %v7184 = vpop.f32.mrf.mxu0
        %v7185 = vadd.f32 0.0, %v7184
        %v7186 = vpop.f32.mrf.mxu0
        %7187 = vdwg.mxu0
        %7188 = vmatpush.bf16.msra.mxu0 0
        %7189 = vmatpush.bf16.msra.mxu0 0
        %7190 = vmatpush.bf16.msra.mxu0 0
        %7191 = vmatpush.bf16.msra.mxu0 0
        %7192 = vmatpush.bf16.msra.mxu0 0
        %7193 = vmatpush.bf16.msra.mxu0 0
        %7194 = vmatpush.bf16.msra.mxu0 0
        %7195 = vmatpush.bf16.msra.mxu0 %v7141
        %7196 = vmatmul.bf16.gmra.mxu0 %v7093
        %v7197 = vpop.f32.mrf.mxu0
        %v7198 = vadd.f32 %v7185, %v7197
        %v7199 = vpop.f32.mrf.mxu0
        %7200 = vdwg.mxu0
        %s7201 = scalar_lea.vmem %s9, 4
        %v7202 = vld [vmem:[%s7201] sm:$0x3]
        %v7204 = vsel %vm4888, %v7202, 0
        %7206 = vmatpush.bf16.msra.mxu0 0
        %7207 = vmatpush.bf16.msra.mxu0 0
        %7208 = vmatpush.bf16.msra.mxu0 0
        %7209 = vmatpush.bf16.msra.mxu0 0
        %7210 = vmatpush.bf16.msra.mxu0 0
        %7211 = vmatpush.bf16.msra.mxu0 0
        %7212 = vmatpush.bf16.msra.mxu0 0
        %7213 = vmatpush.bf16.msra.mxu0 %v7112
        %7214 = vmatmul.bf16.gmra.mxu0 %v7204
        %v7215 = vpop.f32.mrf.mxu0
        %v7216 = vadd.f32 0.0, %v7215
        %v7217 = vpop.f32.mrf.mxu0
        %7218 = vdwg.mxu0
        %v7219 = vadd.f32 %v7108, %v7216
        %v7221 = vsel %vm446, %v7033, 0
        %7223 = vmatpush.bf16.msra.mxu0 0
        %7224 = vmatpush.bf16.msra.mxu0 0
        %7225 = vmatpush.bf16.msra.mxu0 0
        %7226 = vmatpush.bf16.msra.mxu0 0
        %7227 = vmatpush.bf16.msra.mxu0 0
        %7228 = vmatpush.bf16.msra.mxu0 0
        %7229 = vmatpush.bf16.msra.mxu0 0
        %7230 = vmatpush.bf16.msra.mxu0 %v7221
        %7231 = vmatmul.bf16.gmra.mxu0 %v7204
        %v7232 = vpop.f32.mrf.mxu0
        %v7233 = vadd.f32 0.0, %v7232
        %v7234 = vpop.f32.mrf.mxu0
        %7235 = vdwg.mxu0
        %v7236 = vadd.f32 %v7137, %v7233
        %7237 = vmatpush.bf16.msra.mxu0 0
        %7238 = vmatpush.bf16.msra.mxu0 0
        %7239 = vmatpush.bf16.msra.mxu0 0
        %7240 = vmatpush.bf16.msra.mxu0 0
        %7241 = vmatpush.bf16.msra.mxu0 0
        %7242 = vmatpush.bf16.msra.mxu0 0
        %7243 = vmatpush.bf16.msra.mxu0 0
        %7244 = vmatpush.bf16.msra.mxu0 %v7173
        %7245 = vmatmul.bf16.gmra.mxu0 %v7204
        %v7246 = vpop.f32.mrf.mxu0
        %v7247 = vadd.f32 0.0, %v7246
        %v7248 = vpop.f32.mrf.mxu0
        %7249 = vdwg.mxu0
        %v7250 = vadd.f32 %v7169, %v7247
        %v7252 = vsel %vm446, %v7045, 0
        %7254 = vmatpush.bf16.msra.mxu0 0
        %7255 = vmatpush.bf16.msra.mxu0 0
        %7256 = vmatpush.bf16.msra.mxu0 0
        %7257 = vmatpush.bf16.msra.mxu0 0
        %7258 = vmatpush.bf16.msra.mxu0 0
        %7259 = vmatpush.bf16.msra.mxu0 0
        %7260 = vmatpush.bf16.msra.mxu0 0
        %7261 = vmatpush.bf16.msra.mxu0 %v7252
        %7262 = vmatmul.bf16.gmra.mxu0 %v7204
        %v7263 = vpop.f32.mrf.mxu0
        %v7264 = vadd.f32 0.0, %v7263
        %v7265 = vpop.f32.mrf.mxu0
        %7266 = vdwg.mxu0
        %v7267 = vadd.f32 %v7198, %v7264
        %s7268 = scalar_lea.vmem %s9, 6
        %v7269 = vld [vmem:[%s7268] sm:$0x3]
        %v7271 = vsel %vm4888, %v7269, 0
        %7273 = vmatpush.bf16.msra.mxu0 0
        %7274 = vmatpush.bf16.msra.mxu0 0
        %7275 = vmatpush.bf16.msra.mxu0 0
        %7276 = vmatpush.bf16.msra.mxu0 0
        %7277 = vmatpush.bf16.msra.mxu0 0
        %7278 = vmatpush.bf16.msra.mxu0 0
        %7279 = vmatpush.bf16.msra.mxu0 0
        %7280 = vmatpush.bf16.msra.mxu0 %v7157
        %7281 = vmatmul.bf16.gmra.mxu0 %v7271
        %v7282 = vpop.f32.mrf.mxu0
        %v7283 = vadd.f32 0.0, %v7282
        %v7284 = vpop.f32.mrf.mxu0
        %7285 = vdwg.mxu0
        %v7286 = vadd.f32 %v7219, %v7283
        %7287 = vmatpush.bf16.msra.mxu0 0
        %7288 = vmatpush.bf16.msra.mxu0 0
        %7289 = vmatpush.bf16.msra.mxu0 0
        %7290 = vmatpush.bf16.msra.mxu0 0
        %7291 = vmatpush.bf16.msra.mxu0 0
        %7292 = vmatpush.bf16.msra.mxu0 0
        %7293 = vmatpush.bf16.msra.mxu0 0
        %7294 = vmatpush.bf16.msra.mxu0 %v7141
        %7295 = vmatmul.bf16.gmra.mxu0 %v7271
        %v7296 = vpop.f32.mrf.mxu0
        %v7297 = vadd.f32 0.0, %v7296
        %v7298 = vpop.f32.mrf.mxu0
        %7299 = vdwg.mxu0
        %v7300 = vadd.f32 %v7236, %v7297
        %v7302 = vsel %vm446, %v7048, 0
        %7304 = vmatpush.bf16.msra.mxu0 0
        %7305 = vmatpush.bf16.msra.mxu0 0
        %7306 = vmatpush.bf16.msra.mxu0 0
        %7307 = vmatpush.bf16.msra.mxu0 0
        %7308 = vmatpush.bf16.msra.mxu0 0
        %7309 = vmatpush.bf16.msra.mxu0 0
        %7310 = vmatpush.bf16.msra.mxu0 0
        %7311 = vmatpush.bf16.msra.mxu0 %v7302
        %7312 = vmatmul.bf16.gmra.mxu0 %v7271
        %v7313 = vpop.f32.mrf.mxu0
        %v7314 = vadd.f32 0.0, %v7313
        %v7315 = vpop.f32.mrf.mxu0
        %7316 = vdwg.mxu0
        %v7317 = vadd.f32 %v7250, %v7314
        %v7319 = vsel %vm446, %v7051, 0
        %7321 = vmatpush.bf16.msra.mxu0 0
        %7322 = vmatpush.bf16.msra.mxu0 0
        %7323 = vmatpush.bf16.msra.mxu0 0
        %7324 = vmatpush.bf16.msra.mxu0 0
        %7325 = vmatpush.bf16.msra.mxu0 0
        %7326 = vmatpush.bf16.msra.mxu0 0
        %7327 = vmatpush.bf16.msra.mxu0 0
        %7328 = vmatpush.bf16.msra.mxu0 %v7319
        %7329 = vmatmul.bf16.gmra.mxu0 %v7271
        %v7330 = vpop.f32.mrf.mxu0
        %v7331 = vadd.f32 0.0, %v7330
        %v7332 = vpop.f32.mrf.mxu0
        %7333 = vdwg.mxu0
        %v7334 = vadd.f32 %v7267, %v7331
        %s7335 = scalar_lea.vmem %s9, 8
        %v7336 = vld [vmem:[%s7335] sm:$0x3]
        %v7338 = vsel %vm4888, %v7336, 0
        %7340 = vmatpush.bf16.msra.mxu0 0
        %7341 = vmatpush.bf16.msra.mxu0 0
        %7342 = vmatpush.bf16.msra.mxu0 0
        %7343 = vmatpush.bf16.msra.mxu0 0
        %7344 = vmatpush.bf16.msra.mxu0 0
        %7345 = vmatpush.bf16.msra.mxu0 0
        %7346 = vmatpush.bf16.msra.mxu0 0
        %7347 = vmatpush.bf16.msra.mxu0 %v7141
        %7348 = vmatmul.bf16.gmra.mxu0 %v7338
        %v7349 = vpop.f32.mrf.mxu0
        %v7350 = vadd.f32 0.0, %v7349
        %v7351 = vpop.f32.mrf.mxu0
        %7352 = vdwg.mxu0
        %v7353 = vadd.f32 %v7286, %v7350
        %7354 = vmatpush.bf16.msra.mxu0 0
        %7355 = vmatpush.bf16.msra.mxu0 0
        %7356 = vmatpush.bf16.msra.mxu0 0
        %7357 = vmatpush.bf16.msra.mxu0 0
        %7358 = vmatpush.bf16.msra.mxu0 0
        %7359 = vmatpush.bf16.msra.mxu0 0
        %7360 = vmatpush.bf16.msra.mxu0 0
        %7361 = vmatpush.bf16.msra.mxu0 %v7173
        %7362 = vmatmul.bf16.gmra.mxu0 %v7338
        %v7363 = vpop.f32.mrf.mxu0
        %v7364 = vadd.f32 0.0, %v7363
        %v7365 = vpop.f32.mrf.mxu0
        %7366 = vdwg.mxu0
        %v7367 = vadd.f32 %v7300, %v7364
        %7368 = vmatpush.bf16.msra.mxu0 0
        %7369 = vmatpush.bf16.msra.mxu0 0
        %7370 = vmatpush.bf16.msra.mxu0 0
        %7371 = vmatpush.bf16.msra.mxu0 0
        %7372 = vmatpush.bf16.msra.mxu0 0
        %7373 = vmatpush.bf16.msra.mxu0 0
        %7374 = vmatpush.bf16.msra.mxu0 0
        %7375 = vmatpush.bf16.msra.mxu0 %v7319
        %7376 = vmatmul.bf16.gmra.mxu0 %v7338
        %v7377 = vpop.f32.mrf.mxu0
        %v7378 = vadd.f32 0.0, %v7377
        %v7379 = vpop.f32.mrf.mxu0
        %7380 = vdwg.mxu0
        %v7381 = vadd.f32 %v7317, %v7378
        %v7383 = vsel %vm446, %v7054, 0
        %7385 = vmatpush.bf16.msra.mxu0 0
        %7386 = vmatpush.bf16.msra.mxu0 0
        %7387 = vmatpush.bf16.msra.mxu0 0
        %7388 = vmatpush.bf16.msra.mxu0 0
        %7389 = vmatpush.bf16.msra.mxu0 0
        %7390 = vmatpush.bf16.msra.mxu0 0
        %7391 = vmatpush.bf16.msra.mxu0 0
        %7392 = vmatpush.bf16.msra.mxu0 %v7383
        %7393 = vmatmul.bf16.gmra.mxu0 %v7338
        %v7394 = vpop.f32.mrf.mxu0
        %v7395 = vadd.f32 0.0, %v7394
        %v7396 = vpop.f32.mrf.mxu0
        %7397 = vdwg.mxu0
        %v7398 = vadd.f32 %v7334, %v7395
        %s7399 = scalar_lea.vmem %s9, 10
        %v7400 = vld [vmem:[%s7399] sm:$0x3]
        %v7402 = vsel %vm4888, %v7400, 0
        %7404 = vmatpush.bf16.msra.mxu0 0
        %7405 = vmatpush.bf16.msra.mxu0 0
        %7406 = vmatpush.bf16.msra.mxu0 0
        %7407 = vmatpush.bf16.msra.mxu0 0
        %7408 = vmatpush.bf16.msra.mxu0 0
        %7409 = vmatpush.bf16.msra.mxu0 0
        %7410 = vmatpush.bf16.msra.mxu0 0
        %7411 = vmatpush.bf16.msra.mxu0 %v7173
        %7412 = vmatmul.bf16.gmra.mxu0 %v7402
        %v7413 = vpop.f32.mrf.mxu0
        %v7414 = vadd.f32 0.0, %v7413
        %v7415 = vpop.f32.mrf.mxu0
        %7416 = vdwg.mxu0
        %v7417 = vadd.f32 %v7353, %v7414
        %7418 = vmatpush.bf16.msra.mxu0 0
        %7419 = vmatpush.bf16.msra.mxu0 0
        %7420 = vmatpush.bf16.msra.mxu0 0
        %7421 = vmatpush.bf16.msra.mxu0 0
        %7422 = vmatpush.bf16.msra.mxu0 0
        %7423 = vmatpush.bf16.msra.mxu0 0
        %7424 = vmatpush.bf16.msra.mxu0 0
        %7425 = vmatpush.bf16.msra.mxu0 %v7252
        %7426 = vmatmul.bf16.gmra.mxu0 %v7402
        %v7427 = vpop.f32.mrf.mxu0
        %v7428 = vadd.f32 0.0, %v7427
        %v7429 = vpop.f32.mrf.mxu0
        %7430 = vdwg.mxu0
        %v7431 = vadd.f32 %v7367, %v7428
        %7432 = vmatpush.bf16.msra.mxu0 0
        %7433 = vmatpush.bf16.msra.mxu0 0
        %7434 = vmatpush.bf16.msra.mxu0 0
        %7435 = vmatpush.bf16.msra.mxu0 0
        %7436 = vmatpush.bf16.msra.mxu0 0
        %7437 = vmatpush.bf16.msra.mxu0 0
        %7438 = vmatpush.bf16.msra.mxu0 0
        %7439 = vmatpush.bf16.msra.mxu0 %v7383
        %7440 = vmatmul.bf16.gmra.mxu0 %v7402
        %v7441 = vpop.f32.mrf.mxu0
        %v7442 = vadd.f32 0.0, %v7441
        %v7443 = vpop.f32.mrf.mxu0
        %7444 = vdwg.mxu0
        %v7445 = vadd.f32 %v7381, %v7442
        %v7447 = vsel %vm446, %v7057, 0
        %7449 = vmatpush.bf16.msra.mxu0 0
        %7450 = vmatpush.bf16.msra.mxu0 0
        %7451 = vmatpush.bf16.msra.mxu0 0
        %7452 = vmatpush.bf16.msra.mxu0 0
        %7453 = vmatpush.bf16.msra.mxu0 0
        %7454 = vmatpush.bf16.msra.mxu0 0
        %7455 = vmatpush.bf16.msra.mxu0 0
        %7456 = vmatpush.bf16.msra.mxu0 %v7447
        %7457 = vmatmul.bf16.gmra.mxu0 %v7402
        %v7458 = vpop.f32.mrf.mxu0
        %v7459 = vadd.f32 0.0, %v7458
        %v7460 = vpop.f32.mrf.mxu0
        %7461 = vdwg.mxu0
        %v7462 = vadd.f32 %v7398, %v7459
        %s7463 = scalar_lea.vmem %s9, 12
        %v7464 = vld [vmem:[%s7463] sm:$0x3]
        %v7466 = vsel %vm4888, %v7464, 0
        %7468 = vmatpush.bf16.msra.mxu0 0
        %7469 = vmatpush.bf16.msra.mxu0 0
        %7470 = vmatpush.bf16.msra.mxu0 0
        %7471 = vmatpush.bf16.msra.mxu0 0
        %7472 = vmatpush.bf16.msra.mxu0 0
        %7473 = vmatpush.bf16.msra.mxu0 0
        %7474 = vmatpush.bf16.msra.mxu0 0
        %7475 = vmatpush.bf16.msra.mxu0 %v7302
        %7476 = vmatmul.bf16.gmra.mxu0 %v7466
        %v7477 = vpop.f32.mrf.mxu0
        %v7478 = vadd.f32 0.0, %v7477
        %v7479 = vpop.f32.mrf.mxu0
        %7480 = vdwg.mxu0
        %v7481 = vadd.f32 %v7417, %v7478
        %7482 = vmatpush.bf16.msra.mxu0 0
        %7483 = vmatpush.bf16.msra.mxu0 0
        %7484 = vmatpush.bf16.msra.mxu0 0
        %7485 = vmatpush.bf16.msra.mxu0 0
        %7486 = vmatpush.bf16.msra.mxu0 0
        %7487 = vmatpush.bf16.msra.mxu0 0
        %7488 = vmatpush.bf16.msra.mxu0 0
        %7489 = vmatpush.bf16.msra.mxu0 %v7319
        %7490 = vmatmul.bf16.gmra.mxu0 %v7466
        %v7491 = vpop.f32.mrf.mxu0
        %v7492 = vadd.f32 0.0, %v7491
        %v7493 = vpop.f32.mrf.mxu0
        %7494 = vdwg.mxu0
        %v7495 = vadd.f32 %v7431, %v7492
        %v7497 = vsel %vm446, %v7060, 0
        %7499 = vmatpush.bf16.msra.mxu0 0
        %7500 = vmatpush.bf16.msra.mxu0 0
        %7501 = vmatpush.bf16.msra.mxu0 0
        %7502 = vmatpush.bf16.msra.mxu0 0
        %7503 = vmatpush.bf16.msra.mxu0 0
        %7504 = vmatpush.bf16.msra.mxu0 0
        %7505 = vmatpush.bf16.msra.mxu0 0
        %7506 = vmatpush.bf16.msra.mxu0 %v7497
        %7507 = vmatmul.bf16.gmra.mxu0 %v7466
        %v7508 = vpop.f32.mrf.mxu0
        %v7509 = vadd.f32 0.0, %v7508
        %v7510 = vpop.f32.mrf.mxu0
        %7511 = vdwg.mxu0
        %v7512 = vadd.f32 %v7445, %v7509
        %v7514 = vsel %vm446, %v7063, 0
        %7516 = vmatpush.bf16.msra.mxu0 0
        %7517 = vmatpush.bf16.msra.mxu0 0
        %7518 = vmatpush.bf16.msra.mxu0 0
        %7519 = vmatpush.bf16.msra.mxu0 0
        %7520 = vmatpush.bf16.msra.mxu0 0
        %7521 = vmatpush.bf16.msra.mxu0 0
        %7522 = vmatpush.bf16.msra.mxu0 0
        %7523 = vmatpush.bf16.msra.mxu0 %v7514
        %7524 = vmatmul.bf16.gmra.mxu0 %v7466
        %v7525 = vpop.f32.mrf.mxu0
        %v7526 = vadd.f32 0.0, %v7525
        %v7527 = vpop.f32.mrf.mxu0
        %7528 = vdwg.mxu0
        %v7529 = vadd.f32 %v7462, %v7526
        %s7530 = scalar_lea.vmem %s9, 14
        %v7531 = vld [vmem:[%s7530] sm:$0x3]
        %v7533 = vsel %vm4888, %v7531, 0
        %7535 = vmatpush.bf16.msra.mxu0 0
        %7536 = vmatpush.bf16.msra.mxu0 0
        %7537 = vmatpush.bf16.msra.mxu0 0
        %7538 = vmatpush.bf16.msra.mxu0 0
        %7539 = vmatpush.bf16.msra.mxu0 0
        %7540 = vmatpush.bf16.msra.mxu0 0
        %7541 = vmatpush.bf16.msra.mxu0 0
        %7542 = vmatpush.bf16.msra.mxu0 %v7319
        %7543 = vmatmul.bf16.gmra.mxu0 %v7533
        %v7544 = vpop.f32.mrf.mxu0
        %v7545 = vadd.f32 0.0, %v7544
        %v7546 = vpop.f32.mrf.mxu0
        %7547 = vdwg.mxu0
        %v7548 = vadd.f32 %v7481, %v7545
        %7549 = vmatpush.bf16.msra.mxu0 0
        %7550 = vmatpush.bf16.msra.mxu0 0
        %7551 = vmatpush.bf16.msra.mxu0 0
        %7552 = vmatpush.bf16.msra.mxu0 0
        %7553 = vmatpush.bf16.msra.mxu0 0
        %7554 = vmatpush.bf16.msra.mxu0 0
        %7555 = vmatpush.bf16.msra.mxu0 0
        %7556 = vmatpush.bf16.msra.mxu0 %v7383
        %7557 = vmatmul.bf16.gmra.mxu0 %v7533
        %v7558 = vpop.f32.mrf.mxu0
        %v7559 = vadd.f32 0.0, %v7558
        %v7560 = vpop.f32.mrf.mxu0
        %7561 = vdwg.mxu0
        %v7562 = vadd.f32 %v7495, %v7559
        %7563 = vmatpush.bf16.msra.mxu0 0
        %7564 = vmatpush.bf16.msra.mxu0 0
        %7565 = vmatpush.bf16.msra.mxu0 0
        %7566 = vmatpush.bf16.msra.mxu0 0
        %7567 = vmatpush.bf16.msra.mxu0 0
        %7568 = vmatpush.bf16.msra.mxu0 0
        %7569 = vmatpush.bf16.msra.mxu0 0
        %7570 = vmatpush.bf16.msra.mxu0 %v7514
        %7571 = vmatmul.bf16.gmra.mxu0 %v7533
        %v7572 = vpop.f32.mrf.mxu0
        %v7573 = vadd.f32 0.0, %v7572
        %v7574 = vpop.f32.mrf.mxu0
        %7575 = vdwg.mxu0
        %v7576 = vadd.f32 %v7512, %v7573
        %v7578 = vsel %vm446, %v7066, 0
        %7580 = vmatpush.bf16.msra.mxu0 0
        %7581 = vmatpush.bf16.msra.mxu0 0
        %7582 = vmatpush.bf16.msra.mxu0 0
        %7583 = vmatpush.bf16.msra.mxu0 0
        %7584 = vmatpush.bf16.msra.mxu0 0
        %7585 = vmatpush.bf16.msra.mxu0 0
        %7586 = vmatpush.bf16.msra.mxu0 0
        %7587 = vmatpush.bf16.msra.mxu0 %v7578
        %7588 = vmatmul.bf16.gmra.mxu0 %v7533
        %v7589 = vpop.f32.mrf.mxu0
        %v7590 = vadd.f32 0.0, %v7589
        %v7591 = vpop.f32.mrf.mxu0
        %7592 = vdwg.mxu0
        %v7593 = vadd.f32 %v7529, %v7590
        %s7594 = scalar_lea.vmem %s9, 16
        %v7595 = vld [vmem:[%s7594] sm:$0x3]
        %v7597 = vsel %vm4888, %v7595, 0
        %7599 = vmatpush.bf16.msra.mxu0 0
        %7600 = vmatpush.bf16.msra.mxu0 0
        %7601 = vmatpush.bf16.msra.mxu0 0
        %7602 = vmatpush.bf16.msra.mxu0 0
        %7603 = vmatpush.bf16.msra.mxu0 0
        %7604 = vmatpush.bf16.msra.mxu0 0
        %7605 = vmatpush.bf16.msra.mxu0 0
        %7606 = vmatpush.bf16.msra.mxu0 %v7383
        %7607 = vmatmul.bf16.gmra.mxu0 %v7597
        %v7608 = vpop.f32.mrf.mxu0
        %v7609 = vadd.f32 0.0, %v7608
        %v7610 = vpop.f32.mrf.mxu0
        %7611 = vdwg.mxu0
        %v7612 = vadd.f32 %v7548, %v7609
        %7613 = vmatpush.bf16.msra.mxu0 0
        %7614 = vmatpush.bf16.msra.mxu0 0
        %7615 = vmatpush.bf16.msra.mxu0 0
        %7616 = vmatpush.bf16.msra.mxu0 0
        %7617 = vmatpush.bf16.msra.mxu0 0
        %7618 = vmatpush.bf16.msra.mxu0 0
        %7619 = vmatpush.bf16.msra.mxu0 0
        %7620 = vmatpush.bf16.msra.mxu0 %v7447
        %7621 = vmatmul.bf16.gmra.mxu0 %v7597
        %v7622 = vpop.f32.mrf.mxu0
        %v7623 = vadd.f32 0.0, %v7622
        %v7624 = vpop.f32.mrf.mxu0
        %7625 = vdwg.mxu0
        %v7626 = vadd.f32 %v7562, %v7623
        %7627 = vmatpush.bf16.msra.mxu0 0
        %7628 = vmatpush.bf16.msra.mxu0 0
        %7629 = vmatpush.bf16.msra.mxu0 0
        %7630 = vmatpush.bf16.msra.mxu0 0
        %7631 = vmatpush.bf16.msra.mxu0 0
        %7632 = vmatpush.bf16.msra.mxu0 0
        %7633 = vmatpush.bf16.msra.mxu0 0
        %7634 = vmatpush.bf16.msra.mxu0 %v7578
        %7635 = vmatmul.bf16.gmra.mxu0 %v7597
        %v7636 = vpop.f32.mrf.mxu0
        %v7637 = vadd.f32 0.0, %v7636
        %v7638 = vpop.f32.mrf.mxu0
        %7639 = vdwg.mxu0
        %v7640 = vadd.f32 %v7576, %v7637
        %v7642 = vsel %vm446, %v7069, 0
        %7644 = vmatpush.bf16.msra.mxu0 0
        %7645 = vmatpush.bf16.msra.mxu0 0
        %7646 = vmatpush.bf16.msra.mxu0 0
        %7647 = vmatpush.bf16.msra.mxu0 0
        %7648 = vmatpush.bf16.msra.mxu0 0
        %7649 = vmatpush.bf16.msra.mxu0 0
        %7650 = vmatpush.bf16.msra.mxu0 0
        %7651 = vmatpush.bf16.msra.mxu0 %v7642
        %7652 = vmatmul.bf16.gmra.mxu0 %v7597
        %v7653 = vpop.f32.mrf.mxu0
        %v7654 = vadd.f32 0.0, %v7653
        %v7655 = vpop.f32.mrf.mxu0
        %7656 = vdwg.mxu0
        %v7657 = vadd.f32 %v7593, %v7654
        %v7658 = vmul.f32 %v7612, 0.2
        %v7659 = vmax.f32 %v7612, %v7658
        %v7660 = vpack.c.bf16 %v7659, %v7659
        %v7661 = vmul.f32 %v7626, 0.2
        %v7662 = vmax.f32 %v7626, %v7661
        %v7663 = vpack.c.bf16 %v7662, %v7662
        %v7664 = vmul.f32 %v7640, 0.2
        %v7665 = vmax.f32 %v7640, %v7664
        %v7666 = vpack.c.bf16 %v7665, %v7665
        %v7667 = vmul.f32 %v7657, 0.2
        %v7668 = vmax.f32 %v7657, %v7667
        %v7669 = vpack.c.bf16 %v7668, %v7668
        %v7670 = vld [vmem:[%s10] sm:$0xf]
        %s7671 = scalar_lea.vmem %s10, 4
        %v7672 = vld [vmem:[%s7671] sm:$0xf]
        %v7674 = vsel %vm4888, %v7672, 0
        %v7677 = vsel %vm446, %v7663, 0
        %7679 = vmatpush.bf16.msra.mxu0 0
        %7680 = vmatpush.bf16.msra.mxu0 0
        %7681 = vmatpush.bf16.msra.mxu0 0
        %7682 = vmatpush.bf16.msra.mxu0 0
        %7683 = vmatpush.bf16.msra.mxu0 0
        %7684 = vmatpush.bf16.msra.mxu0 0
        %7685 = vmatpush.bf16.msra.mxu0 0
        %7686 = vmatpush.bf16.msra.mxu0 %v7677
        %7687 = vmatmul.bf16.gmra.mxu0 %v7674
        %v7688 = vpop.f32.mrf.mxu0
        %v7689 = vadd.f32 0.0, %v7688
        %v7690 = vpop.f32.mrf.mxu0
        %7691 = vdwg.mxu0
        %v7693 = vsel %vm4888, %v7670, 0
        %v7696 = vsel %vm446, %v7660, 0
        %7698 = vmatpush.bf16.msra.mxu0 0
        %7699 = vmatpush.bf16.msra.mxu0 0
        %7700 = vmatpush.bf16.msra.mxu0 0
        %7701 = vmatpush.bf16.msra.mxu0 0
        %7702 = vmatpush.bf16.msra.mxu0 0
        %7703 = vmatpush.bf16.msra.mxu0 0
        %7704 = vmatpush.bf16.msra.mxu0 0
        %7705 = vmatpush.bf16.msra.mxu0 %v7696
        %7706 = vmatmul.bf16.gmra.mxu0 %v7693
        %v7707 = vpop.f32.mrf.mxu0
        %v7708 = vadd.f32 %v7689, %v7707
        %v7709 = vpop.f32.mrf.mxu0
        %7710 = vdwg.mxu0
        %s7711 = scalar_lea.vmem %s10, 8
        %v7712 = vld [vmem:[%s7711] sm:$0xf]
        %v7714 = vsel %vm4888, %v7712, 0
        %v7717 = vsel %vm446, %v7666, 0
        %7719 = vmatpush.bf16.msra.mxu0 0
        %7720 = vmatpush.bf16.msra.mxu0 0
        %7721 = vmatpush.bf16.msra.mxu0 0
        %7722 = vmatpush.bf16.msra.mxu0 0
        %7723 = vmatpush.bf16.msra.mxu0 0
        %7724 = vmatpush.bf16.msra.mxu0 0
        %7725 = vmatpush.bf16.msra.mxu0 0
        %7726 = vmatpush.bf16.msra.mxu0 %v7717
        %7727 = vmatmul.bf16.gmra.mxu0 %v7714
        %v7728 = vpop.f32.mrf.mxu0
        %v7729 = vadd.f32 0.0, %v7728
        %v7730 = vpop.f32.mrf.mxu0
        %7731 = vdwg.mxu0
        %v7732 = vadd.f32 %v7708, %v7729
        %s7733 = scalar_lea.vmem %s10, 12
        %v7734 = vld [vmem:[%s7733] sm:$0xf]
        %v7736 = vsel %vm4888, %v7734, 0
        %v7739 = vsel %vm446, %v7669, 0
        %7741 = vmatpush.bf16.msra.mxu0 0
        %7742 = vmatpush.bf16.msra.mxu0 0
        %7743 = vmatpush.bf16.msra.mxu0 0
        %7744 = vmatpush.bf16.msra.mxu0 0
        %7745 = vmatpush.bf16.msra.mxu0 0
        %7746 = vmatpush.bf16.msra.mxu0 0
        %7747 = vmatpush.bf16.msra.mxu0 0
        %7748 = vmatpush.bf16.msra.mxu0 %v7739
        %7749 = vmatmul.bf16.gmra.mxu0 %v7736
        %v7750 = vpop.f32.mrf.mxu0
        %v7751 = vadd.f32 0.0, %v7750
        %v7752 = vpop.f32.mrf.mxu0
        %7753 = vdwg.mxu0
        %v7754 = vadd.f32 %v7732, %v7751
        %v7755 = vmul.f32 %v7754, 0.2
        %v7756 = vmax.f32 %v7754, %v7755
        %7757 = vst.msk [vmem:[%s422] sm:$0xff] %vm509, %v7756
        %s7758 = sand.u32 %s292, 1
        %s7759 = scalar_lea.sflag [#allocation3], %s7758
        %s7760 = sand.u32 %s292, 1
        %s7761 = smul.addr %s7760, 8
        %s7762 = scalar_lea.vmem [#allocation2], %s7761
        // Predicated region
        $region65: #{tpu_custom_call.1} parent=63 // pred_check
          %p7763 = pneg %p302
        $region66: #{tpu_custom_call.1} parent=63 // pred_check_branch
          %7765 = sbr.rel (%p7763) target = $region68
        $region67: #{tpu_custom_call.1} parent=63 // pred_region
          %7767 = vsyncadd %s7759, 0
          %s7768 = sadd.s32 %s30, %s29
          %s7769 = smul.addr %s7768, 8
          %s7770 = scalar_lea.hbm %s11, %s7769
          %s7772 = sshll.u32 %s7762, 4
          %s7773 = int_to_ptr.vmem [resolvable:$true] %s7772
          %s7774 = sshll.u32 %s7770, 4
          %s7775 = int_to_ptr.hbm [resolvable:$true] %s7774
          %7777 = dma.vmem_to_hbm [thread:$0]  %s7773, 128, %s7775, %s7759
        $region68: #{tpu_custom_call.1} parent=63 // pred_fallthru
          _
      $region64: #{tpu_custom_call.1} parent=5 // pred_fallthru
        _
      %p7778 = scmp.le.s32.totalorder 2, %s20
      // Predicated region
      $region69: #{tpu_custom_call.1} parent=5 // pred_check
        %p7779 = pneg %p7778
      $region70: #{tpu_custom_call.1} parent=5 // pred_check_branch
        %7781 = sbr.rel (%p7779) target = $region72
      $region71: #{tpu_custom_call.1} parent=5 // pred_region
        %s7782 = ssub.s32 %s20, 2
        // Predicated region
        $region73: #{tpu_custom_call.1} parent=71 // pred_check
          %p7783 = pneg %p308
        $region74: #{tpu_custom_call.1} parent=71 // pred_check_branch
          %7785 = sbr.rel (%p7783) target = $region76
        $region75: #{tpu_custom_call.1} parent=71 // pred_region
          %s7786 = sand.u32 %s293, 1
          %s7787 = scalar_lea.sflag [#allocation3], %s7786
          %s7788 = sand.u32 %s293, 1
          %s7789 = smul.addr %s7788, 8
          %s7790 = scalar_lea.vmem [#allocation2], %s7789
          %7792 = dma.done %s7787, 128
        $region76: #{tpu_custom_call.1} parent=71 // pred_fallthru
          _
      $region72: #{tpu_custom_call.1} parent=5 // pred_fallthru
        _
    $region6: #{tpu_custom_call.1} parent=1 // loop_footer
      %s24 = sadd.s32 1, %s20
    $region7: #{tpu_custom_call.1} parent=1 // loop_footer_branch
      %19 = sbr.rel target = $region3
    $region8: #{tpu_custom_call.1} parent=1 // loop_exit
      _
    %7793 = vsyncpa [#allocation3], 1
    %s7794 = scalar_lea.sflag [#allocation3], 1
    %7795 = vsyncpa %s7794, 1

</llo_original>
